<compile_context>
chip_gen: v5e
topology: v5e:2x2
jax: 0.10.0
libtpu: 0.0.40
codegen_flags: <defaults>
</compile_context>

<pallas_src>
import numpy as np
import jax
import jax.numpy as jnp
from jax import lax
from jax.experimental import pallas as pl
from jax.experimental.pallas import tpu as pltpu

EPS = 1e-5     # nn.GroupNorm default
GUARD = 8      # sublane-aligned guard rows above/below the padded image scratch


def _silu(x):
    return x * jax.nn.sigmoid(x)


def _padded_rows(H, W):
    # guard | W zero rows | H*W image rows | W zero rows | guard
    return 2 * GUARD + 2 * W + H * W


def _make_kernel(H, W, Cin, Cout, has_shortcut):
    HW = H * W
    BASE = GUARD + W                     # first image row inside the scratch
    n1 = float(HW * (Cin // min(32, Cin)))
    n2 = float(HW * (Cout // min(32, Cout)))

    def group_norm(hf, gsum, gback, gamma, beta, n_per_group):
        # Two-pass GroupNorm: mean, then centered variance (no cancellation).
        # Group reduction via tiny f32 matmuls with 0/1 membership matrices.
        s = jnp.sum(hf, axis=0, keepdims=True)                              # (1, C)
        mean_g = jnp.dot(s, gsum, preferred_element_type=jnp.float32) * (1.0 / n_per_group)
        mean_c = jnp.dot(mean_g, gback, preferred_element_type=jnp.float32)  # (1, C)
        d = hf - mean_c
        sq = jnp.sum(d * d, axis=0, keepdims=True)                          # (1, C)
        var_g = jnp.dot(sq, gsum, preferred_element_type=jnp.float32) * (1.0 / n_per_group)
        var_c = jnp.dot(var_g, gback, preferred_element_type=jnp.float32)   # (1, C)
        coeff = lax.rsqrt(var_c + EPS) * gamma
        return d * coeff + beta

    def conv3x3(h, pbuf, w_ref, mask_l, mask_r, cin):
        # 3x3 "same" conv as 9 shifted bf16 matmuls with f32 accumulation.
        # Vertical padding: zero row-bands in the bf16 scratch.
        # Horizontal (+-1) shift: static +-1 slices of the scratch + column mask.
        hb = h.astype(jnp.bfloat16)                      # cast once per conv
        zrow = jnp.zeros((W, cin), jnp.bfloat16)
        pbuf[GUARD:GUARD + W, :] = zrow                  # top zero band
        pbuf[BASE:BASE + HW, :] = hb                     # image
        pbuf[BASE + HW:BASE + HW + W, :] = zrow          # bottom zero band

        def mm(tap, k):
            return jnp.dot(tap, w_ref[k], preferred_element_type=jnp.float32)

        acc = mm(hb, 4)                                  # centre tap, no mask
        k = 0
        for dy in (-1, 0, 1):
            for dx in (-1, 0, 1):
                if dy == 0 and dx == 0:
                    k += 1
                    continue
                start = BASE + dy * W + dx               # static, always in bounds
                tap = pbuf[start:start + HW, :]
                if dx == -1:
                    tap = jnp.where(mask_l, tap, jnp.zeros((), jnp.bfloat16))
                elif dx == 1:
                    tap = jnp.where(mask_r, tap, jnp.zeros((), jnp.bfloat16))
                acc = acc + mm(tap, k)
                k += 1
        return acc

    def kernel(*refs):
        if has_shortcut:
            (x_ref, tsig_ref,
             g1_ref, b1_ref, gsum1_ref, gbck1_ref, w1_ref,
             g2_ref, b2_ref, gsum2_ref, gbck2_ref, w2_ref,
             obias_ref, wsc_ref,
             out_ref, pbuf1, pbuf2) = refs
        else:
            (x_ref, tsig_ref,
             g1_ref, b1_ref, gsum1_ref, gbck1_ref, w1_ref,
             g2_ref, b2_ref, gsum2_ref, gbck2_ref, w2_ref,
             obias_ref,
             out_ref, pbuf1) = refs
            pbuf2 = pbuf1                                # Cin == Cout -> reuse scratch

        xf = x_ref[0]                                    # (HW, Cin) f32

        # Column masks for the dx = -1 / +1 taps; built once, used by both convs.
        col = lax.broadcasted_iota(jnp.int32, (HW, 1), 0) % W
        mask_l = col > 0
        mask_r = col < (W - 1)

        # norm1 + SiLU
        h = _silu(group_norm(xf, gsum1_ref[...], gbck1_ref[...],
                             g1_ref[...], b1_ref[...], n1))

        # conv1 (3x3, pad 1); time signal already contains bt + conv1 bias.
        h = conv3x3(h, pbuf1, w1_ref, mask_l, mask_r, Cin)
        h = h + tsig_ref[0]

        # norm2 + SiLU   (dropout p=0 -> Identity)
        h = _silu(group_norm(h, gsum2_ref[...], gbck2_ref[...],
                             g2_ref[...], b2_ref[...], n2))

        # conv2 (3x3, pad 1)
        h = conv3x3(h, pbuf2, w2_ref, mask_l, mask_r, Cout)

        # shortcut: 1x1 conv only when Cin != Cout, identity otherwise.
        if has_shortcut:
            sc = jnp.dot(xf.astype(jnp.bfloat16), wsc_ref[...],
                         preferred_element_type=jnp.float32)
            out = h + sc + obias_ref[...]
        else:
            out = h + xf + obias_ref[...]

        out_ref[0] = out

    return kernel


def residual_block_forward(x_nchw, time_emb, params):
    """x_nchw: (B, Cin, H, W); time_emb: (B, TD) -> (B, Cout, H, W)."""
    B, Cin, H, W = x_nchw.shape
    Cout = params["w1"].shape[-1]
    HW = H * W
    G1 = min(32, Cin)
    G2 = min(32, Cout)
    if Cin % G1 or Cout % G2:
        raise ValueError("channels must be divisible by num_groups (as in PyTorch GroupNorm)")
    has_shortcut = "wsc" in params                       # Cin != Cout

    # NCHW -> NHWC -> (B, HW, C): channels on the lane axis.
    # TODO(synk): keep activations NHWC across the network to avoid these transposes.
    x_flat = jnp.transpose(x_nchw, (0, 2, 3, 1)).reshape(B, HW, Cin).astype(jnp.float32)

    # Time MLP hoisted out of the kernel: one (B,TD)x(TD,Cout) XLA matmul, with
    # the time-linear bias and conv1 bias folded in.
    tsig = (jnp.dot(jax.nn.silu(time_emb.astype(jnp.float32)), params["wt"],
                    precision=lax.Precision.HIGHEST)
            + params["bt"] + params["c1b"]).reshape(B, 1, Cout)
    out_bias = params["c2b"] + params["bsc"] if has_shortcut else params["c2b"]

    # bf16 matmul weights (half the DMA / VMEM); f32 accumulation in-kernel.
    w1 = params["w1"].astype(jnp.bfloat16)
    w2 = params["w2"].astype(jnp.bfloat16)

    args = [x_flat, tsig,
            params["g1"], params["b1"], params["gsum1"], params["gbck1"], w1,
            params["g2"], params["b2"], params["gsum2"], params["gbck2"], w2,
            out_bias]
    if has_shortcut:
        args.append(params["wsc"].astype(jnp.bfloat16))

    kernel = _make_kernel(H, W, Cin, Cout, has_shortcut)
    PROWS = _padded_rows(H, W)

    # ---- device-aware scoped-VMEM limit, lane/sublane-padding-aware estimate ----
    def padded(rows, cols, itemsize):
        sub = 8 if itemsize == 4 else 16
        return (-(-rows // sub) * sub) * (-(-cols // 128) * 128) * itemsize

    cmax = max(Cin, Cout)
    est = (2 * padded(HW, Cin, 4) + 2 * padded(HW, Cout, 4)            # x / out blocks (2x buffered)
           + 2 * padded(1, Cout, 4)                                    # time-signal blocks
           + 6 * padded(HW, cmax, 4)                                   # f32 intermediates
           + 4 * padded(HW, cmax, 2)                                   # bf16 taps
           + padded(PROWS, Cin, 2)
           + (padded(PROWS, Cout, 2) if has_shortcut else 0)           # conv scratches
           + 2 * (9 * padded(Cin, Cout, 2) + 9 * padded(Cout, Cout, 2)
                  + padded(Cin, Cout, 2))                              # bf16 weights (2x buffered)
           + 2 * (2 * padded(1, Cin, 4) + 3 * padded(1, Cout, 4)
                  + padded(Cin, G1, 4) + padded(G1, Cin, 4)
                  + padded(Cout, G2, 4) + padded(G2, Cout, 4)))        # GN params
    try:
        cap = int(pltpu.get_tpu_info().vmem_capacity_bytes)
    except Exception:
        cap = 64 * 2 ** 20            # conservative: v7x per-TensorCore VMEM
    vmem_limit = int(min(max(2 * est, 32 * 2 ** 20), cap - 16 * 2 ** 20))

    # ---- specs ----
    def data_spec(shape):
        return pl.BlockSpec(shape, lambda b: (b, 0, 0))

    def param_spec(shape):
        nd = len(shape)
        return pl.BlockSpec(shape, lambda b, _nd=nd: (0,) * _nd)

    in_specs = [data_spec((1, HW, Cin)), data_spec((1, 1, Cout)),
                param_spec((1, Cin)), param_spec((1, Cin)),
                param_spec((Cin, G1)), param_spec((G1, Cin)),
                param_spec((9, Cin, Cout)),
                param_spec((1, Cout)), param_spec((1, Cout)),
                param_spec((Cout, G2)), param_spec((G2, Cout)),
                param_spec((9, Cout, Cout)),
                param_spec((1, Cout))]
    if has_shortcut:
        in_specs.append(param_spec((Cin, Cout)))

    scratch_shapes = [pltpu.VMEM((PROWS, Cin), jnp.bfloat16)]
    if has_shortcut:                       # Cin != Cout -> separate padded scratch
        scratch_shapes.append(pltpu.VMEM((PROWS, Cout), jnp.bfloat16))

    out_flat = pl.pallas_call(
        kernel,
        out_shape=jax.ShapeDtypeStruct((B, HW, Cout), jnp.float32),
        grid_spec=pltpu.PrefetchScalarGridSpec(
            num_scalar_prefetch=0,
            grid=(B,),
            in_specs=in_specs,
            out_specs=pl.BlockSpec((1, HW, Cout), lambda b: (b, 0, 0)),
            scratch_shapes=scratch_shapes),
        compiler_params=pltpu.CompilerParams(
            dimension_semantics=("parallel",),       # batch steps are independent
            vmem_limit_bytes=vmem_limit),
    )(*args)

    out = out_flat.reshape(B, H, W, Cout)
    return jnp.transpose(out, (0, 3, 1, 2))          # back to NCHW (no host sync here)


def init_params(key, Cin, Cout, TD):
    G1 = min(32, Cin)
    G2 = min(32, Cout)

    def gmats(C, G):
        gs = C // G
        grp = jnp.arange(C) // gs
        gsum = (grp[:, None] == jnp.arange(G)[None, :]).astype(jnp.float32)
        return gsum, gsum.T

    gsum1, gbck1 = gmats(Cin, G1)
    gsum2, gbck2 = gmats(Cout, G2)
    ks = jax.random.split(key, 12)
    p = dict(
        g1=1.0 + 0.1 * jax.random.normal(ks[0], (1, Cin), jnp.float32),
        b1=0.1 * jax.random.normal(ks[1], (1, Cin), jnp.float32),
        gsum1=gsum1, gbck1=gbck1,
        w1=0.1 * jax.random.normal(ks[2], (9, Cin, Cout), jnp.float32),
        c1b=0.1 * jax.random.normal(ks[3], (1, Cout), jnp.float32),
        wt=0.1 * jax.random.normal(ks[4], (TD, Cout), jnp.float32),
        bt=0.1 * jax.random.normal(ks[5], (1, Cout), jnp.float32),
        g2=1.0 + 0.1 * jax.random.normal(ks[6], (1, Cout), jnp.float32),
        b2=0.1 * jax.random.normal(ks[7], (1, Cout), jnp.float32),
        gsum2=gsum2, gbck2=gbck2,
        w2=0.1 * jax.random.normal(ks[8], (9, Cout, Cout), jnp.float32),
        c2b=0.1 * jax.random.normal(ks[9], (1, Cout), jnp.float32),
    )
    if Cin != Cout:   # nn.Identity shortcut (Cin == Cout) carries no params
        p["wsc"] = 0.1 * jax.random.normal(ks[10], (Cin, Cout), jnp.float32)
        p["bsc"] = 0.1 * jax.random.normal(ks[11], (1, Cout), jnp.float32)
    return p


def ref_forward(x, temb, p, Cin, Cout):
    """Pure-JAX f32 NCHW reference matching the PyTorch module."""
    B = x.shape[0]
    G1 = min(32, Cin)
    G2 = min(32, Cout)
    prec = lax.Precision.HIGHEST

    def gn(h, G, gamma, beta):
        b, c, hh, ww = h.shape
        hg = h.reshape(b, G, c // G, hh, ww)
        mean = hg.mean(axis=(2, 3, 4), keepdims=True)
        var = ((hg - mean) ** 2).mean(axis=(2, 3, 4), keepdims=True)
        hn = ((hg - mean) / jnp.sqrt(var + EPS)).reshape(b, c, hh, ww)
        return hn * gamma.reshape(1, c, 1, 1) + beta.reshape(1, c, 1, 1)

    def conv(h, w_taps, bias):
        ci, co = w_taps.shape[1], w_taps.shape[2]
        w = w_taps.reshape(3, 3, ci, co).transpose(3, 2, 0, 1)  # OIHW
        y = lax.conv_general_dilated(h, w, (1, 1), ((1, 1), (1, 1)),
                                     dimension_numbers=("NCHW", "OIHW", "NCHW"),
                                     precision=prec)
        return y + bias.reshape(1, co, 1, 1)

    h = gn(x, G1, p["g1"], p["b1"])
    h = jax.nn.silu(h)
    h = conv(h, p["w1"], p["c1b"])
    t = jnp.dot(jax.nn.silu(temb), p["wt"], precision=prec) + p["bt"]
    h = h + t.reshape(B, Cout, 1, 1)
    h = gn(h, G2, p["g2"], p["b2"])
    h = jax.nn.silu(h)
    h = conv(h, p["w2"], p["c2b"])
    if "wsc" in p:
        sc = jnp.einsum("bchw,co->bohw", x, p["wsc"], precision=prec) \
            + p["bsc"].reshape(1, Cout, 1, 1)
    else:
        sc = x
    return h + sc


if __name__ == "__main__":
    B, Cin, Cout, H, W, TD = 2, 4, 8, 16, 16, 32
    key = jax.random.PRNGKey(0)
    kx, kt, kp = jax.random.split(key, 3)
    x = jax.random.normal(kx, (B, Cin, H, W), jnp.float32)
    temb = jax.random.normal(kt, (B, TD), jnp.float32)
    params = init_params(kp, Cin, Cout, TD)

    out = jax.block_until_ready(residual_block_forward(x, temb, params))

    ref = ref_forward(x, temb, params, Cin, Cout)
    err = float(jnp.max(jnp.abs(out - ref)))
    # bf16 matmul operands with f32 accumulation -> slightly looser tolerance than pure f32
    if not np.allclose(np.asarray(out), np.asarray(ref), rtol=3e-2, atol=3e-2):
        raise AssertionError(f"Pallas vs reference mismatch, max abs err = {err}")
    # TODO(synk): dropout > 0 (training mode) not implemented; module default p=0 -> Identity.
    print("KERNEL_OK")
</pallas_src>

<mosaic_0001>
module attributes {stable_mosaic.version = 11 : i64} {
  func.func @kernel(%arg0: i32, %arg1: memref<1x256x4xf32, #tpu.memory_space<vmem>>, %arg2: memref<1x1x8xf32, #tpu.memory_space<vmem>>, %arg3: memref<1x4xf32, #tpu.memory_space<vmem>>, %arg4: memref<1x4xf32, #tpu.memory_space<vmem>>, %arg5: memref<4x4xf32, #tpu.memory_space<vmem>>, %arg6: memref<4x4xf32, #tpu.memory_space<vmem>>, %arg7: memref<9x4x8xbf16, #tpu.memory_space<vmem>>, %arg8: memref<1x8xf32, #tpu.memory_space<vmem>>, %arg9: memref<1x8xf32, #tpu.memory_space<vmem>>, %arg10: memref<8x8xf32, #tpu.memory_space<vmem>>, %arg11: memref<8x8xf32, #tpu.memory_space<vmem>>, %arg12: memref<9x8x8xbf16, #tpu.memory_space<vmem>>, %arg13: memref<1x8xf32, #tpu.memory_space<vmem>>, %arg14: memref<4x8xbf16, #tpu.memory_space<vmem>>, %arg15: memref<1x256x8xf32, #tpu.memory_space<vmem>>, %arg16: memref<304x4xbf16, #tpu.memory_space<vmem>>, %arg17: memref<304x8xbf16, #tpu.memory_space<vmem>>) attributes {dimension_semantics = [#tpu.dimension_semantics<parallel>], iteration_bounds = array<i64: 2>, scalar_prefetch = 0 : i64, scratch_operands = 2 : i64, tpu.core_type = #tpu.core_type<tc>, window_params = [{transform_indices = @transform_0, window_bounds = array<i64: 1, 256, 4>}, {transform_indices = @transform_1, window_bounds = array<i64: 1, 1, 8>}, {pipeline_mode = #tpu.pipeline_mode<synchronous>, transform_indices = @transform_2, window_bounds = array<i64: 1, 4>}, {pipeline_mode = #tpu.pipeline_mode<synchronous>, transform_indices = @transform_3, window_bounds = array<i64: 1, 4>}, {pipeline_mode = #tpu.pipeline_mode<synchronous>, transform_indices = @transform_4, window_bounds = array<i64: 4, 4>}, {pipeline_mode = #tpu.pipeline_mode<synchronous>, transform_indices = @transform_5, window_bounds = array<i64: 4, 4>}, {pipeline_mode = #tpu.pipeline_mode<synchronous>, transform_indices = @transform_6, window_bounds = array<i64: 9, 4, 8>}, {pipeline_mode = #tpu.pipeline_mode<synchronous>, transform_indices = @transform_7, window_bounds = array<i64: 1, 8>}, {pipeline_mode = #tpu.pipeline_mode<synchronous>, transform_indices = @transform_8, window_bounds = array<i64: 1, 8>}, {pipeline_mode = #tpu.pipeline_mode<synchronous>, transform_indices = @transform_9, window_bounds = array<i64: 8, 8>}, {pipeline_mode = #tpu.pipeline_mode<synchronous>, transform_indices = @transform_10, window_bounds = array<i64: 8, 8>}, {pipeline_mode = #tpu.pipeline_mode<synchronous>, transform_indices = @transform_11, window_bounds = array<i64: 9, 8, 8>}, {pipeline_mode = #tpu.pipeline_mode<synchronous>, transform_indices = @transform_12, window_bounds = array<i64: 1, 8>}, {pipeline_mode = #tpu.pipeline_mode<synchronous>, transform_indices = @transform_13, window_bounds = array<i64: 4, 8>}, {transform_indices = @transform_14, window_bounds = array<i64: 1, 256, 8>}]} {
    %c0 = arith.constant 0 : index
    %c0_0 = arith.constant 0 : index
    %c0_1 = arith.constant 0 : index
    %0 = vector.load %arg1[%c0, %c0_0, %c0_1] : memref<1x256x4xf32, #tpu.memory_space<vmem>>, vector<1x256x4xf32>
    %1 = vector.shape_cast %0 : vector<1x256x4xf32> to vector<256x4xf32>
    %2 = tpu.iota {dimensions = array<i32: 0>} : vector<256x1xi32>
    %c16_i32 = arith.constant 16 : i32
    %c0_i32 = arith.constant 0 : i32
    %3 = arith.cmpi eq, %c16_i32, %c0_i32 : i32
    %c1_i32 = arith.constant 1 : i32
    %4 = arith.select %3, %c1_i32, %c16_i32 : i32
    %5 = vector.broadcast %4 : i32 to vector<256x1xi32>
    %6 = arith.remsi %2, %5 : vector<256x1xi32>
    %c0_i32_2 = arith.constant 0 : i32
    %7 = vector.broadcast %c0_i32_2 : i32 to vector<256x1xi32>
    %8 = arith.cmpi ne, %6, %7 : vector<256x1xi32>
    %c0_i32_3 = arith.constant 0 : i32
    %9 = vector.broadcast %c0_i32_3 : i32 to vector<256x1xi32>
    %10 = arith.cmpi slt, %6, %9 : vector<256x1xi32>
    %c0_i32_4 = arith.constant 0 : i32
    %11 = arith.cmpi slt, %4, %c0_i32_4 : i32
    %12 = vector.broadcast %11 : i1 to vector<256x1xi1>
    %13 = vector.broadcast %12 : vector<256x1xi1> to vector<256x1xi1>
    %14 = arith.xori %10, %13 : vector<256x1xi1>
    %15 = arith.andi %14, %8 : vector<256x1xi1>
    %16 = vector.broadcast %4 : i32 to vector<256x1xi32>
    %17 = arith.addi %6, %16 : vector<256x1xi32>
    %18 = arith.select %15, %17, %6 : vector<256x1xi1>, vector<256x1xi32>
    %c0_i32_5 = arith.constant 0 : i32
    %19 = vector.broadcast %c0_i32_5 : i32 to vector<256x1xi32>
    %20 = arith.cmpi sgt, %18, %19 : vector<256x1xi32>
    %c15_i32 = arith.constant 15 : i32
    %21 = vector.broadcast %c15_i32 : i32 to vector<256x1xi32>
    %22 = arith.cmpi slt, %18, %21 : vector<256x1xi32>
    %c0_6 = arith.constant 0 : index
    %c0_7 = arith.constant 0 : index
    %23 = vector.load %arg5[%c0_6, %c0_7] : memref<4x4xf32, #tpu.memory_space<vmem>>, vector<4x4xf32>
    %c0_8 = arith.constant 0 : index
    %c0_9 = arith.constant 0 : index
    %24 = vector.load %arg6[%c0_8, %c0_9] : memref<4x4xf32, #tpu.memory_space<vmem>>, vector<4x4xf32>
    %c0_10 = arith.constant 0 : index
    %c0_11 = arith.constant 0 : index
    %25 = vector.load %arg3[%c0_10, %c0_11] : memref<1x4xf32, #tpu.memory_space<vmem>>, vector<1x4xf32>
    %c0_12 = arith.constant 0 : index
    %c0_13 = arith.constant 0 : index
    %26 = vector.load %arg4[%c0_12, %c0_13] : memref<1x4xf32, #tpu.memory_space<vmem>>, vector<1x4xf32>
    %cst = arith.constant dense<0.000000e+00> : vector<4xf32>
    %27 = vector.multi_reduction <add>, %1, %cst [0] : vector<256x4xf32> to vector<4xf32>
    %28 = vector.shape_cast %27 : vector<4xf32> to vector<1x4xf32>
    %cst_14 = arith.constant dense<0.000000e+00> : vector<1x4xf32>
    %29 = tpu.matmul %28, %23, %cst_14 {dimension_numbers = #tpu.dot_dimension_numbers<[1], [0], [0], [1], [0, 0, 1, 1], [], []>} : vector<1x4xf32>, vector<4x4xf32>, vector<1x4xf32> -> vector<1x4xf32>
    %cst_15 = arith.constant 3.906250e-03 : f32
    %30 = vector.broadcast %cst_15 : f32 to vector<1x4xf32>
    %31 = arith.mulf %29, %30 : vector<1x4xf32>
    %cst_16 = arith.constant dense<0.000000e+00> : vector<1x4xf32>
    %32 = tpu.matmul %31, %24, %cst_16 {dimension_numbers = #tpu.dot_dimension_numbers<[1], [0], [0], [1], [0, 0, 1, 1], [], []>} : vector<1x4xf32>, vector<4x4xf32>, vector<1x4xf32> -> vector<1x4xf32>
    %33 = vector.broadcast %32 : vector<1x4xf32> to vector<256x4xf32>
    %34 = arith.subf %1, %33 : vector<256x4xf32>
    %35 = arith.mulf %34, %34 : vector<256x4xf32>
    %cst_17 = arith.constant dense<0.000000e+00> : vector<4xf32>
    %36 = vector.multi_reduction <add>, %35, %cst_17 [0] : vector<256x4xf32> to vector<4xf32>
    %37 = vector.shape_cast %36 : vector<4xf32> to vector<1x4xf32>
    %cst_18 = arith.constant dense<0.000000e+00> : vector<1x4xf32>
    %38 = tpu.matmul %37, %23, %cst_18 {dimension_numbers = #tpu.dot_dimension_numbers<[1], [0], [0], [1], [0, 0, 1, 1], [], []>} : vector<1x4xf32>, vector<4x4xf32>, vector<1x4xf32> -> vector<1x4xf32>
    %cst_19 = arith.constant 3.906250e-03 : f32
    %39 = vector.broadcast %cst_19 : f32 to vector<1x4xf32>
    %40 = arith.mulf %38, %39 : vector<1x4xf32>
    %cst_20 = arith.constant dense<0.000000e+00> : vector<1x4xf32>
    %41 = tpu.matmul %40, %24, %cst_20 {dimension_numbers = #tpu.dot_dimension_numbers<[1], [0], [0], [1], [0, 0, 1, 1], [], []>} : vector<1x4xf32>, vector<4x4xf32>, vector<1x4xf32> -> vector<1x4xf32>
    %cst_21 = arith.constant 9.99999974E-6 : f32
    %42 = vector.broadcast %cst_21 : f32 to vector<1x4xf32>
    %43 = arith.addf %41, %42 : vector<1x4xf32>
    %44 = math.rsqrt %43 : vector<1x4xf32>
    %45 = arith.mulf %44, %25 : vector<1x4xf32>
    %46 = vector.broadcast %45 : vector<1x4xf32> to vector<256x4xf32>
    %47 = arith.mulf %34, %46 : vector<256x4xf32>
    %48 = vector.broadcast %26 : vector<1x4xf32> to vector<256x4xf32>
    %49 = arith.addf %47, %48 : vector<256x4xf32>
    %50 = arith.negf %49 : vector<256x4xf32>
    %51 = math.exp %50 : vector<256x4xf32>
    %cst_22 = arith.constant 1.000000e+00 : f32
    %52 = vector.broadcast %cst_22 : f32 to vector<256x4xf32>
    %53 = arith.addf %52, %51 : vector<256x4xf32>
    %54 = arith.divf %52, %53 : vector<256x4xf32>
    %55 = arith.mulf %49, %54 : vector<256x4xf32>
    %56 = arith.truncf %55 : vector<256x4xf32> to vector<256x4xbf16>
    %cst_23 = arith.constant 0.000000e+00 : bf16
    %57 = vector.broadcast %cst_23 : bf16 to vector<16x4xbf16>
    %c8 = arith.constant 8 : index
    %c0_24 = arith.constant 0 : index
    %58 = vector.load %arg16[%c8, %c0_24] : memref<304x4xbf16, #tpu.memory_space<vmem>>, vector<16x4xbf16>
    tpu.vector_store %arg16[%c8, %c0_24], %57 {strides = array<i32>} : memref<304x4xbf16, #tpu.memory_space<vmem>>, vector<16x4xbf16>,
    %c24 = arith.constant 24 : index
    %c0_25 = arith.constant 0 : index
    %59 = vector.load %arg16[%c24, %c0_25] : memref<304x4xbf16, #tpu.memory_space<vmem>>, vector<256x4xbf16>
    tpu.vector_store %arg16[%c24, %c0_25], %56 {strides = array<i32>} : memref<304x4xbf16, #tpu.memory_space<vmem>>, vector<256x4xbf16>,
    %c280 = arith.constant 280 : index
    %c0_26 = arith.constant 0 : index
    %60 = vector.load %arg16[%c280, %c0_26] : memref<304x4xbf16, #tpu.memory_space<vmem>>, vector<16x4xbf16>
    tpu.vector_store %arg16[%c280, %c0_26], %57 {strides = array<i32>} : memref<304x4xbf16, #tpu.memory_space<vmem>>, vector<16x4xbf16>,
    %c4 = arith.constant 4 : index
    %c0_27 = arith.constant 0 : index
    %c0_28 = arith.constant 0 : index
    %61 = vector.load %arg7[%c4, %c0_27, %c0_28] : memref<9x4x8xbf16, #tpu.memory_space<vmem>>, vector<1x4x8xbf16>
    %62 = vector.shape_cast %61 : vector<1x4x8xbf16> to vector<4x8xbf16>
    %cst_29 = arith.constant dense<0.000000e+00> : vector<256x8xf32>
    %63 = tpu.matmul %56, %62, %cst_29 {dimension_numbers = #tpu.dot_dimension_numbers<[1], [0], [0], [1], [0, 0, 1, 1], [], []>} : vector<256x4xbf16>, vector<4x8xbf16>, vector<256x8xf32> -> vector<256x8xf32>
    %c7 = arith.constant 7 : index
    %c0_30 = arith.constant 0 : index
    %64 = vector.load %arg16[%c7, %c0_30] : memref<304x4xbf16, #tpu.memory_space<vmem>>, vector<256x4xbf16>
    %cst_31 = arith.constant 0.000000e+00 : bf16
    %65 = vector.shape_cast %20 : vector<256x1xi1> to vector<256x1xi1>
    %66 = vector.broadcast %65 : vector<256x1xi1> to vector<256x4xi1>
    %67 = vector.broadcast %cst_31 : bf16 to vector<256x4xbf16>
    %68 = arith.select %66, %64, %67 : vector<256x4xi1>, vector<256x4xbf16>
    %c0_32 = arith.constant 0 : index
    %c0_33 = arith.constant 0 : index
    %c0_34 = arith.constant 0 : index
    %69 = vector.load %arg7[%c0_32, %c0_33, %c0_34] : memref<9x4x8xbf16, #tpu.memory_space<vmem>>, vector<1x4x8xbf16>
    %70 = vector.shape_cast %69 : vector<1x4x8xbf16> to vector<4x8xbf16>
    %cst_35 = arith.constant dense<0.000000e+00> : vector<256x8xf32>
    %71 = tpu.matmul %68, %70, %cst_35 {dimension_numbers = #tpu.dot_dimension_numbers<[1], [0], [0], [1], [0, 0, 1, 1], [], []>} : vector<256x4xbf16>, vector<4x8xbf16>, vector<256x8xf32> -> vector<256x8xf32>
    %72 = arith.addf %63, %71 : vector<256x8xf32>
    %c8_36 = arith.constant 8 : index
    %c0_37 = arith.constant 0 : index
    %73 = vector.load %arg16[%c8_36, %c0_37] : memref<304x4xbf16, #tpu.memory_space<vmem>>, vector<256x4xbf16>
    %c1 = arith.constant 1 : index
    %c0_38 = arith.constant 0 : index
    %c0_39 = arith.constant 0 : index
    %74 = vector.load %arg7[%c1, %c0_38, %c0_39] : memref<9x4x8xbf16, #tpu.memory_space<vmem>>, vector<1x4x8xbf16>
    %75 = vector.shape_cast %74 : vector<1x4x8xbf16> to vector<4x8xbf16>
    %cst_40 = arith.constant dense<0.000000e+00> : vector<256x8xf32>
    %76 = tpu.matmul %73, %75, %cst_40 {dimension_numbers = #tpu.dot_dimension_numbers<[1], [0], [0], [1], [0, 0, 1, 1], [], []>} : vector<256x4xbf16>, vector<4x8xbf16>, vector<256x8xf32> -> vector<256x8xf32>
    %77 = arith.addf %72, %76 : vector<256x8xf32>
    %c9 = arith.constant 9 : index
    %c0_41 = arith.constant 0 : index
    %78 = vector.load %arg16[%c9, %c0_41] : memref<304x4xbf16, #tpu.memory_space<vmem>>, vector<256x4xbf16>
    %cst_42 = arith.constant 0.000000e+00 : bf16
    %79 = vector.shape_cast %22 : vector<256x1xi1> to vector<256x1xi1>
    %80 = vector.broadcast %79 : vector<256x1xi1> to vector<256x4xi1>
    %81 = vector.broadcast %cst_42 : bf16 to vector<256x4xbf16>
    %82 = arith.select %80, %78, %81 : vector<256x4xi1>, vector<256x4xbf16>
    %c2 = arith.constant 2 : index
    %c0_43 = arith.constant 0 : index
    %c0_44 = arith.constant 0 : index
    %83 = vector.load %arg7[%c2, %c0_43, %c0_44] : memref<9x4x8xbf16, #tpu.memory_space<vmem>>, vector<1x4x8xbf16>
    %84 = vector.shape_cast %83 : vector<1x4x8xbf16> to vector<4x8xbf16>
    %cst_45 = arith.constant dense<0.000000e+00> : vector<256x8xf32>
    %85 = tpu.matmul %82, %84, %cst_45 {dimension_numbers = #tpu.dot_dimension_numbers<[1], [0], [0], [1], [0, 0, 1, 1], [], []>} : vector<256x4xbf16>, vector<4x8xbf16>, vector<256x8xf32> -> vector<256x8xf32>
    %86 = arith.addf %77, %85 : vector<256x8xf32>
    %c23 = arith.constant 23 : index
    %c0_46 = arith.constant 0 : index
    %87 = vector.load %arg16[%c23, %c0_46] : memref<304x4xbf16, #tpu.memory_space<vmem>>, vector<256x4xbf16>
    %cst_47 = arith.constant 0.000000e+00 : bf16
    %88 = vector.shape_cast %20 : vector<256x1xi1> to vector<256x1xi1>
    %89 = vector.broadcast %88 : vector<256x1xi1> to vector<256x4xi1>
    %90 = vector.broadcast %cst_47 : bf16 to vector<256x4xbf16>
    %91 = arith.select %89, %87, %90 : vector<256x4xi1>, vector<256x4xbf16>
    %c3 = arith.constant 3 : index
    %c0_48 = arith.constant 0 : index
    %c0_49 = arith.constant 0 : index
    %92 = vector.load %arg7[%c3, %c0_48, %c0_49] : memref<9x4x8xbf16, #tpu.memory_space<vmem>>, vector<1x4x8xbf16>
    %93 = vector.shape_cast %92 : vector<1x4x8xbf16> to vector<4x8xbf16>
    %cst_50 = arith.constant dense<0.000000e+00> : vector<256x8xf32>
    %94 = tpu.matmul %91, %93, %cst_50 {dimension_numbers = #tpu.dot_dimension_numbers<[1], [0], [0], [1], [0, 0, 1, 1], [], []>} : vector<256x4xbf16>, vector<4x8xbf16>, vector<256x8xf32> -> vector<256x8xf32>
    %95 = arith.addf %86, %94 : vector<256x8xf32>
    %c25 = arith.constant 25 : index
    %c0_51 = arith.constant 0 : index
    %96 = vector.load %arg16[%c25, %c0_51] : memref<304x4xbf16, #tpu.memory_space<vmem>>, vector<256x4xbf16>
    %cst_52 = arith.constant 0.000000e+00 : bf16
    %97 = vector.shape_cast %22 : vector<256x1xi1> to vector<256x1xi1>
    %98 = vector.broadcast %97 : vector<256x1xi1> to vector<256x4xi1>
    %99 = vector.broadcast %cst_52 : bf16 to vector<256x4xbf16>
    %100 = arith.select %98, %96, %99 : vector<256x4xi1>, vector<256x4xbf16>
    %c5 = arith.constant 5 : index
    %c0_53 = arith.constant 0 : index
    %c0_54 = arith.constant 0 : index
    %101 = vector.load %arg7[%c5, %c0_53, %c0_54] : memref<9x4x8xbf16, #tpu.memory_space<vmem>>, vector<1x4x8xbf16>
    %102 = vector.shape_cast %101 : vector<1x4x8xbf16> to vector<4x8xbf16>
    %cst_55 = arith.constant dense<0.000000e+00> : vector<256x8xf32>
    %103 = tpu.matmul %100, %102, %cst_55 {dimension_numbers = #tpu.dot_dimension_numbers<[1], [0], [0], [1], [0, 0, 1, 1], [], []>} : vector<256x4xbf16>, vector<4x8xbf16>, vector<256x8xf32> -> vector<256x8xf32>
    %104 = arith.addf %95, %103 : vector<256x8xf32>
    %c39 = arith.constant 39 : index
    %c0_56 = arith.constant 0 : index
    %105 = vector.load %arg16[%c39, %c0_56] : memref<304x4xbf16, #tpu.memory_space<vmem>>, vector<256x4xbf16>
    %cst_57 = arith.constant 0.000000e+00 : bf16
    %106 = vector.shape_cast %20 : vector<256x1xi1> to vector<256x1xi1>
    %107 = vector.broadcast %106 : vector<256x1xi1> to vector<256x4xi1>
    %108 = vector.broadcast %cst_57 : bf16 to vector<256x4xbf16>
    %109 = arith.select %107, %105, %108 : vector<256x4xi1>, vector<256x4xbf16>
    %c6 = arith.constant 6 : index
    %c0_58 = arith.constant 0 : index
    %c0_59 = arith.constant 0 : index
    %110 = vector.load %arg7[%c6, %c0_58, %c0_59] : memref<9x4x8xbf16, #tpu.memory_space<vmem>>, vector<1x4x8xbf16>
    %111 = vector.shape_cast %110 : vector<1x4x8xbf16> to vector<4x8xbf16>
    %cst_60 = arith.constant dense<0.000000e+00> : vector<256x8xf32>
    %112 = tpu.matmul %109, %111, %cst_60 {dimension_numbers = #tpu.dot_dimension_numbers<[1], [0], [0], [1], [0, 0, 1, 1], [], []>} : vector<256x4xbf16>, vector<4x8xbf16>, vector<256x8xf32> -> vector<256x8xf32>
    %113 = arith.addf %104, %112 : vector<256x8xf32>
    %c40 = arith.constant 40 : index
    %c0_61 = arith.constant 0 : index
    %114 = vector.load %arg16[%c40, %c0_61] : memref<304x4xbf16, #tpu.memory_space<vmem>>, vector<256x4xbf16>
    %c7_62 = arith.constant 7 : index
    %c0_63 = arith.constant 0 : index
    %c0_64 = arith.constant 0 : index
    %115 = vector.load %arg7[%c7_62, %c0_63, %c0_64] : memref<9x4x8xbf16, #tpu.memory_space<vmem>>, vector<1x4x8xbf16>
    %116 = vector.shape_cast %115 : vector<1x4x8xbf16> to vector<4x8xbf16>
    %cst_65 = arith.constant dense<0.000000e+00> : vector<256x8xf32>
    %117 = tpu.matmul %114, %116, %cst_65 {dimension_numbers = #tpu.dot_dimension_numbers<[1], [0], [0], [1], [0, 0, 1, 1], [], []>} : vector<256x4xbf16>, vector<4x8xbf16>, vector<256x8xf32> -> vector<256x8xf32>
    %118 = arith.addf %113, %117 : vector<256x8xf32>
    %c41 = arith.constant 41 : index
    %c0_66 = arith.constant 0 : index
    %119 = vector.load %arg16[%c41, %c0_66] : memref<304x4xbf16, #tpu.memory_space<vmem>>, vector<256x4xbf16>
    %cst_67 = arith.constant 0.000000e+00 : bf16
    %120 = vector.shape_cast %22 : vector<256x1xi1> to vector<256x1xi1>
    %121 = vector.broadcast %120 : vector<256x1xi1> to vector<256x4xi1>
    %122 = vector.broadcast %cst_67 : bf16 to vector<256x4xbf16>
    %123 = arith.select %121, %119, %122 : vector<256x4xi1>, vector<256x4xbf16>
    %c8_68 = arith.constant 8 : index
    %c0_69 = arith.constant 0 : index
    %c0_70 = arith.constant 0 : index
    %124 = vector.load %arg7[%c8_68, %c0_69, %c0_70] : memref<9x4x8xbf16, #tpu.memory_space<vmem>>, vector<1x4x8xbf16>
    %125 = vector.shape_cast %124 : vector<1x4x8xbf16> to vector<4x8xbf16>
    %cst_71 = arith.constant dense<0.000000e+00> : vector<256x8xf32>
    %126 = tpu.matmul %123, %125, %cst_71 {dimension_numbers = #tpu.dot_dimension_numbers<[1], [0], [0], [1], [0, 0, 1, 1], [], []>} : vector<256x4xbf16>, vector<4x8xbf16>, vector<256x8xf32> -> vector<256x8xf32>
    %127 = arith.addf %118, %126 : vector<256x8xf32>
    %c0_72 = arith.constant 0 : index
    %c0_73 = arith.constant 0 : index
    %c0_74 = arith.constant 0 : index
    %128 = vector.load %arg2[%c0_72, %c0_73, %c0_74] : memref<1x1x8xf32, #tpu.memory_space<vmem>>, vector<1x1x8xf32>
    %129 = vector.shape_cast %128 : vector<1x1x8xf32> to vector<1x8xf32>
    %130 = vector.broadcast %129 : vector<1x8xf32> to vector<256x8xf32>
    %131 = arith.addf %127, %130 : vector<256x8xf32>
    %c0_75 = arith.constant 0 : index
    %c0_76 = arith.constant 0 : index
    %132 = vector.load %arg10[%c0_75, %c0_76] : memref<8x8xf32, #tpu.memory_space<vmem>>, vector<8x8xf32>
    %c0_77 = arith.constant 0 : index
    %c0_78 = arith.constant 0 : index
    %133 = vector.load %arg11[%c0_77, %c0_78] : memref<8x8xf32, #tpu.memory_space<vmem>>, vector<8x8xf32>
    %c0_79 = arith.constant 0 : index
    %c0_80 = arith.constant 0 : index
    %134 = vector.load %arg8[%c0_79, %c0_80] : memref<1x8xf32, #tpu.memory_space<vmem>>, vector<1x8xf32>
    %c0_81 = arith.constant 0 : index
    %c0_82 = arith.constant 0 : index
    %135 = vector.load %arg9[%c0_81, %c0_82] : memref<1x8xf32, #tpu.memory_space<vmem>>, vector<1x8xf32>
    %cst_83 = arith.constant dense<0.000000e+00> : vector<8xf32>
    %136 = vector.multi_reduction <add>, %131, %cst_83 [0] : vector<256x8xf32> to vector<8xf32>
    %137 = vector.shape_cast %136 : vector<8xf32> to vector<1x8xf32>
    %cst_84 = arith.constant dense<0.000000e+00> : vector<1x8xf32>
    %138 = tpu.matmul %137, %132, %cst_84 {dimension_numbers = #tpu.dot_dimension_numbers<[1], [0], [0], [1], [0, 0, 1, 1], [], []>} : vector<1x8xf32>, vector<8x8xf32>, vector<1x8xf32> -> vector<1x8xf32>
    %cst_85 = arith.constant 3.906250e-03 : f32
    %139 = vector.broadcast %cst_85 : f32 to vector<1x8xf32>
    %140 = arith.mulf %138, %139 : vector<1x8xf32>
    %cst_86 = arith.constant dense<0.000000e+00> : vector<1x8xf32>
    %141 = tpu.matmul %140, %133, %cst_86 {dimension_numbers = #tpu.dot_dimension_numbers<[1], [0], [0], [1], [0, 0, 1, 1], [], []>} : vector<1x8xf32>, vector<8x8xf32>, vector<1x8xf32> -> vector<1x8xf32>
    %142 = vector.broadcast %141 : vector<1x8xf32> to vector<256x8xf32>
    %143 = arith.subf %131, %142 : vector<256x8xf32>
    %144 = arith.mulf %143, %143 : vector<256x8xf32>
    %cst_87 = arith.constant dense<0.000000e+00> : vector<8xf32>
    %145 = vector.multi_reduction <add>, %144, %cst_87 [0] : vector<256x8xf32> to vector<8xf32>
    %146 = vector.shape_cast %145 : vector<8xf32> to vector<1x8xf32>
    %cst_88 = arith.constant dense<0.000000e+00> : vector<1x8xf32>
    %147 = tpu.matmul %146, %132, %cst_88 {dimension_numbers = #tpu.dot_dimension_numbers<[1], [0], [0], [1], [0, 0, 1, 1], [], []>} : vector<1x8xf32>, vector<8x8xf32>, vector<1x8xf32> -> vector<1x8xf32>
    %cst_89 = arith.constant 3.906250e-03 : f32
    %148 = vector.broadcast %cst_89 : f32 to vector<1x8xf32>
    %149 = arith.mulf %147, %148 : vector<1x8xf32>
    %cst_90 = arith.constant dense<0.000000e+00> : vector<1x8xf32>
    %150 = tpu.matmul %149, %133, %cst_90 {dimension_numbers = #tpu.dot_dimension_numbers<[1], [0], [0], [1], [0, 0, 1, 1], [], []>} : vector<1x8xf32>, vector<8x8xf32>, vector<1x8xf32> -> vector<1x8xf32>
    %cst_91 = arith.constant 9.99999974E-6 : f32
    %151 = vector.broadcast %cst_91 : f32 to vector<1x8xf32>
    %152 = arith.addf %150, %151 : vector<1x8xf32>
    %153 = math.rsqrt %152 : vector<1x8xf32>
    %154 = arith.mulf %153, %134 : vector<1x8xf32>
    %155 = vector.broadcast %154 : vector<1x8xf32> to vector<256x8xf32>
    %156 = arith.mulf %143, %155 : vector<256x8xf32>
    %157 = vector.broadcast %135 : vector<1x8xf32> to vector<256x8xf32>
    %158 = arith.addf %156, %157 : vector<256x8xf32>
    %159 = arith.negf %158 : vector<256x8xf32>
    %160 = math.exp %159 : vector<256x8xf32>
    %cst_92 = arith.constant 1.000000e+00 : f32
    %161 = vector.broadcast %cst_92 : f32 to vector<256x8xf32>
    %162 = arith.addf %161, %160 : vector<256x8xf32>
    %163 = arith.divf %161, %162 : vector<256x8xf32>
    %164 = arith.mulf %158, %163 : vector<256x8xf32>
    %165 = arith.truncf %164 : vector<256x8xf32> to vector<256x8xbf16>
    %cst_93 = arith.constant 0.000000e+00 : bf16
    %166 = vector.broadcast %cst_93 : bf16 to vector<16x8xbf16>
    %c8_94 = arith.constant 8 : index
    %c0_95 = arith.constant 0 : index
    %167 = vector.load %arg17[%c8_94, %c0_95] : memref<304x8xbf16, #tpu.memory_space<vmem>>, vector<16x8xbf16>
    tpu.vector_store %arg17[%c8_94, %c0_95], %166 {strides = array<i32>} : memref<304x8xbf16, #tpu.memory_space<vmem>>, vector<16x8xbf16>,
    %c24_96 = arith.constant 24 : index
    %c0_97 = arith.constant 0 : index
    %168 = vector.load %arg17[%c24_96, %c0_97] : memref<304x8xbf16, #tpu.memory_space<vmem>>, vector<256x8xbf16>
    tpu.vector_store %arg17[%c24_96, %c0_97], %165 {strides = array<i32>} : memref<304x8xbf16, #tpu.memory_space<vmem>>, vector<256x8xbf16>,
    %c280_98 = arith.constant 280 : index
    %c0_99 = arith.constant 0 : index
    %169 = vector.load %arg17[%c280_98, %c0_99] : memref<304x8xbf16, #tpu.memory_space<vmem>>, vector<16x8xbf16>
    tpu.vector_store %arg17[%c280_98, %c0_99], %166 {strides = array<i32>} : memref<304x8xbf16, #tpu.memory_space<vmem>>, vector<16x8xbf16>,
    %c4_100 = arith.constant 4 : index
    %c0_101 = arith.constant 0 : index
    %c0_102 = arith.constant 0 : index
    %170 = vector.load %arg12[%c4_100, %c0_101, %c0_102] : memref<9x8x8xbf16, #tpu.memory_space<vmem>>, vector<1x8x8xbf16>
    %171 = vector.shape_cast %170 : vector<1x8x8xbf16> to vector<8x8xbf16>
    %cst_103 = arith.constant dense<0.000000e+00> : vector<256x8xf32>
    %172 = tpu.matmul %165, %171, %cst_103 {dimension_numbers = #tpu.dot_dimension_numbers<[1], [0], [0], [1], [0, 0, 1, 1], [], []>} : vector<256x8xbf16>, vector<8x8xbf16>, vector<256x8xf32> -> vector<256x8xf32>
    %c7_104 = arith.constant 7 : index
    %c0_105 = arith.constant 0 : index
    %173 = vector.load %arg17[%c7_104, %c0_105] : memref<304x8xbf16, #tpu.memory_space<vmem>>, vector<256x8xbf16>
    %cst_106 = arith.constant 0.000000e+00 : bf16
    %174 = vector.shape_cast %20 : vector<256x1xi1> to vector<256x1xi1>
    %175 = vector.broadcast %174 : vector<256x1xi1> to vector<256x8xi1>
    %176 = vector.broadcast %cst_106 : bf16 to vector<256x8xbf16>
    %177 = arith.select %175, %173, %176 : vector<256x8xi1>, vector<256x8xbf16>
    %c0_107 = arith.constant 0 : index
    %c0_108 = arith.constant 0 : index
    %c0_109 = arith.constant 0 : index
    %178 = vector.load %arg12[%c0_107, %c0_108, %c0_109] : memref<9x8x8xbf16, #tpu.memory_space<vmem>>, vector<1x8x8xbf16>
    %179 = vector.shape_cast %178 : vector<1x8x8xbf16> to vector<8x8xbf16>
    %cst_110 = arith.constant dense<0.000000e+00> : vector<256x8xf32>
    %180 = tpu.matmul %177, %179, %cst_110 {dimension_numbers = #tpu.dot_dimension_numbers<[1], [0], [0], [1], [0, 0, 1, 1], [], []>} : vector<256x8xbf16>, vector<8x8xbf16>, vector<256x8xf32> -> vector<256x8xf32>
    %181 = arith.addf %172, %180 : vector<256x8xf32>
    %c8_111 = arith.constant 8 : index
    %c0_112 = arith.constant 0 : index
    %182 = vector.load %arg17[%c8_111, %c0_112] : memref<304x8xbf16, #tpu.memory_space<vmem>>, vector<256x8xbf16>
    %c1_113 = arith.constant 1 : index
    %c0_114 = arith.constant 0 : index
    %c0_115 = arith.constant 0 : index
    %183 = vector.load %arg12[%c1_113, %c0_114, %c0_115] : memref<9x8x8xbf16, #tpu.memory_space<vmem>>, vector<1x8x8xbf16>
    %184 = vector.shape_cast %183 : vector<1x8x8xbf16> to vector<8x8xbf16>
    %cst_116 = arith.constant dense<0.000000e+00> : vector<256x8xf32>
    %185 = tpu.matmul %182, %184, %cst_116 {dimension_numbers = #tpu.dot_dimension_numbers<[1], [0], [0], [1], [0, 0, 1, 1], [], []>} : vector<256x8xbf16>, vector<8x8xbf16>, vector<256x8xf32> -> vector<256x8xf32>
    %186 = arith.addf %181, %185 : vector<256x8xf32>
    %c9_117 = arith.constant 9 : index
    %c0_118 = arith.constant 0 : index
    %187 = vector.load %arg17[%c9_117, %c0_118] : memref<304x8xbf16, #tpu.memory_space<vmem>>, vector<256x8xbf16>
    %cst_119 = arith.constant 0.000000e+00 : bf16
    %188 = vector.shape_cast %22 : vector<256x1xi1> to vector<256x1xi1>
    %189 = vector.broadcast %188 : vector<256x1xi1> to vector<256x8xi1>
    %190 = vector.broadcast %cst_119 : bf16 to vector<256x8xbf16>
    %191 = arith.select %189, %187, %190 : vector<256x8xi1>, vector<256x8xbf16>
    %c2_120 = arith.constant 2 : index
    %c0_121 = arith.constant 0 : index
    %c0_122 = arith.constant 0 : index
    %192 = vector.load %arg12[%c2_120, %c0_121, %c0_122] : memref<9x8x8xbf16, #tpu.memory_space<vmem>>, vector<1x8x8xbf16>
    %193 = vector.shape_cast %192 : vector<1x8x8xbf16> to vector<8x8xbf16>
    %cst_123 = arith.constant dense<0.000000e+00> : vector<256x8xf32>
    %194 = tpu.matmul %191, %193, %cst_123 {dimension_numbers = #tpu.dot_dimension_numbers<[1], [0], [0], [1], [0, 0, 1, 1], [], []>} : vector<256x8xbf16>, vector<8x8xbf16>, vector<256x8xf32> -> vector<256x8xf32>
    %195 = arith.addf %186, %194 : vector<256x8xf32>
    %c23_124 = arith.constant 23 : index
    %c0_125 = arith.constant 0 : index
    %196 = vector.load %arg17[%c23_124, %c0_125] : memref<304x8xbf16, #tpu.memory_space<vmem>>, vector<256x8xbf16>
    %cst_126 = arith.constant 0.000000e+00 : bf16
    %197 = vector.shape_cast %20 : vector<256x1xi1> to vector<256x1xi1>
    %198 = vector.broadcast %197 : vector<256x1xi1> to vector<256x8xi1>
    %199 = vector.broadcast %cst_126 : bf16 to vector<256x8xbf16>
    %200 = arith.select %198, %196, %199 : vector<256x8xi1>, vector<256x8xbf16>
    %c3_127 = arith.constant 3 : index
    %c0_128 = arith.constant 0 : index
    %c0_129 = arith.constant 0 : index
    %201 = vector.load %arg12[%c3_127, %c0_128, %c0_129] : memref<9x8x8xbf16, #tpu.memory_space<vmem>>, vector<1x8x8xbf16>
    %202 = vector.shape_cast %201 : vector<1x8x8xbf16> to vector<8x8xbf16>
    %cst_130 = arith.constant dense<0.000000e+00> : vector<256x8xf32>
    %203 = tpu.matmul %200, %202, %cst_130 {dimension_numbers = #tpu.dot_dimension_numbers<[1], [0], [0], [1], [0, 0, 1, 1], [], []>} : vector<256x8xbf16>, vector<8x8xbf16>, vector<256x8xf32> -> vector<256x8xf32>
    %204 = arith.addf %195, %203 : vector<256x8xf32>
    %c25_131 = arith.constant 25 : index
    %c0_132 = arith.constant 0 : index
    %205 = vector.load %arg17[%c25_131, %c0_132] : memref<304x8xbf16, #tpu.memory_space<vmem>>, vector<256x8xbf16>
    %cst_133 = arith.constant 0.000000e+00 : bf16
    %206 = vector.shape_cast %22 : vector<256x1xi1> to vector<256x1xi1>
    %207 = vector.broadcast %206 : vector<256x1xi1> to vector<256x8xi1>
    %208 = vector.broadcast %cst_133 : bf16 to vector<256x8xbf16>
    %209 = arith.select %207, %205, %208 : vector<256x8xi1>, vector<256x8xbf16>
    %c5_134 = arith.constant 5 : index
    %c0_135 = arith.constant 0 : index
    %c0_136 = arith.constant 0 : index
    %210 = vector.load %arg12[%c5_134, %c0_135, %c0_136] : memref<9x8x8xbf16, #tpu.memory_space<vmem>>, vector<1x8x8xbf16>
    %211 = vector.shape_cast %210 : vector<1x8x8xbf16> to vector<8x8xbf16>
    %cst_137 = arith.constant dense<0.000000e+00> : vector<256x8xf32>
    %212 = tpu.matmul %209, %211, %cst_137 {dimension_numbers = #tpu.dot_dimension_numbers<[1], [0], [0], [1], [0, 0, 1, 1], [], []>} : vector<256x8xbf16>, vector<8x8xbf16>, vector<256x8xf32> -> vector<256x8xf32>
    %213 = arith.addf %204, %212 : vector<256x8xf32>
    %c39_138 = arith.constant 39 : index
    %c0_139 = arith.constant 0 : index
    %214 = vector.load %arg17[%c39_138, %c0_139] : memref<304x8xbf16, #tpu.memory_space<vmem>>, vector<256x8xbf16>
    %cst_140 = arith.constant 0.000000e+00 : bf16
    %215 = vector.shape_cast %20 : vector<256x1xi1> to vector<256x1xi1>
    %216 = vector.broadcast %215 : vector<256x1xi1> to vector<256x8xi1>
    %217 = vector.broadcast %cst_140 : bf16 to vector<256x8xbf16>
    %218 = arith.select %216, %214, %217 : vector<256x8xi1>, vector<256x8xbf16>
    %c6_141 = arith.constant 6 : index
    %c0_142 = arith.constant 0 : index
    %c0_143 = arith.constant 0 : index
    %219 = vector.load %arg12[%c6_141, %c0_142, %c0_143] : memref<9x8x8xbf16, #tpu.memory_space<vmem>>, vector<1x8x8xbf16>
    %220 = vector.shape_cast %219 : vector<1x8x8xbf16> to vector<8x8xbf16>
    %cst_144 = arith.constant dense<0.000000e+00> : vector<256x8xf32>
    %221 = tpu.matmul %218, %220, %cst_144 {dimension_numbers = #tpu.dot_dimension_numbers<[1], [0], [0], [1], [0, 0, 1, 1], [], []>} : vector<256x8xbf16>, vector<8x8xbf16>, vector<256x8xf32> -> vector<256x8xf32>
    %222 = arith.addf %213, %221 : vector<256x8xf32>
    %c40_145 = arith.constant 40 : index
    %c0_146 = arith.constant 0 : index
    %223 = vector.load %arg17[%c40_145, %c0_146] : memref<304x8xbf16, #tpu.memory_space<vmem>>, vector<256x8xbf16>
    %c7_147 = arith.constant 7 : index
    %c0_148 = arith.constant 0 : index
    %c0_149 = arith.constant 0 : index
    %224 = vector.load %arg12[%c7_147, %c0_148, %c0_149] : memref<9x8x8xbf16, #tpu.memory_space<vmem>>, vector<1x8x8xbf16>
    %225 = vector.shape_cast %224 : vector<1x8x8xbf16> to vector<8x8xbf16>
    %cst_150 = arith.constant dense<0.000000e+00> : vector<256x8xf32>
    %226 = tpu.matmul %223, %225, %cst_150 {dimension_numbers = #tpu.dot_dimension_numbers<[1], [0], [0], [1], [0, 0, 1, 1], [], []>} : vector<256x8xbf16>, vector<8x8xbf16>, vector<256x8xf32> -> vector<256x8xf32>
    %227 = arith.addf %222, %226 : vector<256x8xf32>
    %c41_151 = arith.constant 41 : index
    %c0_152 = arith.constant 0 : index
    %228 = vector.load %arg17[%c41_151, %c0_152] : memref<304x8xbf16, #tpu.memory_space<vmem>>, vector<256x8xbf16>
    %cst_153 = arith.constant 0.000000e+00 : bf16
    %229 = vector.shape_cast %22 : vector<256x1xi1> to vector<256x1xi1>
    %230 = vector.broadcast %229 : vector<256x1xi1> to vector<256x8xi1>
    %231 = vector.broadcast %cst_153 : bf16 to vector<256x8xbf16>
    %232 = arith.select %230, %228, %231 : vector<256x8xi1>, vector<256x8xbf16>
    %c8_154 = arith.constant 8 : index
    %c0_155 = arith.constant 0 : index
    %c0_156 = arith.constant 0 : index
    %233 = vector.load %arg12[%c8_154, %c0_155, %c0_156] : memref<9x8x8xbf16, #tpu.memory_space<vmem>>, vector<1x8x8xbf16>
    %234 = vector.shape_cast %233 : vector<1x8x8xbf16> to vector<8x8xbf16>
    %cst_157 = arith.constant dense<0.000000e+00> : vector<256x8xf32>
    %235 = tpu.matmul %232, %234, %cst_157 {dimension_numbers = #tpu.dot_dimension_numbers<[1], [0], [0], [1], [0, 0, 1, 1], [], []>} : vector<256x8xbf16>, vector<8x8xbf16>, vector<256x8xf32> -> vector<256x8xf32>
    %236 = arith.addf %227, %235 : vector<256x8xf32>
    %237 = arith.truncf %1 : vector<256x4xf32> to vector<256x4xbf16>
    %c0_158 = arith.constant 0 : index
    %c0_159 = arith.constant 0 : index
    %238 = vector.load %arg14[%c0_158, %c0_159] : memref<4x8xbf16, #tpu.memory_space<vmem>>, vector<4x8xbf16>
    %cst_160 = arith.constant dense<0.000000e+00> : vector<256x8xf32>
    %239 = tpu.matmul %237, %238, %cst_160 {dimension_numbers = #tpu.dot_dimension_numbers<[1], [0], [0], [1], [0, 0, 1, 1], [], []>} : vector<256x4xbf16>, vector<4x8xbf16>, vector<256x8xf32> -> vector<256x8xf32>
    %240 = arith.addf %236, %239 : vector<256x8xf32>
    %c0_161 = arith.constant 0 : index
    %c0_162 = arith.constant 0 : index
    %241 = vector.load %arg13[%c0_161, %c0_162] : memref<1x8xf32, #tpu.memory_space<vmem>>, vector<1x8xf32>
    %242 = vector.broadcast %241 : vector<1x8xf32> to vector<256x8xf32>
    %243 = arith.addf %240, %242 : vector<256x8xf32>
    %c0_163 = arith.constant 0 : index
    %c0_164 = arith.constant 0 : index
    %c0_165 = arith.constant 0 : index
    %244 = vector.load %arg15[%c0_163, %c0_164, %c0_165] : memref<1x256x8xf32, #tpu.memory_space<vmem>>, vector<1x256x8xf32>
    %245 = vector.shape_cast %244 : vector<1x256x8xf32> to vector<256x8xf32>
    %246 = vector.shape_cast %243 : vector<256x8xf32> to vector<1x256x8xf32>
    tpu.vector_store %arg15[%c0_163, %c0_164, %c0_165], %246 {strides = array<i32>} : memref<1x256x8xf32, #tpu.memory_space<vmem>>, vector<1x256x8xf32>,
    return
  }
  func.func @transform_0(%arg0: i32) -> (i32, i32, i32) {
    %c0_i32 = arith.constant 0 : i32
    %c0_i32_0 = arith.constant 0 : i32
    %c0_i32_1 = arith.constant 0 : i32
    return %arg0, %c0_i32, %c0_i32_0 : i32, i32, i32
  }
  func.func @transform_1(%arg0: i32) -> (i32, i32, i32) {
    %c0_i32 = arith.constant 0 : i32
    %c0_i32_0 = arith.constant 0 : i32
    %c0_i32_1 = arith.constant 0 : i32
    return %arg0, %c0_i32, %c0_i32_0 : i32, i32, i32
  }
  func.func @transform_2(%arg0: i32) -> (i32, i32) {
    %c0_i32 = arith.constant 0 : i32
    %c0_i32_0 = arith.constant 0 : i32
    %c0_i32_1 = arith.constant 0 : i32
    return %c0_i32, %c0_i32_0 : i32, i32
  }
  func.func @transform_3(%arg0: i32) -> (i32, i32) {
    %c0_i32 = arith.constant 0 : i32
    %c0_i32_0 = arith.constant 0 : i32
    %c0_i32_1 = arith.constant 0 : i32
    return %c0_i32, %c0_i32_0 : i32, i32
  }
  func.func @transform_4(%arg0: i32) -> (i32, i32) {
    %c0_i32 = arith.constant 0 : i32
    %c0_i32_0 = arith.constant 0 : i32
    %c0_i32_1 = arith.constant 0 : i32
    return %c0_i32, %c0_i32_0 : i32, i32
  }
  func.func @transform_5(%arg0: i32) -> (i32, i32) {
    %c0_i32 = arith.constant 0 : i32
    %c0_i32_0 = arith.constant 0 : i32
    %c0_i32_1 = arith.constant 0 : i32
    return %c0_i32, %c0_i32_0 : i32, i32
  }
  func.func @transform_6(%arg0: i32) -> (i32, i32, i32) {
    %c0_i32 = arith.constant 0 : i32
    %c0_i32_0 = arith.constant 0 : i32
    %c0_i32_1 = arith.constant 0 : i32
    %c0_i32_2 = arith.constant 0 : i32
    return %c0_i32, %c0_i32_0, %c0_i32_1 : i32, i32, i32
  }
  func.func @transform_7(%arg0: i32) -> (i32, i32) {
    %c0_i32 = arith.constant 0 : i32
    %c0_i32_0 = arith.constant 0 : i32
    %c0_i32_1 = arith.constant 0 : i32
    return %c0_i32, %c0_i32_0 : i32, i32
  }
  func.func @transform_8(%arg0: i32) -> (i32, i32) {
    %c0_i32 = arith.constant 0 : i32
    %c0_i32_0 = arith.constant 0 : i32
    %c0_i32_1 = arith.constant 0 : i32
    return %c0_i32, %c0_i32_0 : i32, i32
  }
  func.func @transform_9(%arg0: i32) -> (i32, i32) {
    %c0_i32 = arith.constant 0 : i32
    %c0_i32_0 = arith.constant 0 : i32
    %c0_i32_1 = arith.constant 0 : i32
    return %c0_i32, %c0_i32_0 : i32, i32
  }
  func.func @transform_10(%arg0: i32) -> (i32, i32) {
    %c0_i32 = arith.constant 0 : i32
    %c0_i32_0 = arith.constant 0 : i32
    %c0_i32_1 = arith.constant 0 : i32
    return %c0_i32, %c0_i32_0 : i32, i32
  }
  func.func @transform_11(%arg0: i32) -> (i32, i32, i32) {
    %c0_i32 = arith.constant 0 : i32
    %c0_i32_0 = arith.constant 0 : i32
    %c0_i32_1 = arith.constant 0 : i32
    %c0_i32_2 = arith.constant 0 : i32
    return %c0_i32, %c0_i32_0, %c0_i32_1 : i32, i32, i32
  }
  func.func @transform_12(%arg0: i32) -> (i32, i32) {
    %c0_i32 = arith.constant 0 : i32
    %c0_i32_0 = arith.constant 0 : i32
    %c0_i32_1 = arith.constant 0 : i32
    return %c0_i32, %c0_i32_0 : i32, i32
  }
  func.func @transform_13(%arg0: i32) -> (i32, i32) {
    %c0_i32 = arith.constant 0 : i32
    %c0_i32_0 = arith.constant 0 : i32
    %c0_i32_1 = arith.constant 0 : i32
    return %c0_i32, %c0_i32_0 : i32, i32
  }
  func.func @transform_14(%arg0: i32) -> (i32, i32, i32) {
    %c0_i32 = arith.constant 0 : i32
    %c0_i32_0 = arith.constant 0 : i32
    %c0_i32_1 = arith.constant 0 : i32
    return %arg0, %c0_i32, %c0_i32_0 : i32, i32, i32
  }
}

</mosaic_0001>

<llo_original>
// kernel: tpu_custom_call.1
$region0: #{tpu_custom_call.1}
  #allocation0 [shape = 'u32[]', space=smem, size = 0x4, offset = 0x4, fixed_abs, tag = 'smem constant byte address 0x4 - core index']
  #allocation1 [shape = 'u32[72,128]{1,0:T(1,128)}', space=vmem, size = 0x9000, scoped, tag = 'internal scratch']
  #allocation2 [shape = 'bf16[304,4]{1,0:T(8,128)(2,1)}', space=vmem, size = 0x13000, scoped, tag = 'scratch operand']
  #allocation3 [shape = 'bf16[304,8]{1,0:T(8,128)(2,1)}', space=vmem, size = 0x13000, scoped, tag = 'scratch operand']
  %s0 = inlined_call_operand.vmem [shape: f32[2,256,4], index: 0, kind: input, shape index: {}]
  %s1 = inlined_call_operand.vmem [shape: f32[2,1,8], index: 1, kind: input, shape index: {}]
  %s2 = inlined_call_operand.vmem [shape: f32[1,4], index: 2, kind: input, shape index: {}]
  %s3 = inlined_call_operand.vmem [shape: f32[1,4], index: 3, kind: input, shape index: {}]
  %s4 = inlined_call_operand.vmem [shape: f32[4,4], index: 4, kind: input, shape index: {}]
  %s5 = inlined_call_operand.vmem [shape: f32[4,4], index: 5, kind: input, shape index: {}]
  %s6 = inlined_call_operand.vmem [shape: bf16[9,4,8], index: 6, kind: input, shape index: {}]
  %s7 = inlined_call_operand.vmem [shape: f32[1,8], index: 7, kind: input, shape index: {}]
  %s8 = inlined_call_operand.vmem [shape: f32[1,8], index: 8, kind: input, shape index: {}]
  %s9 = inlined_call_operand.vmem [shape: f32[8,8], index: 9, kind: input, shape index: {}]
  %s10 = inlined_call_operand.vmem [shape: f32[8,8], index: 10, kind: input, shape index: {}]
  %s11 = inlined_call_operand.vmem [shape: bf16[9,8,8], index: 11, kind: input, shape index: {}]
  %s12 = inlined_call_operand.vmem [shape: f32[1,8], index: 12, kind: input, shape index: {}]
  %s13 = inlined_call_operand.vmem [shape: bf16[4,8], index: 13, kind: input, shape index: {}]
  %s14 = inlined_call_operand.vmem [shape: f32[2,256,8], index: 14, kind: output, shape index: {}]
  %s15 = sld [smem:[#allocation0]]
  $region89: #{tpu_custom_call.1} parent=0
    _
  %s17 = ssub.s32 1, %s15
  %s18 = scalar_select 0, %s17, %s15
  loop: start=0, step=1, limit=4
  $region2: #{tpu_custom_call.1} parent=0 // loop_pre_header
    _
  $region3: #{tpu_custom_call.1} parent=0 // loop_header
    %s20 = sphi 0, %s24
    %p21 = scmp.ge.s32.totalorder %s20, 4
    %s30 = sphi 0, %s32
    %s33 = sphi 0, %s30
    %s34 = sphi 0, %s33
    %s50 = sphi 0, %s34
    %s56 = sphi 0, %s58
    %s59 = sphi 0, %s56
    %s60 = sphi 0, %s59
    %s76 = sphi 0, %s60
    %s80 = sphi 0, %s80
    %s82 = sphi 0, %s80
    %s83 = sphi 0, %s82
    %s97 = sphi 0, %s83
    %s101 = sphi 0, %s101
    %s103 = sphi 0, %s101
    %s104 = sphi 0, %s103
    %s118 = sphi 0, %s104
    %s122 = sphi 0, %s122
    %s124 = sphi 0, %s122
    %s125 = sphi 0, %s124
    %s139 = sphi 0, %s125
    %s143 = sphi 0, %s143
    %s145 = sphi 0, %s143
    %s146 = sphi 0, %s145
    %s160 = sphi 0, %s146
    %s164 = sphi 0, %s164
    %s166 = sphi 0, %s164
    %s167 = sphi 0, %s166
    %s181 = sphi 0, %s167
    %s185 = sphi 0, %s185
    %s187 = sphi 0, %s185
    %s188 = sphi 0, %s187
    %s202 = sphi 0, %s188
    %s206 = sphi 0, %s206
    %s208 = sphi 0, %s206
    %s209 = sphi 0, %s208
    %s223 = sphi 0, %s209
    %s227 = sphi 0, %s227
    %s229 = sphi 0, %s227
    %s230 = sphi 0, %s229
    %s244 = sphi 0, %s230
    %s248 = sphi 0, %s248
    %s250 = sphi 0, %s248
    %s251 = sphi 0, %s250
    %s265 = sphi 0, %s251
    %s269 = sphi 0, %s269
    %s271 = sphi 0, %s269
    %s272 = sphi 0, %s271
    %s286 = sphi 0, %s272
    %s290 = sphi 0, %s290
    %s292 = sphi 0, %s290
    %s293 = sphi 0, %s292
    %s307 = sphi 0, %s293
    %s311 = sphi 0, %s311
    %s313 = sphi 0, %s311
    %s314 = sphi 0, %s313
    %s328 = sphi 0, %s314
    %s334 = sphi 0, %s336
    %s337 = sphi 0, %s334
    %s338 = sphi 0, %s337
    %s354 = sphi 0, %s338
  $region4: #{tpu_custom_call.1} parent=0 // loop_header_branch
    %23 = sbr.rel (%p21) target = $region8
  $region5: #{tpu_custom_call.1} parent=0 // loop_body
    %s25 = ssub.s32 %s20, 1
    %s26 = ssub.s32 %s20, 2
    %s27 = sadd.s32 %s20, 1
    %s28 = ssub.s32 %s20, %s27
    %p29 = scmp.eq.s32.totalorder %s28, 0
    %s31 = sadd.s32 %s30, 1
    %s32 = scalar_select %p29, %s30, %s31
    %p35 = pneg %p29
    %p36 = scmp.eq.s32.totalorder %s20, 1
    %p37 = por %p35, %p36
    %p38 = scmp.ne.s32.totalorder %s30, %s33
    %p39 = scmp.eq.s32.totalorder %s20, 0
    %p40 = por %p38, %p39
    %p41 = scmp.ne.s32.totalorder %s30, %s33
    %p42 = scmp.eq.s32.totalorder %s25, 1
    %p43 = por %p41, %p42
    %p44 = scmp.ne.s32.totalorder %s33, %s34
    %p45 = scmp.eq.s32.totalorder %s25, 0
    %p46 = por %p44, %p45
    %p47 = scmp.ne.s32.totalorder %s33, %s34
    %p48 = scmp.eq.s32.totalorder %s26, 1
    %p49 = por %p47, %p48
    %p51 = scmp.ne.s32.totalorder %s34, %s50
    %p52 = scmp.eq.s32.totalorder %s26, 0
    %p53 = por %p51, %p52
    %s54 = ssub.s32 %s20, %s27
    %p55 = scmp.eq.s32.totalorder %s54, 0
    %s57 = sadd.s32 %s56, 1
    %s58 = scalar_select %p55, %s56, %s57
    %p61 = pneg %p55
    %p62 = scmp.eq.s32.totalorder %s20, 1
    %p63 = por %p61, %p62
    %p64 = scmp.ne.s32.totalorder %s56, %s59
    %p65 = scmp.eq.s32.totalorder %s20, 0
    %p66 = por %p64, %p65
    %p67 = scmp.ne.s32.totalorder %s56, %s59
    %p68 = scmp.eq.s32.totalorder %s25, 1
    %p69 = por %p67, %p68
    %p70 = scmp.ne.s32.totalorder %s59, %s60
    %p71 = scmp.eq.s32.totalorder %s25, 0
    %p72 = por %p70, %p71
    %p73 = scmp.ne.s32.totalorder %s59, %s60
    %p74 = scmp.eq.s32.totalorder %s26, 1
    %p75 = por %p73, %p74
    %p77 = scmp.ne.s32.totalorder %s60, %s76
    %p78 = scmp.eq.s32.totalorder %s26, 0
    %p79 = por %p77, %p78
    %s81 = sadd.s32 %s80, 1
    %p84 = scmp.eq.s32.totalorder %s20, 1
    %p85 = scmp.ne.s32.totalorder %s80, %s82
    %p86 = scmp.eq.s32.totalorder %s20, 0
    %p87 = por %p85, %p86
    %p88 = scmp.ne.s32.totalorder %s80, %s82
    %p89 = scmp.eq.s32.totalorder %s25, 1
    %p90 = por %p88, %p89
    %p91 = scmp.ne.s32.totalorder %s82, %s83
    %p92 = scmp.eq.s32.totalorder %s25, 0
    %p93 = por %p91, %p92
    %p94 = scmp.ne.s32.totalorder %s82, %s83
    %p95 = scmp.eq.s32.totalorder %s26, 1
    %p96 = por %p94, %p95
    %p98 = scmp.ne.s32.totalorder %s83, %s97
    %p99 = scmp.eq.s32.totalorder %s26, 0
    %p100 = por %p98, %p99
    %s102 = sadd.s32 %s101, 1
    %p105 = scmp.eq.s32.totalorder %s20, 1
    %p106 = scmp.ne.s32.totalorder %s101, %s103
    %p107 = scmp.eq.s32.totalorder %s20, 0
    %p108 = por %p106, %p107
    %p109 = scmp.ne.s32.totalorder %s101, %s103
    %p110 = scmp.eq.s32.totalorder %s25, 1
    %p111 = por %p109, %p110
    %p112 = scmp.ne.s32.totalorder %s103, %s104
    %p113 = scmp.eq.s32.totalorder %s25, 0
    %p114 = por %p112, %p113
    %p115 = scmp.ne.s32.totalorder %s103, %s104
    %p116 = scmp.eq.s32.totalorder %s26, 1
    %p117 = por %p115, %p116
    %p119 = scmp.ne.s32.totalorder %s104, %s118
    %p120 = scmp.eq.s32.totalorder %s26, 0
    %p121 = por %p119, %p120
    %s123 = sadd.s32 %s122, 1
    %p126 = scmp.eq.s32.totalorder %s20, 1
    %p127 = scmp.ne.s32.totalorder %s122, %s124
    %p128 = scmp.eq.s32.totalorder %s20, 0
    %p129 = por %p127, %p128
    %p130 = scmp.ne.s32.totalorder %s122, %s124
    %p131 = scmp.eq.s32.totalorder %s25, 1
    %p132 = por %p130, %p131
    %p133 = scmp.ne.s32.totalorder %s124, %s125
    %p134 = scmp.eq.s32.totalorder %s25, 0
    %p135 = por %p133, %p134
    %p136 = scmp.ne.s32.totalorder %s124, %s125
    %p137 = scmp.eq.s32.totalorder %s26, 1
    %p138 = por %p136, %p137
    %p140 = scmp.ne.s32.totalorder %s125, %s139
    %p141 = scmp.eq.s32.totalorder %s26, 0
    %p142 = por %p140, %p141
    %s144 = sadd.s32 %s143, 1
    %p147 = scmp.eq.s32.totalorder %s20, 1
    %p148 = scmp.ne.s32.totalorder %s143, %s145
    %p149 = scmp.eq.s32.totalorder %s20, 0
    %p150 = por %p148, %p149
    %p151 = scmp.ne.s32.totalorder %s143, %s145
    %p152 = scmp.eq.s32.totalorder %s25, 1
    %p153 = por %p151, %p152
    %p154 = scmp.ne.s32.totalorder %s145, %s146
    %p155 = scmp.eq.s32.totalorder %s25, 0
    %p156 = por %p154, %p155
    %p157 = scmp.ne.s32.totalorder %s145, %s146
    %p158 = scmp.eq.s32.totalorder %s26, 1
    %p159 = por %p157, %p158
    %p161 = scmp.ne.s32.totalorder %s146, %s160
    %p162 = scmp.eq.s32.totalorder %s26, 0
    %p163 = por %p161, %p162
    %s165 = sadd.s32 %s164, 1
    %p168 = scmp.eq.s32.totalorder %s20, 1
    %p169 = scmp.ne.s32.totalorder %s164, %s166
    %p170 = scmp.eq.s32.totalorder %s20, 0
    %p171 = por %p169, %p170
    %p172 = scmp.ne.s32.totalorder %s164, %s166
    %p173 = scmp.eq.s32.totalorder %s25, 1
    %p174 = por %p172, %p173
    %p175 = scmp.ne.s32.totalorder %s166, %s167
    %p176 = scmp.eq.s32.totalorder %s25, 0
    %p177 = por %p175, %p176
    %p178 = scmp.ne.s32.totalorder %s166, %s167
    %p179 = scmp.eq.s32.totalorder %s26, 1
    %p180 = por %p178, %p179
    %p182 = scmp.ne.s32.totalorder %s167, %s181
    %p183 = scmp.eq.s32.totalorder %s26, 0
    %p184 = por %p182, %p183
    %s186 = sadd.s32 %s185, 1
    %p189 = scmp.eq.s32.totalorder %s20, 1
    %p190 = scmp.ne.s32.totalorder %s185, %s187
    %p191 = scmp.eq.s32.totalorder %s20, 0
    %p192 = por %p190, %p191
    %p193 = scmp.ne.s32.totalorder %s185, %s187
    %p194 = scmp.eq.s32.totalorder %s25, 1
    %p195 = por %p193, %p194
    %p196 = scmp.ne.s32.totalorder %s187, %s188
    %p197 = scmp.eq.s32.totalorder %s25, 0
    %p198 = por %p196, %p197
    %p199 = scmp.ne.s32.totalorder %s187, %s188
    %p200 = scmp.eq.s32.totalorder %s26, 1
    %p201 = por %p199, %p200
    %p203 = scmp.ne.s32.totalorder %s188, %s202
    %p204 = scmp.eq.s32.totalorder %s26, 0
    %p205 = por %p203, %p204
    %s207 = sadd.s32 %s206, 1
    %p210 = scmp.eq.s32.totalorder %s20, 1
    %p211 = scmp.ne.s32.totalorder %s206, %s208
    %p212 = scmp.eq.s32.totalorder %s20, 0
    %p213 = por %p211, %p212
    %p214 = scmp.ne.s32.totalorder %s206, %s208
    %p215 = scmp.eq.s32.totalorder %s25, 1
    %p216 = por %p214, %p215
    %p217 = scmp.ne.s32.totalorder %s208, %s209
    %p218 = scmp.eq.s32.totalorder %s25, 0
    %p219 = por %p217, %p218
    %p220 = scmp.ne.s32.totalorder %s208, %s209
    %p221 = scmp.eq.s32.totalorder %s26, 1
    %p222 = por %p220, %p221
    %p224 = scmp.ne.s32.totalorder %s209, %s223
    %p225 = scmp.eq.s32.totalorder %s26, 0
    %p226 = por %p224, %p225
    %s228 = sadd.s32 %s227, 1
    %p231 = scmp.eq.s32.totalorder %s20, 1
    %p232 = scmp.ne.s32.totalorder %s227, %s229
    %p233 = scmp.eq.s32.totalorder %s20, 0
    %p234 = por %p232, %p233
    %p235 = scmp.ne.s32.totalorder %s227, %s229
    %p236 = scmp.eq.s32.totalorder %s25, 1
    %p237 = por %p235, %p236
    %p238 = scmp.ne.s32.totalorder %s229, %s230
    %p239 = scmp.eq.s32.totalorder %s25, 0
    %p240 = por %p238, %p239
    %p241 = scmp.ne.s32.totalorder %s229, %s230
    %p242 = scmp.eq.s32.totalorder %s26, 1
    %p243 = por %p241, %p242
    %p245 = scmp.ne.s32.totalorder %s230, %s244
    %p246 = scmp.eq.s32.totalorder %s26, 0
    %p247 = por %p245, %p246
    %s249 = sadd.s32 %s248, 1
    %p252 = scmp.eq.s32.totalorder %s20, 1
    %p253 = scmp.ne.s32.totalorder %s248, %s250
    %p254 = scmp.eq.s32.totalorder %s20, 0
    %p255 = por %p253, %p254
    %p256 = scmp.ne.s32.totalorder %s248, %s250
    %p257 = scmp.eq.s32.totalorder %s25, 1
    %p258 = por %p256, %p257
    %p259 = scmp.ne.s32.totalorder %s250, %s251
    %p260 = scmp.eq.s32.totalorder %s25, 0
    %p261 = por %p259, %p260
    %p262 = scmp.ne.s32.totalorder %s250, %s251
    %p263 = scmp.eq.s32.totalorder %s26, 1
    %p264 = por %p262, %p263
    %p266 = scmp.ne.s32.totalorder %s251, %s265
    %p267 = scmp.eq.s32.totalorder %s26, 0
    %p268 = por %p266, %p267
    %s270 = sadd.s32 %s269, 1
    %p273 = scmp.eq.s32.totalorder %s20, 1
    %p274 = scmp.ne.s32.totalorder %s269, %s271
    %p275 = scmp.eq.s32.totalorder %s20, 0
    %p276 = por %p274, %p275
    %p277 = scmp.ne.s32.totalorder %s269, %s271
    %p278 = scmp.eq.s32.totalorder %s25, 1
    %p279 = por %p277, %p278
    %p280 = scmp.ne.s32.totalorder %s271, %s272
    %p281 = scmp.eq.s32.totalorder %s25, 0
    %p282 = por %p280, %p281
    %p283 = scmp.ne.s32.totalorder %s271, %s272
    %p284 = scmp.eq.s32.totalorder %s26, 1
    %p285 = por %p283, %p284
    %p287 = scmp.ne.s32.totalorder %s272, %s286
    %p288 = scmp.eq.s32.totalorder %s26, 0
    %p289 = por %p287, %p288
    %s291 = sadd.s32 %s290, 1
    %p294 = scmp.eq.s32.totalorder %s20, 1
    %p295 = scmp.ne.s32.totalorder %s290, %s292
    %p296 = scmp.eq.s32.totalorder %s20, 0
    %p297 = por %p295, %p296
    %p298 = scmp.ne.s32.totalorder %s290, %s292
    %p299 = scmp.eq.s32.totalorder %s25, 1
    %p300 = por %p298, %p299
    %p301 = scmp.ne.s32.totalorder %s292, %s293
    %p302 = scmp.eq.s32.totalorder %s25, 0
    %p303 = por %p301, %p302
    %p304 = scmp.ne.s32.totalorder %s292, %s293
    %p305 = scmp.eq.s32.totalorder %s26, 1
    %p306 = por %p304, %p305
    %p308 = scmp.ne.s32.totalorder %s293, %s307
    %p309 = scmp.eq.s32.totalorder %s26, 0
    %p310 = por %p308, %p309
    %s312 = sadd.s32 %s311, 1
    %p315 = scmp.eq.s32.totalorder %s20, 1
    %p316 = scmp.ne.s32.totalorder %s311, %s313
    %p317 = scmp.eq.s32.totalorder %s20, 0
    %p318 = por %p316, %p317
    %p319 = scmp.ne.s32.totalorder %s311, %s313
    %p320 = scmp.eq.s32.totalorder %s25, 1
    %p321 = por %p319, %p320
    %p322 = scmp.ne.s32.totalorder %s313, %s314
    %p323 = scmp.eq.s32.totalorder %s25, 0
    %p324 = por %p322, %p323
    %p325 = scmp.ne.s32.totalorder %s313, %s314
    %p326 = scmp.eq.s32.totalorder %s26, 1
    %p327 = por %p325, %p326
    %p329 = scmp.ne.s32.totalorder %s314, %s328
    %p330 = scmp.eq.s32.totalorder %s26, 0
    %p331 = por %p329, %p330
    %s332 = ssub.s32 %s20, %s27
    %p333 = scmp.eq.s32.totalorder %s332, 0
    %s335 = sadd.s32 %s334, 1
    %s336 = scalar_select %p333, %s334, %s335
    %p339 = pneg %p333
    %p340 = scmp.eq.s32.totalorder %s20, 1
    %p341 = por %p339, %p340
    %p342 = scmp.ne.s32.totalorder %s334, %s337
    %p343 = scmp.eq.s32.totalorder %s20, 0
    %p344 = por %p342, %p343
    %p345 = scmp.ne.s32.totalorder %s334, %s337
    %p346 = scmp.eq.s32.totalorder %s25, 1
    %p347 = por %p345, %p346
    %p348 = scmp.ne.s32.totalorder %s337, %s338
    %p349 = scmp.eq.s32.totalorder %s25, 0
    %p350 = por %p348, %p349
    %p351 = scmp.ne.s32.totalorder %s337, %s338
    %p352 = scmp.eq.s32.totalorder %s26, 1
    %p353 = por %p351, %p352
    %p355 = scmp.ne.s32.totalorder %s338, %s354
    %p356 = scmp.eq.s32.totalorder %s26, 0
    %p357 = por %p355, %p356
    %p358 = scmp.le.s32.totalorder 1, %s20
    %p359 = scmp.lt.s32.totalorder %s20, 3
    %p360 = pnand %p358, %p359
    %p361 = pneg %p360
    // Predicated region
    $region9: #{tpu_custom_call.1} parent=5 // pred_check
      _
    $region10: #{tpu_custom_call.1} parent=5 // pred_check_branch
      %363 = sbr.rel (%p360) target = $region12
    $region11: #{tpu_custom_call.1} parent=5 // pred_region
      %s364 = ssub.s32 %s20, 1
      // Predicated region
      $region13: #{tpu_custom_call.1} parent=11 // pred_check
        %p365 = pneg %p93
      $region14: #{tpu_custom_call.1} parent=11 // pred_check_branch
        %367 = sbr.rel (%p365) target = $region16
      $region15: #{tpu_custom_call.1} parent=11 // pred_region
        _
      $region16: #{tpu_custom_call.1} parent=11 // pred_fallthru
        _
      // Predicated region
      $region17: #{tpu_custom_call.1} parent=11 // pred_check
        %p368 = pneg %p114
      $region18: #{tpu_custom_call.1} parent=11 // pred_check_branch
        %370 = sbr.rel (%p368) target = $region20
      $region19: #{tpu_custom_call.1} parent=11 // pred_region
        _
      $region20: #{tpu_custom_call.1} parent=11 // pred_fallthru
        _
      // Predicated region
      $region21: #{tpu_custom_call.1} parent=11 // pred_check
        %p371 = pneg %p135
      $region22: #{tpu_custom_call.1} parent=11 // pred_check_branch
        %373 = sbr.rel (%p371) target = $region24
      $region23: #{tpu_custom_call.1} parent=11 // pred_region
        _
      $region24: #{tpu_custom_call.1} parent=11 // pred_fallthru
        _
      // Predicated region
      $region25: #{tpu_custom_call.1} parent=11 // pred_check
        %p374 = pneg %p156
      $region26: #{tpu_custom_call.1} parent=11 // pred_check_branch
        %376 = sbr.rel (%p374) target = $region28
      $region27: #{tpu_custom_call.1} parent=11 // pred_region
        _
      $region28: #{tpu_custom_call.1} parent=11 // pred_fallthru
        _
      // Predicated region
      $region29: #{tpu_custom_call.1} parent=11 // pred_check
        %p377 = pneg %p177
      $region30: #{tpu_custom_call.1} parent=11 // pred_check_branch
        %379 = sbr.rel (%p377) target = $region32
      $region31: #{tpu_custom_call.1} parent=11 // pred_region
        _
      $region32: #{tpu_custom_call.1} parent=11 // pred_fallthru
        _
      // Predicated region
      $region33: #{tpu_custom_call.1} parent=11 // pred_check
        %p380 = pneg %p198
      $region34: #{tpu_custom_call.1} parent=11 // pred_check_branch
        %382 = sbr.rel (%p380) target = $region36
      $region35: #{tpu_custom_call.1} parent=11 // pred_region
        _
      $region36: #{tpu_custom_call.1} parent=11 // pred_fallthru
        _
      // Predicated region
      $region37: #{tpu_custom_call.1} parent=11 // pred_check
        %p383 = pneg %p219
      $region38: #{tpu_custom_call.1} parent=11 // pred_check_branch
        %385 = sbr.rel (%p383) target = $region40
      $region39: #{tpu_custom_call.1} parent=11 // pred_region
        _
      $region40: #{tpu_custom_call.1} parent=11 // pred_fallthru
        _
      // Predicated region
      $region41: #{tpu_custom_call.1} parent=11 // pred_check
        %p386 = pneg %p240
      $region42: #{tpu_custom_call.1} parent=11 // pred_check_branch
        %388 = sbr.rel (%p386) target = $region44
      $region43: #{tpu_custom_call.1} parent=11 // pred_region
        _
      $region44: #{tpu_custom_call.1} parent=11 // pred_fallthru
        _
      // Predicated region
      $region45: #{tpu_custom_call.1} parent=11 // pred_check
        %p389 = pneg %p261
      $region46: #{tpu_custom_call.1} parent=11 // pred_check_branch
        %391 = sbr.rel (%p389) target = $region48
      $region47: #{tpu_custom_call.1} parent=11 // pred_region
        _
      $region48: #{tpu_custom_call.1} parent=11 // pred_fallthru
        _
      // Predicated region
      $region49: #{tpu_custom_call.1} parent=11 // pred_check
        %p392 = pneg %p282
      $region50: #{tpu_custom_call.1} parent=11 // pred_check_branch
        %394 = sbr.rel (%p392) target = $region52
      $region51: #{tpu_custom_call.1} parent=11 // pred_region
        _
      $region52: #{tpu_custom_call.1} parent=11 // pred_fallthru
        _
      // Predicated region
      $region53: #{tpu_custom_call.1} parent=11 // pred_check
        %p395 = pneg %p303
      $region54: #{tpu_custom_call.1} parent=11 // pred_check_branch
        %397 = sbr.rel (%p395) target = $region56
      $region55: #{tpu_custom_call.1} parent=11 // pred_region
        _
      $region56: #{tpu_custom_call.1} parent=11 // pred_fallthru
        _
      // Predicated region
      $region57: #{tpu_custom_call.1} parent=11 // pred_check
        %p398 = pneg %p324
      $region58: #{tpu_custom_call.1} parent=11 // pred_check_branch
        %400 = sbr.rel (%p398) target = $region60
      $region59: #{tpu_custom_call.1} parent=11 // pred_region
        _
      $region60: #{tpu_custom_call.1} parent=11 // pred_fallthru
        _
    $region12: #{tpu_custom_call.1} parent=5 // pred_fallthru
      _
    %p401 = scmp.lt.s32.totalorder %s20, 2
    // Predicated region
    $region61: #{tpu_custom_call.1} parent=5 // pred_check
      %p402 = pneg %p401
    $region62: #{tpu_custom_call.1} parent=5 // pred_check_branch
      %404 = sbr.rel (%p402) target = $region64
    $region63: #{tpu_custom_call.1} parent=5 // pred_region
      // Predicated region
      $region65: #{tpu_custom_call.1} parent=63 // pred_check
        %p405 = pneg %p40
      $region66: #{tpu_custom_call.1} parent=63 // pred_check_branch
        %407 = sbr.rel (%p405) target = $region68
      $region67: #{tpu_custom_call.1} parent=63 // pred_region
        %p408 = scmp.lt.s32.totalorder %s20, 1
        %s409 = scalar_select %p408, %s20, 1
        %s410 = smul.addr %s409, 32
        %s411 = smul.addr %s410, 8
        %s412 = scalar_lea.vmem %s0, %s411
      $region68: #{tpu_custom_call.1} parent=63 // pred_fallthru
        _
      // Predicated region
      $region69: #{tpu_custom_call.1} parent=63 // pred_check
        %p413 = pneg %p66
      $region70: #{tpu_custom_call.1} parent=63 // pred_check_branch
        %415 = sbr.rel (%p413) target = $region72
      $region71: #{tpu_custom_call.1} parent=63 // pred_region
        %p416 = scmp.lt.s32.totalorder %s20, 1
        %s417 = scalar_select %p416, %s20, 1
        %s418 = scalar_lea.vmem %s1, %s417
      $region72: #{tpu_custom_call.1} parent=63 // pred_fallthru
        _
    $region64: #{tpu_custom_call.1} parent=5 // pred_fallthru
      _
    %p419 = scmp.le.s32.totalorder 1, %s20
    %p420 = scmp.lt.s32.totalorder %s20, 3
    %p421 = pnand %p419, %p420
    %p422 = pneg %p421
    // Predicated region
    $region73: #{tpu_custom_call.1} parent=5 // pred_check
      _
    $region74: #{tpu_custom_call.1} parent=5 // pred_check_branch
      %424 = sbr.rel (%p421) target = $region76
    $region75: #{tpu_custom_call.1} parent=5 // pred_region
      %s425 = ssub.s32 %s20, 1
      %p426 = scmp.lt.s32.totalorder %s25, 1
      %s427 = scalar_select %p426, %s25, 1
      %s428 = smul.addr %s427, 32
      %s429 = smul.addr %s428, 8
      %s430 = scalar_lea.vmem %s0, %s429
      %p431 = pneg %p46
      %p432 = pneg %p43
      %p433 = scmp.lt.s32.totalorder %s25, 1
      %s434 = scalar_select %p433, %s25, 1
      %s435 = scalar_lea.vmem %s1, %s434
      %p436 = pneg %p72
      %p437 = pneg %p69
      %p438 = pneg %p93
      %p439 = pneg %p90
      %p440 = pneg %p114
      %p441 = pneg %p111
      %p442 = pneg %p135
      %p443 = pneg %p132
      %p444 = pneg %p156
      %p445 = pneg %p153
      %p446 = pneg %p177
      %p447 = pneg %p174
      %p448 = pneg %p198
      %p449 = pneg %p195
      %p450 = pneg %p219
      %p451 = pneg %p216
      %p452 = pneg %p240
      %p453 = pneg %p237
      %p454 = pneg %p261
      %p455 = pneg %p258
      %p456 = pneg %p282
      %p457 = pneg %p279
      %p458 = pneg %p303
      %p459 = pneg %p300
      %p460 = pneg %p324
      %p461 = pneg %p321
      %p462 = pneg %p350
      %p463 = pneg %p347
      %p464 = scmp.lt.s32.totalorder %s25, 1
      %s465 = scalar_select %p464, %s25, 1
      %s466 = smul.addr %s465, 32
      %s467 = smul.addr %s466, 8
      %s468 = scalar_lea.vmem %s14, %s467
      %p469 = scmp.lt.s32.totalorder %s25, 1
      %s470 = scalar_select %p469, %s25, 1
      %s471 = smul.addr %s470, 32
      %s472 = smul.addr %s471, 8
      %s473 = scalar_lea.vmem %s0, %s472
      %p474 = scmp.lt.s32.totalorder %s25, 1
      %s475 = scalar_select %p474, %s25, 1
      %s476 = scalar_lea.vmem %s1, %s475
      %p477 = scmp.lt.s32.totalorder %s25, 1
      %s478 = scalar_select %p477, %s25, 1
      %s479 = smul.addr %s478, 32
      %s480 = smul.addr %s479, 8
      %s481 = scalar_lea.vmem %s14, %s480
      %v485 = vld [vmem:[%s473] sm:$0xff]
      %v486 = vld [vmem:[%s473 + $0x8] sm:$0xff]
      %v487 = vld [vmem:[%s473 + $0x10] sm:$0xff]
      %v488 = vld [vmem:[%s473 + $0x18] sm:$0xff]
      %v489 = vld [vmem:[%s473 + $0x20] sm:$0xff]
      %v490 = vld [vmem:[%s473 + $0x28] sm:$0xff]
      %v491 = vld [vmem:[%s473 + $0x30] sm:$0xff]
      %v492 = vld [vmem:[%s473 + $0x38] sm:$0xff]
      %v493 = vld [vmem:[%s473 + $0x40] sm:$0xff]
      %v494 = vld [vmem:[%s473 + $0x48] sm:$0xff]
      %v495 = vld [vmem:[%s473 + $0x50] sm:$0xff]
      %v496 = vld [vmem:[%s473 + $0x58] sm:$0xff]
      %v497 = vld [vmem:[%s473 + $0x60] sm:$0xff]
      %v498 = vld [vmem:[%s473 + $0x68] sm:$0xff]
      %v499 = vld [vmem:[%s473 + $0x70] sm:$0xff]
      %v500 = vld [vmem:[%s473 + $0x78] sm:$0xff]
      %v501 = vld [vmem:[%s473 + $0x80] sm:$0xff]
      %v502 = vld [vmem:[%s473 + $0x88] sm:$0xff]
      %v503 = vld [vmem:[%s473 + $0x90] sm:$0xff]
      %v504 = vld [vmem:[%s473 + $0x98] sm:$0xff]
      %v505 = vld [vmem:[%s473 + $0xa0] sm:$0xff]
      %v506 = vld [vmem:[%s473 + $0xa8] sm:$0xff]
      %v507 = vld [vmem:[%s473 + $0xb0] sm:$0xff]
      %v508 = vld [vmem:[%s473 + $0xb8] sm:$0xff]
      %v509 = vld [vmem:[%s473 + $0xc0] sm:$0xff]
      %v510 = vld [vmem:[%s473 + $0xc8] sm:$0xff]
      %v511 = vld [vmem:[%s473 + $0xd0] sm:$0xff]
      %v512 = vld [vmem:[%s473 + $0xd8] sm:$0xff]
      %v513 = vld [vmem:[%s473 + $0xe0] sm:$0xff]
      %v514 = vld [vmem:[%s473 + $0xe8] sm:$0xff]
      %v515 = vld [vmem:[%s473 + $0xf0] sm:$0xff]
      %v516 = vld [vmem:[%s473 + $0xf8] sm:$0xff]
      %v517 = vlaneseq
      %v518 = vshrl.u32 %v517, 7
      %v519 = vadd.s32 %v518, 8
      %v520 = vadd.s32 %v518, 16
      %v521 = vadd.s32 %v518, 24
      %v522 = vadd.s32 %v518, 32
      %v523 = vadd.s32 %v518, 40
      %v524 = vadd.s32 %v518, 48
      %v525 = vadd.s32 %v518, 56
      %v526 = vadd.s32 %v518, 64
      %v527 = vadd.s32 %v518, 72
      %v528 = vadd.s32 %v518, 80
      %v529 = vadd.s32 %v518, 88
      %v530 = vadd.s32 %v518, 96
      %v531 = vadd.s32 %v518, 104
      %v532 = vadd.s32 %v518, 112
      %v533 = vadd.s32 %v518, 120
      %v534 = vadd.s32 %v518, 128
      %v535 = vadd.s32 %v518, 136
      %v536 = vadd.s32 %v518, 144
      %v537 = vadd.s32 %v518, 152
      %v538 = vadd.s32 %v518, 160
      %v539 = vadd.s32 %v518, 168
      %v540 = vadd.s32 %v518, 176
      %v541 = vadd.s32 %v518, 184
      %v542 = vadd.s32 %v518, 192
      %v543 = vadd.s32 %v518, 200
      %v544 = vadd.s32 %v518, 208
      %v545 = vadd.s32 %v518, 216
      %v546 = vadd.s32 %v518, 224
      %v547 = vadd.s32 %v518, 232
      %v548 = vadd.s32 %v518, 240
      %v549 = vadd.s32 %v518, 248
      %vm550 = vcmp.lt.s32.totalorder %v518, 0
      %v551 = vsub.s32 0, %v518
      %v552 = vsel %vm550, %v551, %v518
      %v553 = vshrl.u32 %v552, 4
      %v554 = vand.u32 %v552, 15
      %v555 = vsub.s32 0, %v554
      %v556 = vsel %vm550, %v555, %v554
      %vm557 = vcmp.lt.s32.totalorder %v519, 0
      %v558 = vsub.s32 0, %v519
      %v559 = vsel %vm557, %v558, %v519
      %v560 = vshrl.u32 %v559, 4
      %v561 = vand.u32 %v559, 15
      %v562 = vsub.s32 0, %v561
      %v563 = vsel %vm557, %v562, %v561
      %vm564 = vcmp.lt.s32.totalorder %v520, 0
      %v565 = vsub.s32 0, %v520
      %v566 = vsel %vm564, %v565, %v520
      %v567 = vshrl.u32 %v566, 4
      %v568 = vand.u32 %v566, 15
      %v569 = vsub.s32 0, %v568
      %v570 = vsel %vm564, %v569, %v568
      %vm571 = vcmp.lt.s32.totalorder %v521, 0
      %v572 = vsub.s32 0, %v521
      %v573 = vsel %vm571, %v572, %v521
      %v574 = vshrl.u32 %v573, 4
      %v575 = vand.u32 %v573, 15
      %v576 = vsub.s32 0, %v575
      %v577 = vsel %vm571, %v576, %v575
      %vm578 = vcmp.lt.s32.totalorder %v522, 0
      %v579 = vsub.s32 0, %v522
      %v580 = vsel %vm578, %v579, %v522
      %v581 = vshrl.u32 %v580, 4
      %v582 = vand.u32 %v580, 15
      %v583 = vsub.s32 0, %v582
      %v584 = vsel %vm578, %v583, %v582
      %vm585 = vcmp.lt.s32.totalorder %v523, 0
      %v586 = vsub.s32 0, %v523
      %v587 = vsel %vm585, %v586, %v523
      %v588 = vshrl.u32 %v587, 4
      %v589 = vand.u32 %v587, 15
      %v590 = vsub.s32 0, %v589
      %v591 = vsel %vm585, %v590, %v589
      %vm592 = vcmp.lt.s32.totalorder %v524, 0
      %v593 = vsub.s32 0, %v524
      %v594 = vsel %vm592, %v593, %v524
      %v595 = vshrl.u32 %v594, 4
      %v596 = vand.u32 %v594, 15
      %v597 = vsub.s32 0, %v596
      %v598 = vsel %vm592, %v597, %v596
      %vm599 = vcmp.lt.s32.totalorder %v525, 0
      %v600 = vsub.s32 0, %v525
      %v601 = vsel %vm599, %v600, %v525
      %v602 = vshrl.u32 %v601, 4
      %v603 = vand.u32 %v601, 15
      %v604 = vsub.s32 0, %v603
      %v605 = vsel %vm599, %v604, %v603
      %vm606 = vcmp.lt.s32.totalorder %v526, 0
      %v607 = vsub.s32 0, %v526
      %v608 = vsel %vm606, %v607, %v526
      %v609 = vshrl.u32 %v608, 4
      %v610 = vand.u32 %v608, 15
      %v611 = vsub.s32 0, %v610
      %v612 = vsel %vm606, %v611, %v610
      %vm613 = vcmp.lt.s32.totalorder %v527, 0
      %v614 = vsub.s32 0, %v527
      %v615 = vsel %vm613, %v614, %v527
      %v616 = vshrl.u32 %v615, 4
      %v617 = vand.u32 %v615, 15
      %v618 = vsub.s32 0, %v617
      %v619 = vsel %vm613, %v618, %v617
      %vm620 = vcmp.lt.s32.totalorder %v528, 0
      %v621 = vsub.s32 0, %v528
      %v622 = vsel %vm620, %v621, %v528
      %v623 = vshrl.u32 %v622, 4
      %v624 = vand.u32 %v622, 15
      %v625 = vsub.s32 0, %v624
      %v626 = vsel %vm620, %v625, %v624
      %vm627 = vcmp.lt.s32.totalorder %v529, 0
      %v628 = vsub.s32 0, %v529
      %v629 = vsel %vm627, %v628, %v529
      %v630 = vshrl.u32 %v629, 4
      %v631 = vand.u32 %v629, 15
      %v632 = vsub.s32 0, %v631
      %v633 = vsel %vm627, %v632, %v631
      %vm634 = vcmp.lt.s32.totalorder %v530, 0
      %v635 = vsub.s32 0, %v530
      %v636 = vsel %vm634, %v635, %v530
      %v637 = vshrl.u32 %v636, 4
      %v638 = vand.u32 %v636, 15
      %v639 = vsub.s32 0, %v638
      %v640 = vsel %vm634, %v639, %v638
      %vm641 = vcmp.lt.s32.totalorder %v531, 0
      %v642 = vsub.s32 0, %v531
      %v643 = vsel %vm641, %v642, %v531
      %v644 = vshrl.u32 %v643, 4
      %v645 = vand.u32 %v643, 15
      %v646 = vsub.s32 0, %v645
      %v647 = vsel %vm641, %v646, %v645
      %vm648 = vcmp.lt.s32.totalorder %v532, 0
      %v649 = vsub.s32 0, %v532
      %v650 = vsel %vm648, %v649, %v532
      %v651 = vshrl.u32 %v650, 4
      %v652 = vand.u32 %v650, 15
      %v653 = vsub.s32 0, %v652
      %v654 = vsel %vm648, %v653, %v652
      %vm655 = vcmp.lt.s32.totalorder %v533, 0
      %v656 = vsub.s32 0, %v533
      %v657 = vsel %vm655, %v656, %v533
      %v658 = vshrl.u32 %v657, 4
      %v659 = vand.u32 %v657, 15
      %v660 = vsub.s32 0, %v659
      %v661 = vsel %vm655, %v660, %v659
      %vm662 = vcmp.lt.s32.totalorder %v534, 0
      %v663 = vsub.s32 0, %v534
      %v664 = vsel %vm662, %v663, %v534
      %v665 = vshrl.u32 %v664, 4
      %v666 = vand.u32 %v664, 15
      %v667 = vsub.s32 0, %v666
      %v668 = vsel %vm662, %v667, %v666
      %vm669 = vcmp.lt.s32.totalorder %v535, 0
      %v670 = vsub.s32 0, %v535
      %v671 = vsel %vm669, %v670, %v535
      %v672 = vshrl.u32 %v671, 4
      %v673 = vand.u32 %v671, 15
      %v674 = vsub.s32 0, %v673
      %v675 = vsel %vm669, %v674, %v673
      %vm676 = vcmp.lt.s32.totalorder %v536, 0
      %v677 = vsub.s32 0, %v536
      %v678 = vsel %vm676, %v677, %v536
      %v679 = vshrl.u32 %v678, 4
      %v680 = vand.u32 %v678, 15
      %v681 = vsub.s32 0, %v680
      %v682 = vsel %vm676, %v681, %v680
      %vm683 = vcmp.lt.s32.totalorder %v537, 0
      %v684 = vsub.s32 0, %v537
      %v685 = vsel %vm683, %v684, %v537
      %v686 = vshrl.u32 %v685, 4
      %v687 = vand.u32 %v685, 15
      %v688 = vsub.s32 0, %v687
      %v689 = vsel %vm683, %v688, %v687
      %vm690 = vcmp.lt.s32.totalorder %v538, 0
      %v691 = vsub.s32 0, %v538
      %v692 = vsel %vm690, %v691, %v538
      %v693 = vshrl.u32 %v692, 4
      %v694 = vand.u32 %v692, 15
      %v695 = vsub.s32 0, %v694
      %v696 = vsel %vm690, %v695, %v694
      %vm697 = vcmp.lt.s32.totalorder %v539, 0
      %v698 = vsub.s32 0, %v539
      %v699 = vsel %vm697, %v698, %v539
      %v700 = vshrl.u32 %v699, 4
      %v701 = vand.u32 %v699, 15
      %v702 = vsub.s32 0, %v701
      %v703 = vsel %vm697, %v702, %v701
      %vm704 = vcmp.lt.s32.totalorder %v540, 0
      %v705 = vsub.s32 0, %v540
      %v706 = vsel %vm704, %v705, %v540
      %v707 = vshrl.u32 %v706, 4
      %v708 = vand.u32 %v706, 15
      %v709 = vsub.s32 0, %v708
      %v710 = vsel %vm704, %v709, %v708
      %vm711 = vcmp.lt.s32.totalorder %v541, 0
      %v712 = vsub.s32 0, %v541
      %v713 = vsel %vm711, %v712, %v541
      %v714 = vshrl.u32 %v713, 4
      %v715 = vand.u32 %v713, 15
      %v716 = vsub.s32 0, %v715
      %v717 = vsel %vm711, %v716, %v715
      %vm718 = vcmp.lt.s32.totalorder %v542, 0
      %v719 = vsub.s32 0, %v542
      %v720 = vsel %vm718, %v719, %v542
      %v721 = vshrl.u32 %v720, 4
      %v722 = vand.u32 %v720, 15
      %v723 = vsub.s32 0, %v722
      %v724 = vsel %vm718, %v723, %v722
      %vm725 = vcmp.lt.s32.totalorder %v543, 0
      %v726 = vsub.s32 0, %v543
      %v727 = vsel %vm725, %v726, %v543
      %v728 = vshrl.u32 %v727, 4
      %v729 = vand.u32 %v727, 15
      %v730 = vsub.s32 0, %v729
      %v731 = vsel %vm725, %v730, %v729
      %vm732 = vcmp.lt.s32.totalorder %v544, 0
      %v733 = vsub.s32 0, %v544
      %v734 = vsel %vm732, %v733, %v544
      %v735 = vshrl.u32 %v734, 4
      %v736 = vand.u32 %v734, 15
      %v737 = vsub.s32 0, %v736
      %v738 = vsel %vm732, %v737, %v736
      %vm739 = vcmp.lt.s32.totalorder %v545, 0
      %v740 = vsub.s32 0, %v545
      %v741 = vsel %vm739, %v740, %v545
      %v742 = vshrl.u32 %v741, 4
      %v743 = vand.u32 %v741, 15
      %v744 = vsub.s32 0, %v743
      %v745 = vsel %vm739, %v744, %v743
      %vm746 = vcmp.lt.s32.totalorder %v546, 0
      %v747 = vsub.s32 0, %v546
      %v748 = vsel %vm746, %v747, %v546
      %v749 = vshrl.u32 %v748, 4
      %v750 = vand.u32 %v748, 15
      %v751 = vsub.s32 0, %v750
      %v752 = vsel %vm746, %v751, %v750
      %vm753 = vcmp.lt.s32.totalorder %v547, 0
      %v754 = vsub.s32 0, %v547
      %v755 = vsel %vm753, %v754, %v547
      %v756 = vshrl.u32 %v755, 4
      %v757 = vand.u32 %v755, 15
      %v758 = vsub.s32 0, %v757
      %v759 = vsel %vm753, %v758, %v757
      %vm760 = vcmp.lt.s32.totalorder %v548, 0
      %v761 = vsub.s32 0, %v548
      %v762 = vsel %vm760, %v761, %v548
      %v763 = vshrl.u32 %v762, 4
      %v764 = vand.u32 %v762, 15
      %v765 = vsub.s32 0, %v764
      %v766 = vsel %vm760, %v765, %v764
      %vm767 = vcmp.lt.s32.totalorder %v549, 0
      %v768 = vsub.s32 0, %v549
      %v769 = vsel %vm767, %v768, %v549
      %v770 = vshrl.u32 %v769, 4
      %v771 = vand.u32 %v769, 15
      %v772 = vsub.s32 0, %v771
      %v773 = vsel %vm767, %v772, %v771
      %vm774 = vcmp.ne.s32.totalorder %v556, 0
      %vm775 = vcmp.ne.s32.totalorder %v563, 0
      %vm776 = vcmp.ne.s32.totalorder %v570, 0
      %vm777 = vcmp.ne.s32.totalorder %v577, 0
      %vm778 = vcmp.ne.s32.totalorder %v584, 0
      %vm779 = vcmp.ne.s32.totalorder %v591, 0
      %vm780 = vcmp.ne.s32.totalorder %v598, 0
      %vm781 = vcmp.ne.s32.totalorder %v605, 0
      %vm782 = vcmp.ne.s32.totalorder %v612, 0
      %vm783 = vcmp.ne.s32.totalorder %v619, 0
      %vm784 = vcmp.ne.s32.totalorder %v626, 0
      %vm785 = vcmp.ne.s32.totalorder %v633, 0
      %vm786 = vcmp.ne.s32.totalorder %v640, 0
      %vm787 = vcmp.ne.s32.totalorder %v647, 0
      %vm788 = vcmp.ne.s32.totalorder %v654, 0
      %vm789 = vcmp.ne.s32.totalorder %v661, 0
      %vm790 = vcmp.ne.s32.totalorder %v668, 0
      %vm791 = vcmp.ne.s32.totalorder %v675, 0
      %vm792 = vcmp.ne.s32.totalorder %v682, 0
      %vm793 = vcmp.ne.s32.totalorder %v689, 0
      %vm794 = vcmp.ne.s32.totalorder %v696, 0
      %vm795 = vcmp.ne.s32.totalorder %v703, 0
      %vm796 = vcmp.ne.s32.totalorder %v710, 0
      %vm797 = vcmp.ne.s32.totalorder %v717, 0
      %vm798 = vcmp.ne.s32.totalorder %v724, 0
      %vm799 = vcmp.ne.s32.totalorder %v731, 0
      %vm800 = vcmp.ne.s32.totalorder %v738, 0
      %vm801 = vcmp.ne.s32.totalorder %v745, 0
      %vm802 = vcmp.ne.s32.totalorder %v752, 0
      %vm803 = vcmp.ne.s32.totalorder %v759, 0
      %vm804 = vcmp.ne.s32.totalorder %v766, 0
      %vm805 = vcmp.ne.s32.totalorder %v773, 0
      %vm806 = vcmp.lt.s32.totalorder %v556, 0
      %vm807 = vcmp.lt.s32.totalorder %v563, 0
      %vm808 = vcmp.lt.s32.totalorder %v570, 0
      %vm809 = vcmp.lt.s32.totalorder %v577, 0
      %vm810 = vcmp.lt.s32.totalorder %v584, 0
      %vm811 = vcmp.lt.s32.totalorder %v591, 0
      %vm812 = vcmp.lt.s32.totalorder %v598, 0
      %vm813 = vcmp.lt.s32.totalorder %v605, 0
      %vm814 = vcmp.lt.s32.totalorder %v612, 0
      %vm815 = vcmp.lt.s32.totalorder %v619, 0
      %vm816 = vcmp.lt.s32.totalorder %v626, 0
      %vm817 = vcmp.lt.s32.totalorder %v633, 0
      %vm818 = vcmp.lt.s32.totalorder %v640, 0
      %vm819 = vcmp.lt.s32.totalorder %v647, 0
      %vm820 = vcmp.lt.s32.totalorder %v654, 0
      %vm821 = vcmp.lt.s32.totalorder %v661, 0
      %vm822 = vcmp.lt.s32.totalorder %v668, 0
      %vm823 = vcmp.lt.s32.totalorder %v675, 0
      %vm824 = vcmp.lt.s32.totalorder %v682, 0
      %vm825 = vcmp.lt.s32.totalorder %v689, 0
      %vm826 = vcmp.lt.s32.totalorder %v696, 0
      %vm827 = vcmp.lt.s32.totalorder %v703, 0
      %vm828 = vcmp.lt.s32.totalorder %v710, 0
      %vm829 = vcmp.lt.s32.totalorder %v717, 0
      %vm830 = vcmp.lt.s32.totalorder %v724, 0
      %vm831 = vcmp.lt.s32.totalorder %v731, 0
      %vm832 = vcmp.lt.s32.totalorder %v738, 0
      %vm833 = vcmp.lt.s32.totalorder %v745, 0
      %vm834 = vcmp.lt.s32.totalorder %v752, 0
      %vm835 = vcmp.lt.s32.totalorder %v759, 0
      %vm836 = vcmp.lt.s32.totalorder %v766, 0
      %vm837 = vcmp.lt.s32.totalorder %v773, 0
      %vm838 = vmand %vm806, %vm774
      %vm839 = vmand %vm807, %vm775
      %vm840 = vmand %vm808, %vm776
      %vm841 = vmand %vm809, %vm777
      %vm842 = vmand %vm810, %vm778
      %vm843 = vmand %vm811, %vm779
      %vm844 = vmand %vm812, %vm780
      %vm845 = vmand %vm813, %vm781
      %vm846 = vmand %vm814, %vm782
      %vm847 = vmand %vm815, %vm783
      %vm848 = vmand %vm816, %vm784
      %vm849 = vmand %vm817, %vm785
      %vm850 = vmand %vm818, %vm786
      %vm851 = vmand %vm819, %vm787
      %vm852 = vmand %vm820, %vm788
      %vm853 = vmand %vm821, %vm789
      %vm854 = vmand %vm822, %vm790
      %vm855 = vmand %vm823, %vm791
      %vm856 = vmand %vm824, %vm792
      %vm857 = vmand %vm825, %vm793
      %vm858 = vmand %vm826, %vm794
      %vm859 = vmand %vm827, %vm795
      %vm860 = vmand %vm828, %vm796
      %vm861 = vmand %vm829, %vm797
      %vm862 = vmand %vm830, %vm798
      %vm863 = vmand %vm831, %vm799
      %vm864 = vmand %vm832, %vm800
      %vm865 = vmand %vm833, %vm801
      %vm866 = vmand %vm834, %vm802
      %vm867 = vmand %vm835, %vm803
      %vm868 = vmand %vm836, %vm804
      %vm869 = vmand %vm837, %vm805
      %v870 = vadd.s32 %v556, 16
      %v871 = vadd.s32 %v563, 16
      %v872 = vadd.s32 %v570, 16
      %v873 = vadd.s32 %v577, 16
      %v874 = vadd.s32 %v584, 16
      %v875 = vadd.s32 %v591, 16
      %v876 = vadd.s32 %v598, 16
      %v877 = vadd.s32 %v605, 16
      %v878 = vadd.s32 %v612, 16
      %v879 = vadd.s32 %v619, 16
      %v880 = vadd.s32 %v626, 16
      %v881 = vadd.s32 %v633, 16
      %v882 = vadd.s32 %v640, 16
      %v883 = vadd.s32 %v647, 16
      %v884 = vadd.s32 %v654, 16
      %v885 = vadd.s32 %v661, 16
      %v886 = vadd.s32 %v668, 16
      %v887 = vadd.s32 %v675, 16
      %v888 = vadd.s32 %v682, 16
      %v889 = vadd.s32 %v689, 16
      %v890 = vadd.s32 %v696, 16
      %v891 = vadd.s32 %v703, 16
      %v892 = vadd.s32 %v710, 16
      %v893 = vadd.s32 %v717, 16
      %v894 = vadd.s32 %v724, 16
      %v895 = vadd.s32 %v731, 16
      %v896 = vadd.s32 %v738, 16
      %v897 = vadd.s32 %v745, 16
      %v898 = vadd.s32 %v752, 16
      %v899 = vadd.s32 %v759, 16
      %v900 = vadd.s32 %v766, 16
      %v901 = vadd.s32 %v773, 16
      %v902 = vsel %vm838, %v870, %v556
      %v903 = vsel %vm839, %v871, %v563
      %v904 = vsel %vm840, %v872, %v570
      %v905 = vsel %vm841, %v873, %v577
      %v906 = vsel %vm842, %v874, %v584
      %v907 = vsel %vm843, %v875, %v591
      %v908 = vsel %vm844, %v876, %v598
      %v909 = vsel %vm845, %v877, %v605
      %v910 = vsel %vm846, %v878, %v612
      %v911 = vsel %vm847, %v879, %v619
      %v912 = vsel %vm848, %v880, %v626
      %v913 = vsel %vm849, %v881, %v633
      %v914 = vsel %vm850, %v882, %v640
      %v915 = vsel %vm851, %v883, %v647
      %v916 = vsel %vm852, %v884, %v654
      %v917 = vsel %vm853, %v885, %v661
      %v918 = vsel %vm854, %v886, %v668
      %v919 = vsel %vm855, %v887, %v675
      %v920 = vsel %vm856, %v888, %v682
      %v921 = vsel %vm857, %v889, %v689
      %v922 = vsel %vm858, %v890, %v696
      %v923 = vsel %vm859, %v891, %v703
      %v924 = vsel %vm860, %v892, %v710
      %v925 = vsel %vm861, %v893, %v717
      %v926 = vsel %vm862, %v894, %v724
      %v927 = vsel %vm863, %v895, %v731
      %v928 = vsel %vm864, %v896, %v738
      %v929 = vsel %vm865, %v897, %v745
      %v930 = vsel %vm866, %v898, %v752
      %v931 = vsel %vm867, %v899, %v759
      %v932 = vsel %vm868, %v900, %v766
      %v933 = vsel %vm869, %v901, %v773
      %vm934 = vcmp.gt.s32.totalorder %v902, 0
      %vm935 = vcmp.gt.s32.totalorder %v903, 0
      %vm936 = vcmp.gt.s32.totalorder %v904, 0
      %vm937 = vcmp.gt.s32.totalorder %v905, 0
      %vm938 = vcmp.gt.s32.totalorder %v906, 0
      %vm939 = vcmp.gt.s32.totalorder %v907, 0
      %vm940 = vcmp.gt.s32.totalorder %v908, 0
      %vm941 = vcmp.gt.s32.totalorder %v909, 0
      %vm942 = vcmp.gt.s32.totalorder %v910, 0
      %vm943 = vcmp.gt.s32.totalorder %v911, 0
      %vm944 = vcmp.gt.s32.totalorder %v912, 0
      %vm945 = vcmp.gt.s32.totalorder %v913, 0
      %vm946 = vcmp.gt.s32.totalorder %v914, 0
      %vm947 = vcmp.gt.s32.totalorder %v915, 0
      %vm948 = vcmp.gt.s32.totalorder %v916, 0
      %vm949 = vcmp.gt.s32.totalorder %v917, 0
      %vm950 = vcmp.gt.s32.totalorder %v918, 0
      %vm951 = vcmp.gt.s32.totalorder %v919, 0
      %vm952 = vcmp.gt.s32.totalorder %v920, 0
      %vm953 = vcmp.gt.s32.totalorder %v921, 0
      %vm954 = vcmp.gt.s32.totalorder %v922, 0
      %vm955 = vcmp.gt.s32.totalorder %v923, 0
      %vm956 = vcmp.gt.s32.totalorder %v924, 0
      %vm957 = vcmp.gt.s32.totalorder %v925, 0
      %vm958 = vcmp.gt.s32.totalorder %v926, 0
      %vm959 = vcmp.gt.s32.totalorder %v927, 0
      %vm960 = vcmp.gt.s32.totalorder %v928, 0
      %vm961 = vcmp.gt.s32.totalorder %v929, 0
      %vm962 = vcmp.gt.s32.totalorder %v930, 0
      %vm963 = vcmp.gt.s32.totalorder %v931, 0
      %vm964 = vcmp.gt.s32.totalorder %v932, 0
      %vm965 = vcmp.gt.s32.totalorder %v933, 0
      %vm966 = vcmp.lt.s32.totalorder %v902, 15
      %vm967 = vcmp.lt.s32.totalorder %v903, 15
      %vm968 = vcmp.lt.s32.totalorder %v904, 15
      %vm969 = vcmp.lt.s32.totalorder %v905, 15
      %vm970 = vcmp.lt.s32.totalorder %v906, 15
      %vm971 = vcmp.lt.s32.totalorder %v907, 15
      %vm972 = vcmp.lt.s32.totalorder %v908, 15
      %vm973 = vcmp.lt.s32.totalorder %v909, 15
      %vm974 = vcmp.lt.s32.totalorder %v910, 15
      %vm975 = vcmp.lt.s32.totalorder %v911, 15
      %vm976 = vcmp.lt.s32.totalorder %v912, 15
      %vm977 = vcmp.lt.s32.totalorder %v913, 15
      %vm978 = vcmp.lt.s32.totalorder %v914, 15
      %vm979 = vcmp.lt.s32.totalorder %v915, 15
      %vm980 = vcmp.lt.s32.totalorder %v916, 15
      %vm981 = vcmp.lt.s32.totalorder %v917, 15
      %vm982 = vcmp.lt.s32.totalorder %v918, 15
      %vm983 = vcmp.lt.s32.totalorder %v919, 15
      %vm984 = vcmp.lt.s32.totalorder %v920, 15
      %vm985 = vcmp.lt.s32.totalorder %v921, 15
      %vm986 = vcmp.lt.s32.totalorder %v922, 15
      %vm987 = vcmp.lt.s32.totalorder %v923, 15
      %vm988 = vcmp.lt.s32.totalorder %v924, 15
      %vm989 = vcmp.lt.s32.totalorder %v925, 15
      %vm990 = vcmp.lt.s32.totalorder %v926, 15
      %vm991 = vcmp.lt.s32.totalorder %v927, 15
      %vm992 = vcmp.lt.s32.totalorder %v928, 15
      %vm993 = vcmp.lt.s32.totalorder %v929, 15
      %vm994 = vcmp.lt.s32.totalorder %v930, 15
      %vm995 = vcmp.lt.s32.totalorder %v931, 15
      %vm996 = vcmp.lt.s32.totalorder %v932, 15
      %vm997 = vcmp.lt.s32.totalorder %v933, 15
      %v998 = vld [vmem:[%s4] sm:$0xf]
      %v999 = vld [vmem:[%s5] sm:$0xf]
      %v1000 = vld [vmem:[%s2] sm:$0x1]
      %v1001 = vld [vmem:[%s3] sm:$0x1]
      %vm1002 = vcmask 31744
      %v1003 = vsel %vm1002, %v485, 0.0
      %v1004 = vsel %vm1002, %v486, 0.0
      %v1005 = vadd.f32 %v1003, %v1004
      %v1006 = vsel %vm1002, %v487, 0.0
      %v1007 = vadd.f32 %v1005, %v1006
      %v1008 = vsel %vm1002, %v488, 0.0
      %v1009 = vadd.f32 %v1007, %v1008
      %v1010 = vsel %vm1002, %v489, 0.0
      %v1011 = vadd.f32 %v1009, %v1010
      %v1012 = vsel %vm1002, %v490, 0.0
      %v1013 = vadd.f32 %v1011, %v1012
      %v1014 = vsel %vm1002, %v491, 0.0
      %v1015 = vadd.f32 %v1013, %v1014
      %v1016 = vsel %vm1002, %v492, 0.0
      %v1017 = vadd.f32 %v1015, %v1016
      %v1018 = vsel %vm1002, %v493, 0.0
      %v1019 = vadd.f32 %v1017, %v1018
      %v1020 = vsel %vm1002, %v494, 0.0
      %v1021 = vadd.f32 %v1019, %v1020
      %v1022 = vsel %vm1002, %v495, 0.0
      %v1023 = vadd.f32 %v1021, %v1022
      %v1024 = vsel %vm1002, %v496, 0.0
      %v1025 = vadd.f32 %v1023, %v1024
      %v1026 = vsel %vm1002, %v497, 0.0
      %v1027 = vadd.f32 %v1025, %v1026
      %v1028 = vsel %vm1002, %v498, 0.0
      %v1029 = vadd.f32 %v1027, %v1028
      %v1030 = vsel %vm1002, %v499, 0.0
      %v1031 = vadd.f32 %v1029, %v1030
      %v1032 = vsel %vm1002, %v500, 0.0
      %v1033 = vadd.f32 %v1031, %v1032
      %v1034 = vsel %vm1002, %v501, 0.0
      %v1035 = vadd.f32 %v1033, %v1034
      %v1036 = vsel %vm1002, %v502, 0.0
      %v1037 = vadd.f32 %v1035, %v1036
      %v1038 = vsel %vm1002, %v503, 0.0
      %v1039 = vadd.f32 %v1037, %v1038
      %v1040 = vsel %vm1002, %v504, 0.0
      %v1041 = vadd.f32 %v1039, %v1040
      %v1042 = vsel %vm1002, %v505, 0.0
      %v1043 = vadd.f32 %v1041, %v1042
      %v1044 = vsel %vm1002, %v506, 0.0
      %v1045 = vadd.f32 %v1043, %v1044
      %v1046 = vsel %vm1002, %v507, 0.0
      %v1047 = vadd.f32 %v1045, %v1046
      %v1048 = vsel %vm1002, %v508, 0.0
      %v1049 = vadd.f32 %v1047, %v1048
      %v1050 = vsel %vm1002, %v509, 0.0
      %v1051 = vadd.f32 %v1049, %v1050
      %v1052 = vsel %vm1002, %v510, 0.0
      %v1053 = vadd.f32 %v1051, %v1052
      %v1054 = vsel %vm1002, %v511, 0.0
      %v1055 = vadd.f32 %v1053, %v1054
      %v1056 = vsel %vm1002, %v512, 0.0
      %v1057 = vadd.f32 %v1055, %v1056
      %v1058 = vsel %vm1002, %v513, 0.0
      %v1059 = vadd.f32 %v1057, %v1058
      %v1060 = vsel %vm1002, %v514, 0.0
      %v1061 = vadd.f32 %v1059, %v1060
      %v1062 = vsel %vm1002, %v515, 0.0
      %v1063 = vadd.f32 %v1061, %v1062
      %v1064 = vsel %vm1002, %v516, 0.0
      %v1065 = vadd.f32 %v1063, %v1064
      %v1066 = vrot.slane %v1065, 4
      %v1067 = vadd.f32 %v1065, %v1066
      %v1068 = vrot.slane %v1067, 2
      %v1069 = vadd.f32 %v1067, %v1068
      %v1070 = vrot.slane %v1069, 1
      %v1071 = vadd.f32 %v1069, %v1070
      %v1073 = vsel %vm1002, %v1071, 0
      %vm1075 = vcmask 1043456
      %v1077 = vsel %vm1075, %v998, 0
      %1079 = vmatpush.msra.mxu0 0.0
      %1080 = vmatpush.msra.mxu0 0.0
      %1081 = vmatpush.msra.mxu0 0.0
      %1082 = vmatpush.msra.mxu0 0.0
      %1083 = vmatpush.msra.mxu0 0.0
      %1084 = vmatpush.msra.mxu0 0.0
      %1085 = vmatpush.msra.mxu0 0.0
      %1086 = vmatpush.msra.mxu0 0.0
      %1087 = vmatpush.msra.mxu0 0.0
      %1088 = vmatpush.msra.mxu0 0.0
      %1089 = vmatpush.msra.mxu0 0.0
      %1090 = vmatpush.msra.mxu0 0.0
      %1091 = vmatpush.msra.mxu0 0.0
      %1092 = vmatpush.msra.mxu0 0.0
      %1093 = vmatpush.msra.mxu0 0.0
      %1094 = vmatpush.msra.mxu0 %v1077
      %1095 = vmatmul.f32.gmra.mxu0 %v1073
      %v1096 = vpop.f32.mrf.mxu0
      %v1097 = vadd.f32 0.0, %v1096
      %1098 = vdwg.mxu0
      %v1099 = vmul.f32 %v1097, 0.00390625
      %v1101 = vsel %vm1002, %v1099, 0
      %v1104 = vsel %vm1075, %v999, 0
      %1106 = vmatpush.msra.mxu0 0.0
      %1107 = vmatpush.msra.mxu0 0.0
      %1108 = vmatpush.msra.mxu0 0.0
      %1109 = vmatpush.msra.mxu0 0.0
      %1110 = vmatpush.msra.mxu0 0.0
      %1111 = vmatpush.msra.mxu0 0.0
      %1112 = vmatpush.msra.mxu0 0.0
      %1113 = vmatpush.msra.mxu0 0.0
      %1114 = vmatpush.msra.mxu0 0.0
      %1115 = vmatpush.msra.mxu0 0.0
      %1116 = vmatpush.msra.mxu0 0.0
      %1117 = vmatpush.msra.mxu0 0.0
      %1118 = vmatpush.msra.mxu0 0.0
      %1119 = vmatpush.msra.mxu0 0.0
      %1120 = vmatpush.msra.mxu0 0.0
      %1121 = vmatpush.msra.mxu0 %v1104
      %1122 = vmatmul.f32.gmra.mxu0 %v1101
      %v1123 = vpop.f32.mrf.mxu0
      %v1124 = vadd.f32 0.0, %v1123
      %1125 = vdwg.mxu0
      %v1126 = vperm.slane %v1124, 0
      %v1127 = vsub.f32 %v485, %v1126
      %v1128 = vsub.f32 %v486, %v1126
      %v1129 = vsub.f32 %v487, %v1126
      %v1130 = vsub.f32 %v488, %v1126
      %v1131 = vsub.f32 %v489, %v1126
      %v1132 = vsub.f32 %v490, %v1126
      %v1133 = vsub.f32 %v491, %v1126
      %v1134 = vsub.f32 %v492, %v1126
      %v1135 = vsub.f32 %v493, %v1126
      %v1136 = vsub.f32 %v494, %v1126
      %v1137 = vsub.f32 %v495, %v1126
      %v1138 = vsub.f32 %v496, %v1126
      %v1139 = vsub.f32 %v497, %v1126
      %v1140 = vsub.f32 %v498, %v1126
      %v1141 = vsub.f32 %v499, %v1126
      %v1142 = vsub.f32 %v500, %v1126
      %v1143 = vsub.f32 %v501, %v1126
      %v1144 = vsub.f32 %v502, %v1126
      %v1145 = vsub.f32 %v503, %v1126
      %v1146 = vsub.f32 %v504, %v1126
      %v1147 = vsub.f32 %v505, %v1126
      %v1148 = vsub.f32 %v506, %v1126
      %v1149 = vsub.f32 %v507, %v1126
      %v1150 = vsub.f32 %v508, %v1126
      %v1151 = vsub.f32 %v509, %v1126
      %v1152 = vsub.f32 %v510, %v1126
      %v1153 = vsub.f32 %v511, %v1126
      %v1154 = vsub.f32 %v512, %v1126
      %v1155 = vsub.f32 %v513, %v1126
      %v1156 = vsub.f32 %v514, %v1126
      %v1157 = vsub.f32 %v515, %v1126
      %v1158 = vsub.f32 %v516, %v1126
      %v1159 = vmul.f32 %v1127, %v1127
      %v1160 = vmul.f32 %v1128, %v1128
      %v1161 = vmul.f32 %v1129, %v1129
      %v1162 = vmul.f32 %v1130, %v1130
      %v1163 = vmul.f32 %v1131, %v1131
      %v1164 = vmul.f32 %v1132, %v1132
      %v1165 = vmul.f32 %v1133, %v1133
      %v1166 = vmul.f32 %v1134, %v1134
      %v1167 = vmul.f32 %v1135, %v1135
      %v1168 = vmul.f32 %v1136, %v1136
      %v1169 = vmul.f32 %v1137, %v1137
      %v1170 = vmul.f32 %v1138, %v1138
      %v1171 = vmul.f32 %v1139, %v1139
      %v1172 = vmul.f32 %v1140, %v1140
      %v1173 = vmul.f32 %v1141, %v1141
      %v1174 = vmul.f32 %v1142, %v1142
      %v1175 = vmul.f32 %v1143, %v1143
      %v1176 = vmul.f32 %v1144, %v1144
      %v1177 = vmul.f32 %v1145, %v1145
      %v1178 = vmul.f32 %v1146, %v1146
      %v1179 = vmul.f32 %v1147, %v1147
      %v1180 = vmul.f32 %v1148, %v1148
      %v1181 = vmul.f32 %v1149, %v1149
      %v1182 = vmul.f32 %v1150, %v1150
      %v1183 = vmul.f32 %v1151, %v1151
      %v1184 = vmul.f32 %v1152, %v1152
      %v1185 = vmul.f32 %v1153, %v1153
      %v1186 = vmul.f32 %v1154, %v1154
      %v1187 = vmul.f32 %v1155, %v1155
      %v1188 = vmul.f32 %v1156, %v1156
      %v1189 = vmul.f32 %v1157, %v1157
      %v1190 = vmul.f32 %v1158, %v1158
      %v1191 = vsel %vm1002, %v1159, 0.0
      %v1192 = vsel %vm1002, %v1160, 0.0
      %v1193 = vadd.f32 %v1191, %v1192
      %v1194 = vsel %vm1002, %v1161, 0.0
      %v1195 = vadd.f32 %v1193, %v1194
      %v1196 = vsel %vm1002, %v1162, 0.0
      %v1197 = vadd.f32 %v1195, %v1196
      %v1198 = vsel %vm1002, %v1163, 0.0
      %v1199 = vadd.f32 %v1197, %v1198
      %v1200 = vsel %vm1002, %v1164, 0.0
      %v1201 = vadd.f32 %v1199, %v1200
      %v1202 = vsel %vm1002, %v1165, 0.0
      %v1203 = vadd.f32 %v1201, %v1202
      %v1204 = vsel %vm1002, %v1166, 0.0
      %v1205 = vadd.f32 %v1203, %v1204
      %v1206 = vsel %vm1002, %v1167, 0.0
      %v1207 = vadd.f32 %v1205, %v1206
      %v1208 = vsel %vm1002, %v1168, 0.0
      %v1209 = vadd.f32 %v1207, %v1208
      %v1210 = vsel %vm1002, %v1169, 0.0
      %v1211 = vadd.f32 %v1209, %v1210
      %v1212 = vsel %vm1002, %v1170, 0.0
      %v1213 = vadd.f32 %v1211, %v1212
      %v1214 = vsel %vm1002, %v1171, 0.0
      %v1215 = vadd.f32 %v1213, %v1214
      %v1216 = vsel %vm1002, %v1172, 0.0
      %v1217 = vadd.f32 %v1215, %v1216
      %v1218 = vsel %vm1002, %v1173, 0.0
      %v1219 = vadd.f32 %v1217, %v1218
      %v1220 = vsel %vm1002, %v1174, 0.0
      %v1221 = vadd.f32 %v1219, %v1220
      %v1222 = vsel %vm1002, %v1175, 0.0
      %v1223 = vadd.f32 %v1221, %v1222
      %v1224 = vsel %vm1002, %v1176, 0.0
      %v1225 = vadd.f32 %v1223, %v1224
      %v1226 = vsel %vm1002, %v1177, 0.0
      %v1227 = vadd.f32 %v1225, %v1226
      %v1228 = vsel %vm1002, %v1178, 0.0
      %v1229 = vadd.f32 %v1227, %v1228
      %v1230 = vsel %vm1002, %v1179, 0.0
      %v1231 = vadd.f32 %v1229, %v1230
      %v1232 = vsel %vm1002, %v1180, 0.0
      %v1233 = vadd.f32 %v1231, %v1232
      %v1234 = vsel %vm1002, %v1181, 0.0
      %v1235 = vadd.f32 %v1233, %v1234
      %v1236 = vsel %vm1002, %v1182, 0.0
      %v1237 = vadd.f32 %v1235, %v1236
      %v1238 = vsel %vm1002, %v1183, 0.0
      %v1239 = vadd.f32 %v1237, %v1238
      %v1240 = vsel %vm1002, %v1184, 0.0
      %v1241 = vadd.f32 %v1239, %v1240
      %v1242 = vsel %vm1002, %v1185, 0.0
      %v1243 = vadd.f32 %v1241, %v1242
      %v1244 = vsel %vm1002, %v1186, 0.0
      %v1245 = vadd.f32 %v1243, %v1244
      %v1246 = vsel %vm1002, %v1187, 0.0
      %v1247 = vadd.f32 %v1245, %v1246
      %v1248 = vsel %vm1002, %v1188, 0.0
      %v1249 = vadd.f32 %v1247, %v1248
      %v1250 = vsel %vm1002, %v1189, 0.0
      %v1251 = vadd.f32 %v1249, %v1250
      %v1252 = vsel %vm1002, %v1190, 0.0
      %v1253 = vadd.f32 %v1251, %v1252
      %v1254 = vrot.slane %v1253, 4
      %v1255 = vadd.f32 %v1253, %v1254
      %v1256 = vrot.slane %v1255, 2
      %v1257 = vadd.f32 %v1255, %v1256
      %v1258 = vrot.slane %v1257, 1
      %v1259 = vadd.f32 %v1257, %v1258
      %v1261 = vsel %vm1002, %v1259, 0
      %1263 = vmatpush.msra.mxu0 0.0
      %1264 = vmatpush.msra.mxu0 0.0
      %1265 = vmatpush.msra.mxu0 0.0
      %1266 = vmatpush.msra.mxu0 0.0
      %1267 = vmatpush.msra.mxu0 0.0
      %1268 = vmatpush.msra.mxu0 0.0
      %1269 = vmatpush.msra.mxu0 0.0
      %1270 = vmatpush.msra.mxu0 0.0
      %1271 = vmatpush.msra.mxu0 0.0
      %1272 = vmatpush.msra.mxu0 0.0
      %1273 = vmatpush.msra.mxu0 0.0
      %1274 = vmatpush.msra.mxu0 0.0
      %1275 = vmatpush.msra.mxu0 0.0
      %1276 = vmatpush.msra.mxu0 0.0
      %1277 = vmatpush.msra.mxu0 0.0
      %1278 = vmatpush.msra.mxu0 %v1077
      %1279 = vmatmul.f32.gmra.mxu0 %v1261
      %v1280 = vpop.f32.mrf.mxu0
      %v1281 = vadd.f32 0.0, %v1280
      %1282 = vdwg.mxu0
      %v1283 = vmul.f32 %v1281, 0.00390625
      %v1285 = vsel %vm1002, %v1283, 0
      %1287 = vmatpush.msra.mxu0 0.0
      %1288 = vmatpush.msra.mxu0 0.0
      %1289 = vmatpush.msra.mxu0 0.0
      %1290 = vmatpush.msra.mxu0 0.0
      %1291 = vmatpush.msra.mxu0 0.0
      %1292 = vmatpush.msra.mxu0 0.0
      %1293 = vmatpush.msra.mxu0 0.0
      %1294 = vmatpush.msra.mxu0 0.0
      %1295 = vmatpush.msra.mxu0 0.0
      %1296 = vmatpush.msra.mxu0 0.0
      %1297 = vmatpush.msra.mxu0 0.0
      %1298 = vmatpush.msra.mxu0 0.0
      %1299 = vmatpush.msra.mxu0 0.0
      %1300 = vmatpush.msra.mxu0 0.0
      %1301 = vmatpush.msra.mxu0 0.0
      %1302 = vmatpush.msra.mxu0 %v1104
      %1303 = vmatmul.f32.gmra.mxu0 %v1285
      %v1304 = vpop.f32.mrf.mxu0
      %v1305 = vadd.f32 1e-05, %v1304
      %1306 = vdwg.mxu0
      %v1307 = vrsqrt.pop %v1305
      %v1308 = vmul.f32 %v1307, %v1305
      %v1309 = vmul.f32 %v1308, %v1307
      %v1310 = vmul.f32 0.5, %v1309
      %v1311 = vsub.f32 1.5, %v1310
      %v1312 = vmul.f32 %v1307, %v1311
      %vm1313 = vweird.f32 %v1305
      %vm1314 = vweird.f32 %v1307
      %vm1315 = vmor %vm1313, %vm1314
      %v1316 = vsel %vm1315, %v1307, %v1312
      %v1317 = vmul.f32 %v1316, %v1000
      %v1318 = vperm.slane %v1317, 0
      %v1319 = vmul.f32 %v1127, %v1318
      %v1320 = vmul.f32 %v1128, %v1318
      %v1321 = vmul.f32 %v1129, %v1318
      %v1322 = vmul.f32 %v1130, %v1318
      %v1323 = vmul.f32 %v1131, %v1318
      %v1324 = vmul.f32 %v1132, %v1318
      %v1325 = vmul.f32 %v1133, %v1318
      %v1326 = vmul.f32 %v1134, %v1318
      %v1327 = vmul.f32 %v1135, %v1318
      %v1328 = vmul.f32 %v1136, %v1318
      %v1329 = vmul.f32 %v1137, %v1318
      %v1330 = vmul.f32 %v1138, %v1318
      %v1331 = vmul.f32 %v1139, %v1318
      %v1332 = vmul.f32 %v1140, %v1318
      %v1333 = vmul.f32 %v1141, %v1318
      %v1334 = vmul.f32 %v1142, %v1318
      %v1335 = vmul.f32 %v1143, %v1318
      %v1336 = vmul.f32 %v1144, %v1318
      %v1337 = vmul.f32 %v1145, %v1318
      %v1338 = vmul.f32 %v1146, %v1318
      %v1339 = vmul.f32 %v1147, %v1318
      %v1340 = vmul.f32 %v1148, %v1318
      %v1341 = vmul.f32 %v1149, %v1318
      %v1342 = vmul.f32 %v1150, %v1318
      %v1343 = vmul.f32 %v1151, %v1318
      %v1344 = vmul.f32 %v1152, %v1318
      %v1345 = vmul.f32 %v1153, %v1318
      %v1346 = vmul.f32 %v1154, %v1318
      %v1347 = vmul.f32 %v1155, %v1318
      %v1348 = vmul.f32 %v1156, %v1318
      %v1349 = vmul.f32 %v1157, %v1318
      %v1350 = vmul.f32 %v1158, %v1318
      %v1352 = vperm.slane %v1001, 0
      %v1354 = vadd.f32 %v1319, %v1352
      %v1355 = vadd.f32 %v1320, %v1352
      %v1356 = vadd.f32 %v1321, %v1352
      %v1357 = vadd.f32 %v1322, %v1352
      %v1358 = vadd.f32 %v1323, %v1352
      %v1359 = vadd.f32 %v1324, %v1352
      %v1360 = vadd.f32 %v1325, %v1352
      %v1361 = vadd.f32 %v1326, %v1352
      %v1362 = vadd.f32 %v1327, %v1352
      %v1363 = vadd.f32 %v1328, %v1352
      %v1364 = vadd.f32 %v1329, %v1352
      %v1365 = vadd.f32 %v1330, %v1352
      %v1366 = vadd.f32 %v1331, %v1352
      %v1367 = vadd.f32 %v1332, %v1352
      %v1368 = vadd.f32 %v1333, %v1352
      %v1369 = vadd.f32 %v1334, %v1352
      %v1370 = vadd.f32 %v1335, %v1352
      %v1371 = vadd.f32 %v1336, %v1352
      %v1372 = vadd.f32 %v1337, %v1352
      %v1373 = vadd.f32 %v1338, %v1352
      %v1374 = vadd.f32 %v1339, %v1352
      %v1375 = vadd.f32 %v1340, %v1352
      %v1376 = vadd.f32 %v1341, %v1352
      %v1377 = vadd.f32 %v1342, %v1352
      %v1378 = vadd.f32 %v1343, %v1352
      %v1379 = vadd.f32 %v1344, %v1352
      %v1380 = vadd.f32 %v1345, %v1352
      %v1381 = vadd.f32 %v1346, %v1352
      %v1382 = vadd.f32 %v1347, %v1352
      %v1383 = vadd.f32 %v1348, %v1352
      %v1384 = vadd.f32 %v1349, %v1352
      %v1385 = vadd.f32 %v1350, %v1352
      %v1386 = vxor.u32 %v1354, 2147483648
      %v1387 = vxor.u32 %v1355, 2147483648
      %v1388 = vxor.u32 %v1356, 2147483648
      %v1389 = vxor.u32 %v1357, 2147483648
      %v1390 = vxor.u32 %v1358, 2147483648
      %v1391 = vxor.u32 %v1359, 2147483648
      %v1392 = vxor.u32 %v1360, 2147483648
      %v1393 = vxor.u32 %v1361, 2147483648
      %v1394 = vxor.u32 %v1362, 2147483648
      %v1395 = vxor.u32 %v1363, 2147483648
      %v1396 = vxor.u32 %v1364, 2147483648
      %v1397 = vxor.u32 %v1365, 2147483648
      %v1398 = vxor.u32 %v1366, 2147483648
      %v1399 = vxor.u32 %v1367, 2147483648
      %v1400 = vxor.u32 %v1368, 2147483648
      %v1401 = vxor.u32 %v1369, 2147483648
      %v1402 = vxor.u32 %v1370, 2147483648
      %v1403 = vxor.u32 %v1371, 2147483648
      %v1404 = vxor.u32 %v1372, 2147483648
      %v1405 = vxor.u32 %v1373, 2147483648
      %v1406 = vxor.u32 %v1374, 2147483648
      %v1407 = vxor.u32 %v1375, 2147483648
      %v1408 = vxor.u32 %v1376, 2147483648
      %v1409 = vxor.u32 %v1377, 2147483648
      %v1410 = vxor.u32 %v1378, 2147483648
      %v1411 = vxor.u32 %v1379, 2147483648
      %v1412 = vxor.u32 %v1380, 2147483648
      %v1413 = vxor.u32 %v1381, 2147483648
      %v1414 = vxor.u32 %v1382, 2147483648
      %v1415 = vxor.u32 %v1383, 2147483648
      %v1416 = vxor.u32 %v1384, 2147483648
      %v1417 = vxor.u32 %v1385, 2147483648
      %v1418 = vmul.f32 %v1386, 1.442695
      %v1419 = vpow.pop %v1418
      %v1420 = vmul.f32 %v1387, 1.442695
      %v1421 = vpow.pop %v1420
      %v1422 = vmul.f32 %v1388, 1.442695
      %v1423 = vpow.pop %v1422
      %v1424 = vmul.f32 %v1389, 1.442695
      %v1425 = vpow.pop %v1424
      %v1426 = vmul.f32 %v1390, 1.442695
      %v1427 = vpow.pop %v1426
      %v1428 = vmul.f32 %v1391, 1.442695
      %v1429 = vpow.pop %v1428
      %v1430 = vmul.f32 %v1392, 1.442695
      %v1431 = vpow.pop %v1430
      %v1432 = vmul.f32 %v1393, 1.442695
      %v1433 = vpow.pop %v1432
      %v1434 = vmul.f32 %v1394, 1.442695
      %v1435 = vpow.pop %v1434
      %v1436 = vmul.f32 %v1395, 1.442695
      %v1437 = vpow.pop %v1436
      %v1438 = vmul.f32 %v1396, 1.442695
      %v1439 = vpow.pop %v1438
      %v1440 = vmul.f32 %v1397, 1.442695
      %v1441 = vpow.pop %v1440
      %v1442 = vmul.f32 %v1398, 1.442695
      %v1443 = vpow.pop %v1442
      %v1444 = vmul.f32 %v1399, 1.442695
      %v1445 = vpow.pop %v1444
      %v1446 = vmul.f32 %v1400, 1.442695
      %v1447 = vpow.pop %v1446
      %v1448 = vmul.f32 %v1401, 1.442695
      %v1449 = vpow.pop %v1448
      %v1450 = vmul.f32 %v1402, 1.442695
      %v1451 = vpow.pop %v1450
      %v1452 = vmul.f32 %v1403, 1.442695
      %v1453 = vpow.pop %v1452
      %v1454 = vmul.f32 %v1404, 1.442695
      %v1455 = vpow.pop %v1454
      %v1456 = vmul.f32 %v1405, 1.442695
      %v1457 = vpow.pop %v1456
      %v1458 = vmul.f32 %v1406, 1.442695
      %v1459 = vpow.pop %v1458
      %v1460 = vmul.f32 %v1407, 1.442695
      %v1461 = vpow.pop %v1460
      %v1462 = vmul.f32 %v1408, 1.442695
      %v1463 = vpow.pop %v1462
      %v1464 = vmul.f32 %v1409, 1.442695
      %v1465 = vpow.pop %v1464
      %v1466 = vmul.f32 %v1410, 1.442695
      %v1467 = vpow.pop %v1466
      %v1468 = vmul.f32 %v1411, 1.442695
      %v1469 = vpow.pop %v1468
      %v1470 = vmul.f32 %v1412, 1.442695
      %v1471 = vpow.pop %v1470
      %v1472 = vmul.f32 %v1413, 1.442695
      %v1473 = vpow.pop %v1472
      %v1474 = vmul.f32 %v1414, 1.442695
      %v1475 = vpow.pop %v1474
      %v1476 = vmul.f32 %v1415, 1.442695
      %v1477 = vpow.pop %v1476
      %v1478 = vmul.f32 %v1416, 1.442695
      %v1479 = vpow.pop %v1478
      %v1480 = vmul.f32 %v1417, 1.442695
      %v1481 = vpow.pop %v1480
      %v1482 = vadd.f32 %v1419, 1.0
      %v1483 = vadd.f32 %v1421, 1.0
      %v1484 = vadd.f32 %v1423, 1.0
      %v1485 = vadd.f32 %v1425, 1.0
      %v1486 = vadd.f32 %v1427, 1.0
      %v1487 = vadd.f32 %v1429, 1.0
      %v1488 = vadd.f32 %v1431, 1.0
      %v1489 = vadd.f32 %v1433, 1.0
      %v1490 = vadd.f32 %v1435, 1.0
      %v1491 = vadd.f32 %v1437, 1.0
      %v1492 = vadd.f32 %v1439, 1.0
      %v1493 = vadd.f32 %v1441, 1.0
      %v1494 = vadd.f32 %v1443, 1.0
      %v1495 = vadd.f32 %v1445, 1.0
      %v1496 = vadd.f32 %v1447, 1.0
      %v1497 = vadd.f32 %v1449, 1.0
      %v1498 = vadd.f32 %v1451, 1.0
      %v1499 = vadd.f32 %v1453, 1.0
      %v1500 = vadd.f32 %v1455, 1.0
      %v1501 = vadd.f32 %v1457, 1.0
      %v1502 = vadd.f32 %v1459, 1.0
      %v1503 = vadd.f32 %v1461, 1.0
      %v1504 = vadd.f32 %v1463, 1.0
      %v1505 = vadd.f32 %v1465, 1.0
      %v1506 = vadd.f32 %v1467, 1.0
      %v1507 = vadd.f32 %v1469, 1.0
      %v1508 = vadd.f32 %v1471, 1.0
      %v1509 = vadd.f32 %v1473, 1.0
      %v1510 = vadd.f32 %v1475, 1.0
      %v1511 = vadd.f32 %v1477, 1.0
      %v1512 = vadd.f32 %v1479, 1.0
      %v1513 = vadd.f32 %v1481, 1.0
      %v1514 = vrcp.pop %v1482
      %v1515 = vmul.f32 %v1482, %v1514
      %v1516 = vsub.f32 1.0, %v1515
      %v1517 = vmul.f32 %v1514, %v1516
      %v1518 = vadd.f32 %v1514, %v1517
      %vm1519 = vweird.f32 %v1482
      %vm1520 = vweird.f32 %v1514
      %vm1521 = vmor %vm1519, %vm1520
      %v1522 = vsel %vm1521, %v1514, %v1518
      %v1523 = vand.u32 2147483647, %v1482
      %vm1524 = vcmp.eq.f32.partialorder %v1523, 8.507059e+37
      %v1525 = vand.u32 %v1482, 2147483648
      %v1526 = vor.u32 1.1754944e-38, %v1525
      %v1527 = vsel %vm1524, %v1526, %v1522
      %v1528 = vmul.f32 1.0, %v1527
      %v1529 = vrcp.pop %v1483
      %v1530 = vmul.f32 %v1483, %v1529
      %v1531 = vsub.f32 1.0, %v1530
      %v1532 = vmul.f32 %v1529, %v1531
      %v1533 = vadd.f32 %v1529, %v1532
      %vm1534 = vweird.f32 %v1483
      %vm1535 = vweird.f32 %v1529
      %vm1536 = vmor %vm1534, %vm1535
      %v1537 = vsel %vm1536, %v1529, %v1533
      %v1538 = vand.u32 2147483647, %v1483
      %vm1539 = vcmp.eq.f32.partialorder %v1538, 8.507059e+37
      %v1540 = vand.u32 %v1483, 2147483648
      %v1541 = vor.u32 1.1754944e-38, %v1540
      %v1542 = vsel %vm1539, %v1541, %v1537
      %v1543 = vmul.f32 1.0, %v1542
      %v1544 = vrcp.pop %v1484
      %v1545 = vmul.f32 %v1484, %v1544
      %v1546 = vsub.f32 1.0, %v1545
      %v1547 = vmul.f32 %v1544, %v1546
      %v1548 = vadd.f32 %v1544, %v1547
      %vm1549 = vweird.f32 %v1484
      %vm1550 = vweird.f32 %v1544
      %vm1551 = vmor %vm1549, %vm1550
      %v1552 = vsel %vm1551, %v1544, %v1548
      %v1553 = vand.u32 2147483647, %v1484
      %vm1554 = vcmp.eq.f32.partialorder %v1553, 8.507059e+37
      %v1555 = vand.u32 %v1484, 2147483648
      %v1556 = vor.u32 1.1754944e-38, %v1555
      %v1557 = vsel %vm1554, %v1556, %v1552
      %v1558 = vmul.f32 1.0, %v1557
      %v1559 = vrcp.pop %v1485
      %v1560 = vmul.f32 %v1485, %v1559
      %v1561 = vsub.f32 1.0, %v1560
      %v1562 = vmul.f32 %v1559, %v1561
      %v1563 = vadd.f32 %v1559, %v1562
      %vm1564 = vweird.f32 %v1485
      %vm1565 = vweird.f32 %v1559
      %vm1566 = vmor %vm1564, %vm1565
      %v1567 = vsel %vm1566, %v1559, %v1563
      %v1568 = vand.u32 2147483647, %v1485
      %vm1569 = vcmp.eq.f32.partialorder %v1568, 8.507059e+37
      %v1570 = vand.u32 %v1485, 2147483648
      %v1571 = vor.u32 1.1754944e-38, %v1570
      %v1572 = vsel %vm1569, %v1571, %v1567
      %v1573 = vmul.f32 1.0, %v1572
      %v1574 = vrcp.pop %v1486
      %v1575 = vmul.f32 %v1486, %v1574
      %v1576 = vsub.f32 1.0, %v1575
      %v1577 = vmul.f32 %v1574, %v1576
      %v1578 = vadd.f32 %v1574, %v1577
      %vm1579 = vweird.f32 %v1486
      %vm1580 = vweird.f32 %v1574
      %vm1581 = vmor %vm1579, %vm1580
      %v1582 = vsel %vm1581, %v1574, %v1578
      %v1583 = vand.u32 2147483647, %v1486
      %vm1584 = vcmp.eq.f32.partialorder %v1583, 8.507059e+37
      %v1585 = vand.u32 %v1486, 2147483648
      %v1586 = vor.u32 1.1754944e-38, %v1585
      %v1587 = vsel %vm1584, %v1586, %v1582
      %v1588 = vmul.f32 1.0, %v1587
      %v1589 = vrcp.pop %v1487
      %v1590 = vmul.f32 %v1487, %v1589
      %v1591 = vsub.f32 1.0, %v1590
      %v1592 = vmul.f32 %v1589, %v1591
      %v1593 = vadd.f32 %v1589, %v1592
      %vm1594 = vweird.f32 %v1487
      %vm1595 = vweird.f32 %v1589
      %vm1596 = vmor %vm1594, %vm1595
      %v1597 = vsel %vm1596, %v1589, %v1593
      %v1598 = vand.u32 2147483647, %v1487
      %vm1599 = vcmp.eq.f32.partialorder %v1598, 8.507059e+37
      %v1600 = vand.u32 %v1487, 2147483648
      %v1601 = vor.u32 1.1754944e-38, %v1600
      %v1602 = vsel %vm1599, %v1601, %v1597
      %v1603 = vmul.f32 1.0, %v1602
      %v1604 = vrcp.pop %v1488
      %v1605 = vmul.f32 %v1488, %v1604
      %v1606 = vsub.f32 1.0, %v1605
      %v1607 = vmul.f32 %v1604, %v1606
      %v1608 = vadd.f32 %v1604, %v1607
      %vm1609 = vweird.f32 %v1488
      %vm1610 = vweird.f32 %v1604
      %vm1611 = vmor %vm1609, %vm1610
      %v1612 = vsel %vm1611, %v1604, %v1608
      %v1613 = vand.u32 2147483647, %v1488
      %vm1614 = vcmp.eq.f32.partialorder %v1613, 8.507059e+37
      %v1615 = vand.u32 %v1488, 2147483648
      %v1616 = vor.u32 1.1754944e-38, %v1615
      %v1617 = vsel %vm1614, %v1616, %v1612
      %v1618 = vmul.f32 1.0, %v1617
      %v1619 = vrcp.pop %v1489
      %v1620 = vmul.f32 %v1489, %v1619
      %v1621 = vsub.f32 1.0, %v1620
      %v1622 = vmul.f32 %v1619, %v1621
      %v1623 = vadd.f32 %v1619, %v1622
      %vm1624 = vweird.f32 %v1489
      %vm1625 = vweird.f32 %v1619
      %vm1626 = vmor %vm1624, %vm1625
      %v1627 = vsel %vm1626, %v1619, %v1623
      %v1628 = vand.u32 2147483647, %v1489
      %vm1629 = vcmp.eq.f32.partialorder %v1628, 8.507059e+37
      %v1630 = vand.u32 %v1489, 2147483648
      %v1631 = vor.u32 1.1754944e-38, %v1630
      %v1632 = vsel %vm1629, %v1631, %v1627
      %v1633 = vmul.f32 1.0, %v1632
      %v1634 = vrcp.pop %v1490
      %v1635 = vmul.f32 %v1490, %v1634
      %v1636 = vsub.f32 1.0, %v1635
      %v1637 = vmul.f32 %v1634, %v1636
      %v1638 = vadd.f32 %v1634, %v1637
      %vm1639 = vweird.f32 %v1490
      %vm1640 = vweird.f32 %v1634
      %vm1641 = vmor %vm1639, %vm1640
      %v1642 = vsel %vm1641, %v1634, %v1638
      %v1643 = vand.u32 2147483647, %v1490
      %vm1644 = vcmp.eq.f32.partialorder %v1643, 8.507059e+37
      %v1645 = vand.u32 %v1490, 2147483648
      %v1646 = vor.u32 1.1754944e-38, %v1645
      %v1647 = vsel %vm1644, %v1646, %v1642
      %v1648 = vmul.f32 1.0, %v1647
      %v1649 = vrcp.pop %v1491
      %v1650 = vmul.f32 %v1491, %v1649
      %v1651 = vsub.f32 1.0, %v1650
      %v1652 = vmul.f32 %v1649, %v1651
      %v1653 = vadd.f32 %v1649, %v1652
      %vm1654 = vweird.f32 %v1491
      %vm1655 = vweird.f32 %v1649
      %vm1656 = vmor %vm1654, %vm1655
      %v1657 = vsel %vm1656, %v1649, %v1653
      %v1658 = vand.u32 2147483647, %v1491
      %vm1659 = vcmp.eq.f32.partialorder %v1658, 8.507059e+37
      %v1660 = vand.u32 %v1491, 2147483648
      %v1661 = vor.u32 1.1754944e-38, %v1660
      %v1662 = vsel %vm1659, %v1661, %v1657
      %v1663 = vmul.f32 1.0, %v1662
      %v1664 = vrcp.pop %v1492
      %v1665 = vmul.f32 %v1492, %v1664
      %v1666 = vsub.f32 1.0, %v1665
      %v1667 = vmul.f32 %v1664, %v1666
      %v1668 = vadd.f32 %v1664, %v1667
      %vm1669 = vweird.f32 %v1492
      %vm1670 = vweird.f32 %v1664
      %vm1671 = vmor %vm1669, %vm1670
      %v1672 = vsel %vm1671, %v1664, %v1668
      %v1673 = vand.u32 2147483647, %v1492
      %vm1674 = vcmp.eq.f32.partialorder %v1673, 8.507059e+37
      %v1675 = vand.u32 %v1492, 2147483648
      %v1676 = vor.u32 1.1754944e-38, %v1675
      %v1677 = vsel %vm1674, %v1676, %v1672
      %v1678 = vmul.f32 1.0, %v1677
      %v1679 = vrcp.pop %v1493
      %v1680 = vmul.f32 %v1493, %v1679
      %v1681 = vsub.f32 1.0, %v1680
      %v1682 = vmul.f32 %v1679, %v1681
      %v1683 = vadd.f32 %v1679, %v1682
      %vm1684 = vweird.f32 %v1493
      %vm1685 = vweird.f32 %v1679
      %vm1686 = vmor %vm1684, %vm1685
      %v1687 = vsel %vm1686, %v1679, %v1683
      %v1688 = vand.u32 2147483647, %v1493
      %vm1689 = vcmp.eq.f32.partialorder %v1688, 8.507059e+37
      %v1690 = vand.u32 %v1493, 2147483648
      %v1691 = vor.u32 1.1754944e-38, %v1690
      %v1692 = vsel %vm1689, %v1691, %v1687
      %v1693 = vmul.f32 1.0, %v1692
      %v1694 = vrcp.pop %v1494
      %v1695 = vmul.f32 %v1494, %v1694
      %v1696 = vsub.f32 1.0, %v1695
      %v1697 = vmul.f32 %v1694, %v1696
      %v1698 = vadd.f32 %v1694, %v1697
      %vm1699 = vweird.f32 %v1494
      %vm1700 = vweird.f32 %v1694
      %vm1701 = vmor %vm1699, %vm1700
      %v1702 = vsel %vm1701, %v1694, %v1698
      %v1703 = vand.u32 2147483647, %v1494
      %vm1704 = vcmp.eq.f32.partialorder %v1703, 8.507059e+37
      %v1705 = vand.u32 %v1494, 2147483648
      %v1706 = vor.u32 1.1754944e-38, %v1705
      %v1707 = vsel %vm1704, %v1706, %v1702
      %v1708 = vmul.f32 1.0, %v1707
      %v1709 = vrcp.pop %v1495
      %v1710 = vmul.f32 %v1495, %v1709
      %v1711 = vsub.f32 1.0, %v1710
      %v1712 = vmul.f32 %v1709, %v1711
      %v1713 = vadd.f32 %v1709, %v1712
      %vm1714 = vweird.f32 %v1495
      %vm1715 = vweird.f32 %v1709
      %vm1716 = vmor %vm1714, %vm1715
      %v1717 = vsel %vm1716, %v1709, %v1713
      %v1718 = vand.u32 2147483647, %v1495
      %vm1719 = vcmp.eq.f32.partialorder %v1718, 8.507059e+37
      %v1720 = vand.u32 %v1495, 2147483648
      %v1721 = vor.u32 1.1754944e-38, %v1720
      %v1722 = vsel %vm1719, %v1721, %v1717
      %v1723 = vmul.f32 1.0, %v1722
      %v1724 = vrcp.pop %v1496
      %v1725 = vmul.f32 %v1496, %v1724
      %v1726 = vsub.f32 1.0, %v1725
      %v1727 = vmul.f32 %v1724, %v1726
      %v1728 = vadd.f32 %v1724, %v1727
      %vm1729 = vweird.f32 %v1496
      %vm1730 = vweird.f32 %v1724
      %vm1731 = vmor %vm1729, %vm1730
      %v1732 = vsel %vm1731, %v1724, %v1728
      %v1733 = vand.u32 2147483647, %v1496
      %vm1734 = vcmp.eq.f32.partialorder %v1733, 8.507059e+37
      %v1735 = vand.u32 %v1496, 2147483648
      %v1736 = vor.u32 1.1754944e-38, %v1735
      %v1737 = vsel %vm1734, %v1736, %v1732
      %v1738 = vmul.f32 1.0, %v1737
      %v1739 = vrcp.pop %v1497
      %v1740 = vmul.f32 %v1497, %v1739
      %v1741 = vsub.f32 1.0, %v1740
      %v1742 = vmul.f32 %v1739, %v1741
      %v1743 = vadd.f32 %v1739, %v1742
      %vm1744 = vweird.f32 %v1497
      %vm1745 = vweird.f32 %v1739
      %vm1746 = vmor %vm1744, %vm1745
      %v1747 = vsel %vm1746, %v1739, %v1743
      %v1748 = vand.u32 2147483647, %v1497
      %vm1749 = vcmp.eq.f32.partialorder %v1748, 8.507059e+37
      %v1750 = vand.u32 %v1497, 2147483648
      %v1751 = vor.u32 1.1754944e-38, %v1750
      %v1752 = vsel %vm1749, %v1751, %v1747
      %v1753 = vmul.f32 1.0, %v1752
      %v1754 = vrcp.pop %v1498
      %v1755 = vmul.f32 %v1498, %v1754
      %v1756 = vsub.f32 1.0, %v1755
      %v1757 = vmul.f32 %v1754, %v1756
      %v1758 = vadd.f32 %v1754, %v1757
      %vm1759 = vweird.f32 %v1498
      %vm1760 = vweird.f32 %v1754
      %vm1761 = vmor %vm1759, %vm1760
      %v1762 = vsel %vm1761, %v1754, %v1758
      %v1763 = vand.u32 2147483647, %v1498
      %vm1764 = vcmp.eq.f32.partialorder %v1763, 8.507059e+37
      %v1765 = vand.u32 %v1498, 2147483648
      %v1766 = vor.u32 1.1754944e-38, %v1765
      %v1767 = vsel %vm1764, %v1766, %v1762
      %v1768 = vmul.f32 1.0, %v1767
      %v1769 = vrcp.pop %v1499
      %v1770 = vmul.f32 %v1499, %v1769
      %v1771 = vsub.f32 1.0, %v1770
      %v1772 = vmul.f32 %v1769, %v1771
      %v1773 = vadd.f32 %v1769, %v1772
      %vm1774 = vweird.f32 %v1499
      %vm1775 = vweird.f32 %v1769
      %vm1776 = vmor %vm1774, %vm1775
      %v1777 = vsel %vm1776, %v1769, %v1773
      %v1778 = vand.u32 2147483647, %v1499
      %vm1779 = vcmp.eq.f32.partialorder %v1778, 8.507059e+37
      %v1780 = vand.u32 %v1499, 2147483648
      %v1781 = vor.u32 1.1754944e-38, %v1780
      %v1782 = vsel %vm1779, %v1781, %v1777
      %v1783 = vmul.f32 1.0, %v1782
      %v1784 = vrcp.pop %v1500
      %v1785 = vmul.f32 %v1500, %v1784
      %v1786 = vsub.f32 1.0, %v1785
      %v1787 = vmul.f32 %v1784, %v1786
      %v1788 = vadd.f32 %v1784, %v1787
      %vm1789 = vweird.f32 %v1500
      %vm1790 = vweird.f32 %v1784
      %vm1791 = vmor %vm1789, %vm1790
      %v1792 = vsel %vm1791, %v1784, %v1788
      %v1793 = vand.u32 2147483647, %v1500
      %vm1794 = vcmp.eq.f32.partialorder %v1793, 8.507059e+37
      %v1795 = vand.u32 %v1500, 2147483648
      %v1796 = vor.u32 1.1754944e-38, %v1795
      %v1797 = vsel %vm1794, %v1796, %v1792
      %v1798 = vmul.f32 1.0, %v1797
      %v1799 = vrcp.pop %v1501
      %v1800 = vmul.f32 %v1501, %v1799
      %v1801 = vsub.f32 1.0, %v1800
      %v1802 = vmul.f32 %v1799, %v1801
      %v1803 = vadd.f32 %v1799, %v1802
      %vm1804 = vweird.f32 %v1501
      %vm1805 = vweird.f32 %v1799
      %vm1806 = vmor %vm1804, %vm1805
      %v1807 = vsel %vm1806, %v1799, %v1803
      %v1808 = vand.u32 2147483647, %v1501
      %vm1809 = vcmp.eq.f32.partialorder %v1808, 8.507059e+37
      %v1810 = vand.u32 %v1501, 2147483648
      %v1811 = vor.u32 1.1754944e-38, %v1810
      %v1812 = vsel %vm1809, %v1811, %v1807
      %v1813 = vmul.f32 1.0, %v1812
      %v1814 = vrcp.pop %v1502
      %v1815 = vmul.f32 %v1502, %v1814
      %v1816 = vsub.f32 1.0, %v1815
      %v1817 = vmul.f32 %v1814, %v1816
      %v1818 = vadd.f32 %v1814, %v1817
      %vm1819 = vweird.f32 %v1502
      %vm1820 = vweird.f32 %v1814
      %vm1821 = vmor %vm1819, %vm1820
      %v1822 = vsel %vm1821, %v1814, %v1818
      %v1823 = vand.u32 2147483647, %v1502
      %vm1824 = vcmp.eq.f32.partialorder %v1823, 8.507059e+37
      %v1825 = vand.u32 %v1502, 2147483648
      %v1826 = vor.u32 1.1754944e-38, %v1825
      %v1827 = vsel %vm1824, %v1826, %v1822
      %v1828 = vmul.f32 1.0, %v1827
      %v1829 = vrcp.pop %v1503
      %v1830 = vmul.f32 %v1503, %v1829
      %v1831 = vsub.f32 1.0, %v1830
      %v1832 = vmul.f32 %v1829, %v1831
      %v1833 = vadd.f32 %v1829, %v1832
      %vm1834 = vweird.f32 %v1503
      %vm1835 = vweird.f32 %v1829
      %vm1836 = vmor %vm1834, %vm1835
      %v1837 = vsel %vm1836, %v1829, %v1833
      %v1838 = vand.u32 2147483647, %v1503
      %vm1839 = vcmp.eq.f32.partialorder %v1838, 8.507059e+37
      %v1840 = vand.u32 %v1503, 2147483648
      %v1841 = vor.u32 1.1754944e-38, %v1840
      %v1842 = vsel %vm1839, %v1841, %v1837
      %v1843 = vmul.f32 1.0, %v1842
      %v1844 = vrcp.pop %v1504
      %v1845 = vmul.f32 %v1504, %v1844
      %v1846 = vsub.f32 1.0, %v1845
      %v1847 = vmul.f32 %v1844, %v1846
      %v1848 = vadd.f32 %v1844, %v1847
      %vm1849 = vweird.f32 %v1504
      %vm1850 = vweird.f32 %v1844
      %vm1851 = vmor %vm1849, %vm1850
      %v1852 = vsel %vm1851, %v1844, %v1848
      %v1853 = vand.u32 2147483647, %v1504
      %vm1854 = vcmp.eq.f32.partialorder %v1853, 8.507059e+37
      %v1855 = vand.u32 %v1504, 2147483648
      %v1856 = vor.u32 1.1754944e-38, %v1855
      %v1857 = vsel %vm1854, %v1856, %v1852
      %v1858 = vmul.f32 1.0, %v1857
      %v1859 = vrcp.pop %v1505
      %v1860 = vmul.f32 %v1505, %v1859
      %v1861 = vsub.f32 1.0, %v1860
      %v1862 = vmul.f32 %v1859, %v1861
      %v1863 = vadd.f32 %v1859, %v1862
      %vm1864 = vweird.f32 %v1505
      %vm1865 = vweird.f32 %v1859
      %vm1866 = vmor %vm1864, %vm1865
      %v1867 = vsel %vm1866, %v1859, %v1863
      %v1868 = vand.u32 2147483647, %v1505
      %vm1869 = vcmp.eq.f32.partialorder %v1868, 8.507059e+37
      %v1870 = vand.u32 %v1505, 2147483648
      %v1871 = vor.u32 1.1754944e-38, %v1870
      %v1872 = vsel %vm1869, %v1871, %v1867
      %v1873 = vmul.f32 1.0, %v1872
      %v1874 = vrcp.pop %v1506
      %v1875 = vmul.f32 %v1506, %v1874
      %v1876 = vsub.f32 1.0, %v1875
      %v1877 = vmul.f32 %v1874, %v1876
      %v1878 = vadd.f32 %v1874, %v1877
      %vm1879 = vweird.f32 %v1506
      %vm1880 = vweird.f32 %v1874
      %vm1881 = vmor %vm1879, %vm1880
      %v1882 = vsel %vm1881, %v1874, %v1878
      %v1883 = vand.u32 2147483647, %v1506
      %vm1884 = vcmp.eq.f32.partialorder %v1883, 8.507059e+37
      %v1885 = vand.u32 %v1506, 2147483648
      %v1886 = vor.u32 1.1754944e-38, %v1885
      %v1887 = vsel %vm1884, %v1886, %v1882
      %v1888 = vmul.f32 1.0, %v1887
      %v1889 = vrcp.pop %v1507
      %v1890 = vmul.f32 %v1507, %v1889
      %v1891 = vsub.f32 1.0, %v1890
      %v1892 = vmul.f32 %v1889, %v1891
      %v1893 = vadd.f32 %v1889, %v1892
      %vm1894 = vweird.f32 %v1507
      %vm1895 = vweird.f32 %v1889
      %vm1896 = vmor %vm1894, %vm1895
      %v1897 = vsel %vm1896, %v1889, %v1893
      %v1898 = vand.u32 2147483647, %v1507
      %vm1899 = vcmp.eq.f32.partialorder %v1898, 8.507059e+37
      %v1900 = vand.u32 %v1507, 2147483648
      %v1901 = vor.u32 1.1754944e-38, %v1900
      %v1902 = vsel %vm1899, %v1901, %v1897
      %v1903 = vmul.f32 1.0, %v1902
      %v1904 = vrcp.pop %v1508
      %v1905 = vmul.f32 %v1508, %v1904
      %v1906 = vsub.f32 1.0, %v1905
      %v1907 = vmul.f32 %v1904, %v1906
      %v1908 = vadd.f32 %v1904, %v1907
      %vm1909 = vweird.f32 %v1508
      %vm1910 = vweird.f32 %v1904
      %vm1911 = vmor %vm1909, %vm1910
      %v1912 = vsel %vm1911, %v1904, %v1908
      %v1913 = vand.u32 2147483647, %v1508
      %vm1914 = vcmp.eq.f32.partialorder %v1913, 8.507059e+37
      %v1915 = vand.u32 %v1508, 2147483648
      %v1916 = vor.u32 1.1754944e-38, %v1915
      %v1917 = vsel %vm1914, %v1916, %v1912
      %v1918 = vmul.f32 1.0, %v1917
      %v1919 = vrcp.pop %v1509
      %v1920 = vmul.f32 %v1509, %v1919
      %v1921 = vsub.f32 1.0, %v1920
      %v1922 = vmul.f32 %v1919, %v1921
      %v1923 = vadd.f32 %v1919, %v1922
      %vm1924 = vweird.f32 %v1509
      %vm1925 = vweird.f32 %v1919
      %vm1926 = vmor %vm1924, %vm1925
      %v1927 = vsel %vm1926, %v1919, %v1923
      %v1928 = vand.u32 2147483647, %v1509
      %vm1929 = vcmp.eq.f32.partialorder %v1928, 8.507059e+37
      %v1930 = vand.u32 %v1509, 2147483648
      %v1931 = vor.u32 1.1754944e-38, %v1930
      %v1932 = vsel %vm1929, %v1931, %v1927
      %v1933 = vmul.f32 1.0, %v1932
      %v1934 = vrcp.pop %v1510
      %v1935 = vmul.f32 %v1510, %v1934
      %v1936 = vsub.f32 1.0, %v1935
      %v1937 = vmul.f32 %v1934, %v1936
      %v1938 = vadd.f32 %v1934, %v1937
      %vm1939 = vweird.f32 %v1510
      %vm1940 = vweird.f32 %v1934
      %vm1941 = vmor %vm1939, %vm1940
      %v1942 = vsel %vm1941, %v1934, %v1938
      %v1943 = vand.u32 2147483647, %v1510
      %vm1944 = vcmp.eq.f32.partialorder %v1943, 8.507059e+37
      %v1945 = vand.u32 %v1510, 2147483648
      %v1946 = vor.u32 1.1754944e-38, %v1945
      %v1947 = vsel %vm1944, %v1946, %v1942
      %v1948 = vmul.f32 1.0, %v1947
      %v1949 = vrcp.pop %v1511
      %v1950 = vmul.f32 %v1511, %v1949
      %v1951 = vsub.f32 1.0, %v1950
      %v1952 = vmul.f32 %v1949, %v1951
      %v1953 = vadd.f32 %v1949, %v1952
      %vm1954 = vweird.f32 %v1511
      %vm1955 = vweird.f32 %v1949
      %vm1956 = vmor %vm1954, %vm1955
      %v1957 = vsel %vm1956, %v1949, %v1953
      %v1958 = vand.u32 2147483647, %v1511
      %vm1959 = vcmp.eq.f32.partialorder %v1958, 8.507059e+37
      %v1960 = vand.u32 %v1511, 2147483648
      %v1961 = vor.u32 1.1754944e-38, %v1960
      %v1962 = vsel %vm1959, %v1961, %v1957
      %v1963 = vmul.f32 1.0, %v1962
      %v1964 = vrcp.pop %v1512
      %v1965 = vmul.f32 %v1512, %v1964
      %v1966 = vsub.f32 1.0, %v1965
      %v1967 = vmul.f32 %v1964, %v1966
      %v1968 = vadd.f32 %v1964, %v1967
      %vm1969 = vweird.f32 %v1512
      %vm1970 = vweird.f32 %v1964
      %vm1971 = vmor %vm1969, %vm1970
      %v1972 = vsel %vm1971, %v1964, %v1968
      %v1973 = vand.u32 2147483647, %v1512
      %vm1974 = vcmp.eq.f32.partialorder %v1973, 8.507059e+37
      %v1975 = vand.u32 %v1512, 2147483648
      %v1976 = vor.u32 1.1754944e-38, %v1975
      %v1977 = vsel %vm1974, %v1976, %v1972
      %v1978 = vmul.f32 1.0, %v1977
      %v1979 = vrcp.pop %v1513
      %v1980 = vmul.f32 %v1513, %v1979
      %v1981 = vsub.f32 1.0, %v1980
      %v1982 = vmul.f32 %v1979, %v1981
      %v1983 = vadd.f32 %v1979, %v1982
      %vm1984 = vweird.f32 %v1513
      %vm1985 = vweird.f32 %v1979
      %vm1986 = vmor %vm1984, %vm1985
      %v1987 = vsel %vm1986, %v1979, %v1983
      %v1988 = vand.u32 2147483647, %v1513
      %vm1989 = vcmp.eq.f32.partialorder %v1988, 8.507059e+37
      %v1990 = vand.u32 %v1513, 2147483648
      %v1991 = vor.u32 1.1754944e-38, %v1990
      %v1992 = vsel %vm1989, %v1991, %v1987
      %v1993 = vmul.f32 1.0, %v1992
      %v1994 = vmul.f32 %v1354, %v1528
      %v1995 = vmul.f32 %v1355, %v1543
      %v1996 = vmul.f32 %v1356, %v1558
      %v1997 = vmul.f32 %v1357, %v1573
      %v1998 = vmul.f32 %v1358, %v1588
      %v1999 = vmul.f32 %v1359, %v1603
      %v2000 = vmul.f32 %v1360, %v1618
      %v2001 = vmul.f32 %v1361, %v1633
      %v2002 = vmul.f32 %v1362, %v1648
      %v2003 = vmul.f32 %v1363, %v1663
      %v2004 = vmul.f32 %v1364, %v1678
      %v2005 = vmul.f32 %v1365, %v1693
      %v2006 = vmul.f32 %v1366, %v1708
      %v2007 = vmul.f32 %v1367, %v1723
      %v2008 = vmul.f32 %v1368, %v1738
      %v2009 = vmul.f32 %v1369, %v1753
      %v2010 = vmul.f32 %v1370, %v1768
      %v2011 = vmul.f32 %v1371, %v1783
      %v2012 = vmul.f32 %v1372, %v1798
      %v2013 = vmul.f32 %v1373, %v1813
      %v2014 = vmul.f32 %v1374, %v1828
      %v2015 = vmul.f32 %v1375, %v1843
      %v2016 = vmul.f32 %v1376, %v1858
      %v2017 = vmul.f32 %v1377, %v1873
      %v2018 = vmul.f32 %v1378, %v1888
      %v2019 = vmul.f32 %v1379, %v1903
      %v2020 = vmul.f32 %v1380, %v1918
      %v2021 = vmul.f32 %v1381, %v1933
      %v2022 = vmul.f32 %v1382, %v1948
      %v2023 = vmul.f32 %v1383, %v1963
      %v2024 = vmul.f32 %v1384, %v1978
      %v2025 = vmul.f32 %v1385, %v1993
      %v2026 = vpack.c.bf16 %v1994, %v1994
      %v2027 = vpack.c.bf16 %v1995, %v1995
      %v2028 = vpack.c.bf16 %v1996, %v1996
      %v2029 = vpack.c.bf16 %v1997, %v1997
      %v2030 = vpack.c.bf16 %v1998, %v1998
      %v2031 = vpack.c.bf16 %v1999, %v1999
      %v2032 = vpack.c.bf16 %v2000, %v2000
      %v2033 = vpack.c.bf16 %v2001, %v2001
      %v2034 = vpack.c.bf16 %v2002, %v2002
      %v2035 = vpack.c.bf16 %v2003, %v2003
      %v2036 = vpack.c.bf16 %v2004, %v2004
      %v2037 = vpack.c.bf16 %v2005, %v2005
      %v2038 = vpack.c.bf16 %v2006, %v2006
      %v2039 = vpack.c.bf16 %v2007, %v2007
      %v2040 = vpack.c.bf16 %v2008, %v2008
      %v2041 = vpack.c.bf16 %v2009, %v2009
      %v2042 = vpack.c.bf16 %v2010, %v2010
      %v2043 = vpack.c.bf16 %v2011, %v2011
      %v2044 = vpack.c.bf16 %v2012, %v2012
      %v2045 = vpack.c.bf16 %v2013, %v2013
      %v2046 = vpack.c.bf16 %v2014, %v2014
      %v2047 = vpack.c.bf16 %v2015, %v2015
      %v2048 = vpack.c.bf16 %v2016, %v2016
      %v2049 = vpack.c.bf16 %v2017, %v2017
      %v2050 = vpack.c.bf16 %v2018, %v2018
      %v2051 = vpack.c.bf16 %v2019, %v2019
      %v2052 = vpack.c.bf16 %v2020, %v2020
      %v2053 = vpack.c.bf16 %v2021, %v2021
      %v2054 = vpack.c.bf16 %v2022, %v2022
      %v2055 = vpack.c.bf16 %v2023, %v2023
      %v2056 = vpack.c.bf16 %v2024, %v2024
      %v2057 = vpack.c.bf16 %v2025, %v2025
      %vm2058 = vcmask 27648
      %2059 = vst.msk [vmem:[#allocation2 + $0x4] sm:$0xf] %vm2058, 0
      %2060 = vst.msk [vmem:[#allocation2 + $0x8] sm:$0xf] %vm2058, 0
      %2061 = vst.msk [vmem:[#allocation2 + $0xc] sm:$0xf] %vm2058, %v2026
      %2062 = vst.msk [vmem:[#allocation2 + $0x10] sm:$0xf] %vm2058, %v2027
      %2063 = vst.msk [vmem:[#allocation2 + $0x14] sm:$0xf] %vm2058, %v2028
      %2064 = vst.msk [vmem:[#allocation2 + $0x18] sm:$0xf] %vm2058, %v2029
      %2065 = vst.msk [vmem:[#allocation2 + $0x1c] sm:$0xf] %vm2058, %v2030
      %2066 = vst.msk [vmem:[#allocation2 + $0x20] sm:$0xf] %vm2058, %v2031
      %2067 = vst.msk [vmem:[#allocation2 + $0x24] sm:$0xf] %vm2058, %v2032
      %2068 = vst.msk [vmem:[#allocation2 + $0x28] sm:$0xf] %vm2058, %v2033
      %2069 = vst.msk [vmem:[#allocation2 + $0x2c] sm:$0xf] %vm2058, %v2034
      %2070 = vst.msk [vmem:[#allocation2 + $0x30] sm:$0xf] %vm2058, %v2035
      %2071 = vst.msk [vmem:[#allocation2 + $0x34] sm:$0xf] %vm2058, %v2036
      %2072 = vst.msk [vmem:[#allocation2 + $0x38] sm:$0xf] %vm2058, %v2037
      %2073 = vst.msk [vmem:[#allocation2 + $0x3c] sm:$0xf] %vm2058, %v2038
      %2074 = vst.msk [vmem:[#allocation2 + $0x40] sm:$0xf] %vm2058, %v2039
      %2075 = vst.msk [vmem:[#allocation2 + $0x44] sm:$0xf] %vm2058, %v2040
      %2076 = vst.msk [vmem:[#allocation2 + $0x48] sm:$0xf] %vm2058, %v2041
      %2077 = vst.msk [vmem:[#allocation2 + $0x4c] sm:$0xf] %vm2058, %v2042
      %2078 = vst.msk [vmem:[#allocation2 + $0x50] sm:$0xf] %vm2058, %v2043
      %2079 = vst.msk [vmem:[#allocation2 + $0x54] sm:$0xf] %vm2058, %v2044
      %2080 = vst.msk [vmem:[#allocation2 + $0x58] sm:$0xf] %vm2058, %v2045
      %2081 = vst.msk [vmem:[#allocation2 + $0x5c] sm:$0xf] %vm2058, %v2046
      %2082 = vst.msk [vmem:[#allocation2 + $0x60] sm:$0xf] %vm2058, %v2047
      %2083 = vst.msk [vmem:[#allocation2 + $0x64] sm:$0xf] %vm2058, %v2048
      %2084 = vst.msk [vmem:[#allocation2 + $0x68] sm:$0xf] %vm2058, %v2049
      %2085 = vst.msk [vmem:[#allocation2 + $0x6c] sm:$0xf] %vm2058, %v2050
      %2086 = vst.msk [vmem:[#allocation2 + $0x70] sm:$0xf] %vm2058, %v2051
      %2087 = vst.msk [vmem:[#allocation2 + $0x74] sm:$0xf] %vm2058, %v2052
      %2088 = vst.msk [vmem:[#allocation2 + $0x78] sm:$0xf] %vm2058, %v2053
      %2089 = vst.msk [vmem:[#allocation2 + $0x7c] sm:$0xf] %vm2058, %v2054
      %2090 = vst.msk [vmem:[#allocation2 + $0x80] sm:$0xf] %vm2058, %v2055
      %2091 = vst.msk [vmem:[#allocation2 + $0x84] sm:$0xf] %vm2058, %v2056
      %2092 = vst.msk [vmem:[#allocation2 + $0x88] sm:$0xf] %vm2058, %v2057
      %2093 = vst.msk [vmem:[#allocation2 + $0x8c] sm:$0xf] %vm2058, 0
      %2094 = vst.msk [vmem:[#allocation2 + $0x90] sm:$0xf] %vm2058, 0
      %s2095 = scalar_lea.vmem %s6, 8
      %v2096 = vld [vmem:[%s2095] sm:$0x3]
      %v2097 = vld [vmem:[#allocation2] sm:$0x8]
      %v2098 = vld [vmem:[#allocation2 + $0x4] sm:$0xf]
      %v2099 = vld [vmem:[#allocation2 + $0x8] sm:$0xf]
      %v2100 = vld [vmem:[#allocation2 + $0xc] sm:$0xf]
      %v2101 = vld [vmem:[#allocation2 + $0x10] sm:$0xf]
      %v2102 = vld [vmem:[#allocation2 + $0x14] sm:$0xf]
      %v2103 = vld [vmem:[#allocation2 + $0x18] sm:$0xf]
      %v2104 = vld [vmem:[#allocation2 + $0x1c] sm:$0xf]
      %v2105 = vld [vmem:[#allocation2 + $0x20] sm:$0xf]
      %v2106 = vld [vmem:[#allocation2 + $0x24] sm:$0xf]
      %v2107 = vld [vmem:[#allocation2 + $0x28] sm:$0xf]
      %v2108 = vld [vmem:[#allocation2 + $0x2c] sm:$0xf]
      %v2109 = vld [vmem:[#allocation2 + $0x30] sm:$0xf]
      %v2110 = vld [vmem:[#allocation2 + $0x34] sm:$0xf]
      %v2111 = vld [vmem:[#allocation2 + $0x38] sm:$0xf]
      %v2112 = vld [vmem:[#allocation2 + $0x3c] sm:$0xf]
      %v2113 = vld [vmem:[#allocation2 + $0x40] sm:$0xf]
      %v2114 = vld [vmem:[#allocation2 + $0x44] sm:$0xf]
      %v2115 = vld [vmem:[#allocation2 + $0x48] sm:$0xf]
      %v2116 = vld [vmem:[#allocation2 + $0x4c] sm:$0xf]
      %v2117 = vld [vmem:[#allocation2 + $0x50] sm:$0xf]
      %v2118 = vld [vmem:[#allocation2 + $0x54] sm:$0xf]
      %v2119 = vld [vmem:[#allocation2 + $0x58] sm:$0xf]
      %v2120 = vld [vmem:[#allocation2 + $0x5c] sm:$0xf]
      %v2121 = vld [vmem:[#allocation2 + $0x60] sm:$0xf]
      %v2122 = vld [vmem:[#allocation2 + $0x64] sm:$0xf]
      %v2123 = vld [vmem:[#allocation2 + $0x68] sm:$0xf]
      %v2124 = vld [vmem:[#allocation2 + $0x6c] sm:$0xf]
      %v2125 = vld [vmem:[#allocation2 + $0x70] sm:$0xf]
      %v2126 = vld [vmem:[#allocation2 + $0x74] sm:$0xf]
      %v2127 = vld [vmem:[#allocation2 + $0x78] sm:$0xf]
      %v2128 = vld [vmem:[#allocation2 + $0x7c] sm:$0xf]
      %v2129 = vld [vmem:[#allocation2 + $0x80] sm:$0xf]
      %v2130 = vsel %vm934, 1, 0
      %v2131 = vsel %vm935, 1, 0
      %v2132 = vsel %vm936, 1, 0
      %v2133 = vsel %vm937, 1, 0
      %v2134 = vsel %vm938, 1, 0
      %v2135 = vsel %vm939, 1, 0
      %v2136 = vsel %vm940, 1, 0
      %v2137 = vsel %vm941, 1, 0
      %v2138 = vsel %vm942, 1, 0
      %v2139 = vsel %vm943, 1, 0
      %v2140 = vsel %vm944, 1, 0
      %v2141 = vsel %vm945, 1, 0
      %v2142 = vsel %vm946, 1, 0
      %v2143 = vsel %vm947, 1, 0
      %v2144 = vsel %vm948, 1, 0
      %v2145 = vsel %vm949, 1, 0
      %v2146 = vsel %vm950, 1, 0
      %v2147 = vsel %vm951, 1, 0
      %v2148 = vsel %vm952, 1, 0
      %v2149 = vsel %vm953, 1, 0
      %v2150 = vsel %vm954, 1, 0
      %v2151 = vsel %vm955, 1, 0
      %v2152 = vsel %vm956, 1, 0
      %v2153 = vsel %vm957, 1, 0
      %v2154 = vsel %vm958, 1, 0
      %v2155 = vsel %vm959, 1, 0
      %v2156 = vsel %vm960, 1, 0
      %v2157 = vsel %vm961, 1, 0
      %v2158 = vsel %vm962, 1, 0
      %v2159 = vsel %vm963, 1, 0
      %v2160 = vsel %vm964, 1, 0
      %v2161 = vsel %vm965, 1, 0
      %vm2162 = vcmp.eq.s32.totalorder %v2130, 1
      %vm2163 = vcmp.eq.s32.totalorder %v2131, 1
      %vm2164 = vcmp.eq.s32.totalorder %v2132, 1
      %vm2165 = vcmp.eq.s32.totalorder %v2133, 1
      %vm2166 = vcmp.eq.s32.totalorder %v2134, 1
      %vm2167 = vcmp.eq.s32.totalorder %v2135, 1
      %vm2168 = vcmp.eq.s32.totalorder %v2136, 1
      %vm2169 = vcmp.eq.s32.totalorder %v2137, 1
      %vm2170 = vcmp.eq.s32.totalorder %v2138, 1
      %vm2171 = vcmp.eq.s32.totalorder %v2139, 1
      %vm2172 = vcmp.eq.s32.totalorder %v2140, 1
      %vm2173 = vcmp.eq.s32.totalorder %v2141, 1
      %vm2174 = vcmp.eq.s32.totalorder %v2142, 1
      %vm2175 = vcmp.eq.s32.totalorder %v2143, 1
      %vm2176 = vcmp.eq.s32.totalorder %v2144, 1
      %vm2177 = vcmp.eq.s32.totalorder %v2145, 1
      %vm2178 = vcmp.eq.s32.totalorder %v2146, 1
      %vm2179 = vcmp.eq.s32.totalorder %v2147, 1
      %vm2180 = vcmp.eq.s32.totalorder %v2148, 1
      %vm2181 = vcmp.eq.s32.totalorder %v2149, 1
      %vm2182 = vcmp.eq.s32.totalorder %v2150, 1
      %vm2183 = vcmp.eq.s32.totalorder %v2151, 1
      %vm2184 = vcmp.eq.s32.totalorder %v2152, 1
      %vm2185 = vcmp.eq.s32.totalorder %v2153, 1
      %vm2186 = vcmp.eq.s32.totalorder %v2154, 1
      %vm2187 = vcmp.eq.s32.totalorder %v2155, 1
      %vm2188 = vcmp.eq.s32.totalorder %v2156, 1
      %vm2189 = vcmp.eq.s32.totalorder %v2157, 1
      %vm2190 = vcmp.eq.s32.totalorder %v2158, 1
      %vm2191 = vcmp.eq.s32.totalorder %v2159, 1
      %vm2192 = vcmp.eq.s32.totalorder %v2160, 1
      %vm2193 = vcmp.eq.s32.totalorder %v2161, 1
      %vm2194 = vmpackc.low %vm2162, %vm2162
      %vm2195 = vmpackc.low %vm2163, %vm2163
      %vm2196 = vmpackc.low %vm2164, %vm2164
      %vm2197 = vmpackc.low %vm2165, %vm2165
      %vm2198 = vmpackc.low %vm2166, %vm2166
      %vm2199 = vmpackc.low %vm2167, %vm2167
      %vm2200 = vmpackc.low %vm2168, %vm2168
      %vm2201 = vmpackc.low %vm2169, %vm2169
      %vm2202 = vmpackc.low %vm2170, %vm2170
      %vm2203 = vmpackc.low %vm2171, %vm2171
      %vm2204 = vmpackc.low %vm2172, %vm2172
      %vm2205 = vmpackc.low %vm2173, %vm2173
      %vm2206 = vmpackc.low %vm2174, %vm2174
      %vm2207 = vmpackc.low %vm2175, %vm2175
      %vm2208 = vmpackc.low %vm2176, %vm2176
      %vm2209 = vmpackc.low %vm2177, %vm2177
      %vm2210 = vmpackc.low %vm2178, %vm2178
      %vm2211 = vmpackc.low %vm2179, %vm2179
      %vm2212 = vmpackc.low %vm2180, %vm2180
      %vm2213 = vmpackc.low %vm2181, %vm2181
      %vm2214 = vmpackc.low %vm2182, %vm2182
      %vm2215 = vmpackc.low %vm2183, %vm2183
      %vm2216 = vmpackc.low %vm2184, %vm2184
      %vm2217 = vmpackc.low %vm2185, %vm2185
      %vm2218 = vmpackc.low %vm2186, %vm2186
      %vm2219 = vmpackc.low %vm2187, %vm2187
      %vm2220 = vmpackc.low %vm2188, %vm2188
      %vm2221 = vmpackc.low %vm2189, %vm2189
      %vm2222 = vmpackc.low %vm2190, %vm2190
      %vm2223 = vmpackc.low %vm2191, %vm2191
      %vm2224 = vmpackc.low %vm2192, %vm2192
      %vm2225 = vmpackc.low %vm2193, %vm2193
      %v2226 = vsel %vm2194, 65537, 0
      %v2227 = vsel %vm2195, 65537, 0
      %v2228 = vsel %vm2196, 65537, 0
      %v2229 = vsel %vm2197, 65537, 0
      %v2230 = vsel %vm2198, 65537, 0
      %v2231 = vsel %vm2199, 65537, 0
      %v2232 = vsel %vm2200, 65537, 0
      %v2233 = vsel %vm2201, 65537, 0
      %v2234 = vsel %vm2202, 65537, 0
      %v2235 = vsel %vm2203, 65537, 0
      %v2236 = vsel %vm2204, 65537, 0
      %v2237 = vsel %vm2205, 65537, 0
      %v2238 = vsel %vm2206, 65537, 0
      %v2239 = vsel %vm2207, 65537, 0
      %v2240 = vsel %vm2208, 65537, 0
      %v2241 = vsel %vm2209, 65537, 0
      %v2242 = vsel %vm2210, 65537, 0
      %v2243 = vsel %vm2211, 65537, 0
      %v2244 = vsel %vm2212, 65537, 0
      %v2245 = vsel %vm2213, 65537, 0
      %v2246 = vsel %vm2214, 65537, 0
      %v2247 = vsel %vm2215, 65537, 0
      %v2248 = vsel %vm2216, 65537, 0
      %v2249 = vsel %vm2217, 65537, 0
      %v2250 = vsel %vm2218, 65537, 0
      %v2251 = vsel %vm2219, 65537, 0
      %v2252 = vsel %vm2220, 65537, 0
      %v2253 = vsel %vm2221, 65537, 0
      %v2254 = vsel %vm2222, 65537, 0
      %v2255 = vsel %vm2223, 65537, 0
      %v2256 = vsel %vm2224, 65537, 0
      %v2257 = vsel %vm2225, 65537, 0
      %vm2258 = vsmask.f32 3328
      %vm2259 = vsmask.f32 7440
      %vm2260 = vmor %vm2258, %vm2259
      %v2262 = vshll.u32 %v2226, 16
      %v2264 = vrot.slane %v2262, 5
      %v2265 = vshrl.u32 %v2226, 16
      %v2267 = vrot.slane %v2265, 4
      %v2268 = vor.u32 %v2267, %v2264
      %v2269 = vrot.slane %v2268, 4
      %v2271 = vshll.u32 %v2227, 16
      %v2273 = vrot.slane %v2271, 5
      %v2274 = vsel %vm2260, %v2269, %v2273
      %v2275 = vshrl.u32 %v2227, 16
      %v2277 = vrot.slane %v2275, 4
      %v2278 = vor.u32 %v2277, %v2273
      %v2279 = vrot.slane %v2278, 4
      %v2281 = vshll.u32 %v2228, 16
      %v2283 = vrot.slane %v2281, 5
      %v2284 = vsel %vm2260, %v2279, %v2283
      %v2285 = vshrl.u32 %v2228, 16
      %v2287 = vrot.slane %v2285, 4
      %v2288 = vor.u32 %v2287, %v2283
      %v2289 = vrot.slane %v2288, 4
      %v2291 = vshll.u32 %v2229, 16
      %v2293 = vrot.slane %v2291, 5
      %v2294 = vsel %vm2260, %v2289, %v2293
      %v2295 = vshrl.u32 %v2229, 16
      %v2297 = vrot.slane %v2295, 4
      %v2298 = vor.u32 %v2297, %v2293
      %v2299 = vrot.slane %v2298, 4
      %v2301 = vshll.u32 %v2230, 16
      %v2303 = vrot.slane %v2301, 5
      %v2304 = vsel %vm2260, %v2299, %v2303
      %v2305 = vshrl.u32 %v2230, 16
      %v2307 = vrot.slane %v2305, 4
      %v2308 = vor.u32 %v2307, %v2303
      %v2309 = vrot.slane %v2308, 4
      %v2311 = vshll.u32 %v2231, 16
      %v2313 = vrot.slane %v2311, 5
      %v2314 = vsel %vm2260, %v2309, %v2313
      %v2315 = vshrl.u32 %v2231, 16
      %v2317 = vrot.slane %v2315, 4
      %v2318 = vor.u32 %v2317, %v2313
      %v2319 = vrot.slane %v2318, 4
      %v2321 = vshll.u32 %v2232, 16
      %v2323 = vrot.slane %v2321, 5
      %v2324 = vsel %vm2260, %v2319, %v2323
      %v2325 = vshrl.u32 %v2232, 16
      %v2327 = vrot.slane %v2325, 4
      %v2328 = vor.u32 %v2327, %v2323
      %v2329 = vrot.slane %v2328, 4
      %v2331 = vshll.u32 %v2233, 16
      %v2333 = vrot.slane %v2331, 5
      %v2334 = vsel %vm2260, %v2329, %v2333
      %v2335 = vshrl.u32 %v2233, 16
      %v2337 = vrot.slane %v2335, 4
      %v2338 = vor.u32 %v2337, %v2333
      %v2339 = vrot.slane %v2338, 4
      %v2341 = vshll.u32 %v2234, 16
      %v2343 = vrot.slane %v2341, 5
      %v2344 = vsel %vm2260, %v2339, %v2343
      %v2345 = vshrl.u32 %v2234, 16
      %v2347 = vrot.slane %v2345, 4
      %v2348 = vor.u32 %v2347, %v2343
      %v2349 = vrot.slane %v2348, 4
      %v2351 = vshll.u32 %v2235, 16
      %v2353 = vrot.slane %v2351, 5
      %v2354 = vsel %vm2260, %v2349, %v2353
      %v2355 = vshrl.u32 %v2235, 16
      %v2357 = vrot.slane %v2355, 4
      %v2358 = vor.u32 %v2357, %v2353
      %v2359 = vrot.slane %v2358, 4
      %v2361 = vshll.u32 %v2236, 16
      %v2363 = vrot.slane %v2361, 5
      %v2364 = vsel %vm2260, %v2359, %v2363
      %v2365 = vshrl.u32 %v2236, 16
      %v2367 = vrot.slane %v2365, 4
      %v2368 = vor.u32 %v2367, %v2363
      %v2369 = vrot.slane %v2368, 4
      %v2371 = vshll.u32 %v2237, 16
      %v2373 = vrot.slane %v2371, 5
      %v2374 = vsel %vm2260, %v2369, %v2373
      %v2375 = vshrl.u32 %v2237, 16
      %v2377 = vrot.slane %v2375, 4
      %v2378 = vor.u32 %v2377, %v2373
      %v2379 = vrot.slane %v2378, 4
      %v2381 = vshll.u32 %v2238, 16
      %v2383 = vrot.slane %v2381, 5
      %v2384 = vsel %vm2260, %v2379, %v2383
      %v2385 = vshrl.u32 %v2238, 16
      %v2387 = vrot.slane %v2385, 4
      %v2388 = vor.u32 %v2387, %v2383
      %v2389 = vrot.slane %v2388, 4
      %v2391 = vshll.u32 %v2239, 16
      %v2393 = vrot.slane %v2391, 5
      %v2394 = vsel %vm2260, %v2389, %v2393
      %v2395 = vshrl.u32 %v2239, 16
      %v2397 = vrot.slane %v2395, 4
      %v2398 = vor.u32 %v2397, %v2393
      %v2399 = vrot.slane %v2398, 4
      %v2401 = vshll.u32 %v2240, 16
      %v2403 = vrot.slane %v2401, 5
      %v2404 = vsel %vm2260, %v2399, %v2403
      %v2405 = vshrl.u32 %v2240, 16
      %v2407 = vrot.slane %v2405, 4
      %v2408 = vor.u32 %v2407, %v2403
      %v2409 = vrot.slane %v2408, 4
      %v2411 = vshll.u32 %v2241, 16
      %v2413 = vrot.slane %v2411, 5
      %v2414 = vsel %vm2260, %v2409, %v2413
      %v2415 = vshrl.u32 %v2241, 16
      %v2417 = vrot.slane %v2415, 4
      %v2418 = vor.u32 %v2417, %v2413
      %v2419 = vrot.slane %v2418, 4
      %v2421 = vshll.u32 %v2242, 16
      %v2423 = vrot.slane %v2421, 5
      %v2424 = vsel %vm2260, %v2419, %v2423
      %v2425 = vshrl.u32 %v2242, 16
      %v2427 = vrot.slane %v2425, 4
      %v2428 = vor.u32 %v2427, %v2423
      %v2429 = vrot.slane %v2428, 4
      %v2431 = vshll.u32 %v2243, 16
      %v2433 = vrot.slane %v2431, 5
      %v2434 = vsel %vm2260, %v2429, %v2433
      %v2435 = vshrl.u32 %v2243, 16
      %v2437 = vrot.slane %v2435, 4
      %v2438 = vor.u32 %v2437, %v2433
      %v2439 = vrot.slane %v2438, 4
      %v2441 = vshll.u32 %v2244, 16
      %v2443 = vrot.slane %v2441, 5
      %v2444 = vsel %vm2260, %v2439, %v2443
      %v2445 = vshrl.u32 %v2244, 16
      %v2447 = vrot.slane %v2445, 4
      %v2448 = vor.u32 %v2447, %v2443
      %v2449 = vrot.slane %v2448, 4
      %v2451 = vshll.u32 %v2245, 16
      %v2453 = vrot.slane %v2451, 5
      %v2454 = vsel %vm2260, %v2449, %v2453
      %v2455 = vshrl.u32 %v2245, 16
      %v2457 = vrot.slane %v2455, 4
      %v2458 = vor.u32 %v2457, %v2453
      %v2459 = vrot.slane %v2458, 4
      %v2461 = vshll.u32 %v2246, 16
      %v2463 = vrot.slane %v2461, 5
      %v2464 = vsel %vm2260, %v2459, %v2463
      %v2465 = vshrl.u32 %v2246, 16
      %v2467 = vrot.slane %v2465, 4
      %v2468 = vor.u32 %v2467, %v2463
      %v2469 = vrot.slane %v2468, 4
      %v2471 = vshll.u32 %v2247, 16
      %v2473 = vrot.slane %v2471, 5
      %v2474 = vsel %vm2260, %v2469, %v2473
      %v2475 = vshrl.u32 %v2247, 16
      %v2477 = vrot.slane %v2475, 4
      %v2478 = vor.u32 %v2477, %v2473
      %v2479 = vrot.slane %v2478, 4
      %v2481 = vshll.u32 %v2248, 16
      %v2483 = vrot.slane %v2481, 5
      %v2484 = vsel %vm2260, %v2479, %v2483
      %v2485 = vshrl.u32 %v2248, 16
      %v2487 = vrot.slane %v2485, 4
      %v2488 = vor.u32 %v2487, %v2483
      %v2489 = vrot.slane %v2488, 4
      %v2491 = vshll.u32 %v2249, 16
      %v2493 = vrot.slane %v2491, 5
      %v2494 = vsel %vm2260, %v2489, %v2493
      %v2495 = vshrl.u32 %v2249, 16
      %v2497 = vrot.slane %v2495, 4
      %v2498 = vor.u32 %v2497, %v2493
      %v2499 = vrot.slane %v2498, 4
      %v2501 = vshll.u32 %v2250, 16
      %v2503 = vrot.slane %v2501, 5
      %v2504 = vsel %vm2260, %v2499, %v2503
      %v2505 = vshrl.u32 %v2250, 16
      %v2507 = vrot.slane %v2505, 4
      %v2508 = vor.u32 %v2507, %v2503
      %v2509 = vrot.slane %v2508, 4
      %v2511 = vshll.u32 %v2251, 16
      %v2513 = vrot.slane %v2511, 5
      %v2514 = vsel %vm2260, %v2509, %v2513
      %v2515 = vshrl.u32 %v2251, 16
      %v2517 = vrot.slane %v2515, 4
      %v2518 = vor.u32 %v2517, %v2513
      %v2519 = vrot.slane %v2518, 4
      %v2521 = vshll.u32 %v2252, 16
      %v2523 = vrot.slane %v2521, 5
      %v2524 = vsel %vm2260, %v2519, %v2523
      %v2525 = vshrl.u32 %v2252, 16
      %v2527 = vrot.slane %v2525, 4
      %v2528 = vor.u32 %v2527, %v2523
      %v2529 = vrot.slane %v2528, 4
      %v2531 = vshll.u32 %v2253, 16
      %v2533 = vrot.slane %v2531, 5
      %v2534 = vsel %vm2260, %v2529, %v2533
      %v2535 = vshrl.u32 %v2253, 16
      %v2537 = vrot.slane %v2535, 4
      %v2538 = vor.u32 %v2537, %v2533
      %v2539 = vrot.slane %v2538, 4
      %v2541 = vshll.u32 %v2254, 16
      %v2543 = vrot.slane %v2541, 5
      %v2544 = vsel %vm2260, %v2539, %v2543
      %v2545 = vshrl.u32 %v2254, 16
      %v2547 = vrot.slane %v2545, 4
      %v2548 = vor.u32 %v2547, %v2543
      %v2549 = vrot.slane %v2548, 4
      %v2551 = vshll.u32 %v2255, 16
      %v2553 = vrot.slane %v2551, 5
      %v2554 = vsel %vm2260, %v2549, %v2553
      %v2555 = vshrl.u32 %v2255, 16
      %v2557 = vrot.slane %v2555, 4
      %v2558 = vor.u32 %v2557, %v2553
      %v2559 = vrot.slane %v2558, 4
      %v2561 = vshll.u32 %v2256, 16
      %v2563 = vrot.slane %v2561, 5
      %v2564 = vsel %vm2260, %v2559, %v2563
      %v2565 = vshrl.u32 %v2256, 16
      %v2567 = vrot.slane %v2565, 4
      %v2568 = vor.u32 %v2567, %v2563
      %v2569 = vrot.slane %v2568, 4
      %v2571 = vshll.u32 %v2257, 16
      %v2573 = vrot.slane %v2571, 5
      %v2574 = vsel %vm2260, %v2569, %v2573
      %v2575 = vshrl.u32 %v2257, 16
      %v2577 = vrot.slane %v2575, 4
      %v2578 = vor.u32 %v2577, %v2573
      %v2579 = vrot.slane %v2578, 4
      %v2580 = vunpack.c.l.b16 %v2264
      %v2581 = vunpack.c.h.b16 %v2264
      %v2582 = vunpack.c.l.b16 0
      %v2583 = vunpack.c.h.b16 0
      %vm2584 = vcmp.ne.s32.totalorder %v2580, %v2582
      %vm2585 = vcmp.ne.s32.totalorder %v2581, %v2583
      %vm2586 = vmpackc.low %vm2585, %vm2584
      %v2587 = vunpack.c.l.b16 %v2274
      %v2588 = vunpack.c.h.b16 %v2274
      %v2589 = vunpack.c.l.b16 0
      %v2590 = vunpack.c.h.b16 0
      %vm2591 = vcmp.ne.s32.totalorder %v2587, %v2589
      %vm2592 = vcmp.ne.s32.totalorder %v2588, %v2590
      %vm2593 = vmpackc.low %vm2592, %vm2591
      %v2594 = vunpack.c.l.b16 %v2284
      %v2595 = vunpack.c.h.b16 %v2284
      %v2596 = vunpack.c.l.b16 0
      %v2597 = vunpack.c.h.b16 0
      %vm2598 = vcmp.ne.s32.totalorder %v2594, %v2596
      %vm2599 = vcmp.ne.s32.totalorder %v2595, %v2597
      %vm2600 = vmpackc.low %vm2599, %vm2598
      %v2601 = vunpack.c.l.b16 %v2294
      %v2602 = vunpack.c.h.b16 %v2294
      %v2603 = vunpack.c.l.b16 0
      %v2604 = vunpack.c.h.b16 0
      %vm2605 = vcmp.ne.s32.totalorder %v2601, %v2603
      %vm2606 = vcmp.ne.s32.totalorder %v2602, %v2604
      %vm2607 = vmpackc.low %vm2606, %vm2605
      %v2608 = vunpack.c.l.b16 %v2304
      %v2609 = vunpack.c.h.b16 %v2304
      %v2610 = vunpack.c.l.b16 0
      %v2611 = vunpack.c.h.b16 0
      %vm2612 = vcmp.ne.s32.totalorder %v2608, %v2610
      %vm2613 = vcmp.ne.s32.totalorder %v2609, %v2611
      %vm2614 = vmpackc.low %vm2613, %vm2612
      %v2615 = vunpack.c.l.b16 %v2314
      %v2616 = vunpack.c.h.b16 %v2314
      %v2617 = vunpack.c.l.b16 0
      %v2618 = vunpack.c.h.b16 0
      %vm2619 = vcmp.ne.s32.totalorder %v2615, %v2617
      %vm2620 = vcmp.ne.s32.totalorder %v2616, %v2618
      %vm2621 = vmpackc.low %vm2620, %vm2619
      %v2622 = vunpack.c.l.b16 %v2324
      %v2623 = vunpack.c.h.b16 %v2324
      %v2624 = vunpack.c.l.b16 0
      %v2625 = vunpack.c.h.b16 0
      %vm2626 = vcmp.ne.s32.totalorder %v2622, %v2624
      %vm2627 = vcmp.ne.s32.totalorder %v2623, %v2625
      %vm2628 = vmpackc.low %vm2627, %vm2626
      %v2629 = vunpack.c.l.b16 %v2334
      %v2630 = vunpack.c.h.b16 %v2334
      %v2631 = vunpack.c.l.b16 0
      %v2632 = vunpack.c.h.b16 0
      %vm2633 = vcmp.ne.s32.totalorder %v2629, %v2631
      %vm2634 = vcmp.ne.s32.totalorder %v2630, %v2632
      %vm2635 = vmpackc.low %vm2634, %vm2633
      %v2636 = vunpack.c.l.b16 %v2344
      %v2637 = vunpack.c.h.b16 %v2344
      %v2638 = vunpack.c.l.b16 0
      %v2639 = vunpack.c.h.b16 0
      %vm2640 = vcmp.ne.s32.totalorder %v2636, %v2638
      %vm2641 = vcmp.ne.s32.totalorder %v2637, %v2639
      %vm2642 = vmpackc.low %vm2641, %vm2640
      %v2643 = vunpack.c.l.b16 %v2354
      %v2644 = vunpack.c.h.b16 %v2354
      %v2645 = vunpack.c.l.b16 0
      %v2646 = vunpack.c.h.b16 0
      %vm2647 = vcmp.ne.s32.totalorder %v2643, %v2645
      %vm2648 = vcmp.ne.s32.totalorder %v2644, %v2646
      %vm2649 = vmpackc.low %vm2648, %vm2647
      %v2650 = vunpack.c.l.b16 %v2364
      %v2651 = vunpack.c.h.b16 %v2364
      %v2652 = vunpack.c.l.b16 0
      %v2653 = vunpack.c.h.b16 0
      %vm2654 = vcmp.ne.s32.totalorder %v2650, %v2652
      %vm2655 = vcmp.ne.s32.totalorder %v2651, %v2653
      %vm2656 = vmpackc.low %vm2655, %vm2654
      %v2657 = vunpack.c.l.b16 %v2374
      %v2658 = vunpack.c.h.b16 %v2374
      %v2659 = vunpack.c.l.b16 0
      %v2660 = vunpack.c.h.b16 0
      %vm2661 = vcmp.ne.s32.totalorder %v2657, %v2659
      %vm2662 = vcmp.ne.s32.totalorder %v2658, %v2660
      %vm2663 = vmpackc.low %vm2662, %vm2661
      %v2664 = vunpack.c.l.b16 %v2384
      %v2665 = vunpack.c.h.b16 %v2384
      %v2666 = vunpack.c.l.b16 0
      %v2667 = vunpack.c.h.b16 0
      %vm2668 = vcmp.ne.s32.totalorder %v2664, %v2666
      %vm2669 = vcmp.ne.s32.totalorder %v2665, %v2667
      %vm2670 = vmpackc.low %vm2669, %vm2668
      %v2671 = vunpack.c.l.b16 %v2394
      %v2672 = vunpack.c.h.b16 %v2394
      %v2673 = vunpack.c.l.b16 0
      %v2674 = vunpack.c.h.b16 0
      %vm2675 = vcmp.ne.s32.totalorder %v2671, %v2673
      %vm2676 = vcmp.ne.s32.totalorder %v2672, %v2674
      %vm2677 = vmpackc.low %vm2676, %vm2675
      %v2678 = vunpack.c.l.b16 %v2404
      %v2679 = vunpack.c.h.b16 %v2404
      %v2680 = vunpack.c.l.b16 0
      %v2681 = vunpack.c.h.b16 0
      %vm2682 = vcmp.ne.s32.totalorder %v2678, %v2680
      %vm2683 = vcmp.ne.s32.totalorder %v2679, %v2681
      %vm2684 = vmpackc.low %vm2683, %vm2682
      %v2685 = vunpack.c.l.b16 %v2414
      %v2686 = vunpack.c.h.b16 %v2414
      %v2687 = vunpack.c.l.b16 0
      %v2688 = vunpack.c.h.b16 0
      %vm2689 = vcmp.ne.s32.totalorder %v2685, %v2687
      %vm2690 = vcmp.ne.s32.totalorder %v2686, %v2688
      %vm2691 = vmpackc.low %vm2690, %vm2689
      %v2692 = vunpack.c.l.b16 %v2424
      %v2693 = vunpack.c.h.b16 %v2424
      %v2694 = vunpack.c.l.b16 0
      %v2695 = vunpack.c.h.b16 0
      %vm2696 = vcmp.ne.s32.totalorder %v2692, %v2694
      %vm2697 = vcmp.ne.s32.totalorder %v2693, %v2695
      %vm2698 = vmpackc.low %vm2697, %vm2696
      %v2699 = vunpack.c.l.b16 %v2434
      %v2700 = vunpack.c.h.b16 %v2434
      %v2701 = vunpack.c.l.b16 0
      %v2702 = vunpack.c.h.b16 0
      %vm2703 = vcmp.ne.s32.totalorder %v2699, %v2701
      %vm2704 = vcmp.ne.s32.totalorder %v2700, %v2702
      %vm2705 = vmpackc.low %vm2704, %vm2703
      %v2706 = vunpack.c.l.b16 %v2444
      %v2707 = vunpack.c.h.b16 %v2444
      %v2708 = vunpack.c.l.b16 0
      %v2709 = vunpack.c.h.b16 0
      %vm2710 = vcmp.ne.s32.totalorder %v2706, %v2708
      %vm2711 = vcmp.ne.s32.totalorder %v2707, %v2709
      %vm2712 = vmpackc.low %vm2711, %vm2710
      %v2713 = vunpack.c.l.b16 %v2454
      %v2714 = vunpack.c.h.b16 %v2454
      %v2715 = vunpack.c.l.b16 0
      %v2716 = vunpack.c.h.b16 0
      %vm2717 = vcmp.ne.s32.totalorder %v2713, %v2715
      %vm2718 = vcmp.ne.s32.totalorder %v2714, %v2716
      %vm2719 = vmpackc.low %vm2718, %vm2717
      %v2720 = vunpack.c.l.b16 %v2464
      %v2721 = vunpack.c.h.b16 %v2464
      %v2722 = vunpack.c.l.b16 0
      %v2723 = vunpack.c.h.b16 0
      %vm2724 = vcmp.ne.s32.totalorder %v2720, %v2722
      %vm2725 = vcmp.ne.s32.totalorder %v2721, %v2723
      %vm2726 = vmpackc.low %vm2725, %vm2724
      %v2727 = vunpack.c.l.b16 %v2474
      %v2728 = vunpack.c.h.b16 %v2474
      %v2729 = vunpack.c.l.b16 0
      %v2730 = vunpack.c.h.b16 0
      %vm2731 = vcmp.ne.s32.totalorder %v2727, %v2729
      %vm2732 = vcmp.ne.s32.totalorder %v2728, %v2730
      %vm2733 = vmpackc.low %vm2732, %vm2731
      %v2734 = vunpack.c.l.b16 %v2484
      %v2735 = vunpack.c.h.b16 %v2484
      %v2736 = vunpack.c.l.b16 0
      %v2737 = vunpack.c.h.b16 0
      %vm2738 = vcmp.ne.s32.totalorder %v2734, %v2736
      %vm2739 = vcmp.ne.s32.totalorder %v2735, %v2737
      %vm2740 = vmpackc.low %vm2739, %vm2738
      %v2741 = vunpack.c.l.b16 %v2494
      %v2742 = vunpack.c.h.b16 %v2494
      %v2743 = vunpack.c.l.b16 0
      %v2744 = vunpack.c.h.b16 0
      %vm2745 = vcmp.ne.s32.totalorder %v2741, %v2743
      %vm2746 = vcmp.ne.s32.totalorder %v2742, %v2744
      %vm2747 = vmpackc.low %vm2746, %vm2745
      %v2748 = vunpack.c.l.b16 %v2504
      %v2749 = vunpack.c.h.b16 %v2504
      %v2750 = vunpack.c.l.b16 0
      %v2751 = vunpack.c.h.b16 0
      %vm2752 = vcmp.ne.s32.totalorder %v2748, %v2750
      %vm2753 = vcmp.ne.s32.totalorder %v2749, %v2751
      %vm2754 = vmpackc.low %vm2753, %vm2752
      %v2755 = vunpack.c.l.b16 %v2514
      %v2756 = vunpack.c.h.b16 %v2514
      %v2757 = vunpack.c.l.b16 0
      %v2758 = vunpack.c.h.b16 0
      %vm2759 = vcmp.ne.s32.totalorder %v2755, %v2757
      %vm2760 = vcmp.ne.s32.totalorder %v2756, %v2758
      %vm2761 = vmpackc.low %vm2760, %vm2759
      %v2762 = vunpack.c.l.b16 %v2524
      %v2763 = vunpack.c.h.b16 %v2524
      %v2764 = vunpack.c.l.b16 0
      %v2765 = vunpack.c.h.b16 0
      %vm2766 = vcmp.ne.s32.totalorder %v2762, %v2764
      %vm2767 = vcmp.ne.s32.totalorder %v2763, %v2765
      %vm2768 = vmpackc.low %vm2767, %vm2766
      %v2769 = vunpack.c.l.b16 %v2534
      %v2770 = vunpack.c.h.b16 %v2534
      %v2771 = vunpack.c.l.b16 0
      %v2772 = vunpack.c.h.b16 0
      %vm2773 = vcmp.ne.s32.totalorder %v2769, %v2771
      %vm2774 = vcmp.ne.s32.totalorder %v2770, %v2772
      %vm2775 = vmpackc.low %vm2774, %vm2773
      %v2776 = vunpack.c.l.b16 %v2544
      %v2777 = vunpack.c.h.b16 %v2544
      %v2778 = vunpack.c.l.b16 0
      %v2779 = vunpack.c.h.b16 0
      %vm2780 = vcmp.ne.s32.totalorder %v2776, %v2778
      %vm2781 = vcmp.ne.s32.totalorder %v2777, %v2779
      %vm2782 = vmpackc.low %vm2781, %vm2780
      %v2783 = vunpack.c.l.b16 %v2554
      %v2784 = vunpack.c.h.b16 %v2554
      %v2785 = vunpack.c.l.b16 0
      %v2786 = vunpack.c.h.b16 0
      %vm2787 = vcmp.ne.s32.totalorder %v2783, %v2785
      %vm2788 = vcmp.ne.s32.totalorder %v2784, %v2786
      %vm2789 = vmpackc.low %vm2788, %vm2787
      %v2790 = vunpack.c.l.b16 %v2564
      %v2791 = vunpack.c.h.b16 %v2564
      %v2792 = vunpack.c.l.b16 0
      %v2793 = vunpack.c.h.b16 0
      %vm2794 = vcmp.ne.s32.totalorder %v2790, %v2792
      %vm2795 = vcmp.ne.s32.totalorder %v2791, %v2793
      %vm2796 = vmpackc.low %vm2795, %vm2794
      %v2797 = vunpack.c.l.b16 %v2574
      %v2798 = vunpack.c.h.b16 %v2574
      %v2799 = vunpack.c.l.b16 0
      %v2800 = vunpack.c.h.b16 0
      %vm2801 = vcmp.ne.s32.totalorder %v2797, %v2799
      %vm2802 = vcmp.ne.s32.totalorder %v2798, %v2800
      %vm2803 = vmpackc.low %vm2802, %vm2801
      %v2804 = vunpack.c.l.b16 %v2579
      %v2805 = vunpack.c.h.b16 %v2579
      %v2806 = vunpack.c.l.b16 0
      %v2807 = vunpack.c.h.b16 0
      %vm2808 = vcmp.ne.s32.totalorder %v2804, %v2806
      %vm2809 = vcmp.ne.s32.totalorder %v2805, %v2807
      %vm2810 = vmpackc.low %vm2809, %vm2808
      %v2811 = vsel %vm2586, %v2097, 0
      %v2812 = vsel %vm2593, %v2098, 0
      %v2813 = vsel %vm2600, %v2099, 0
      %v2814 = vsel %vm2607, %v2100, 0
      %v2815 = vsel %vm2614, %v2101, 0
      %v2816 = vsel %vm2621, %v2102, 0
      %v2817 = vsel %vm2628, %v2103, 0
      %v2818 = vsel %vm2635, %v2104, 0
      %v2819 = vsel %vm2642, %v2105, 0
      %v2820 = vsel %vm2649, %v2106, 0
      %v2821 = vsel %vm2656, %v2107, 0
      %v2822 = vsel %vm2663, %v2108, 0
      %v2823 = vsel %vm2670, %v2109, 0
      %v2824 = vsel %vm2677, %v2110, 0
      %v2825 = vsel %vm2684, %v2111, 0
      %v2826 = vsel %vm2691, %v2112, 0
      %v2827 = vsel %vm2698, %v2113, 0
      %v2828 = vsel %vm2705, %v2114, 0
      %v2829 = vsel %vm2712, %v2115, 0
      %v2830 = vsel %vm2719, %v2116, 0
      %v2831 = vsel %vm2726, %v2117, 0
      %v2832 = vsel %vm2733, %v2118, 0
      %v2833 = vsel %vm2740, %v2119, 0
      %v2834 = vsel %vm2747, %v2120, 0
      %v2835 = vsel %vm2754, %v2121, 0
      %v2836 = vsel %vm2761, %v2122, 0
      %v2837 = vsel %vm2768, %v2123, 0
      %v2838 = vsel %vm2775, %v2124, 0
      %v2839 = vsel %vm2782, %v2125, 0
      %v2840 = vsel %vm2789, %v2126, 0
      %v2841 = vsel %vm2796, %v2127, 0
      %v2842 = vsel %vm2803, %v2128, 0
      %v2843 = vsel %vm2810, %v2129, 0
      %v2844 = vld [vmem:[%s6] sm:$0x3]
      %v2878 = vunpack.c.l.b16 %v2811
      %v2879 = vunpack.c.l.b16 %v2812
      %v2880 = vunpack.c.l.b16 %v2813
      %v2881 = vunpack.c.l.b16 %v2814
      %v2882 = vunpack.c.l.b16 %v2815
      %v2883 = vunpack.c.l.b16 %v2816
      %v2884 = vunpack.c.l.b16 %v2817
      %v2885 = vunpack.c.l.b16 %v2818
      %v2886 = vunpack.c.l.b16 %v2819
      %v2887 = vunpack.c.l.b16 %v2820
      %v2888 = vunpack.c.l.b16 %v2821
      %v2889 = vunpack.c.l.b16 %v2822
      %v2890 = vunpack.c.l.b16 %v2823
      %v2891 = vunpack.c.l.b16 %v2824
      %v2892 = vunpack.c.l.b16 %v2825
      %v2893 = vunpack.c.l.b16 %v2826
      %v2894 = vunpack.c.l.b16 %v2827
      %v2895 = vunpack.c.l.b16 %v2828
      %v2896 = vunpack.c.l.b16 %v2829
      %v2897 = vunpack.c.l.b16 %v2830
      %v2898 = vunpack.c.l.b16 %v2831
      %v2899 = vunpack.c.l.b16 %v2832
      %v2900 = vunpack.c.l.b16 %v2833
      %v2901 = vunpack.c.l.b16 %v2834
      %v2902 = vunpack.c.l.b16 %v2835
      %v2903 = vunpack.c.l.b16 %v2836
      %v2904 = vunpack.c.l.b16 %v2837
      %v2905 = vunpack.c.l.b16 %v2838
      %v2906 = vunpack.c.l.b16 %v2839
      %v2907 = vunpack.c.l.b16 %v2840
      %v2908 = vunpack.c.l.b16 %v2841
      %v2909 = vunpack.c.l.b16 %v2842
      %v2910 = vunpack.c.l.b16 %v2843
      %v2911 = vpack.c.b16 %v2879, %v2878
      %v2912 = vpack.c.b16 %v2881, %v2880
      %v2913 = vpack.c.b16 %v2883, %v2882
      %v2914 = vpack.c.b16 %v2885, %v2884
      %v2915 = vpack.c.b16 %v2887, %v2886
      %v2916 = vpack.c.b16 %v2889, %v2888
      %v2917 = vpack.c.b16 %v2891, %v2890
      %v2918 = vpack.c.b16 %v2893, %v2892
      %v2919 = vpack.c.b16 %v2895, %v2894
      %v2920 = vpack.c.b16 %v2897, %v2896
      %v2921 = vpack.c.b16 %v2899, %v2898
      %v2922 = vpack.c.b16 %v2901, %v2900
      %v2923 = vpack.c.b16 %v2903, %v2902
      %v2924 = vpack.c.b16 %v2905, %v2904
      %v2925 = vpack.c.b16 %v2907, %v2906
      %v2926 = vpack.c.b16 %v2909, %v2908
      %v2927 = vpack.c.b16 %v2910, %v2910
      %vm2928 = vsmask.f32 4352
      %v2930 = vshrl.u32 %v2911, 16
      %v2932 = vrot.slane %v2930, 3
      %v2933 = vshll.u32 %v2911, 16
      %v2935 = vrot.slane %v2933, 4
      %v2936 = vor.u32 %v2932, %v2935
      %v2938 = vshrl.u32 %v2912, 16
      %v2940 = vrot.slane %v2938, 3
      %v2941 = vshll.u32 %v2912, 16
      %v2943 = vrot.slane %v2941, 4
      %v2944 = vor.u32 %v2940, %v2943
      %v2945 = vsel %vm2928, %v2936, %v2944
      %v2947 = vshrl.u32 %v2913, 16
      %v2949 = vrot.slane %v2947, 3
      %v2950 = vshll.u32 %v2913, 16
      %v2952 = vrot.slane %v2950, 4
      %v2953 = vor.u32 %v2949, %v2952
      %v2954 = vsel %vm2928, %v2944, %v2953
      %v2956 = vshrl.u32 %v2914, 16
      %v2958 = vrot.slane %v2956, 3
      %v2959 = vshll.u32 %v2914, 16
      %v2961 = vrot.slane %v2959, 4
      %v2962 = vor.u32 %v2958, %v2961
      %v2963 = vsel %vm2928, %v2953, %v2962
      %v2965 = vshrl.u32 %v2915, 16
      %v2967 = vrot.slane %v2965, 3
      %v2968 = vshll.u32 %v2915, 16
      %v2970 = vrot.slane %v2968, 4
      %v2971 = vor.u32 %v2967, %v2970
      %v2972 = vsel %vm2928, %v2962, %v2971
      %v2974 = vshrl.u32 %v2916, 16
      %v2976 = vrot.slane %v2974, 3
      %v2977 = vshll.u32 %v2916, 16
      %v2979 = vrot.slane %v2977, 4
      %v2980 = vor.u32 %v2976, %v2979
      %v2981 = vsel %vm2928, %v2971, %v2980
      %v2983 = vshrl.u32 %v2917, 16
      %v2985 = vrot.slane %v2983, 3
      %v2986 = vshll.u32 %v2917, 16
      %v2988 = vrot.slane %v2986, 4
      %v2989 = vor.u32 %v2985, %v2988
      %v2990 = vsel %vm2928, %v2980, %v2989
      %v2992 = vshrl.u32 %v2918, 16
      %v2994 = vrot.slane %v2992, 3
      %v2995 = vshll.u32 %v2918, 16
      %v2997 = vrot.slane %v2995, 4
      %v2998 = vor.u32 %v2994, %v2997
      %v2999 = vsel %vm2928, %v2989, %v2998
      %v3001 = vshrl.u32 %v2919, 16
      %v3003 = vrot.slane %v3001, 3
      %v3004 = vshll.u32 %v2919, 16
      %v3006 = vrot.slane %v3004, 4
      %v3007 = vor.u32 %v3003, %v3006
      %v3008 = vsel %vm2928, %v2998, %v3007
      %v3010 = vshrl.u32 %v2920, 16
      %v3012 = vrot.slane %v3010, 3
      %v3013 = vshll.u32 %v2920, 16
      %v3015 = vrot.slane %v3013, 4
      %v3016 = vor.u32 %v3012, %v3015
      %v3017 = vsel %vm2928, %v3007, %v3016
      %v3019 = vshrl.u32 %v2921, 16
      %v3021 = vrot.slane %v3019, 3
      %v3022 = vshll.u32 %v2921, 16
      %v3024 = vrot.slane %v3022, 4
      %v3025 = vor.u32 %v3021, %v3024
      %v3026 = vsel %vm2928, %v3016, %v3025
      %v3028 = vshrl.u32 %v2922, 16
      %v3030 = vrot.slane %v3028, 3
      %v3031 = vshll.u32 %v2922, 16
      %v3033 = vrot.slane %v3031, 4
      %v3034 = vor.u32 %v3030, %v3033
      %v3035 = vsel %vm2928, %v3025, %v3034
      %v3037 = vshrl.u32 %v2923, 16
      %v3039 = vrot.slane %v3037, 3
      %v3040 = vshll.u32 %v2923, 16
      %v3042 = vrot.slane %v3040, 4
      %v3043 = vor.u32 %v3039, %v3042
      %v3044 = vsel %vm2928, %v3034, %v3043
      %v3046 = vshrl.u32 %v2924, 16
      %v3048 = vrot.slane %v3046, 3
      %v3049 = vshll.u32 %v2924, 16
      %v3051 = vrot.slane %v3049, 4
      %v3052 = vor.u32 %v3048, %v3051
      %v3053 = vsel %vm2928, %v3043, %v3052
      %v3055 = vshrl.u32 %v2925, 16
      %v3057 = vrot.slane %v3055, 3
      %v3058 = vshll.u32 %v2925, 16
      %v3060 = vrot.slane %v3058, 4
      %v3061 = vor.u32 %v3057, %v3060
      %v3062 = vsel %vm2928, %v3052, %v3061
      %v3064 = vshrl.u32 %v2926, 16
      %v3066 = vrot.slane %v3064, 3
      %v3067 = vshll.u32 %v2926, 16
      %v3069 = vrot.slane %v3067, 4
      %v3070 = vor.u32 %v3066, %v3069
      %v3071 = vsel %vm2928, %v3061, %v3070
      %v3073 = vshrl.u32 %v2927, 16
      %v3075 = vrot.slane %v3073, 3
      %v3076 = vshll.u32 %v2927, 16
      %v3078 = vrot.slane %v3076, 4
      %v3079 = vor.u32 %v3075, %v3078
      %v3080 = vsel %vm2928, %v3070, %v3079
      %v3082 = vsel %vm1002, %v2945, 0
      %v3085 = vsel %vm1002, %v2954, 0
      %v3088 = vsel %vm1002, %v2963, 0
      %v3091 = vsel %vm1002, %v2972, 0
      %v3094 = vsel %vm1002, %v2981, 0
      %v3097 = vsel %vm1002, %v2990, 0
      %v3100 = vsel %vm1002, %v2999, 0
      %v3103 = vsel %vm1002, %v3008, 0
      %v3106 = vsel %vm1002, %v3017, 0
      %v3109 = vsel %vm1002, %v3026, 0
      %v3112 = vsel %vm1002, %v3035, 0
      %v3115 = vsel %vm1002, %v3044, 0
      %v3118 = vsel %vm1002, %v3053, 0
      %v3121 = vsel %vm1002, %v3062, 0
      %v3124 = vsel %vm1002, %v3071, 0
      %v3127 = vsel %vm1002, %v3080, 0
      %vm3129 = vcmask 1041408
      %v3131 = vsel %vm3129, %v2844, 0
      %3133 = vmatpush.bf16.msra.mxu0 0
      %3134 = vmatpush.bf16.msra.mxu0 0
      %3135 = vmatpush.bf16.msra.mxu0 0
      %3136 = vmatpush.bf16.msra.mxu0 0
      %3137 = vmatpush.bf16.msra.mxu0 0
      %3138 = vmatpush.bf16.msra.mxu0 0
      %3139 = vmatpush.bf16.msra.mxu0 0
      %3140 = vmatpush.bf16.msra.mxu0 %v3131
      %3141 = vmatmul.bf16.gmra.mxu0 %v3082
      %v3142 = vpop.f32.mrf.mxu0
      %v3143 = vadd.f32 0.0, %v3142
      %v3144 = vpop.f32.mrf.mxu0
      %v3145 = vadd.f32 0.0, %v3144
      %3146 = vmatmul.bf16.gmra.mxu0 %v3085
      %v3147 = vpop.f32.mrf.mxu0
      %v3148 = vadd.f32 0.0, %v3147
      %v3149 = vpop.f32.mrf.mxu0
      %v3150 = vadd.f32 0.0, %v3149
      %3151 = vmatmul.bf16.gmra.mxu0 %v3088
      %v3152 = vpop.f32.mrf.mxu0
      %v3153 = vadd.f32 0.0, %v3152
      %v3154 = vpop.f32.mrf.mxu0
      %v3155 = vadd.f32 0.0, %v3154
      %3156 = vmatmul.bf16.gmra.mxu0 %v3091
      %v3157 = vpop.f32.mrf.mxu0
      %v3158 = vadd.f32 0.0, %v3157
      %v3159 = vpop.f32.mrf.mxu0
      %v3160 = vadd.f32 0.0, %v3159
      %3161 = vmatmul.bf16.gmra.mxu0 %v3094
      %v3162 = vpop.f32.mrf.mxu0
      %v3163 = vadd.f32 0.0, %v3162
      %v3164 = vpop.f32.mrf.mxu0
      %v3165 = vadd.f32 0.0, %v3164
      %3166 = vmatmul.bf16.gmra.mxu0 %v3097
      %v3167 = vpop.f32.mrf.mxu0
      %v3168 = vadd.f32 0.0, %v3167
      %v3169 = vpop.f32.mrf.mxu0
      %v3170 = vadd.f32 0.0, %v3169
      %3171 = vmatmul.bf16.gmra.mxu0 %v3100
      %v3172 = vpop.f32.mrf.mxu0
      %v3173 = vadd.f32 0.0, %v3172
      %v3174 = vpop.f32.mrf.mxu0
      %v3175 = vadd.f32 0.0, %v3174
      %3176 = vmatmul.bf16.gmra.mxu0 %v3103
      %v3177 = vpop.f32.mrf.mxu0
      %v3178 = vadd.f32 0.0, %v3177
      %v3179 = vpop.f32.mrf.mxu0
      %v3180 = vadd.f32 0.0, %v3179
      %3181 = vmatmul.bf16.gmra.mxu0 %v3106
      %v3182 = vpop.f32.mrf.mxu0
      %v3183 = vadd.f32 0.0, %v3182
      %v3184 = vpop.f32.mrf.mxu0
      %v3185 = vadd.f32 0.0, %v3184
      %3186 = vmatmul.bf16.gmra.mxu0 %v3109
      %v3187 = vpop.f32.mrf.mxu0
      %v3188 = vadd.f32 0.0, %v3187
      %v3189 = vpop.f32.mrf.mxu0
      %v3190 = vadd.f32 0.0, %v3189
      %3191 = vmatmul.bf16.gmra.mxu0 %v3112
      %v3192 = vpop.f32.mrf.mxu0
      %v3193 = vadd.f32 0.0, %v3192
      %v3194 = vpop.f32.mrf.mxu0
      %v3195 = vadd.f32 0.0, %v3194
      %3196 = vmatmul.bf16.gmra.mxu0 %v3115
      %v3197 = vpop.f32.mrf.mxu0
      %v3198 = vadd.f32 0.0, %v3197
      %v3199 = vpop.f32.mrf.mxu0
      %v3200 = vadd.f32 0.0, %v3199
      %3201 = vmatmul.bf16.gmra.mxu0 %v3118
      %v3202 = vpop.f32.mrf.mxu0
      %v3203 = vadd.f32 0.0, %v3202
      %v3204 = vpop.f32.mrf.mxu0
      %v3205 = vadd.f32 0.0, %v3204
      %3206 = vmatmul.bf16.gmra.mxu0 %v3121
      %v3207 = vpop.f32.mrf.mxu0
      %v3208 = vadd.f32 0.0, %v3207
      %v3209 = vpop.f32.mrf.mxu0
      %v3210 = vadd.f32 0.0, %v3209
      %3211 = vmatmul.bf16.gmra.mxu0 %v3124
      %v3212 = vpop.f32.mrf.mxu0
      %v3213 = vadd.f32 0.0, %v3212
      %v3214 = vpop.f32.mrf.mxu0
      %v3215 = vadd.f32 0.0, %v3214
      %3216 = vmatmul.bf16.gmra.mxu0 %v3127
      %v3217 = vpop.f32.mrf.mxu0
      %v3218 = vadd.f32 0.0, %v3217
      %v3219 = vpop.f32.mrf.mxu0
      %v3220 = vadd.f32 0.0, %v3219
      %3221 = vdwg.mxu0
      %v3254 = vunpack.c.l.b16 %v2026
      %v3255 = vunpack.c.l.b16 %v2027
      %v3256 = vunpack.c.l.b16 %v2028
      %v3257 = vunpack.c.l.b16 %v2029
      %v3258 = vunpack.c.l.b16 %v2030
      %v3259 = vunpack.c.l.b16 %v2031
      %v3260 = vunpack.c.l.b16 %v2032
      %v3261 = vunpack.c.l.b16 %v2033
      %v3262 = vunpack.c.l.b16 %v2034
      %v3263 = vunpack.c.l.b16 %v2035
      %v3264 = vunpack.c.l.b16 %v2036
      %v3265 = vunpack.c.l.b16 %v2037
      %v3266 = vunpack.c.l.b16 %v2038
      %v3267 = vunpack.c.l.b16 %v2039
      %v3268 = vunpack.c.l.b16 %v2040
      %v3269 = vunpack.c.l.b16 %v2041
      %v3270 = vunpack.c.l.b16 %v2042
      %v3271 = vunpack.c.l.b16 %v2043
      %v3272 = vunpack.c.l.b16 %v2044
      %v3273 = vunpack.c.l.b16 %v2045
      %v3274 = vunpack.c.l.b16 %v2046
      %v3275 = vunpack.c.l.b16 %v2047
      %v3276 = vunpack.c.l.b16 %v2048
      %v3277 = vunpack.c.l.b16 %v2049
      %v3278 = vunpack.c.l.b16 %v2050
      %v3279 = vunpack.c.l.b16 %v2051
      %v3280 = vunpack.c.l.b16 %v2052
      %v3281 = vunpack.c.l.b16 %v2053
      %v3282 = vunpack.c.l.b16 %v2054
      %v3283 = vunpack.c.l.b16 %v2055
      %v3284 = vunpack.c.l.b16 %v2056
      %v3285 = vunpack.c.l.b16 %v2057
      %v3286 = vpack.c.b16 %v3255, %v3254
      %v3287 = vpack.c.b16 %v3257, %v3256
      %v3288 = vpack.c.b16 %v3259, %v3258
      %v3289 = vpack.c.b16 %v3261, %v3260
      %v3290 = vpack.c.b16 %v3263, %v3262
      %v3291 = vpack.c.b16 %v3265, %v3264
      %v3292 = vpack.c.b16 %v3267, %v3266
      %v3293 = vpack.c.b16 %v3269, %v3268
      %v3294 = vpack.c.b16 %v3271, %v3270
      %v3295 = vpack.c.b16 %v3273, %v3272
      %v3296 = vpack.c.b16 %v3275, %v3274
      %v3297 = vpack.c.b16 %v3277, %v3276
      %v3298 = vpack.c.b16 %v3279, %v3278
      %v3299 = vpack.c.b16 %v3281, %v3280
      %v3300 = vpack.c.b16 %v3283, %v3282
      %v3301 = vpack.c.b16 %v3285, %v3284
      %v3303 = vsel %vm1002, %v3286, 0
      %v3306 = vsel %vm1002, %v3287, 0
      %v3309 = vsel %vm1002, %v3288, 0
      %v3312 = vsel %vm1002, %v3289, 0
      %v3315 = vsel %vm1002, %v3290, 0
      %v3318 = vsel %vm1002, %v3291, 0
      %v3321 = vsel %vm1002, %v3292, 0
      %v3324 = vsel %vm1002, %v3293, 0
      %v3327 = vsel %vm1002, %v3294, 0
      %v3330 = vsel %vm1002, %v3295, 0
      %v3333 = vsel %vm1002, %v3296, 0
      %v3336 = vsel %vm1002, %v3297, 0
      %v3339 = vsel %vm1002, %v3298, 0
      %v3342 = vsel %vm1002, %v3299, 0
      %v3345 = vsel %vm1002, %v3300, 0
      %v3348 = vsel %vm1002, %v3301, 0
      %v3351 = vsel %vm3129, %v2096, 0
      %3353 = vmatpush.bf16.msra.mxu0 0
      %3354 = vmatpush.bf16.msra.mxu0 0
      %3355 = vmatpush.bf16.msra.mxu0 0
      %3356 = vmatpush.bf16.msra.mxu0 0
      %3357 = vmatpush.bf16.msra.mxu0 0
      %3358 = vmatpush.bf16.msra.mxu0 0
      %3359 = vmatpush.bf16.msra.mxu0 0
      %3360 = vmatpush.bf16.msra.mxu0 %v3351
      %3361 = vmatmul.bf16.gmra.mxu0 %v3303
      %v3362 = vpop.f32.mrf.mxu0
      %v3363 = vadd.f32 %v3143, %v3362
      %v3364 = vpop.f32.mrf.mxu0
      %v3365 = vadd.f32 %v3145, %v3364
      %3366 = vmatmul.bf16.gmra.mxu0 %v3306
      %v3367 = vpop.f32.mrf.mxu0
      %v3368 = vadd.f32 %v3148, %v3367
      %v3369 = vpop.f32.mrf.mxu0
      %v3370 = vadd.f32 %v3150, %v3369
      %3371 = vmatmul.bf16.gmra.mxu0 %v3309
      %v3372 = vpop.f32.mrf.mxu0
      %v3373 = vadd.f32 %v3153, %v3372
      %v3374 = vpop.f32.mrf.mxu0
      %v3375 = vadd.f32 %v3155, %v3374
      %3376 = vmatmul.bf16.gmra.mxu0 %v3312
      %v3377 = vpop.f32.mrf.mxu0
      %v3378 = vadd.f32 %v3158, %v3377
      %v3379 = vpop.f32.mrf.mxu0
      %v3380 = vadd.f32 %v3160, %v3379
      %3381 = vmatmul.bf16.gmra.mxu0 %v3315
      %v3382 = vpop.f32.mrf.mxu0
      %v3383 = vadd.f32 %v3163, %v3382
      %v3384 = vpop.f32.mrf.mxu0
      %v3385 = vadd.f32 %v3165, %v3384
      %3386 = vmatmul.bf16.gmra.mxu0 %v3318
      %v3387 = vpop.f32.mrf.mxu0
      %v3388 = vadd.f32 %v3168, %v3387
      %v3389 = vpop.f32.mrf.mxu0
      %v3390 = vadd.f32 %v3170, %v3389
      %3391 = vmatmul.bf16.gmra.mxu0 %v3321
      %v3392 = vpop.f32.mrf.mxu0
      %v3393 = vadd.f32 %v3173, %v3392
      %v3394 = vpop.f32.mrf.mxu0
      %v3395 = vadd.f32 %v3175, %v3394
      %3396 = vmatmul.bf16.gmra.mxu0 %v3324
      %v3397 = vpop.f32.mrf.mxu0
      %v3398 = vadd.f32 %v3178, %v3397
      %v3399 = vpop.f32.mrf.mxu0
      %v3400 = vadd.f32 %v3180, %v3399
      %3401 = vmatmul.bf16.gmra.mxu0 %v3327
      %v3402 = vpop.f32.mrf.mxu0
      %v3403 = vadd.f32 %v3183, %v3402
      %v3404 = vpop.f32.mrf.mxu0
      %v3405 = vadd.f32 %v3185, %v3404
      %3406 = vmatmul.bf16.gmra.mxu0 %v3330
      %v3407 = vpop.f32.mrf.mxu0
      %v3408 = vadd.f32 %v3188, %v3407
      %v3409 = vpop.f32.mrf.mxu0
      %v3410 = vadd.f32 %v3190, %v3409
      %3411 = vmatmul.bf16.gmra.mxu0 %v3333
      %v3412 = vpop.f32.mrf.mxu0
      %v3413 = vadd.f32 %v3193, %v3412
      %v3414 = vpop.f32.mrf.mxu0
      %v3415 = vadd.f32 %v3195, %v3414
      %3416 = vmatmul.bf16.gmra.mxu0 %v3336
      %v3417 = vpop.f32.mrf.mxu0
      %v3418 = vadd.f32 %v3198, %v3417
      %v3419 = vpop.f32.mrf.mxu0
      %v3420 = vadd.f32 %v3200, %v3419
      %3421 = vmatmul.bf16.gmra.mxu0 %v3339
      %v3422 = vpop.f32.mrf.mxu0
      %v3423 = vadd.f32 %v3203, %v3422
      %v3424 = vpop.f32.mrf.mxu0
      %v3425 = vadd.f32 %v3205, %v3424
      %3426 = vmatmul.bf16.gmra.mxu0 %v3342
      %v3427 = vpop.f32.mrf.mxu0
      %v3428 = vadd.f32 %v3208, %v3427
      %v3429 = vpop.f32.mrf.mxu0
      %v3430 = vadd.f32 %v3210, %v3429
      %3431 = vmatmul.bf16.gmra.mxu0 %v3345
      %v3432 = vpop.f32.mrf.mxu0
      %v3433 = vadd.f32 %v3213, %v3432
      %v3434 = vpop.f32.mrf.mxu0
      %v3435 = vadd.f32 %v3215, %v3434
      %3436 = vmatmul.bf16.gmra.mxu0 %v3348
      %v3437 = vpop.f32.mrf.mxu0
      %v3438 = vadd.f32 %v3218, %v3437
      %v3439 = vpop.f32.mrf.mxu0
      %v3440 = vadd.f32 %v3220, %v3439
      %3441 = vdwg.mxu0
      %s3442 = scalar_lea.vmem %s6, 2
      %v3443 = vld [vmem:[%s3442] sm:$0x3]
      %v3476 = vunpack.c.l.b16 %v2098
      %v3477 = vunpack.c.l.b16 %v2099
      %v3478 = vunpack.c.l.b16 %v2100
      %v3479 = vunpack.c.l.b16 %v2101
      %v3480 = vunpack.c.l.b16 %v2102
      %v3481 = vunpack.c.l.b16 %v2103
      %v3482 = vunpack.c.l.b16 %v2104
      %v3483 = vunpack.c.l.b16 %v2105
      %v3484 = vunpack.c.l.b16 %v2106
      %v3485 = vunpack.c.l.b16 %v2107
      %v3486 = vunpack.c.l.b16 %v2108
      %v3487 = vunpack.c.l.b16 %v2109
      %v3488 = vunpack.c.l.b16 %v2110
      %v3489 = vunpack.c.l.b16 %v2111
      %v3490 = vunpack.c.l.b16 %v2112
      %v3491 = vunpack.c.l.b16 %v2113
      %v3492 = vunpack.c.l.b16 %v2114
      %v3493 = vunpack.c.l.b16 %v2115
      %v3494 = vunpack.c.l.b16 %v2116
      %v3495 = vunpack.c.l.b16 %v2117
      %v3496 = vunpack.c.l.b16 %v2118
      %v3497 = vunpack.c.l.b16 %v2119
      %v3498 = vunpack.c.l.b16 %v2120
      %v3499 = vunpack.c.l.b16 %v2121
      %v3500 = vunpack.c.l.b16 %v2122
      %v3501 = vunpack.c.l.b16 %v2123
      %v3502 = vunpack.c.l.b16 %v2124
      %v3503 = vunpack.c.l.b16 %v2125
      %v3504 = vunpack.c.l.b16 %v2126
      %v3505 = vunpack.c.l.b16 %v2127
      %v3506 = vunpack.c.l.b16 %v2128
      %v3507 = vunpack.c.l.b16 %v2129
      %v3508 = vpack.c.b16 %v3477, %v3476
      %v3509 = vpack.c.b16 %v3479, %v3478
      %v3510 = vpack.c.b16 %v3481, %v3480
      %v3511 = vpack.c.b16 %v3483, %v3482
      %v3512 = vpack.c.b16 %v3485, %v3484
      %v3513 = vpack.c.b16 %v3487, %v3486
      %v3514 = vpack.c.b16 %v3489, %v3488
      %v3515 = vpack.c.b16 %v3491, %v3490
      %v3516 = vpack.c.b16 %v3493, %v3492
      %v3517 = vpack.c.b16 %v3495, %v3494
      %v3518 = vpack.c.b16 %v3497, %v3496
      %v3519 = vpack.c.b16 %v3499, %v3498
      %v3520 = vpack.c.b16 %v3501, %v3500
      %v3521 = vpack.c.b16 %v3503, %v3502
      %v3522 = vpack.c.b16 %v3505, %v3504
      %v3523 = vpack.c.b16 %v3507, %v3506
      %v3525 = vsel %vm1002, %v3508, 0
      %v3528 = vsel %vm1002, %v3509, 0
      %v3531 = vsel %vm1002, %v3510, 0
      %v3534 = vsel %vm1002, %v3511, 0
      %v3537 = vsel %vm1002, %v3512, 0
      %v3540 = vsel %vm1002, %v3513, 0
      %v3543 = vsel %vm1002, %v3514, 0
      %v3546 = vsel %vm1002, %v3515, 0
      %v3549 = vsel %vm1002, %v3516, 0
      %v3552 = vsel %vm1002, %v3517, 0
      %v3555 = vsel %vm1002, %v3518, 0
      %v3558 = vsel %vm1002, %v3519, 0
      %v3561 = vsel %vm1002, %v3520, 0
      %v3564 = vsel %vm1002, %v3521, 0
      %v3567 = vsel %vm1002, %v3522, 0
      %v3570 = vsel %vm1002, %v3523, 0
      %v3573 = vsel %vm3129, %v3443, 0
      %3575 = vmatpush.bf16.msra.mxu0 0
      %3576 = vmatpush.bf16.msra.mxu0 0
      %3577 = vmatpush.bf16.msra.mxu0 0
      %3578 = vmatpush.bf16.msra.mxu0 0
      %3579 = vmatpush.bf16.msra.mxu0 0
      %3580 = vmatpush.bf16.msra.mxu0 0
      %3581 = vmatpush.bf16.msra.mxu0 0
      %3582 = vmatpush.bf16.msra.mxu0 %v3573
      %3583 = vmatmul.bf16.gmra.mxu0 %v3525
      %v3584 = vpop.f32.mrf.mxu0
      %v3585 = vadd.f32 0.0, %v3584
      %v3586 = vpop.f32.mrf.mxu0
      %v3587 = vadd.f32 0.0, %v3586
      %3588 = vmatmul.bf16.gmra.mxu0 %v3528
      %v3589 = vpop.f32.mrf.mxu0
      %v3590 = vadd.f32 0.0, %v3589
      %v3591 = vpop.f32.mrf.mxu0
      %v3592 = vadd.f32 0.0, %v3591
      %3593 = vmatmul.bf16.gmra.mxu0 %v3531
      %v3594 = vpop.f32.mrf.mxu0
      %v3595 = vadd.f32 0.0, %v3594
      %v3596 = vpop.f32.mrf.mxu0
      %v3597 = vadd.f32 0.0, %v3596
      %3598 = vmatmul.bf16.gmra.mxu0 %v3534
      %v3599 = vpop.f32.mrf.mxu0
      %v3600 = vadd.f32 0.0, %v3599
      %v3601 = vpop.f32.mrf.mxu0
      %v3602 = vadd.f32 0.0, %v3601
      %3603 = vmatmul.bf16.gmra.mxu0 %v3537
      %v3604 = vpop.f32.mrf.mxu0
      %v3605 = vadd.f32 0.0, %v3604
      %v3606 = vpop.f32.mrf.mxu0
      %v3607 = vadd.f32 0.0, %v3606
      %3608 = vmatmul.bf16.gmra.mxu0 %v3540
      %v3609 = vpop.f32.mrf.mxu0
      %v3610 = vadd.f32 0.0, %v3609
      %v3611 = vpop.f32.mrf.mxu0
      %v3612 = vadd.f32 0.0, %v3611
      %3613 = vmatmul.bf16.gmra.mxu0 %v3543
      %v3614 = vpop.f32.mrf.mxu0
      %v3615 = vadd.f32 0.0, %v3614
      %v3616 = vpop.f32.mrf.mxu0
      %v3617 = vadd.f32 0.0, %v3616
      %3618 = vmatmul.bf16.gmra.mxu0 %v3546
      %v3619 = vpop.f32.mrf.mxu0
      %v3620 = vadd.f32 0.0, %v3619
      %v3621 = vpop.f32.mrf.mxu0
      %v3622 = vadd.f32 0.0, %v3621
      %3623 = vmatmul.bf16.gmra.mxu0 %v3549
      %v3624 = vpop.f32.mrf.mxu0
      %v3625 = vadd.f32 0.0, %v3624
      %v3626 = vpop.f32.mrf.mxu0
      %v3627 = vadd.f32 0.0, %v3626
      %3628 = vmatmul.bf16.gmra.mxu0 %v3552
      %v3629 = vpop.f32.mrf.mxu0
      %v3630 = vadd.f32 0.0, %v3629
      %v3631 = vpop.f32.mrf.mxu0
      %v3632 = vadd.f32 0.0, %v3631
      %3633 = vmatmul.bf16.gmra.mxu0 %v3555
      %v3634 = vpop.f32.mrf.mxu0
      %v3635 = vadd.f32 0.0, %v3634
      %v3636 = vpop.f32.mrf.mxu0
      %v3637 = vadd.f32 0.0, %v3636
      %3638 = vmatmul.bf16.gmra.mxu0 %v3558
      %v3639 = vpop.f32.mrf.mxu0
      %v3640 = vadd.f32 0.0, %v3639
      %v3641 = vpop.f32.mrf.mxu0
      %v3642 = vadd.f32 0.0, %v3641
      %3643 = vmatmul.bf16.gmra.mxu0 %v3561
      %v3644 = vpop.f32.mrf.mxu0
      %v3645 = vadd.f32 0.0, %v3644
      %v3646 = vpop.f32.mrf.mxu0
      %v3647 = vadd.f32 0.0, %v3646
      %3648 = vmatmul.bf16.gmra.mxu0 %v3564
      %v3649 = vpop.f32.mrf.mxu0
      %v3650 = vadd.f32 0.0, %v3649
      %v3651 = vpop.f32.mrf.mxu0
      %v3652 = vadd.f32 0.0, %v3651
      %3653 = vmatmul.bf16.gmra.mxu0 %v3567
      %v3654 = vpop.f32.mrf.mxu0
      %v3655 = vadd.f32 0.0, %v3654
      %v3656 = vpop.f32.mrf.mxu0
      %v3657 = vadd.f32 0.0, %v3656
      %3658 = vmatmul.bf16.gmra.mxu0 %v3570
      %v3659 = vpop.f32.mrf.mxu0
      %v3660 = vadd.f32 0.0, %v3659
      %v3661 = vpop.f32.mrf.mxu0
      %v3662 = vadd.f32 0.0, %v3661
      %3663 = vdwg.mxu0
      %v3664 = vadd.f32 %v3363, %v3585
      %v3665 = vadd.f32 %v3365, %v3587
      %v3666 = vadd.f32 %v3368, %v3590
      %v3667 = vadd.f32 %v3370, %v3592
      %v3668 = vadd.f32 %v3373, %v3595
      %v3669 = vadd.f32 %v3375, %v3597
      %v3670 = vadd.f32 %v3378, %v3600
      %v3671 = vadd.f32 %v3380, %v3602
      %v3672 = vadd.f32 %v3383, %v3605
      %v3673 = vadd.f32 %v3385, %v3607
      %v3674 = vadd.f32 %v3388, %v3610
      %v3675 = vadd.f32 %v3390, %v3612
      %v3676 = vadd.f32 %v3393, %v3615
      %v3677 = vadd.f32 %v3395, %v3617
      %v3678 = vadd.f32 %v3398, %v3620
      %v3679 = vadd.f32 %v3400, %v3622
      %v3680 = vadd.f32 %v3403, %v3625
      %v3681 = vadd.f32 %v3405, %v3627
      %v3682 = vadd.f32 %v3408, %v3630
      %v3683 = vadd.f32 %v3410, %v3632
      %v3684 = vadd.f32 %v3413, %v3635
      %v3685 = vadd.f32 %v3415, %v3637
      %v3686 = vadd.f32 %v3418, %v3640
      %v3687 = vadd.f32 %v3420, %v3642
      %v3688 = vadd.f32 %v3423, %v3645
      %v3689 = vadd.f32 %v3425, %v3647
      %v3690 = vadd.f32 %v3428, %v3650
      %v3691 = vadd.f32 %v3430, %v3652
      %v3692 = vadd.f32 %v3433, %v3655
      %v3693 = vadd.f32 %v3435, %v3657
      %v3694 = vadd.f32 %v3438, %v3660
      %v3695 = vadd.f32 %v3440, %v3662
      %v3696 = vld [vmem:[#allocation2 + $0x4] sm:$0xf]
      %v3697 = vld [vmem:[#allocation2 + $0x8] sm:$0xf]
      %v3698 = vld [vmem:[#allocation2 + $0xc] sm:$0xf]
      %v3699 = vld [vmem:[#allocation2 + $0x10] sm:$0xf]
      %v3700 = vld [vmem:[#allocation2 + $0x14] sm:$0xf]
      %v3701 = vld [vmem:[#allocation2 + $0x18] sm:$0xf]
      %v3702 = vld [vmem:[#allocation2 + $0x1c] sm:$0xf]
      %v3703 = vld [vmem:[#allocation2 + $0x20] sm:$0xf]
      %v3704 = vld [vmem:[#allocation2 + $0x24] sm:$0xf]
      %v3705 = vld [vmem:[#allocation2 + $0x28] sm:$0xf]
      %v3706 = vld [vmem:[#allocation2 + $0x2c] sm:$0xf]
      %v3707 = vld [vmem:[#allocation2 + $0x30] sm:$0xf]
      %v3708 = vld [vmem:[#allocation2 + $0x34] sm:$0xf]
      %v3709 = vld [vmem:[#allocation2 + $0x38] sm:$0xf]
      %v3710 = vld [vmem:[#allocation2 + $0x3c] sm:$0xf]
      %v3711 = vld [vmem:[#allocation2 + $0x40] sm:$0xf]
      %v3712 = vld [vmem:[#allocation2 + $0x44] sm:$0xf]
      %v3713 = vld [vmem:[#allocation2 + $0x48] sm:$0xf]
      %v3714 = vld [vmem:[#allocation2 + $0x4c] sm:$0xf]
      %v3715 = vld [vmem:[#allocation2 + $0x50] sm:$0xf]
      %v3716 = vld [vmem:[#allocation2 + $0x54] sm:$0xf]
      %v3717 = vld [vmem:[#allocation2 + $0x58] sm:$0xf]
      %v3718 = vld [vmem:[#allocation2 + $0x5c] sm:$0xf]
      %v3719 = vld [vmem:[#allocation2 + $0x60] sm:$0xf]
      %v3720 = vld [vmem:[#allocation2 + $0x64] sm:$0xf]
      %v3721 = vld [vmem:[#allocation2 + $0x68] sm:$0xf]
      %v3722 = vld [vmem:[#allocation2 + $0x6c] sm:$0xf]
      %v3723 = vld [vmem:[#allocation2 + $0x70] sm:$0xf]
      %v3724 = vld [vmem:[#allocation2 + $0x74] sm:$0xf]
      %v3725 = vld [vmem:[#allocation2 + $0x78] sm:$0xf]
      %v3726 = vld [vmem:[#allocation2 + $0x7c] sm:$0xf]
      %v3727 = vld [vmem:[#allocation2 + $0x80] sm:$0xf]
      %v3728 = vld [vmem:[#allocation2 + $0x84] sm:$0x1]
      %v3729 = vsel %vm966, 1, 0
      %v3730 = vsel %vm967, 1, 0
      %v3731 = vsel %vm968, 1, 0
      %v3732 = vsel %vm969, 1, 0
      %v3733 = vsel %vm970, 1, 0
      %v3734 = vsel %vm971, 1, 0
      %v3735 = vsel %vm972, 1, 0
      %v3736 = vsel %vm973, 1, 0
      %v3737 = vsel %vm974, 1, 0
      %v3738 = vsel %vm975, 1, 0
      %v3739 = vsel %vm976, 1, 0
      %v3740 = vsel %vm977, 1, 0
      %v3741 = vsel %vm978, 1, 0
      %v3742 = vsel %vm979, 1, 0
      %v3743 = vsel %vm980, 1, 0
      %v3744 = vsel %vm981, 1, 0
      %v3745 = vsel %vm982, 1, 0
      %v3746 = vsel %vm983, 1, 0
      %v3747 = vsel %vm984, 1, 0
      %v3748 = vsel %vm985, 1, 0
      %v3749 = vsel %vm986, 1, 0
      %v3750 = vsel %vm987, 1, 0
      %v3751 = vsel %vm988, 1, 0
      %v3752 = vsel %vm989, 1, 0
      %v3753 = vsel %vm990, 1, 0
      %v3754 = vsel %vm991, 1, 0
      %v3755 = vsel %vm992, 1, 0
      %v3756 = vsel %vm993, 1, 0
      %v3757 = vsel %vm994, 1, 0
      %v3758 = vsel %vm995, 1, 0
      %v3759 = vsel %vm996, 1, 0
      %v3760 = vsel %vm997, 1, 0
      %vm3761 = vcmp.eq.s32.totalorder %v3729, 1
      %vm3762 = vcmp.eq.s32.totalorder %v3730, 1
      %vm3763 = vcmp.eq.s32.totalorder %v3731, 1
      %vm3764 = vcmp.eq.s32.totalorder %v3732, 1
      %vm3765 = vcmp.eq.s32.totalorder %v3733, 1
      %vm3766 = vcmp.eq.s32.totalorder %v3734, 1
      %vm3767 = vcmp.eq.s32.totalorder %v3735, 1
      %vm3768 = vcmp.eq.s32.totalorder %v3736, 1
      %vm3769 = vcmp.eq.s32.totalorder %v3737, 1
      %vm3770 = vcmp.eq.s32.totalorder %v3738, 1
      %vm3771 = vcmp.eq.s32.totalorder %v3739, 1
      %vm3772 = vcmp.eq.s32.totalorder %v3740, 1
      %vm3773 = vcmp.eq.s32.totalorder %v3741, 1
      %vm3774 = vcmp.eq.s32.totalorder %v3742, 1
      %vm3775 = vcmp.eq.s32.totalorder %v3743, 1
      %vm3776 = vcmp.eq.s32.totalorder %v3744, 1
      %vm3777 = vcmp.eq.s32.totalorder %v3745, 1
      %vm3778 = vcmp.eq.s32.totalorder %v3746, 1
      %vm3779 = vcmp.eq.s32.totalorder %v3747, 1
      %vm3780 = vcmp.eq.s32.totalorder %v3748, 1
      %vm3781 = vcmp.eq.s32.totalorder %v3749, 1
      %vm3782 = vcmp.eq.s32.totalorder %v3750, 1
      %vm3783 = vcmp.eq.s32.totalorder %v3751, 1
      %vm3784 = vcmp.eq.s32.totalorder %v3752, 1
      %vm3785 = vcmp.eq.s32.totalorder %v3753, 1
      %vm3786 = vcmp.eq.s32.totalorder %v3754, 1
      %vm3787 = vcmp.eq.s32.totalorder %v3755, 1
      %vm3788 = vcmp.eq.s32.totalorder %v3756, 1
      %vm3789 = vcmp.eq.s32.totalorder %v3757, 1
      %vm3790 = vcmp.eq.s32.totalorder %v3758, 1
      %vm3791 = vcmp.eq.s32.totalorder %v3759, 1
      %vm3792 = vcmp.eq.s32.totalorder %v3760, 1
      %vm3793 = vmpackc.low %vm3761, %vm3761
      %vm3794 = vmpackc.low %vm3762, %vm3762
      %vm3795 = vmpackc.low %vm3763, %vm3763
      %vm3796 = vmpackc.low %vm3764, %vm3764
      %vm3797 = vmpackc.low %vm3765, %vm3765
      %vm3798 = vmpackc.low %vm3766, %vm3766
      %vm3799 = vmpackc.low %vm3767, %vm3767
      %vm3800 = vmpackc.low %vm3768, %vm3768
      %vm3801 = vmpackc.low %vm3769, %vm3769
      %vm3802 = vmpackc.low %vm3770, %vm3770
      %vm3803 = vmpackc.low %vm3771, %vm3771
      %vm3804 = vmpackc.low %vm3772, %vm3772
      %vm3805 = vmpackc.low %vm3773, %vm3773
      %vm3806 = vmpackc.low %vm3774, %vm3774
      %vm3807 = vmpackc.low %vm3775, %vm3775
      %vm3808 = vmpackc.low %vm3776, %vm3776
      %vm3809 = vmpackc.low %vm3777, %vm3777
      %vm3810 = vmpackc.low %vm3778, %vm3778
      %vm3811 = vmpackc.low %vm3779, %vm3779
      %vm3812 = vmpackc.low %vm3780, %vm3780
      %vm3813 = vmpackc.low %vm3781, %vm3781
      %vm3814 = vmpackc.low %vm3782, %vm3782
      %vm3815 = vmpackc.low %vm3783, %vm3783
      %vm3816 = vmpackc.low %vm3784, %vm3784
      %vm3817 = vmpackc.low %vm3785, %vm3785
      %vm3818 = vmpackc.low %vm3786, %vm3786
      %vm3819 = vmpackc.low %vm3787, %vm3787
      %vm3820 = vmpackc.low %vm3788, %vm3788
      %vm3821 = vmpackc.low %vm3789, %vm3789
      %vm3822 = vmpackc.low %vm3790, %vm3790
      %vm3823 = vmpackc.low %vm3791, %vm3791
      %vm3824 = vmpackc.low %vm3792, %vm3792
      %v3825 = vsel %vm3793, 65537, 0
      %v3826 = vsel %vm3794, 65537, 0
      %v3827 = vsel %vm3795, 65537, 0
      %v3828 = vsel %vm3796, 65537, 0
      %v3829 = vsel %vm3797, 65537, 0
      %v3830 = vsel %vm3798, 65537, 0
      %v3831 = vsel %vm3799, 65537, 0
      %v3832 = vsel %vm3800, 65537, 0
      %v3833 = vsel %vm3801, 65537, 0
      %v3834 = vsel %vm3802, 65537, 0
      %v3835 = vsel %vm3803, 65537, 0
      %v3836 = vsel %vm3804, 65537, 0
      %v3837 = vsel %vm3805, 65537, 0
      %v3838 = vsel %vm3806, 65537, 0
      %v3839 = vsel %vm3807, 65537, 0
      %v3840 = vsel %vm3808, 65537, 0
      %v3841 = vsel %vm3809, 65537, 0
      %v3842 = vsel %vm3810, 65537, 0
      %v3843 = vsel %vm3811, 65537, 0
      %v3844 = vsel %vm3812, 65537, 0
      %v3845 = vsel %vm3813, 65537, 0
      %v3846 = vsel %vm3814, 65537, 0
      %v3847 = vsel %vm3815, 65537, 0
      %v3848 = vsel %vm3816, 65537, 0
      %v3849 = vsel %vm3817, 65537, 0
      %v3850 = vsel %vm3818, 65537, 0
      %v3851 = vsel %vm3819, 65537, 0
      %v3852 = vsel %vm3820, 65537, 0
      %v3853 = vsel %vm3821, 65537, 0
      %v3854 = vsel %vm3822, 65537, 0
      %v3855 = vsel %vm3823, 65537, 0
      %v3856 = vsel %vm3824, 65537, 0
      %vm3857 = vsmask.f32 256
      %vm3858 = vsmask.f32 4368
      %vm3859 = vmor %vm3857, %vm3858
      %v3861 = vshrl.u32 %v3825, 16
      %v3863 = vrot.slane %v3861, 7
      %v3864 = vshll.u32 %v3825, 16
      %v3866 = vor.u32 %v3863, %v3864
      %v3867 = vrot.slane %v3863, 4
      %v3869 = vshrl.u32 %v3826, 16
      %v3871 = vrot.slane %v3869, 7
      %v3872 = vshll.u32 %v3826, 16
      %v3874 = vor.u32 %v3871, %v3872
      %v3875 = vsel %vm3859, %v3867, %v3874
      %v3876 = vrot.slane %v3871, 4
      %v3878 = vshrl.u32 %v3827, 16
      %v3880 = vrot.slane %v3878, 7
      %v3881 = vshll.u32 %v3827, 16
      %v3883 = vor.u32 %v3880, %v3881
      %v3884 = vsel %vm3859, %v3876, %v3883
      %v3885 = vrot.slane %v3880, 4
      %v3887 = vshrl.u32 %v3828, 16
      %v3889 = vrot.slane %v3887, 7
      %v3890 = vshll.u32 %v3828, 16
      %v3892 = vor.u32 %v3889, %v3890
      %v3893 = vsel %vm3859, %v3885, %v3892
      %v3894 = vrot.slane %v3889, 4
      %v3896 = vshrl.u32 %v3829, 16
      %v3898 = vrot.slane %v3896, 7
      %v3899 = vshll.u32 %v3829, 16
      %v3901 = vor.u32 %v3898, %v3899
      %v3902 = vsel %vm3859, %v3894, %v3901
      %v3903 = vrot.slane %v3898, 4
      %v3905 = vshrl.u32 %v3830, 16
      %v3907 = vrot.slane %v3905, 7
      %v3908 = vshll.u32 %v3830, 16
      %v3910 = vor.u32 %v3907, %v3908
      %v3911 = vsel %vm3859, %v3903, %v3910
      %v3912 = vrot.slane %v3907, 4
      %v3914 = vshrl.u32 %v3831, 16
      %v3916 = vrot.slane %v3914, 7
      %v3917 = vshll.u32 %v3831, 16
      %v3919 = vor.u32 %v3916, %v3917
      %v3920 = vsel %vm3859, %v3912, %v3919
      %v3921 = vrot.slane %v3916, 4
      %v3923 = vshrl.u32 %v3832, 16
      %v3925 = vrot.slane %v3923, 7
      %v3926 = vshll.u32 %v3832, 16
      %v3928 = vor.u32 %v3925, %v3926
      %v3929 = vsel %vm3859, %v3921, %v3928
      %v3930 = vrot.slane %v3925, 4
      %v3932 = vshrl.u32 %v3833, 16
      %v3934 = vrot.slane %v3932, 7
      %v3935 = vshll.u32 %v3833, 16
      %v3937 = vor.u32 %v3934, %v3935
      %v3938 = vsel %vm3859, %v3930, %v3937
      %v3939 = vrot.slane %v3934, 4
      %v3941 = vshrl.u32 %v3834, 16
      %v3943 = vrot.slane %v3941, 7
      %v3944 = vshll.u32 %v3834, 16
      %v3946 = vor.u32 %v3943, %v3944
      %v3947 = vsel %vm3859, %v3939, %v3946
      %v3948 = vrot.slane %v3943, 4
      %v3950 = vshrl.u32 %v3835, 16
      %v3952 = vrot.slane %v3950, 7
      %v3953 = vshll.u32 %v3835, 16
      %v3955 = vor.u32 %v3952, %v3953
      %v3956 = vsel %vm3859, %v3948, %v3955
      %v3957 = vrot.slane %v3952, 4
      %v3959 = vshrl.u32 %v3836, 16
      %v3961 = vrot.slane %v3959, 7
      %v3962 = vshll.u32 %v3836, 16
      %v3964 = vor.u32 %v3961, %v3962
      %v3965 = vsel %vm3859, %v3957, %v3964
      %v3966 = vrot.slane %v3961, 4
      %v3968 = vshrl.u32 %v3837, 16
      %v3970 = vrot.slane %v3968, 7
      %v3971 = vshll.u32 %v3837, 16
      %v3973 = vor.u32 %v3970, %v3971
      %v3974 = vsel %vm3859, %v3966, %v3973
      %v3975 = vrot.slane %v3970, 4
      %v3977 = vshrl.u32 %v3838, 16
      %v3979 = vrot.slane %v3977, 7
      %v3980 = vshll.u32 %v3838, 16
      %v3982 = vor.u32 %v3979, %v3980
      %v3983 = vsel %vm3859, %v3975, %v3982
      %v3984 = vrot.slane %v3979, 4
      %v3986 = vshrl.u32 %v3839, 16
      %v3988 = vrot.slane %v3986, 7
      %v3989 = vshll.u32 %v3839, 16
      %v3991 = vor.u32 %v3988, %v3989
      %v3992 = vsel %vm3859, %v3984, %v3991
      %v3993 = vrot.slane %v3988, 4
      %v3995 = vshrl.u32 %v3840, 16
      %v3997 = vrot.slane %v3995, 7
      %v3998 = vshll.u32 %v3840, 16
      %v4000 = vor.u32 %v3997, %v3998
      %v4001 = vsel %vm3859, %v3993, %v4000
      %v4002 = vrot.slane %v3997, 4
      %v4004 = vshrl.u32 %v3841, 16
      %v4006 = vrot.slane %v4004, 7
      %v4007 = vshll.u32 %v3841, 16
      %v4009 = vor.u32 %v4006, %v4007
      %v4010 = vsel %vm3859, %v4002, %v4009
      %v4011 = vrot.slane %v4006, 4
      %v4013 = vshrl.u32 %v3842, 16
      %v4015 = vrot.slane %v4013, 7
      %v4016 = vshll.u32 %v3842, 16
      %v4018 = vor.u32 %v4015, %v4016
      %v4019 = vsel %vm3859, %v4011, %v4018
      %v4020 = vrot.slane %v4015, 4
      %v4022 = vshrl.u32 %v3843, 16
      %v4024 = vrot.slane %v4022, 7
      %v4025 = vshll.u32 %v3843, 16
      %v4027 = vor.u32 %v4024, %v4025
      %v4028 = vsel %vm3859, %v4020, %v4027
      %v4029 = vrot.slane %v4024, 4
      %v4031 = vshrl.u32 %v3844, 16
      %v4033 = vrot.slane %v4031, 7
      %v4034 = vshll.u32 %v3844, 16
      %v4036 = vor.u32 %v4033, %v4034
      %v4037 = vsel %vm3859, %v4029, %v4036
      %v4038 = vrot.slane %v4033, 4
      %v4040 = vshrl.u32 %v3845, 16
      %v4042 = vrot.slane %v4040, 7
      %v4043 = vshll.u32 %v3845, 16
      %v4045 = vor.u32 %v4042, %v4043
      %v4046 = vsel %vm3859, %v4038, %v4045
      %v4047 = vrot.slane %v4042, 4
      %v4049 = vshrl.u32 %v3846, 16
      %v4051 = vrot.slane %v4049, 7
      %v4052 = vshll.u32 %v3846, 16
      %v4054 = vor.u32 %v4051, %v4052
      %v4055 = vsel %vm3859, %v4047, %v4054
      %v4056 = vrot.slane %v4051, 4
      %v4058 = vshrl.u32 %v3847, 16
      %v4060 = vrot.slane %v4058, 7
      %v4061 = vshll.u32 %v3847, 16
      %v4063 = vor.u32 %v4060, %v4061
      %v4064 = vsel %vm3859, %v4056, %v4063
      %v4065 = vrot.slane %v4060, 4
      %v4067 = vshrl.u32 %v3848, 16
      %v4069 = vrot.slane %v4067, 7
      %v4070 = vshll.u32 %v3848, 16
      %v4072 = vor.u32 %v4069, %v4070
      %v4073 = vsel %vm3859, %v4065, %v4072
      %v4074 = vrot.slane %v4069, 4
      %v4076 = vshrl.u32 %v3849, 16
      %v4078 = vrot.slane %v4076, 7
      %v4079 = vshll.u32 %v3849, 16
      %v4081 = vor.u32 %v4078, %v4079
      %v4082 = vsel %vm3859, %v4074, %v4081
      %v4083 = vrot.slane %v4078, 4
      %v4085 = vshrl.u32 %v3850, 16
      %v4087 = vrot.slane %v4085, 7
      %v4088 = vshll.u32 %v3850, 16
      %v4090 = vor.u32 %v4087, %v4088
      %v4091 = vsel %vm3859, %v4083, %v4090
      %v4092 = vrot.slane %v4087, 4
      %v4094 = vshrl.u32 %v3851, 16
      %v4096 = vrot.slane %v4094, 7
      %v4097 = vshll.u32 %v3851, 16
      %v4099 = vor.u32 %v4096, %v4097
      %v4100 = vsel %vm3859, %v4092, %v4099
      %v4101 = vrot.slane %v4096, 4
      %v4103 = vshrl.u32 %v3852, 16
      %v4105 = vrot.slane %v4103, 7
      %v4106 = vshll.u32 %v3852, 16
      %v4108 = vor.u32 %v4105, %v4106
      %v4109 = vsel %vm3859, %v4101, %v4108
      %v4110 = vrot.slane %v4105, 4
      %v4112 = vshrl.u32 %v3853, 16
      %v4114 = vrot.slane %v4112, 7
      %v4115 = vshll.u32 %v3853, 16
      %v4117 = vor.u32 %v4114, %v4115
      %v4118 = vsel %vm3859, %v4110, %v4117
      %v4119 = vrot.slane %v4114, 4
      %v4121 = vshrl.u32 %v3854, 16
      %v4123 = vrot.slane %v4121, 7
      %v4124 = vshll.u32 %v3854, 16
      %v4126 = vor.u32 %v4123, %v4124
      %v4127 = vsel %vm3859, %v4119, %v4126
      %v4128 = vrot.slane %v4123, 4
      %v4130 = vshrl.u32 %v3855, 16
      %v4132 = vrot.slane %v4130, 7
      %v4133 = vshll.u32 %v3855, 16
      %v4135 = vor.u32 %v4132, %v4133
      %v4136 = vsel %vm3859, %v4128, %v4135
      %v4137 = vrot.slane %v4132, 4
      %v4139 = vshrl.u32 %v3856, 16
      %v4141 = vrot.slane %v4139, 7
      %v4142 = vshll.u32 %v3856, 16
      %v4144 = vor.u32 %v4141, %v4142
      %v4145 = vsel %vm3859, %v4137, %v4144
      %v4146 = vrot.slane %v4141, 4
      %v4147 = vunpack.c.l.b16 %v3866
      %v4148 = vunpack.c.h.b16 %v3866
      %v4149 = vunpack.c.l.b16 0
      %v4150 = vunpack.c.h.b16 0
      %vm4151 = vcmp.ne.s32.totalorder %v4147, %v4149
      %vm4152 = vcmp.ne.s32.totalorder %v4148, %v4150
      %vm4153 = vmpackc.low %vm4152, %vm4151
      %v4154 = vunpack.c.l.b16 %v3875
      %v4155 = vunpack.c.h.b16 %v3875
      %v4156 = vunpack.c.l.b16 0
      %v4157 = vunpack.c.h.b16 0
      %vm4158 = vcmp.ne.s32.totalorder %v4154, %v4156
      %vm4159 = vcmp.ne.s32.totalorder %v4155, %v4157
      %vm4160 = vmpackc.low %vm4159, %vm4158
      %v4161 = vunpack.c.l.b16 %v3884
      %v4162 = vunpack.c.h.b16 %v3884
      %v4163 = vunpack.c.l.b16 0
      %v4164 = vunpack.c.h.b16 0
      %vm4165 = vcmp.ne.s32.totalorder %v4161, %v4163
      %vm4166 = vcmp.ne.s32.totalorder %v4162, %v4164
      %vm4167 = vmpackc.low %vm4166, %vm4165
      %v4168 = vunpack.c.l.b16 %v3893
      %v4169 = vunpack.c.h.b16 %v3893
      %v4170 = vunpack.c.l.b16 0
      %v4171 = vunpack.c.h.b16 0
      %vm4172 = vcmp.ne.s32.totalorder %v4168, %v4170
      %vm4173 = vcmp.ne.s32.totalorder %v4169, %v4171
      %vm4174 = vmpackc.low %vm4173, %vm4172
      %v4175 = vunpack.c.l.b16 %v3902
      %v4176 = vunpack.c.h.b16 %v3902
      %v4177 = vunpack.c.l.b16 0
      %v4178 = vunpack.c.h.b16 0
      %vm4179 = vcmp.ne.s32.totalorder %v4175, %v4177
      %vm4180 = vcmp.ne.s32.totalorder %v4176, %v4178
      %vm4181 = vmpackc.low %vm4180, %vm4179
      %v4182 = vunpack.c.l.b16 %v3911
      %v4183 = vunpack.c.h.b16 %v3911
      %v4184 = vunpack.c.l.b16 0
      %v4185 = vunpack.c.h.b16 0
      %vm4186 = vcmp.ne.s32.totalorder %v4182, %v4184
      %vm4187 = vcmp.ne.s32.totalorder %v4183, %v4185
      %vm4188 = vmpackc.low %vm4187, %vm4186
      %v4189 = vunpack.c.l.b16 %v3920
      %v4190 = vunpack.c.h.b16 %v3920
      %v4191 = vunpack.c.l.b16 0
      %v4192 = vunpack.c.h.b16 0
      %vm4193 = vcmp.ne.s32.totalorder %v4189, %v4191
      %vm4194 = vcmp.ne.s32.totalorder %v4190, %v4192
      %vm4195 = vmpackc.low %vm4194, %vm4193
      %v4196 = vunpack.c.l.b16 %v3929
      %v4197 = vunpack.c.h.b16 %v3929
      %v4198 = vunpack.c.l.b16 0
      %v4199 = vunpack.c.h.b16 0
      %vm4200 = vcmp.ne.s32.totalorder %v4196, %v4198
      %vm4201 = vcmp.ne.s32.totalorder %v4197, %v4199
      %vm4202 = vmpackc.low %vm4201, %vm4200
      %v4203 = vunpack.c.l.b16 %v3938
      %v4204 = vunpack.c.h.b16 %v3938
      %v4205 = vunpack.c.l.b16 0
      %v4206 = vunpack.c.h.b16 0
      %vm4207 = vcmp.ne.s32.totalorder %v4203, %v4205
      %vm4208 = vcmp.ne.s32.totalorder %v4204, %v4206
      %vm4209 = vmpackc.low %vm4208, %vm4207
      %v4210 = vunpack.c.l.b16 %v3947
      %v4211 = vunpack.c.h.b16 %v3947
      %v4212 = vunpack.c.l.b16 0
      %v4213 = vunpack.c.h.b16 0
      %vm4214 = vcmp.ne.s32.totalorder %v4210, %v4212
      %vm4215 = vcmp.ne.s32.totalorder %v4211, %v4213
      %vm4216 = vmpackc.low %vm4215, %vm4214
      %v4217 = vunpack.c.l.b16 %v3956
      %v4218 = vunpack.c.h.b16 %v3956
      %v4219 = vunpack.c.l.b16 0
      %v4220 = vunpack.c.h.b16 0
      %vm4221 = vcmp.ne.s32.totalorder %v4217, %v4219
      %vm4222 = vcmp.ne.s32.totalorder %v4218, %v4220
      %vm4223 = vmpackc.low %vm4222, %vm4221
      %v4224 = vunpack.c.l.b16 %v3965
      %v4225 = vunpack.c.h.b16 %v3965
      %v4226 = vunpack.c.l.b16 0
      %v4227 = vunpack.c.h.b16 0
      %vm4228 = vcmp.ne.s32.totalorder %v4224, %v4226
      %vm4229 = vcmp.ne.s32.totalorder %v4225, %v4227
      %vm4230 = vmpackc.low %vm4229, %vm4228
      %v4231 = vunpack.c.l.b16 %v3974
      %v4232 = vunpack.c.h.b16 %v3974
      %v4233 = vunpack.c.l.b16 0
      %v4234 = vunpack.c.h.b16 0
      %vm4235 = vcmp.ne.s32.totalorder %v4231, %v4233
      %vm4236 = vcmp.ne.s32.totalorder %v4232, %v4234
      %vm4237 = vmpackc.low %vm4236, %vm4235
      %v4238 = vunpack.c.l.b16 %v3983
      %v4239 = vunpack.c.h.b16 %v3983
      %v4240 = vunpack.c.l.b16 0
      %v4241 = vunpack.c.h.b16 0
      %vm4242 = vcmp.ne.s32.totalorder %v4238, %v4240
      %vm4243 = vcmp.ne.s32.totalorder %v4239, %v4241
      %vm4244 = vmpackc.low %vm4243, %vm4242
      %v4245 = vunpack.c.l.b16 %v3992
      %v4246 = vunpack.c.h.b16 %v3992
      %v4247 = vunpack.c.l.b16 0
      %v4248 = vunpack.c.h.b16 0
      %vm4249 = vcmp.ne.s32.totalorder %v4245, %v4247
      %vm4250 = vcmp.ne.s32.totalorder %v4246, %v4248
      %vm4251 = vmpackc.low %vm4250, %vm4249
      %v4252 = vunpack.c.l.b16 %v4001
      %v4253 = vunpack.c.h.b16 %v4001
      %v4254 = vunpack.c.l.b16 0
      %v4255 = vunpack.c.h.b16 0
      %vm4256 = vcmp.ne.s32.totalorder %v4252, %v4254
      %vm4257 = vcmp.ne.s32.totalorder %v4253, %v4255
      %vm4258 = vmpackc.low %vm4257, %vm4256
      %v4259 = vunpack.c.l.b16 %v4010
      %v4260 = vunpack.c.h.b16 %v4010
      %v4261 = vunpack.c.l.b16 0
      %v4262 = vunpack.c.h.b16 0
      %vm4263 = vcmp.ne.s32.totalorder %v4259, %v4261
      %vm4264 = vcmp.ne.s32.totalorder %v4260, %v4262
      %vm4265 = vmpackc.low %vm4264, %vm4263
      %v4266 = vunpack.c.l.b16 %v4019
      %v4267 = vunpack.c.h.b16 %v4019
      %v4268 = vunpack.c.l.b16 0
      %v4269 = vunpack.c.h.b16 0
      %vm4270 = vcmp.ne.s32.totalorder %v4266, %v4268
      %vm4271 = vcmp.ne.s32.totalorder %v4267, %v4269
      %vm4272 = vmpackc.low %vm4271, %vm4270
      %v4273 = vunpack.c.l.b16 %v4028
      %v4274 = vunpack.c.h.b16 %v4028
      %v4275 = vunpack.c.l.b16 0
      %v4276 = vunpack.c.h.b16 0
      %vm4277 = vcmp.ne.s32.totalorder %v4273, %v4275
      %vm4278 = vcmp.ne.s32.totalorder %v4274, %v4276
      %vm4279 = vmpackc.low %vm4278, %vm4277
      %v4280 = vunpack.c.l.b16 %v4037
      %v4281 = vunpack.c.h.b16 %v4037
      %v4282 = vunpack.c.l.b16 0
      %v4283 = vunpack.c.h.b16 0
      %vm4284 = vcmp.ne.s32.totalorder %v4280, %v4282
      %vm4285 = vcmp.ne.s32.totalorder %v4281, %v4283
      %vm4286 = vmpackc.low %vm4285, %vm4284
      %v4287 = vunpack.c.l.b16 %v4046
      %v4288 = vunpack.c.h.b16 %v4046
      %v4289 = vunpack.c.l.b16 0
      %v4290 = vunpack.c.h.b16 0
      %vm4291 = vcmp.ne.s32.totalorder %v4287, %v4289
      %vm4292 = vcmp.ne.s32.totalorder %v4288, %v4290
      %vm4293 = vmpackc.low %vm4292, %vm4291
      %v4294 = vunpack.c.l.b16 %v4055
      %v4295 = vunpack.c.h.b16 %v4055
      %v4296 = vunpack.c.l.b16 0
      %v4297 = vunpack.c.h.b16 0
      %vm4298 = vcmp.ne.s32.totalorder %v4294, %v4296
      %vm4299 = vcmp.ne.s32.totalorder %v4295, %v4297
      %vm4300 = vmpackc.low %vm4299, %vm4298
      %v4301 = vunpack.c.l.b16 %v4064
      %v4302 = vunpack.c.h.b16 %v4064
      %v4303 = vunpack.c.l.b16 0
      %v4304 = vunpack.c.h.b16 0
      %vm4305 = vcmp.ne.s32.totalorder %v4301, %v4303
      %vm4306 = vcmp.ne.s32.totalorder %v4302, %v4304
      %vm4307 = vmpackc.low %vm4306, %vm4305
      %v4308 = vunpack.c.l.b16 %v4073
      %v4309 = vunpack.c.h.b16 %v4073
      %v4310 = vunpack.c.l.b16 0
      %v4311 = vunpack.c.h.b16 0
      %vm4312 = vcmp.ne.s32.totalorder %v4308, %v4310
      %vm4313 = vcmp.ne.s32.totalorder %v4309, %v4311
      %vm4314 = vmpackc.low %vm4313, %vm4312
      %v4315 = vunpack.c.l.b16 %v4082
      %v4316 = vunpack.c.h.b16 %v4082
      %v4317 = vunpack.c.l.b16 0
      %v4318 = vunpack.c.h.b16 0
      %vm4319 = vcmp.ne.s32.totalorder %v4315, %v4317
      %vm4320 = vcmp.ne.s32.totalorder %v4316, %v4318
      %vm4321 = vmpackc.low %vm4320, %vm4319
      %v4322 = vunpack.c.l.b16 %v4091
      %v4323 = vunpack.c.h.b16 %v4091
      %v4324 = vunpack.c.l.b16 0
      %v4325 = vunpack.c.h.b16 0
      %vm4326 = vcmp.ne.s32.totalorder %v4322, %v4324
      %vm4327 = vcmp.ne.s32.totalorder %v4323, %v4325
      %vm4328 = vmpackc.low %vm4327, %vm4326
      %v4329 = vunpack.c.l.b16 %v4100
      %v4330 = vunpack.c.h.b16 %v4100
      %v4331 = vunpack.c.l.b16 0
      %v4332 = vunpack.c.h.b16 0
      %vm4333 = vcmp.ne.s32.totalorder %v4329, %v4331
      %vm4334 = vcmp.ne.s32.totalorder %v4330, %v4332
      %vm4335 = vmpackc.low %vm4334, %vm4333
      %v4336 = vunpack.c.l.b16 %v4109
      %v4337 = vunpack.c.h.b16 %v4109
      %v4338 = vunpack.c.l.b16 0
      %v4339 = vunpack.c.h.b16 0
      %vm4340 = vcmp.ne.s32.totalorder %v4336, %v4338
      %vm4341 = vcmp.ne.s32.totalorder %v4337, %v4339
      %vm4342 = vmpackc.low %vm4341, %vm4340
      %v4343 = vunpack.c.l.b16 %v4118
      %v4344 = vunpack.c.h.b16 %v4118
      %v4345 = vunpack.c.l.b16 0
      %v4346 = vunpack.c.h.b16 0
      %vm4347 = vcmp.ne.s32.totalorder %v4343, %v4345
      %vm4348 = vcmp.ne.s32.totalorder %v4344, %v4346
      %vm4349 = vmpackc.low %vm4348, %vm4347
      %v4350 = vunpack.c.l.b16 %v4127
      %v4351 = vunpack.c.h.b16 %v4127
      %v4352 = vunpack.c.l.b16 0
      %v4353 = vunpack.c.h.b16 0
      %vm4354 = vcmp.ne.s32.totalorder %v4350, %v4352
      %vm4355 = vcmp.ne.s32.totalorder %v4351, %v4353
      %vm4356 = vmpackc.low %vm4355, %vm4354
      %v4357 = vunpack.c.l.b16 %v4136
      %v4358 = vunpack.c.h.b16 %v4136
      %v4359 = vunpack.c.l.b16 0
      %v4360 = vunpack.c.h.b16 0
      %vm4361 = vcmp.ne.s32.totalorder %v4357, %v4359
      %vm4362 = vcmp.ne.s32.totalorder %v4358, %v4360
      %vm4363 = vmpackc.low %vm4362, %vm4361
      %v4364 = vunpack.c.l.b16 %v4145
      %v4365 = vunpack.c.h.b16 %v4145
      %v4366 = vunpack.c.l.b16 0
      %v4367 = vunpack.c.h.b16 0
      %vm4368 = vcmp.ne.s32.totalorder %v4364, %v4366
      %vm4369 = vcmp.ne.s32.totalorder %v4365, %v4367
      %vm4370 = vmpackc.low %vm4369, %vm4368
      %v4371 = vunpack.c.l.b16 %v4146
      %v4372 = vunpack.c.h.b16 %v4146
      %v4373 = vunpack.c.l.b16 0
      %v4374 = vunpack.c.h.b16 0
      %vm4375 = vcmp.ne.s32.totalorder %v4371, %v4373
      %vm4376 = vcmp.ne.s32.totalorder %v4372, %v4374
      %vm4377 = vmpackc.low %vm4376, %vm4375
      %v4378 = vsel %vm4153, %v3696, 0
      %v4379 = vsel %vm4160, %v3697, 0
      %v4380 = vsel %vm4167, %v3698, 0
      %v4381 = vsel %vm4174, %v3699, 0
      %v4382 = vsel %vm4181, %v3700, 0
      %v4383 = vsel %vm4188, %v3701, 0
      %v4384 = vsel %vm4195, %v3702, 0
      %v4385 = vsel %vm4202, %v3703, 0
      %v4386 = vsel %vm4209, %v3704, 0
      %v4387 = vsel %vm4216, %v3705, 0
      %v4388 = vsel %vm4223, %v3706, 0
      %v4389 = vsel %vm4230, %v3707, 0
      %v4390 = vsel %vm4237, %v3708, 0
      %v4391 = vsel %vm4244, %v3709, 0
      %v4392 = vsel %vm4251, %v3710, 0
      %v4393 = vsel %vm4258, %v3711, 0
      %v4394 = vsel %vm4265, %v3712, 0
      %v4395 = vsel %vm4272, %v3713, 0
      %v4396 = vsel %vm4279, %v3714, 0
      %v4397 = vsel %vm4286, %v3715, 0
      %v4398 = vsel %vm4293, %v3716, 0
      %v4399 = vsel %vm4300, %v3717, 0
      %v4400 = vsel %vm4307, %v3718, 0
      %v4401 = vsel %vm4314, %v3719, 0
      %v4402 = vsel %vm4321, %v3720, 0
      %v4403 = vsel %vm4328, %v3721, 0
      %v4404 = vsel %vm4335, %v3722, 0
      %v4405 = vsel %vm4342, %v3723, 0
      %v4406 = vsel %vm4349, %v3724, 0
      %v4407 = vsel %vm4356, %v3725, 0
      %v4408 = vsel %vm4363, %v3726, 0
      %v4409 = vsel %vm4370, %v3727, 0
      %v4410 = vsel %vm4377, %v3728, 0
      %s4411 = scalar_lea.vmem %s6, 4
      %v4412 = vld [vmem:[%s4411] sm:$0x3]
      %v4446 = vunpack.c.l.b16 %v4378
      %v4447 = vunpack.c.l.b16 %v4379
      %v4448 = vunpack.c.l.b16 %v4380
      %v4449 = vunpack.c.l.b16 %v4381
      %v4450 = vunpack.c.l.b16 %v4382
      %v4451 = vunpack.c.l.b16 %v4383
      %v4452 = vunpack.c.l.b16 %v4384
      %v4453 = vunpack.c.l.b16 %v4385
      %v4454 = vunpack.c.l.b16 %v4386
      %v4455 = vunpack.c.l.b16 %v4387
      %v4456 = vunpack.c.l.b16 %v4388
      %v4457 = vunpack.c.l.b16 %v4389
      %v4458 = vunpack.c.l.b16 %v4390
      %v4459 = vunpack.c.l.b16 %v4391
      %v4460 = vunpack.c.l.b16 %v4392
      %v4461 = vunpack.c.l.b16 %v4393
      %v4462 = vunpack.c.l.b16 %v4394
      %v4463 = vunpack.c.l.b16 %v4395
      %v4464 = vunpack.c.l.b16 %v4396
      %v4465 = vunpack.c.l.b16 %v4397
      %v4466 = vunpack.c.l.b16 %v4398
      %v4467 = vunpack.c.l.b16 %v4399
      %v4468 = vunpack.c.l.b16 %v4400
      %v4469 = vunpack.c.l.b16 %v4401
      %v4470 = vunpack.c.l.b16 %v4402
      %v4471 = vunpack.c.l.b16 %v4403
      %v4472 = vunpack.c.l.b16 %v4404
      %v4473 = vunpack.c.l.b16 %v4405
      %v4474 = vunpack.c.l.b16 %v4406
      %v4475 = vunpack.c.l.b16 %v4407
      %v4476 = vunpack.c.l.b16 %v4408
      %v4477 = vunpack.c.l.b16 %v4409
      %v4478 = vunpack.c.l.b16 %v4410
      %v4479 = vpack.c.b16 %v4447, %v4446
      %v4480 = vpack.c.b16 %v4449, %v4448
      %v4481 = vpack.c.b16 %v4451, %v4450
      %v4482 = vpack.c.b16 %v4453, %v4452
      %v4483 = vpack.c.b16 %v4455, %v4454
      %v4484 = vpack.c.b16 %v4457, %v4456
      %v4485 = vpack.c.b16 %v4459, %v4458
      %v4486 = vpack.c.b16 %v4461, %v4460
      %v4487 = vpack.c.b16 %v4463, %v4462
      %v4488 = vpack.c.b16 %v4465, %v4464
      %v4489 = vpack.c.b16 %v4467, %v4466
      %v4490 = vpack.c.b16 %v4469, %v4468
      %v4491 = vpack.c.b16 %v4471, %v4470
      %v4492 = vpack.c.b16 %v4473, %v4472
      %v4493 = vpack.c.b16 %v4475, %v4474
      %v4494 = vpack.c.b16 %v4477, %v4476
      %v4495 = vpack.c.b16 %v4478, %v4478
      %vm4496 = vsmask.f32 7424
      %v4498 = vshrl.u32 %v4479, 16
      %v4500 = vshll.u32 %v4479, 16
      %v4502 = vrot.slane %v4500, 1
      %v4503 = vor.u32 %v4498, %v4502
      %v4505 = vshll.u32 %v4480, 16
      %v4507 = vrot.slane %v4505, 1
      %v4508 = vsel %vm4496, %v4503, %v4507
      %v4509 = vshrl.u32 %v4480, 16
      %v4511 = vor.u32 %v4509, %v4507
      %v4513 = vshll.u32 %v4481, 16
      %v4515 = vrot.slane %v4513, 1
      %v4516 = vsel %vm4496, %v4511, %v4515
      %v4517 = vshrl.u32 %v4481, 16
      %v4519 = vor.u32 %v4517, %v4515
      %v4521 = vshll.u32 %v4482, 16
      %v4523 = vrot.slane %v4521, 1
      %v4524 = vsel %vm4496, %v4519, %v4523
      %v4525 = vshrl.u32 %v4482, 16
      %v4527 = vor.u32 %v4525, %v4523
      %v4529 = vshll.u32 %v4483, 16
      %v4531 = vrot.slane %v4529, 1
      %v4532 = vsel %vm4496, %v4527, %v4531
      %v4533 = vshrl.u32 %v4483, 16
      %v4535 = vor.u32 %v4533, %v4531
      %v4537 = vshll.u32 %v4484, 16
      %v4539 = vrot.slane %v4537, 1
      %v4540 = vsel %vm4496, %v4535, %v4539
      %v4541 = vshrl.u32 %v4484, 16
      %v4543 = vor.u32 %v4541, %v4539
      %v4545 = vshll.u32 %v4485, 16
      %v4547 = vrot.slane %v4545, 1
      %v4548 = vsel %vm4496, %v4543, %v4547
      %v4549 = vshrl.u32 %v4485, 16
      %v4551 = vor.u32 %v4549, %v4547
      %v4553 = vshll.u32 %v4486, 16
      %v4555 = vrot.slane %v4553, 1
      %v4556 = vsel %vm4496, %v4551, %v4555
      %v4557 = vshrl.u32 %v4486, 16
      %v4559 = vor.u32 %v4557, %v4555
      %v4561 = vshll.u32 %v4487, 16
      %v4563 = vrot.slane %v4561, 1
      %v4564 = vsel %vm4496, %v4559, %v4563
      %v4565 = vshrl.u32 %v4487, 16
      %v4567 = vor.u32 %v4565, %v4563
      %v4569 = vshll.u32 %v4488, 16
      %v4571 = vrot.slane %v4569, 1
      %v4572 = vsel %vm4496, %v4567, %v4571
      %v4573 = vshrl.u32 %v4488, 16
      %v4575 = vor.u32 %v4573, %v4571
      %v4577 = vshll.u32 %v4489, 16
      %v4579 = vrot.slane %v4577, 1
      %v4580 = vsel %vm4496, %v4575, %v4579
      %v4581 = vshrl.u32 %v4489, 16
      %v4583 = vor.u32 %v4581, %v4579
      %v4585 = vshll.u32 %v4490, 16
      %v4587 = vrot.slane %v4585, 1
      %v4588 = vsel %vm4496, %v4583, %v4587
      %v4589 = vshrl.u32 %v4490, 16
      %v4591 = vor.u32 %v4589, %v4587
      %v4593 = vshll.u32 %v4491, 16
      %v4595 = vrot.slane %v4593, 1
      %v4596 = vsel %vm4496, %v4591, %v4595
      %v4597 = vshrl.u32 %v4491, 16
      %v4599 = vor.u32 %v4597, %v4595
      %v4601 = vshll.u32 %v4492, 16
      %v4603 = vrot.slane %v4601, 1
      %v4604 = vsel %vm4496, %v4599, %v4603
      %v4605 = vshrl.u32 %v4492, 16
      %v4607 = vor.u32 %v4605, %v4603
      %v4609 = vshll.u32 %v4493, 16
      %v4611 = vrot.slane %v4609, 1
      %v4612 = vsel %vm4496, %v4607, %v4611
      %v4613 = vshrl.u32 %v4493, 16
      %v4615 = vor.u32 %v4613, %v4611
      %v4617 = vshll.u32 %v4494, 16
      %v4619 = vrot.slane %v4617, 1
      %v4620 = vsel %vm4496, %v4615, %v4619
      %v4621 = vshrl.u32 %v4494, 16
      %v4623 = vor.u32 %v4621, %v4619
      %v4625 = vshll.u32 %v4495, 16
      %v4627 = vrot.slane %v4625, 1
      %v4628 = vsel %vm4496, %v4623, %v4627
      %v4630 = vsel %vm1002, %v4508, 0
      %v4633 = vsel %vm1002, %v4516, 0
      %v4636 = vsel %vm1002, %v4524, 0
      %v4639 = vsel %vm1002, %v4532, 0
      %v4642 = vsel %vm1002, %v4540, 0
      %v4645 = vsel %vm1002, %v4548, 0
      %v4648 = vsel %vm1002, %v4556, 0
      %v4651 = vsel %vm1002, %v4564, 0
      %v4654 = vsel %vm1002, %v4572, 0
      %v4657 = vsel %vm1002, %v4580, 0
      %v4660 = vsel %vm1002, %v4588, 0
      %v4663 = vsel %vm1002, %v4596, 0
      %v4666 = vsel %vm1002, %v4604, 0
      %v4669 = vsel %vm1002, %v4612, 0
      %v4672 = vsel %vm1002, %v4620, 0
      %v4675 = vsel %vm1002, %v4628, 0
      %v4678 = vsel %vm3129, %v4412, 0
      %4680 = vmatpush.bf16.msra.mxu0 0
      %4681 = vmatpush.bf16.msra.mxu0 0
      %4682 = vmatpush.bf16.msra.mxu0 0
      %4683 = vmatpush.bf16.msra.mxu0 0
      %4684 = vmatpush.bf16.msra.mxu0 0
      %4685 = vmatpush.bf16.msra.mxu0 0
      %4686 = vmatpush.bf16.msra.mxu0 0
      %4687 = vmatpush.bf16.msra.mxu0 %v4678
      %4688 = vmatmul.bf16.gmra.mxu0 %v4630
      %v4689 = vpop.f32.mrf.mxu0
      %v4690 = vadd.f32 0.0, %v4689
      %v4691 = vpop.f32.mrf.mxu0
      %v4692 = vadd.f32 0.0, %v4691
      %4693 = vmatmul.bf16.gmra.mxu0 %v4633
      %v4694 = vpop.f32.mrf.mxu0
      %v4695 = vadd.f32 0.0, %v4694
      %v4696 = vpop.f32.mrf.mxu0
      %v4697 = vadd.f32 0.0, %v4696
      %4698 = vmatmul.bf16.gmra.mxu0 %v4636
      %v4699 = vpop.f32.mrf.mxu0
      %v4700 = vadd.f32 0.0, %v4699
      %v4701 = vpop.f32.mrf.mxu0
      %v4702 = vadd.f32 0.0, %v4701
      %4703 = vmatmul.bf16.gmra.mxu0 %v4639
      %v4704 = vpop.f32.mrf.mxu0
      %v4705 = vadd.f32 0.0, %v4704
      %v4706 = vpop.f32.mrf.mxu0
      %v4707 = vadd.f32 0.0, %v4706
      %4708 = vmatmul.bf16.gmra.mxu0 %v4642
      %v4709 = vpop.f32.mrf.mxu0
      %v4710 = vadd.f32 0.0, %v4709
      %v4711 = vpop.f32.mrf.mxu0
      %v4712 = vadd.f32 0.0, %v4711
      %4713 = vmatmul.bf16.gmra.mxu0 %v4645
      %v4714 = vpop.f32.mrf.mxu0
      %v4715 = vadd.f32 0.0, %v4714
      %v4716 = vpop.f32.mrf.mxu0
      %v4717 = vadd.f32 0.0, %v4716
      %4718 = vmatmul.bf16.gmra.mxu0 %v4648
      %v4719 = vpop.f32.mrf.mxu0
      %v4720 = vadd.f32 0.0, %v4719
      %v4721 = vpop.f32.mrf.mxu0
      %v4722 = vadd.f32 0.0, %v4721
      %4723 = vmatmul.bf16.gmra.mxu0 %v4651
      %v4724 = vpop.f32.mrf.mxu0
      %v4725 = vadd.f32 0.0, %v4724
      %v4726 = vpop.f32.mrf.mxu0
      %v4727 = vadd.f32 0.0, %v4726
      %4728 = vmatmul.bf16.gmra.mxu0 %v4654
      %v4729 = vpop.f32.mrf.mxu0
      %v4730 = vadd.f32 0.0, %v4729
      %v4731 = vpop.f32.mrf.mxu0
      %v4732 = vadd.f32 0.0, %v4731
      %4733 = vmatmul.bf16.gmra.mxu0 %v4657
      %v4734 = vpop.f32.mrf.mxu0
      %v4735 = vadd.f32 0.0, %v4734
      %v4736 = vpop.f32.mrf.mxu0
      %v4737 = vadd.f32 0.0, %v4736
      %4738 = vmatmul.bf16.gmra.mxu0 %v4660
      %v4739 = vpop.f32.mrf.mxu0
      %v4740 = vadd.f32 0.0, %v4739
      %v4741 = vpop.f32.mrf.mxu0
      %v4742 = vadd.f32 0.0, %v4741
      %4743 = vmatmul.bf16.gmra.mxu0 %v4663
      %v4744 = vpop.f32.mrf.mxu0
      %v4745 = vadd.f32 0.0, %v4744
      %v4746 = vpop.f32.mrf.mxu0
      %v4747 = vadd.f32 0.0, %v4746
      %4748 = vmatmul.bf16.gmra.mxu0 %v4666
      %v4749 = vpop.f32.mrf.mxu0
      %v4750 = vadd.f32 0.0, %v4749
      %v4751 = vpop.f32.mrf.mxu0
      %v4752 = vadd.f32 0.0, %v4751
      %4753 = vmatmul.bf16.gmra.mxu0 %v4669
      %v4754 = vpop.f32.mrf.mxu0
      %v4755 = vadd.f32 0.0, %v4754
      %v4756 = vpop.f32.mrf.mxu0
      %v4757 = vadd.f32 0.0, %v4756
      %4758 = vmatmul.bf16.gmra.mxu0 %v4672
      %v4759 = vpop.f32.mrf.mxu0
      %v4760 = vadd.f32 0.0, %v4759
      %v4761 = vpop.f32.mrf.mxu0
      %v4762 = vadd.f32 0.0, %v4761
      %4763 = vmatmul.bf16.gmra.mxu0 %v4675
      %v4764 = vpop.f32.mrf.mxu0
      %v4765 = vadd.f32 0.0, %v4764
      %v4766 = vpop.f32.mrf.mxu0
      %v4767 = vadd.f32 0.0, %v4766
      %4768 = vdwg.mxu0
      %v4769 = vadd.f32 %v3664, %v4690
      %v4770 = vadd.f32 %v3665, %v4692
      %v4771 = vadd.f32 %v3666, %v4695
      %v4772 = vadd.f32 %v3667, %v4697
      %v4773 = vadd.f32 %v3668, %v4700
      %v4774 = vadd.f32 %v3669, %v4702
      %v4775 = vadd.f32 %v3670, %v4705
      %v4776 = vadd.f32 %v3671, %v4707
      %v4777 = vadd.f32 %v3672, %v4710
      %v4778 = vadd.f32 %v3673, %v4712
      %v4779 = vadd.f32 %v3674, %v4715
      %v4780 = vadd.f32 %v3675, %v4717
      %v4781 = vadd.f32 %v3676, %v4720
      %v4782 = vadd.f32 %v3677, %v4722
      %v4783 = vadd.f32 %v3678, %v4725
      %v4784 = vadd.f32 %v3679, %v4727
      %v4785 = vadd.f32 %v3680, %v4730
      %v4786 = vadd.f32 %v3681, %v4732
      %v4787 = vadd.f32 %v3682, %v4735
      %v4788 = vadd.f32 %v3683, %v4737
      %v4789 = vadd.f32 %v3684, %v4740
      %v4790 = vadd.f32 %v3685, %v4742
      %v4791 = vadd.f32 %v3686, %v4745
      %v4792 = vadd.f32 %v3687, %v4747
      %v4793 = vadd.f32 %v3688, %v4750
      %v4794 = vadd.f32 %v3689, %v4752
      %v4795 = vadd.f32 %v3690, %v4755
      %v4796 = vadd.f32 %v3691, %v4757
      %v4797 = vadd.f32 %v3692, %v4760
      %v4798 = vadd.f32 %v3693, %v4762
      %v4799 = vadd.f32 %v3694, %v4765
      %v4800 = vadd.f32 %v3695, %v4767
      %v4801 = vld [vmem:[#allocation2 + $0x8] sm:$0x8]
      %v4802 = vld [vmem:[#allocation2 + $0xc] sm:$0xf]
      %v4803 = vld [vmem:[#allocation2 + $0x10] sm:$0xf]
      %v4804 = vld [vmem:[#allocation2 + $0x14] sm:$0xf]
      %v4805 = vld [vmem:[#allocation2 + $0x18] sm:$0xf]
      %v4806 = vld [vmem:[#allocation2 + $0x1c] sm:$0xf]
      %v4807 = vld [vmem:[#allocation2 + $0x20] sm:$0xf]
      %v4808 = vld [vmem:[#allocation2 + $0x24] sm:$0xf]
      %v4809 = vld [vmem:[#allocation2 + $0x28] sm:$0xf]
      %v4810 = vld [vmem:[#allocation2 + $0x2c] sm:$0xf]
      %v4811 = vld [vmem:[#allocation2 + $0x30] sm:$0xf]
      %v4812 = vld [vmem:[#allocation2 + $0x34] sm:$0xf]
      %v4813 = vld [vmem:[#allocation2 + $0x38] sm:$0xf]
      %v4814 = vld [vmem:[#allocation2 + $0x3c] sm:$0xf]
      %v4815 = vld [vmem:[#allocation2 + $0x40] sm:$0xf]
      %v4816 = vld [vmem:[#allocation2 + $0x44] sm:$0xf]
      %v4817 = vld [vmem:[#allocation2 + $0x48] sm:$0xf]
      %v4818 = vld [vmem:[#allocation2 + $0x4c] sm:$0xf]
      %v4819 = vld [vmem:[#allocation2 + $0x50] sm:$0xf]
      %v4820 = vld [vmem:[#allocation2 + $0x54] sm:$0xf]
      %v4821 = vld [vmem:[#allocation2 + $0x58] sm:$0xf]
      %v4822 = vld [vmem:[#allocation2 + $0x5c] sm:$0xf]
      %v4823 = vld [vmem:[#allocation2 + $0x60] sm:$0xf]
      %v4824 = vld [vmem:[#allocation2 + $0x64] sm:$0xf]
      %v4825 = vld [vmem:[#allocation2 + $0x68] sm:$0xf]
      %v4826 = vld [vmem:[#allocation2 + $0x6c] sm:$0xf]
      %v4827 = vld [vmem:[#allocation2 + $0x70] sm:$0xf]
      %v4828 = vld [vmem:[#allocation2 + $0x74] sm:$0xf]
      %v4829 = vld [vmem:[#allocation2 + $0x78] sm:$0xf]
      %v4830 = vld [vmem:[#allocation2 + $0x7c] sm:$0xf]
      %v4831 = vld [vmem:[#allocation2 + $0x80] sm:$0xf]
      %v4832 = vld [vmem:[#allocation2 + $0x84] sm:$0xf]
      %v4833 = vld [vmem:[#allocation2 + $0x88] sm:$0xf]
      %v4834 = vsel %vm2586, %v4801, 0
      %v4835 = vsel %vm2593, %v4802, 0
      %v4836 = vsel %vm2600, %v4803, 0
      %v4837 = vsel %vm2607, %v4804, 0
      %v4838 = vsel %vm2614, %v4805, 0
      %v4839 = vsel %vm2621, %v4806, 0
      %v4840 = vsel %vm2628, %v4807, 0
      %v4841 = vsel %vm2635, %v4808, 0
      %v4842 = vsel %vm2642, %v4809, 0
      %v4843 = vsel %vm2649, %v4810, 0
      %v4844 = vsel %vm2656, %v4811, 0
      %v4845 = vsel %vm2663, %v4812, 0
      %v4846 = vsel %vm2670, %v4813, 0
      %v4847 = vsel %vm2677, %v4814, 0
      %v4848 = vsel %vm2684, %v4815, 0
      %v4849 = vsel %vm2691, %v4816, 0
      %v4850 = vsel %vm2698, %v4817, 0
      %v4851 = vsel %vm2705, %v4818, 0
      %v4852 = vsel %vm2712, %v4819, 0
      %v4853 = vsel %vm2719, %v4820, 0
      %v4854 = vsel %vm2726, %v4821, 0
      %v4855 = vsel %vm2733, %v4822, 0
      %v4856 = vsel %vm2740, %v4823, 0
      %v4857 = vsel %vm2747, %v4824, 0
      %v4858 = vsel %vm2754, %v4825, 0
      %v4859 = vsel %vm2761, %v4826, 0
      %v4860 = vsel %vm2768, %v4827, 0
      %v4861 = vsel %vm2775, %v4828, 0
      %v4862 = vsel %vm2782, %v4829, 0
      %v4863 = vsel %vm2789, %v4830, 0
      %v4864 = vsel %vm2796, %v4831, 0
      %v4865 = vsel %vm2803, %v4832, 0
      %v4866 = vsel %vm2810, %v4833, 0
      %s4867 = scalar_lea.vmem %s6, 6
      %v4868 = vld [vmem:[%s4867] sm:$0x3]
      %v4902 = vunpack.c.l.b16 %v4834
      %v4903 = vunpack.c.l.b16 %v4835
      %v4904 = vunpack.c.l.b16 %v4836
      %v4905 = vunpack.c.l.b16 %v4837
      %v4906 = vunpack.c.l.b16 %v4838
      %v4907 = vunpack.c.l.b16 %v4839
      %v4908 = vunpack.c.l.b16 %v4840
      %v4909 = vunpack.c.l.b16 %v4841
      %v4910 = vunpack.c.l.b16 %v4842
      %v4911 = vunpack.c.l.b16 %v4843
      %v4912 = vunpack.c.l.b16 %v4844
      %v4913 = vunpack.c.l.b16 %v4845
      %v4914 = vunpack.c.l.b16 %v4846
      %v4915 = vunpack.c.l.b16 %v4847
      %v4916 = vunpack.c.l.b16 %v4848
      %v4917 = vunpack.c.l.b16 %v4849
      %v4918 = vunpack.c.l.b16 %v4850
      %v4919 = vunpack.c.l.b16 %v4851
      %v4920 = vunpack.c.l.b16 %v4852
      %v4921 = vunpack.c.l.b16 %v4853
      %v4922 = vunpack.c.l.b16 %v4854
      %v4923 = vunpack.c.l.b16 %v4855
      %v4924 = vunpack.c.l.b16 %v4856
      %v4925 = vunpack.c.l.b16 %v4857
      %v4926 = vunpack.c.l.b16 %v4858
      %v4927 = vunpack.c.l.b16 %v4859
      %v4928 = vunpack.c.l.b16 %v4860
      %v4929 = vunpack.c.l.b16 %v4861
      %v4930 = vunpack.c.l.b16 %v4862
      %v4931 = vunpack.c.l.b16 %v4863
      %v4932 = vunpack.c.l.b16 %v4864
      %v4933 = vunpack.c.l.b16 %v4865
      %v4934 = vunpack.c.l.b16 %v4866
      %v4935 = vpack.c.b16 %v4903, %v4902
      %v4936 = vpack.c.b16 %v4905, %v4904
      %v4937 = vpack.c.b16 %v4907, %v4906
      %v4938 = vpack.c.b16 %v4909, %v4908
      %v4939 = vpack.c.b16 %v4911, %v4910
      %v4940 = vpack.c.b16 %v4913, %v4912
      %v4941 = vpack.c.b16 %v4915, %v4914
      %v4942 = vpack.c.b16 %v4917, %v4916
      %v4943 = vpack.c.b16 %v4919, %v4918
      %v4944 = vpack.c.b16 %v4921, %v4920
      %v4945 = vpack.c.b16 %v4923, %v4922
      %v4946 = vpack.c.b16 %v4925, %v4924
      %v4947 = vpack.c.b16 %v4927, %v4926
      %v4948 = vpack.c.b16 %v4929, %v4928
      %v4949 = vpack.c.b16 %v4931, %v4930
      %v4950 = vpack.c.b16 %v4933, %v4932
      %v4951 = vpack.c.b16 %v4934, %v4934
      %v4953 = vshrl.u32 %v4935, 16
      %v4955 = vrot.slane %v4953, 3
      %v4956 = vshll.u32 %v4935, 16
      %v4958 = vrot.slane %v4956, 4
      %v4959 = vor.u32 %v4955, %v4958
      %v4961 = vshrl.u32 %v4936, 16
      %v4963 = vrot.slane %v4961, 3
      %v4964 = vshll.u32 %v4936, 16
      %v4966 = vrot.slane %v4964, 4
      %v4967 = vor.u32 %v4963, %v4966
      %v4968 = vsel %vm2928, %v4959, %v4967
      %v4970 = vshrl.u32 %v4937, 16
      %v4972 = vrot.slane %v4970, 3
      %v4973 = vshll.u32 %v4937, 16
      %v4975 = vrot.slane %v4973, 4
      %v4976 = vor.u32 %v4972, %v4975
      %v4977 = vsel %vm2928, %v4967, %v4976
      %v4979 = vshrl.u32 %v4938, 16
      %v4981 = vrot.slane %v4979, 3
      %v4982 = vshll.u32 %v4938, 16
      %v4984 = vrot.slane %v4982, 4
      %v4985 = vor.u32 %v4981, %v4984
      %v4986 = vsel %vm2928, %v4976, %v4985
      %v4988 = vshrl.u32 %v4939, 16
      %v4990 = vrot.slane %v4988, 3
      %v4991 = vshll.u32 %v4939, 16
      %v4993 = vrot.slane %v4991, 4
      %v4994 = vor.u32 %v4990, %v4993
      %v4995 = vsel %vm2928, %v4985, %v4994
      %v4997 = vshrl.u32 %v4940, 16
      %v4999 = vrot.slane %v4997, 3
      %v5000 = vshll.u32 %v4940, 16
      %v5002 = vrot.slane %v5000, 4
      %v5003 = vor.u32 %v4999, %v5002
      %v5004 = vsel %vm2928, %v4994, %v5003
      %v5006 = vshrl.u32 %v4941, 16
      %v5008 = vrot.slane %v5006, 3
      %v5009 = vshll.u32 %v4941, 16
      %v5011 = vrot.slane %v5009, 4
      %v5012 = vor.u32 %v5008, %v5011
      %v5013 = vsel %vm2928, %v5003, %v5012
      %v5015 = vshrl.u32 %v4942, 16
      %v5017 = vrot.slane %v5015, 3
      %v5018 = vshll.u32 %v4942, 16
      %v5020 = vrot.slane %v5018, 4
      %v5021 = vor.u32 %v5017, %v5020
      %v5022 = vsel %vm2928, %v5012, %v5021
      %v5024 = vshrl.u32 %v4943, 16
      %v5026 = vrot.slane %v5024, 3
      %v5027 = vshll.u32 %v4943, 16
      %v5029 = vrot.slane %v5027, 4
      %v5030 = vor.u32 %v5026, %v5029
      %v5031 = vsel %vm2928, %v5021, %v5030
      %v5033 = vshrl.u32 %v4944, 16
      %v5035 = vrot.slane %v5033, 3
      %v5036 = vshll.u32 %v4944, 16
      %v5038 = vrot.slane %v5036, 4
      %v5039 = vor.u32 %v5035, %v5038
      %v5040 = vsel %vm2928, %v5030, %v5039
      %v5042 = vshrl.u32 %v4945, 16
      %v5044 = vrot.slane %v5042, 3
      %v5045 = vshll.u32 %v4945, 16
      %v5047 = vrot.slane %v5045, 4
      %v5048 = vor.u32 %v5044, %v5047
      %v5049 = vsel %vm2928, %v5039, %v5048
      %v5051 = vshrl.u32 %v4946, 16
      %v5053 = vrot.slane %v5051, 3
      %v5054 = vshll.u32 %v4946, 16
      %v5056 = vrot.slane %v5054, 4
      %v5057 = vor.u32 %v5053, %v5056
      %v5058 = vsel %vm2928, %v5048, %v5057
      %v5060 = vshrl.u32 %v4947, 16
      %v5062 = vrot.slane %v5060, 3
      %v5063 = vshll.u32 %v4947, 16
      %v5065 = vrot.slane %v5063, 4
      %v5066 = vor.u32 %v5062, %v5065
      %v5067 = vsel %vm2928, %v5057, %v5066
      %v5069 = vshrl.u32 %v4948, 16
      %v5071 = vrot.slane %v5069, 3
      %v5072 = vshll.u32 %v4948, 16
      %v5074 = vrot.slane %v5072, 4
      %v5075 = vor.u32 %v5071, %v5074
      %v5076 = vsel %vm2928, %v5066, %v5075
      %v5078 = vshrl.u32 %v4949, 16
      %v5080 = vrot.slane %v5078, 3
      %v5081 = vshll.u32 %v4949, 16
      %v5083 = vrot.slane %v5081, 4
      %v5084 = vor.u32 %v5080, %v5083
      %v5085 = vsel %vm2928, %v5075, %v5084
      %v5087 = vshrl.u32 %v4950, 16
      %v5089 = vrot.slane %v5087, 3
      %v5090 = vshll.u32 %v4950, 16
      %v5092 = vrot.slane %v5090, 4
      %v5093 = vor.u32 %v5089, %v5092
      %v5094 = vsel %vm2928, %v5084, %v5093
      %v5096 = vshrl.u32 %v4951, 16
      %v5098 = vrot.slane %v5096, 3
      %v5099 = vshll.u32 %v4951, 16
      %v5101 = vrot.slane %v5099, 4
      %v5102 = vor.u32 %v5098, %v5101
      %v5103 = vsel %vm2928, %v5093, %v5102
      %v5105 = vsel %vm1002, %v4968, 0
      %v5108 = vsel %vm1002, %v4977, 0
      %v5111 = vsel %vm1002, %v4986, 0
      %v5114 = vsel %vm1002, %v4995, 0
      %v5117 = vsel %vm1002, %v5004, 0
      %v5120 = vsel %vm1002, %v5013, 0
      %v5123 = vsel %vm1002, %v5022, 0
      %v5126 = vsel %vm1002, %v5031, 0
      %v5129 = vsel %vm1002, %v5040, 0
      %v5132 = vsel %vm1002, %v5049, 0
      %v5135 = vsel %vm1002, %v5058, 0
      %v5138 = vsel %vm1002, %v5067, 0
      %v5141 = vsel %vm1002, %v5076, 0
      %v5144 = vsel %vm1002, %v5085, 0
      %v5147 = vsel %vm1002, %v5094, 0
      %v5150 = vsel %vm1002, %v5103, 0
      %v5153 = vsel %vm3129, %v4868, 0
      %5155 = vmatpush.bf16.msra.mxu0 0
      %5156 = vmatpush.bf16.msra.mxu0 0
      %5157 = vmatpush.bf16.msra.mxu0 0
      %5158 = vmatpush.bf16.msra.mxu0 0
      %5159 = vmatpush.bf16.msra.mxu0 0
      %5160 = vmatpush.bf16.msra.mxu0 0
      %5161 = vmatpush.bf16.msra.mxu0 0
      %5162 = vmatpush.bf16.msra.mxu0 %v5153
      %5163 = vmatmul.bf16.gmra.mxu0 %v5105
      %v5164 = vpop.f32.mrf.mxu0
      %v5165 = vadd.f32 0.0, %v5164
      %v5166 = vpop.f32.mrf.mxu0
      %v5167 = vadd.f32 0.0, %v5166
      %5168 = vmatmul.bf16.gmra.mxu0 %v5108
      %v5169 = vpop.f32.mrf.mxu0
      %v5170 = vadd.f32 0.0, %v5169
      %v5171 = vpop.f32.mrf.mxu0
      %v5172 = vadd.f32 0.0, %v5171
      %5173 = vmatmul.bf16.gmra.mxu0 %v5111
      %v5174 = vpop.f32.mrf.mxu0
      %v5175 = vadd.f32 0.0, %v5174
      %v5176 = vpop.f32.mrf.mxu0
      %v5177 = vadd.f32 0.0, %v5176
      %5178 = vmatmul.bf16.gmra.mxu0 %v5114
      %v5179 = vpop.f32.mrf.mxu0
      %v5180 = vadd.f32 0.0, %v5179
      %v5181 = vpop.f32.mrf.mxu0
      %v5182 = vadd.f32 0.0, %v5181
      %5183 = vmatmul.bf16.gmra.mxu0 %v5117
      %v5184 = vpop.f32.mrf.mxu0
      %v5185 = vadd.f32 0.0, %v5184
      %v5186 = vpop.f32.mrf.mxu0
      %v5187 = vadd.f32 0.0, %v5186
      %5188 = vmatmul.bf16.gmra.mxu0 %v5120
      %v5189 = vpop.f32.mrf.mxu0
      %v5190 = vadd.f32 0.0, %v5189
      %v5191 = vpop.f32.mrf.mxu0
      %v5192 = vadd.f32 0.0, %v5191
      %5193 = vmatmul.bf16.gmra.mxu0 %v5123
      %v5194 = vpop.f32.mrf.mxu0
      %v5195 = vadd.f32 0.0, %v5194
      %v5196 = vpop.f32.mrf.mxu0
      %v5197 = vadd.f32 0.0, %v5196
      %5198 = vmatmul.bf16.gmra.mxu0 %v5126
      %v5199 = vpop.f32.mrf.mxu0
      %v5200 = vadd.f32 0.0, %v5199
      %v5201 = vpop.f32.mrf.mxu0
      %v5202 = vadd.f32 0.0, %v5201
      %5203 = vmatmul.bf16.gmra.mxu0 %v5129
      %v5204 = vpop.f32.mrf.mxu0
      %v5205 = vadd.f32 0.0, %v5204
      %v5206 = vpop.f32.mrf.mxu0
      %v5207 = vadd.f32 0.0, %v5206
      %5208 = vmatmul.bf16.gmra.mxu0 %v5132
      %v5209 = vpop.f32.mrf.mxu0
      %v5210 = vadd.f32 0.0, %v5209
      %v5211 = vpop.f32.mrf.mxu0
      %v5212 = vadd.f32 0.0, %v5211
      %5213 = vmatmul.bf16.gmra.mxu0 %v5135
      %v5214 = vpop.f32.mrf.mxu0
      %v5215 = vadd.f32 0.0, %v5214
      %v5216 = vpop.f32.mrf.mxu0
      %v5217 = vadd.f32 0.0, %v5216
      %5218 = vmatmul.bf16.gmra.mxu0 %v5138
      %v5219 = vpop.f32.mrf.mxu0
      %v5220 = vadd.f32 0.0, %v5219
      %v5221 = vpop.f32.mrf.mxu0
      %v5222 = vadd.f32 0.0, %v5221
      %5223 = vmatmul.bf16.gmra.mxu0 %v5141
      %v5224 = vpop.f32.mrf.mxu0
      %v5225 = vadd.f32 0.0, %v5224
      %v5226 = vpop.f32.mrf.mxu0
      %v5227 = vadd.f32 0.0, %v5226
      %5228 = vmatmul.bf16.gmra.mxu0 %v5144
      %v5229 = vpop.f32.mrf.mxu0
      %v5230 = vadd.f32 0.0, %v5229
      %v5231 = vpop.f32.mrf.mxu0
      %v5232 = vadd.f32 0.0, %v5231
      %5233 = vmatmul.bf16.gmra.mxu0 %v5147
      %v5234 = vpop.f32.mrf.mxu0
      %v5235 = vadd.f32 0.0, %v5234
      %v5236 = vpop.f32.mrf.mxu0
      %v5237 = vadd.f32 0.0, %v5236
      %5238 = vmatmul.bf16.gmra.mxu0 %v5150
      %v5239 = vpop.f32.mrf.mxu0
      %v5240 = vadd.f32 0.0, %v5239
      %v5241 = vpop.f32.mrf.mxu0
      %v5242 = vadd.f32 0.0, %v5241
      %5243 = vdwg.mxu0
      %v5244 = vadd.f32 %v4769, %v5165
      %v5245 = vadd.f32 %v4770, %v5167
      %v5246 = vadd.f32 %v4771, %v5170
      %v5247 = vadd.f32 %v4772, %v5172
      %v5248 = vadd.f32 %v4773, %v5175
      %v5249 = vadd.f32 %v4774, %v5177
      %v5250 = vadd.f32 %v4775, %v5180
      %v5251 = vadd.f32 %v4776, %v5182
      %v5252 = vadd.f32 %v4777, %v5185
      %v5253 = vadd.f32 %v4778, %v5187
      %v5254 = vadd.f32 %v4779, %v5190
      %v5255 = vadd.f32 %v4780, %v5192
      %v5256 = vadd.f32 %v4781, %v5195
      %v5257 = vadd.f32 %v4782, %v5197
      %v5258 = vadd.f32 %v4783, %v5200
      %v5259 = vadd.f32 %v4784, %v5202
      %v5260 = vadd.f32 %v4785, %v5205
      %v5261 = vadd.f32 %v4786, %v5207
      %v5262 = vadd.f32 %v4787, %v5210
      %v5263 = vadd.f32 %v4788, %v5212
      %v5264 = vadd.f32 %v4789, %v5215
      %v5265 = vadd.f32 %v4790, %v5217
      %v5266 = vadd.f32 %v4791, %v5220
      %v5267 = vadd.f32 %v4792, %v5222
      %v5268 = vadd.f32 %v4793, %v5225
      %v5269 = vadd.f32 %v4794, %v5227
      %v5270 = vadd.f32 %v4795, %v5230
      %v5271 = vadd.f32 %v4796, %v5232
      %v5272 = vadd.f32 %v4797, %v5235
      %v5273 = vadd.f32 %v4798, %v5237
      %v5274 = vadd.f32 %v4799, %v5240
      %v5275 = vadd.f32 %v4800, %v5242
      %v5276 = vld [vmem:[#allocation2 + $0xc] sm:$0xf]
      %v5277 = vld [vmem:[#allocation2 + $0x10] sm:$0xf]
      %v5278 = vld [vmem:[#allocation2 + $0x14] sm:$0xf]
      %v5279 = vld [vmem:[#allocation2 + $0x18] sm:$0xf]
      %v5280 = vld [vmem:[#allocation2 + $0x1c] sm:$0xf]
      %v5281 = vld [vmem:[#allocation2 + $0x20] sm:$0xf]
      %v5282 = vld [vmem:[#allocation2 + $0x24] sm:$0xf]
      %v5283 = vld [vmem:[#allocation2 + $0x28] sm:$0xf]
      %v5284 = vld [vmem:[#allocation2 + $0x2c] sm:$0xf]
      %v5285 = vld [vmem:[#allocation2 + $0x30] sm:$0xf]
      %v5286 = vld [vmem:[#allocation2 + $0x34] sm:$0xf]
      %v5287 = vld [vmem:[#allocation2 + $0x38] sm:$0xf]
      %v5288 = vld [vmem:[#allocation2 + $0x3c] sm:$0xf]
      %v5289 = vld [vmem:[#allocation2 + $0x40] sm:$0xf]
      %v5290 = vld [vmem:[#allocation2 + $0x44] sm:$0xf]
      %v5291 = vld [vmem:[#allocation2 + $0x48] sm:$0xf]
      %v5292 = vld [vmem:[#allocation2 + $0x4c] sm:$0xf]
      %v5293 = vld [vmem:[#allocation2 + $0x50] sm:$0xf]
      %v5294 = vld [vmem:[#allocation2 + $0x54] sm:$0xf]
      %v5295 = vld [vmem:[#allocation2 + $0x58] sm:$0xf]
      %v5296 = vld [vmem:[#allocation2 + $0x5c] sm:$0xf]
      %v5297 = vld [vmem:[#allocation2 + $0x60] sm:$0xf]
      %v5298 = vld [vmem:[#allocation2 + $0x64] sm:$0xf]
      %v5299 = vld [vmem:[#allocation2 + $0x68] sm:$0xf]
      %v5300 = vld [vmem:[#allocation2 + $0x6c] sm:$0xf]
      %v5301 = vld [vmem:[#allocation2 + $0x70] sm:$0xf]
      %v5302 = vld [vmem:[#allocation2 + $0x74] sm:$0xf]
      %v5303 = vld [vmem:[#allocation2 + $0x78] sm:$0xf]
      %v5304 = vld [vmem:[#allocation2 + $0x7c] sm:$0xf]
      %v5305 = vld [vmem:[#allocation2 + $0x80] sm:$0xf]
      %v5306 = vld [vmem:[#allocation2 + $0x84] sm:$0xf]
      %v5307 = vld [vmem:[#allocation2 + $0x88] sm:$0xf]
      %v5308 = vld [vmem:[#allocation2 + $0x8c] sm:$0x1]
      %v5309 = vsel %vm4153, %v5276, 0
      %v5310 = vsel %vm4160, %v5277, 0
      %v5311 = vsel %vm4167, %v5278, 0
      %v5312 = vsel %vm4174, %v5279, 0
      %v5313 = vsel %vm4181, %v5280, 0
      %v5314 = vsel %vm4188, %v5281, 0
      %v5315 = vsel %vm4195, %v5282, 0
      %v5316 = vsel %vm4202, %v5283, 0
      %v5317 = vsel %vm4209, %v5284, 0
      %v5318 = vsel %vm4216, %v5285, 0
      %v5319 = vsel %vm4223, %v5286, 0
      %v5320 = vsel %vm4230, %v5287, 0
      %v5321 = vsel %vm4237, %v5288, 0
      %v5322 = vsel %vm4244, %v5289, 0
      %v5323 = vsel %vm4251, %v5290, 0
      %v5324 = vsel %vm4258, %v5291, 0
      %v5325 = vsel %vm4265, %v5292, 0
      %v5326 = vsel %vm4272, %v5293, 0
      %v5327 = vsel %vm4279, %v5294, 0
      %v5328 = vsel %vm4286, %v5295, 0
      %v5329 = vsel %vm4293, %v5296, 0
      %v5330 = vsel %vm4300, %v5297, 0
      %v5331 = vsel %vm4307, %v5298, 0
      %v5332 = vsel %vm4314, %v5299, 0
      %v5333 = vsel %vm4321, %v5300, 0
      %v5334 = vsel %vm4328, %v5301, 0
      %v5335 = vsel %vm4335, %v5302, 0
      %v5336 = vsel %vm4342, %v5303, 0
      %v5337 = vsel %vm4349, %v5304, 0
      %v5338 = vsel %vm4356, %v5305, 0
      %v5339 = vsel %vm4363, %v5306, 0
      %v5340 = vsel %vm4370, %v5307, 0
      %v5341 = vsel %vm4377, %v5308, 0
      %s5342 = scalar_lea.vmem %s6, 10
      %v5343 = vld [vmem:[%s5342] sm:$0x3]
      %v5377 = vunpack.c.l.b16 %v5309
      %v5378 = vunpack.c.l.b16 %v5310
      %v5379 = vunpack.c.l.b16 %v5311
      %v5380 = vunpack.c.l.b16 %v5312
      %v5381 = vunpack.c.l.b16 %v5313
      %v5382 = vunpack.c.l.b16 %v5314
      %v5383 = vunpack.c.l.b16 %v5315
      %v5384 = vunpack.c.l.b16 %v5316
      %v5385 = vunpack.c.l.b16 %v5317
      %v5386 = vunpack.c.l.b16 %v5318
      %v5387 = vunpack.c.l.b16 %v5319
      %v5388 = vunpack.c.l.b16 %v5320
      %v5389 = vunpack.c.l.b16 %v5321
      %v5390 = vunpack.c.l.b16 %v5322
      %v5391 = vunpack.c.l.b16 %v5323
      %v5392 = vunpack.c.l.b16 %v5324
      %v5393 = vunpack.c.l.b16 %v5325
      %v5394 = vunpack.c.l.b16 %v5326
      %v5395 = vunpack.c.l.b16 %v5327
      %v5396 = vunpack.c.l.b16 %v5328
      %v5397 = vunpack.c.l.b16 %v5329
      %v5398 = vunpack.c.l.b16 %v5330
      %v5399 = vunpack.c.l.b16 %v5331
      %v5400 = vunpack.c.l.b16 %v5332
      %v5401 = vunpack.c.l.b16 %v5333
      %v5402 = vunpack.c.l.b16 %v5334
      %v5403 = vunpack.c.l.b16 %v5335
      %v5404 = vunpack.c.l.b16 %v5336
      %v5405 = vunpack.c.l.b16 %v5337
      %v5406 = vunpack.c.l.b16 %v5338
      %v5407 = vunpack.c.l.b16 %v5339
      %v5408 = vunpack.c.l.b16 %v5340
      %v5409 = vunpack.c.l.b16 %v5341
      %v5410 = vpack.c.b16 %v5378, %v5377
      %v5411 = vpack.c.b16 %v5380, %v5379
      %v5412 = vpack.c.b16 %v5382, %v5381
      %v5413 = vpack.c.b16 %v5384, %v5383
      %v5414 = vpack.c.b16 %v5386, %v5385
      %v5415 = vpack.c.b16 %v5388, %v5387
      %v5416 = vpack.c.b16 %v5390, %v5389
      %v5417 = vpack.c.b16 %v5392, %v5391
      %v5418 = vpack.c.b16 %v5394, %v5393
      %v5419 = vpack.c.b16 %v5396, %v5395
      %v5420 = vpack.c.b16 %v5398, %v5397
      %v5421 = vpack.c.b16 %v5400, %v5399
      %v5422 = vpack.c.b16 %v5402, %v5401
      %v5423 = vpack.c.b16 %v5404, %v5403
      %v5424 = vpack.c.b16 %v5406, %v5405
      %v5425 = vpack.c.b16 %v5408, %v5407
      %v5426 = vpack.c.b16 %v5409, %v5409
      %v5428 = vshrl.u32 %v5410, 16
      %v5430 = vshll.u32 %v5410, 16
      %v5432 = vrot.slane %v5430, 1
      %v5433 = vor.u32 %v5428, %v5432
      %v5435 = vshll.u32 %v5411, 16
      %v5437 = vrot.slane %v5435, 1
      %v5438 = vsel %vm4496, %v5433, %v5437
      %v5439 = vshrl.u32 %v5411, 16
      %v5441 = vor.u32 %v5439, %v5437
      %v5443 = vshll.u32 %v5412, 16
      %v5445 = vrot.slane %v5443, 1
      %v5446 = vsel %vm4496, %v5441, %v5445
      %v5447 = vshrl.u32 %v5412, 16
      %v5449 = vor.u32 %v5447, %v5445
      %v5451 = vshll.u32 %v5413, 16
      %v5453 = vrot.slane %v5451, 1
      %v5454 = vsel %vm4496, %v5449, %v5453
      %v5455 = vshrl.u32 %v5413, 16
      %v5457 = vor.u32 %v5455, %v5453
      %v5459 = vshll.u32 %v5414, 16
      %v5461 = vrot.slane %v5459, 1
      %v5462 = vsel %vm4496, %v5457, %v5461
      %v5463 = vshrl.u32 %v5414, 16
      %v5465 = vor.u32 %v5463, %v5461
      %v5467 = vshll.u32 %v5415, 16
      %v5469 = vrot.slane %v5467, 1
      %v5470 = vsel %vm4496, %v5465, %v5469
      %v5471 = vshrl.u32 %v5415, 16
      %v5473 = vor.u32 %v5471, %v5469
      %v5475 = vshll.u32 %v5416, 16
      %v5477 = vrot.slane %v5475, 1
      %v5478 = vsel %vm4496, %v5473, %v5477
      %v5479 = vshrl.u32 %v5416, 16
      %v5481 = vor.u32 %v5479, %v5477
      %v5483 = vshll.u32 %v5417, 16
      %v5485 = vrot.slane %v5483, 1
      %v5486 = vsel %vm4496, %v5481, %v5485
      %v5487 = vshrl.u32 %v5417, 16
      %v5489 = vor.u32 %v5487, %v5485
      %v5491 = vshll.u32 %v5418, 16
      %v5493 = vrot.slane %v5491, 1
      %v5494 = vsel %vm4496, %v5489, %v5493
      %v5495 = vshrl.u32 %v5418, 16
      %v5497 = vor.u32 %v5495, %v5493
      %v5499 = vshll.u32 %v5419, 16
      %v5501 = vrot.slane %v5499, 1
      %v5502 = vsel %vm4496, %v5497, %v5501
      %v5503 = vshrl.u32 %v5419, 16
      %v5505 = vor.u32 %v5503, %v5501
      %v5507 = vshll.u32 %v5420, 16
      %v5509 = vrot.slane %v5507, 1
      %v5510 = vsel %vm4496, %v5505, %v5509
      %v5511 = vshrl.u32 %v5420, 16
      %v5513 = vor.u32 %v5511, %v5509
      %v5515 = vshll.u32 %v5421, 16
      %v5517 = vrot.slane %v5515, 1
      %v5518 = vsel %vm4496, %v5513, %v5517
      %v5519 = vshrl.u32 %v5421, 16
      %v5521 = vor.u32 %v5519, %v5517
      %v5523 = vshll.u32 %v5422, 16
      %v5525 = vrot.slane %v5523, 1
      %v5526 = vsel %vm4496, %v5521, %v5525
      %v5527 = vshrl.u32 %v5422, 16
      %v5529 = vor.u32 %v5527, %v5525
      %v5531 = vshll.u32 %v5423, 16
      %v5533 = vrot.slane %v5531, 1
      %v5534 = vsel %vm4496, %v5529, %v5533
      %v5535 = vshrl.u32 %v5423, 16
      %v5537 = vor.u32 %v5535, %v5533
      %v5539 = vshll.u32 %v5424, 16
      %v5541 = vrot.slane %v5539, 1
      %v5542 = vsel %vm4496, %v5537, %v5541
      %v5543 = vshrl.u32 %v5424, 16
      %v5545 = vor.u32 %v5543, %v5541
      %v5547 = vshll.u32 %v5425, 16
      %v5549 = vrot.slane %v5547, 1
      %v5550 = vsel %vm4496, %v5545, %v5549
      %v5551 = vshrl.u32 %v5425, 16
      %v5553 = vor.u32 %v5551, %v5549
      %v5555 = vshll.u32 %v5426, 16
      %v5557 = vrot.slane %v5555, 1
      %v5558 = vsel %vm4496, %v5553, %v5557
      %v5560 = vsel %vm1002, %v5438, 0
      %v5563 = vsel %vm1002, %v5446, 0
      %v5566 = vsel %vm1002, %v5454, 0
      %v5569 = vsel %vm1002, %v5462, 0
      %v5572 = vsel %vm1002, %v5470, 0
      %v5575 = vsel %vm1002, %v5478, 0
      %v5578 = vsel %vm1002, %v5486, 0
      %v5581 = vsel %vm1002, %v5494, 0
      %v5584 = vsel %vm1002, %v5502, 0
      %v5587 = vsel %vm1002, %v5510, 0
      %v5590 = vsel %vm1002, %v5518, 0
      %v5593 = vsel %vm1002, %v5526, 0
      %v5596 = vsel %vm1002, %v5534, 0
      %v5599 = vsel %vm1002, %v5542, 0
      %v5602 = vsel %vm1002, %v5550, 0
      %v5605 = vsel %vm1002, %v5558, 0
      %v5608 = vsel %vm3129, %v5343, 0
      %5610 = vmatpush.bf16.msra.mxu0 0
      %5611 = vmatpush.bf16.msra.mxu0 0
      %5612 = vmatpush.bf16.msra.mxu0 0
      %5613 = vmatpush.bf16.msra.mxu0 0
      %5614 = vmatpush.bf16.msra.mxu0 0
      %5615 = vmatpush.bf16.msra.mxu0 0
      %5616 = vmatpush.bf16.msra.mxu0 0
      %5617 = vmatpush.bf16.msra.mxu0 %v5608
      %5618 = vmatmul.bf16.gmra.mxu0 %v5560
      %v5619 = vpop.f32.mrf.mxu0
      %v5620 = vadd.f32 0.0, %v5619
      %v5621 = vpop.f32.mrf.mxu0
      %v5622 = vadd.f32 0.0, %v5621
      %5623 = vmatmul.bf16.gmra.mxu0 %v5563
      %v5624 = vpop.f32.mrf.mxu0
      %v5625 = vadd.f32 0.0, %v5624
      %v5626 = vpop.f32.mrf.mxu0
      %v5627 = vadd.f32 0.0, %v5626
      %5628 = vmatmul.bf16.gmra.mxu0 %v5566
      %v5629 = vpop.f32.mrf.mxu0
      %v5630 = vadd.f32 0.0, %v5629
      %v5631 = vpop.f32.mrf.mxu0
      %v5632 = vadd.f32 0.0, %v5631
      %5633 = vmatmul.bf16.gmra.mxu0 %v5569
      %v5634 = vpop.f32.mrf.mxu0
      %v5635 = vadd.f32 0.0, %v5634
      %v5636 = vpop.f32.mrf.mxu0
      %v5637 = vadd.f32 0.0, %v5636
      %5638 = vmatmul.bf16.gmra.mxu0 %v5572
      %v5639 = vpop.f32.mrf.mxu0
      %v5640 = vadd.f32 0.0, %v5639
      %v5641 = vpop.f32.mrf.mxu0
      %v5642 = vadd.f32 0.0, %v5641
      %5643 = vmatmul.bf16.gmra.mxu0 %v5575
      %v5644 = vpop.f32.mrf.mxu0
      %v5645 = vadd.f32 0.0, %v5644
      %v5646 = vpop.f32.mrf.mxu0
      %v5647 = vadd.f32 0.0, %v5646
      %5648 = vmatmul.bf16.gmra.mxu0 %v5578
      %v5649 = vpop.f32.mrf.mxu0
      %v5650 = vadd.f32 0.0, %v5649
      %v5651 = vpop.f32.mrf.mxu0
      %v5652 = vadd.f32 0.0, %v5651
      %5653 = vmatmul.bf16.gmra.mxu0 %v5581
      %v5654 = vpop.f32.mrf.mxu0
      %v5655 = vadd.f32 0.0, %v5654
      %v5656 = vpop.f32.mrf.mxu0
      %v5657 = vadd.f32 0.0, %v5656
      %5658 = vmatmul.bf16.gmra.mxu0 %v5584
      %v5659 = vpop.f32.mrf.mxu0
      %v5660 = vadd.f32 0.0, %v5659
      %v5661 = vpop.f32.mrf.mxu0
      %v5662 = vadd.f32 0.0, %v5661
      %5663 = vmatmul.bf16.gmra.mxu0 %v5587
      %v5664 = vpop.f32.mrf.mxu0
      %v5665 = vadd.f32 0.0, %v5664
      %v5666 = vpop.f32.mrf.mxu0
      %v5667 = vadd.f32 0.0, %v5666
      %5668 = vmatmul.bf16.gmra.mxu0 %v5590
      %v5669 = vpop.f32.mrf.mxu0
      %v5670 = vadd.f32 0.0, %v5669
      %v5671 = vpop.f32.mrf.mxu0
      %v5672 = vadd.f32 0.0, %v5671
      %5673 = vmatmul.bf16.gmra.mxu0 %v5593
      %v5674 = vpop.f32.mrf.mxu0
      %v5675 = vadd.f32 0.0, %v5674
      %v5676 = vpop.f32.mrf.mxu0
      %v5677 = vadd.f32 0.0, %v5676
      %5678 = vmatmul.bf16.gmra.mxu0 %v5596
      %v5679 = vpop.f32.mrf.mxu0
      %v5680 = vadd.f32 0.0, %v5679
      %v5681 = vpop.f32.mrf.mxu0
      %v5682 = vadd.f32 0.0, %v5681
      %5683 = vmatmul.bf16.gmra.mxu0 %v5599
      %v5684 = vpop.f32.mrf.mxu0
      %v5685 = vadd.f32 0.0, %v5684
      %v5686 = vpop.f32.mrf.mxu0
      %v5687 = vadd.f32 0.0, %v5686
      %5688 = vmatmul.bf16.gmra.mxu0 %v5602
      %v5689 = vpop.f32.mrf.mxu0
      %v5690 = vadd.f32 0.0, %v5689
      %v5691 = vpop.f32.mrf.mxu0
      %v5692 = vadd.f32 0.0, %v5691
      %5693 = vmatmul.bf16.gmra.mxu0 %v5605
      %v5694 = vpop.f32.mrf.mxu0
      %v5695 = vadd.f32 0.0, %v5694
      %v5696 = vpop.f32.mrf.mxu0
      %v5697 = vadd.f32 0.0, %v5696
      %5698 = vdwg.mxu0
      %v5699 = vadd.f32 %v5244, %v5620
      %v5700 = vadd.f32 %v5245, %v5622
      %v5701 = vadd.f32 %v5246, %v5625
      %v5702 = vadd.f32 %v5247, %v5627
      %v5703 = vadd.f32 %v5248, %v5630
      %v5704 = vadd.f32 %v5249, %v5632
      %v5705 = vadd.f32 %v5250, %v5635
      %v5706 = vadd.f32 %v5251, %v5637
      %v5707 = vadd.f32 %v5252, %v5640
      %v5708 = vadd.f32 %v5253, %v5642
      %v5709 = vadd.f32 %v5254, %v5645
      %v5710 = vadd.f32 %v5255, %v5647
      %v5711 = vadd.f32 %v5256, %v5650
      %v5712 = vadd.f32 %v5257, %v5652
      %v5713 = vadd.f32 %v5258, %v5655
      %v5714 = vadd.f32 %v5259, %v5657
      %v5715 = vadd.f32 %v5260, %v5660
      %v5716 = vadd.f32 %v5261, %v5662
      %v5717 = vadd.f32 %v5262, %v5665
      %v5718 = vadd.f32 %v5263, %v5667
      %v5719 = vadd.f32 %v5264, %v5670
      %v5720 = vadd.f32 %v5265, %v5672
      %v5721 = vadd.f32 %v5266, %v5675
      %v5722 = vadd.f32 %v5267, %v5677
      %v5723 = vadd.f32 %v5268, %v5680
      %v5724 = vadd.f32 %v5269, %v5682
      %v5725 = vadd.f32 %v5270, %v5685
      %v5726 = vadd.f32 %v5271, %v5687
      %v5727 = vadd.f32 %v5272, %v5690
      %v5728 = vadd.f32 %v5273, %v5692
      %v5729 = vadd.f32 %v5274, %v5695
      %v5730 = vadd.f32 %v5275, %v5697
      %v5731 = vld [vmem:[#allocation2 + $0x10] sm:$0x8]
      %v5732 = vld [vmem:[#allocation2 + $0x14] sm:$0xf]
      %v5733 = vld [vmem:[#allocation2 + $0x18] sm:$0xf]
      %v5734 = vld [vmem:[#allocation2 + $0x1c] sm:$0xf]
      %v5735 = vld [vmem:[#allocation2 + $0x20] sm:$0xf]
      %v5736 = vld [vmem:[#allocation2 + $0x24] sm:$0xf]
      %v5737 = vld [vmem:[#allocation2 + $0x28] sm:$0xf]
      %v5738 = vld [vmem:[#allocation2 + $0x2c] sm:$0xf]
      %v5739 = vld [vmem:[#allocation2 + $0x30] sm:$0xf]
      %v5740 = vld [vmem:[#allocation2 + $0x34] sm:$0xf]
      %v5741 = vld [vmem:[#allocation2 + $0x38] sm:$0xf]
      %v5742 = vld [vmem:[#allocation2 + $0x3c] sm:$0xf]
      %v5743 = vld [vmem:[#allocation2 + $0x40] sm:$0xf]
      %v5744 = vld [vmem:[#allocation2 + $0x44] sm:$0xf]
      %v5745 = vld [vmem:[#allocation2 + $0x48] sm:$0xf]
      %v5746 = vld [vmem:[#allocation2 + $0x4c] sm:$0xf]
      %v5747 = vld [vmem:[#allocation2 + $0x50] sm:$0xf]
      %v5748 = vld [vmem:[#allocation2 + $0x54] sm:$0xf]
      %v5749 = vld [vmem:[#allocation2 + $0x58] sm:$0xf]
      %v5750 = vld [vmem:[#allocation2 + $0x5c] sm:$0xf]
      %v5751 = vld [vmem:[#allocation2 + $0x60] sm:$0xf]
      %v5752 = vld [vmem:[#allocation2 + $0x64] sm:$0xf]
      %v5753 = vld [vmem:[#allocation2 + $0x68] sm:$0xf]
      %v5754 = vld [vmem:[#allocation2 + $0x6c] sm:$0xf]
      %v5755 = vld [vmem:[#allocation2 + $0x70] sm:$0xf]
      %v5756 = vld [vmem:[#allocation2 + $0x74] sm:$0xf]
      %v5757 = vld [vmem:[#allocation2 + $0x78] sm:$0xf]
      %v5758 = vld [vmem:[#allocation2 + $0x7c] sm:$0xf]
      %v5759 = vld [vmem:[#allocation2 + $0x80] sm:$0xf]
      %v5760 = vld [vmem:[#allocation2 + $0x84] sm:$0xf]
      %v5761 = vld [vmem:[#allocation2 + $0x88] sm:$0xf]
      %v5762 = vld [vmem:[#allocation2 + $0x8c] sm:$0xf]
      %v5763 = vld [vmem:[#allocation2 + $0x90] sm:$0xf]
      %v5764 = vsel %vm2586, %v5731, 0
      %v5765 = vsel %vm2593, %v5732, 0
      %v5766 = vsel %vm2600, %v5733, 0
      %v5767 = vsel %vm2607, %v5734, 0
      %v5768 = vsel %vm2614, %v5735, 0
      %v5769 = vsel %vm2621, %v5736, 0
      %v5770 = vsel %vm2628, %v5737, 0
      %v5771 = vsel %vm2635, %v5738, 0
      %v5772 = vsel %vm2642, %v5739, 0
      %v5773 = vsel %vm2649, %v5740, 0
      %v5774 = vsel %vm2656, %v5741, 0
      %v5775 = vsel %vm2663, %v5742, 0
      %v5776 = vsel %vm2670, %v5743, 0
      %v5777 = vsel %vm2677, %v5744, 0
      %v5778 = vsel %vm2684, %v5745, 0
      %v5779 = vsel %vm2691, %v5746, 0
      %v5780 = vsel %vm2698, %v5747, 0
      %v5781 = vsel %vm2705, %v5748, 0
      %v5782 = vsel %vm2712, %v5749, 0
      %v5783 = vsel %vm2719, %v5750, 0
      %v5784 = vsel %vm2726, %v5751, 0
      %v5785 = vsel %vm2733, %v5752, 0
      %v5786 = vsel %vm2740, %v5753, 0
      %v5787 = vsel %vm2747, %v5754, 0
      %v5788 = vsel %vm2754, %v5755, 0
      %v5789 = vsel %vm2761, %v5756, 0
      %v5790 = vsel %vm2768, %v5757, 0
      %v5791 = vsel %vm2775, %v5758, 0
      %v5792 = vsel %vm2782, %v5759, 0
      %v5793 = vsel %vm2789, %v5760, 0
      %v5794 = vsel %vm2796, %v5761, 0
      %v5795 = vsel %vm2803, %v5762, 0
      %v5796 = vsel %vm2810, %v5763, 0
      %s5797 = scalar_lea.vmem %s6, 12
      %v5798 = vld [vmem:[%s5797] sm:$0x3]
      %v5832 = vunpack.c.l.b16 %v5764
      %v5833 = vunpack.c.l.b16 %v5765
      %v5834 = vunpack.c.l.b16 %v5766
      %v5835 = vunpack.c.l.b16 %v5767
      %v5836 = vunpack.c.l.b16 %v5768
      %v5837 = vunpack.c.l.b16 %v5769
      %v5838 = vunpack.c.l.b16 %v5770
      %v5839 = vunpack.c.l.b16 %v5771
      %v5840 = vunpack.c.l.b16 %v5772
      %v5841 = vunpack.c.l.b16 %v5773
      %v5842 = vunpack.c.l.b16 %v5774
      %v5843 = vunpack.c.l.b16 %v5775
      %v5844 = vunpack.c.l.b16 %v5776
      %v5845 = vunpack.c.l.b16 %v5777
      %v5846 = vunpack.c.l.b16 %v5778
      %v5847 = vunpack.c.l.b16 %v5779
      %v5848 = vunpack.c.l.b16 %v5780
      %v5849 = vunpack.c.l.b16 %v5781
      %v5850 = vunpack.c.l.b16 %v5782
      %v5851 = vunpack.c.l.b16 %v5783
      %v5852 = vunpack.c.l.b16 %v5784
      %v5853 = vunpack.c.l.b16 %v5785
      %v5854 = vunpack.c.l.b16 %v5786
      %v5855 = vunpack.c.l.b16 %v5787
      %v5856 = vunpack.c.l.b16 %v5788
      %v5857 = vunpack.c.l.b16 %v5789
      %v5858 = vunpack.c.l.b16 %v5790
      %v5859 = vunpack.c.l.b16 %v5791
      %v5860 = vunpack.c.l.b16 %v5792
      %v5861 = vunpack.c.l.b16 %v5793
      %v5862 = vunpack.c.l.b16 %v5794
      %v5863 = vunpack.c.l.b16 %v5795
      %v5864 = vunpack.c.l.b16 %v5796
      %v5865 = vpack.c.b16 %v5833, %v5832
      %v5866 = vpack.c.b16 %v5835, %v5834
      %v5867 = vpack.c.b16 %v5837, %v5836
      %v5868 = vpack.c.b16 %v5839, %v5838
      %v5869 = vpack.c.b16 %v5841, %v5840
      %v5870 = vpack.c.b16 %v5843, %v5842
      %v5871 = vpack.c.b16 %v5845, %v5844
      %v5872 = vpack.c.b16 %v5847, %v5846
      %v5873 = vpack.c.b16 %v5849, %v5848
      %v5874 = vpack.c.b16 %v5851, %v5850
      %v5875 = vpack.c.b16 %v5853, %v5852
      %v5876 = vpack.c.b16 %v5855, %v5854
      %v5877 = vpack.c.b16 %v5857, %v5856
      %v5878 = vpack.c.b16 %v5859, %v5858
      %v5879 = vpack.c.b16 %v5861, %v5860
      %v5880 = vpack.c.b16 %v5863, %v5862
      %v5881 = vpack.c.b16 %v5864, %v5864
      %v5883 = vshrl.u32 %v5865, 16
      %v5885 = vrot.slane %v5883, 3
      %v5886 = vshll.u32 %v5865, 16
      %v5888 = vrot.slane %v5886, 4
      %v5889 = vor.u32 %v5885, %v5888
      %v5891 = vshrl.u32 %v5866, 16
      %v5893 = vrot.slane %v5891, 3
      %v5894 = vshll.u32 %v5866, 16
      %v5896 = vrot.slane %v5894, 4
      %v5897 = vor.u32 %v5893, %v5896
      %v5898 = vsel %vm2928, %v5889, %v5897
      %v5900 = vshrl.u32 %v5867, 16
      %v5902 = vrot.slane %v5900, 3
      %v5903 = vshll.u32 %v5867, 16
      %v5905 = vrot.slane %v5903, 4
      %v5906 = vor.u32 %v5902, %v5905
      %v5907 = vsel %vm2928, %v5897, %v5906
      %v5909 = vshrl.u32 %v5868, 16
      %v5911 = vrot.slane %v5909, 3
      %v5912 = vshll.u32 %v5868, 16
      %v5914 = vrot.slane %v5912, 4
      %v5915 = vor.u32 %v5911, %v5914
      %v5916 = vsel %vm2928, %v5906, %v5915
      %v5918 = vshrl.u32 %v5869, 16
      %v5920 = vrot.slane %v5918, 3
      %v5921 = vshll.u32 %v5869, 16
      %v5923 = vrot.slane %v5921, 4
      %v5924 = vor.u32 %v5920, %v5923
      %v5925 = vsel %vm2928, %v5915, %v5924
      %v5927 = vshrl.u32 %v5870, 16
      %v5929 = vrot.slane %v5927, 3
      %v5930 = vshll.u32 %v5870, 16
      %v5932 = vrot.slane %v5930, 4
      %v5933 = vor.u32 %v5929, %v5932
      %v5934 = vsel %vm2928, %v5924, %v5933
      %v5936 = vshrl.u32 %v5871, 16
      %v5938 = vrot.slane %v5936, 3
      %v5939 = vshll.u32 %v5871, 16
      %v5941 = vrot.slane %v5939, 4
      %v5942 = vor.u32 %v5938, %v5941
      %v5943 = vsel %vm2928, %v5933, %v5942
      %v5945 = vshrl.u32 %v5872, 16
      %v5947 = vrot.slane %v5945, 3
      %v5948 = vshll.u32 %v5872, 16
      %v5950 = vrot.slane %v5948, 4
      %v5951 = vor.u32 %v5947, %v5950
      %v5952 = vsel %vm2928, %v5942, %v5951
      %v5954 = vshrl.u32 %v5873, 16
      %v5956 = vrot.slane %v5954, 3
      %v5957 = vshll.u32 %v5873, 16
      %v5959 = vrot.slane %v5957, 4
      %v5960 = vor.u32 %v5956, %v5959
      %v5961 = vsel %vm2928, %v5951, %v5960
      %v5963 = vshrl.u32 %v5874, 16
      %v5965 = vrot.slane %v5963, 3
      %v5966 = vshll.u32 %v5874, 16
      %v5968 = vrot.slane %v5966, 4
      %v5969 = vor.u32 %v5965, %v5968
      %v5970 = vsel %vm2928, %v5960, %v5969
      %v5972 = vshrl.u32 %v5875, 16
      %v5974 = vrot.slane %v5972, 3
      %v5975 = vshll.u32 %v5875, 16
      %v5977 = vrot.slane %v5975, 4
      %v5978 = vor.u32 %v5974, %v5977
      %v5979 = vsel %vm2928, %v5969, %v5978
      %v5981 = vshrl.u32 %v5876, 16
      %v5983 = vrot.slane %v5981, 3
      %v5984 = vshll.u32 %v5876, 16
      %v5986 = vrot.slane %v5984, 4
      %v5987 = vor.u32 %v5983, %v5986
      %v5988 = vsel %vm2928, %v5978, %v5987
      %v5990 = vshrl.u32 %v5877, 16
      %v5992 = vrot.slane %v5990, 3
      %v5993 = vshll.u32 %v5877, 16
      %v5995 = vrot.slane %v5993, 4
      %v5996 = vor.u32 %v5992, %v5995
      %v5997 = vsel %vm2928, %v5987, %v5996
      %v5999 = vshrl.u32 %v5878, 16
      %v6001 = vrot.slane %v5999, 3
      %v6002 = vshll.u32 %v5878, 16
      %v6004 = vrot.slane %v6002, 4
      %v6005 = vor.u32 %v6001, %v6004
      %v6006 = vsel %vm2928, %v5996, %v6005
      %v6008 = vshrl.u32 %v5879, 16
      %v6010 = vrot.slane %v6008, 3
      %v6011 = vshll.u32 %v5879, 16
      %v6013 = vrot.slane %v6011, 4
      %v6014 = vor.u32 %v6010, %v6013
      %v6015 = vsel %vm2928, %v6005, %v6014
      %v6017 = vshrl.u32 %v5880, 16
      %v6019 = vrot.slane %v6017, 3
      %v6020 = vshll.u32 %v5880, 16
      %v6022 = vrot.slane %v6020, 4
      %v6023 = vor.u32 %v6019, %v6022
      %v6024 = vsel %vm2928, %v6014, %v6023
      %v6026 = vshrl.u32 %v5881, 16
      %v6028 = vrot.slane %v6026, 3
      %v6029 = vshll.u32 %v5881, 16
      %v6031 = vrot.slane %v6029, 4
      %v6032 = vor.u32 %v6028, %v6031
      %v6033 = vsel %vm2928, %v6023, %v6032
      %v6035 = vsel %vm1002, %v5898, 0
      %v6038 = vsel %vm1002, %v5907, 0
      %v6041 = vsel %vm1002, %v5916, 0
      %v6044 = vsel %vm1002, %v5925, 0
      %v6047 = vsel %vm1002, %v5934, 0
      %v6050 = vsel %vm1002, %v5943, 0
      %v6053 = vsel %vm1002, %v5952, 0
      %v6056 = vsel %vm1002, %v5961, 0
      %v6059 = vsel %vm1002, %v5970, 0
      %v6062 = vsel %vm1002, %v5979, 0
      %v6065 = vsel %vm1002, %v5988, 0
      %v6068 = vsel %vm1002, %v5997, 0
      %v6071 = vsel %vm1002, %v6006, 0
      %v6074 = vsel %vm1002, %v6015, 0
      %v6077 = vsel %vm1002, %v6024, 0
      %v6080 = vsel %vm1002, %v6033, 0
      %v6083 = vsel %vm3129, %v5798, 0
      %6085 = vmatpush.bf16.msra.mxu0 0
      %6086 = vmatpush.bf16.msra.mxu0 0
      %6087 = vmatpush.bf16.msra.mxu0 0
      %6088 = vmatpush.bf16.msra.mxu0 0
      %6089 = vmatpush.bf16.msra.mxu0 0
      %6090 = vmatpush.bf16.msra.mxu0 0
      %6091 = vmatpush.bf16.msra.mxu0 0
      %6092 = vmatpush.bf16.msra.mxu0 %v6083
      %6093 = vmatmul.bf16.gmra.mxu0 %v6035
      %v6094 = vpop.f32.mrf.mxu0
      %v6095 = vadd.f32 0.0, %v6094
      %v6096 = vpop.f32.mrf.mxu0
      %v6097 = vadd.f32 0.0, %v6096
      %6098 = vmatmul.bf16.gmra.mxu0 %v6038
      %v6099 = vpop.f32.mrf.mxu0
      %v6100 = vadd.f32 0.0, %v6099
      %v6101 = vpop.f32.mrf.mxu0
      %v6102 = vadd.f32 0.0, %v6101
      %6103 = vmatmul.bf16.gmra.mxu0 %v6041
      %v6104 = vpop.f32.mrf.mxu0
      %v6105 = vadd.f32 0.0, %v6104
      %v6106 = vpop.f32.mrf.mxu0
      %v6107 = vadd.f32 0.0, %v6106
      %6108 = vmatmul.bf16.gmra.mxu0 %v6044
      %v6109 = vpop.f32.mrf.mxu0
      %v6110 = vadd.f32 0.0, %v6109
      %v6111 = vpop.f32.mrf.mxu0
      %v6112 = vadd.f32 0.0, %v6111
      %6113 = vmatmul.bf16.gmra.mxu0 %v6047
      %v6114 = vpop.f32.mrf.mxu0
      %v6115 = vadd.f32 0.0, %v6114
      %v6116 = vpop.f32.mrf.mxu0
      %v6117 = vadd.f32 0.0, %v6116
      %6118 = vmatmul.bf16.gmra.mxu0 %v6050
      %v6119 = vpop.f32.mrf.mxu0
      %v6120 = vadd.f32 0.0, %v6119
      %v6121 = vpop.f32.mrf.mxu0
      %v6122 = vadd.f32 0.0, %v6121
      %6123 = vmatmul.bf16.gmra.mxu0 %v6053
      %v6124 = vpop.f32.mrf.mxu0
      %v6125 = vadd.f32 0.0, %v6124
      %v6126 = vpop.f32.mrf.mxu0
      %v6127 = vadd.f32 0.0, %v6126
      %6128 = vmatmul.bf16.gmra.mxu0 %v6056
      %v6129 = vpop.f32.mrf.mxu0
      %v6130 = vadd.f32 0.0, %v6129
      %v6131 = vpop.f32.mrf.mxu0
      %v6132 = vadd.f32 0.0, %v6131
      %6133 = vmatmul.bf16.gmra.mxu0 %v6059
      %v6134 = vpop.f32.mrf.mxu0
      %v6135 = vadd.f32 0.0, %v6134
      %v6136 = vpop.f32.mrf.mxu0
      %v6137 = vadd.f32 0.0, %v6136
      %6138 = vmatmul.bf16.gmra.mxu0 %v6062
      %v6139 = vpop.f32.mrf.mxu0
      %v6140 = vadd.f32 0.0, %v6139
      %v6141 = vpop.f32.mrf.mxu0
      %v6142 = vadd.f32 0.0, %v6141
      %6143 = vmatmul.bf16.gmra.mxu0 %v6065
      %v6144 = vpop.f32.mrf.mxu0
      %v6145 = vadd.f32 0.0, %v6144
      %v6146 = vpop.f32.mrf.mxu0
      %v6147 = vadd.f32 0.0, %v6146
      %6148 = vmatmul.bf16.gmra.mxu0 %v6068
      %v6149 = vpop.f32.mrf.mxu0
      %v6150 = vadd.f32 0.0, %v6149
      %v6151 = vpop.f32.mrf.mxu0
      %v6152 = vadd.f32 0.0, %v6151
      %6153 = vmatmul.bf16.gmra.mxu0 %v6071
      %v6154 = vpop.f32.mrf.mxu0
      %v6155 = vadd.f32 0.0, %v6154
      %v6156 = vpop.f32.mrf.mxu0
      %v6157 = vadd.f32 0.0, %v6156
      %6158 = vmatmul.bf16.gmra.mxu0 %v6074
      %v6159 = vpop.f32.mrf.mxu0
      %v6160 = vadd.f32 0.0, %v6159
      %v6161 = vpop.f32.mrf.mxu0
      %v6162 = vadd.f32 0.0, %v6161
      %6163 = vmatmul.bf16.gmra.mxu0 %v6077
      %v6164 = vpop.f32.mrf.mxu0
      %v6165 = vadd.f32 0.0, %v6164
      %v6166 = vpop.f32.mrf.mxu0
      %v6167 = vadd.f32 0.0, %v6166
      %6168 = vmatmul.bf16.gmra.mxu0 %v6080
      %v6169 = vpop.f32.mrf.mxu0
      %v6170 = vadd.f32 0.0, %v6169
      %v6171 = vpop.f32.mrf.mxu0
      %v6172 = vadd.f32 0.0, %v6171
      %6173 = vdwg.mxu0
      %v6174 = vadd.f32 %v5699, %v6095
      %v6175 = vadd.f32 %v5700, %v6097
      %v6176 = vadd.f32 %v5701, %v6100
      %v6177 = vadd.f32 %v5702, %v6102
      %v6178 = vadd.f32 %v5703, %v6105
      %v6179 = vadd.f32 %v5704, %v6107
      %v6180 = vadd.f32 %v5705, %v6110
      %v6181 = vadd.f32 %v5706, %v6112
      %v6182 = vadd.f32 %v5707, %v6115
      %v6183 = vadd.f32 %v5708, %v6117
      %v6184 = vadd.f32 %v5709, %v6120
      %v6185 = vadd.f32 %v5710, %v6122
      %v6186 = vadd.f32 %v5711, %v6125
      %v6187 = vadd.f32 %v5712, %v6127
      %v6188 = vadd.f32 %v5713, %v6130
      %v6189 = vadd.f32 %v5714, %v6132
      %v6190 = vadd.f32 %v5715, %v6135
      %v6191 = vadd.f32 %v5716, %v6137
      %v6192 = vadd.f32 %v5717, %v6140
      %v6193 = vadd.f32 %v5718, %v6142
      %v6194 = vadd.f32 %v5719, %v6145
      %v6195 = vadd.f32 %v5720, %v6147
      %v6196 = vadd.f32 %v5721, %v6150
      %v6197 = vadd.f32 %v5722, %v6152
      %v6198 = vadd.f32 %v5723, %v6155
      %v6199 = vadd.f32 %v5724, %v6157
      %v6200 = vadd.f32 %v5725, %v6160
      %v6201 = vadd.f32 %v5726, %v6162
      %v6202 = vadd.f32 %v5727, %v6165
      %v6203 = vadd.f32 %v5728, %v6167
      %v6204 = vadd.f32 %v5729, %v6170
      %v6205 = vadd.f32 %v5730, %v6172
      %s6206 = scalar_lea.vmem %s6, 14
      %v6207 = vld [vmem:[%s6206] sm:$0x3]
      %v6240 = vunpack.c.l.b16 %v5732
      %v6241 = vunpack.c.l.b16 %v5733
      %v6242 = vunpack.c.l.b16 %v5734
      %v6243 = vunpack.c.l.b16 %v5735
      %v6244 = vunpack.c.l.b16 %v5736
      %v6245 = vunpack.c.l.b16 %v5737
      %v6246 = vunpack.c.l.b16 %v5738
      %v6247 = vunpack.c.l.b16 %v5739
      %v6248 = vunpack.c.l.b16 %v5740
      %v6249 = vunpack.c.l.b16 %v5741
      %v6250 = vunpack.c.l.b16 %v5742
      %v6251 = vunpack.c.l.b16 %v5743
      %v6252 = vunpack.c.l.b16 %v5744
      %v6253 = vunpack.c.l.b16 %v5745
      %v6254 = vunpack.c.l.b16 %v5746
      %v6255 = vunpack.c.l.b16 %v5747
      %v6256 = vunpack.c.l.b16 %v5748
      %v6257 = vunpack.c.l.b16 %v5749
      %v6258 = vunpack.c.l.b16 %v5750
      %v6259 = vunpack.c.l.b16 %v5751
      %v6260 = vunpack.c.l.b16 %v5752
      %v6261 = vunpack.c.l.b16 %v5753
      %v6262 = vunpack.c.l.b16 %v5754
      %v6263 = vunpack.c.l.b16 %v5755
      %v6264 = vunpack.c.l.b16 %v5756
      %v6265 = vunpack.c.l.b16 %v5757
      %v6266 = vunpack.c.l.b16 %v5758
      %v6267 = vunpack.c.l.b16 %v5759
      %v6268 = vunpack.c.l.b16 %v5760
      %v6269 = vunpack.c.l.b16 %v5761
      %v6270 = vunpack.c.l.b16 %v5762
      %v6271 = vunpack.c.l.b16 %v5763
      %v6272 = vpack.c.b16 %v6241, %v6240
      %v6273 = vpack.c.b16 %v6243, %v6242
      %v6274 = vpack.c.b16 %v6245, %v6244
      %v6275 = vpack.c.b16 %v6247, %v6246
      %v6276 = vpack.c.b16 %v6249, %v6248
      %v6277 = vpack.c.b16 %v6251, %v6250
      %v6278 = vpack.c.b16 %v6253, %v6252
      %v6279 = vpack.c.b16 %v6255, %v6254
      %v6280 = vpack.c.b16 %v6257, %v6256
      %v6281 = vpack.c.b16 %v6259, %v6258
      %v6282 = vpack.c.b16 %v6261, %v6260
      %v6283 = vpack.c.b16 %v6263, %v6262
      %v6284 = vpack.c.b16 %v6265, %v6264
      %v6285 = vpack.c.b16 %v6267, %v6266
      %v6286 = vpack.c.b16 %v6269, %v6268
      %v6287 = vpack.c.b16 %v6271, %v6270
      %v6289 = vsel %vm1002, %v6272, 0
      %v6292 = vsel %vm1002, %v6273, 0
      %v6295 = vsel %vm1002, %v6274, 0
      %v6298 = vsel %vm1002, %v6275, 0
      %v6301 = vsel %vm1002, %v6276, 0
      %v6304 = vsel %vm1002, %v6277, 0
      %v6307 = vsel %vm1002, %v6278, 0
      %v6310 = vsel %vm1002, %v6279, 0
      %v6313 = vsel %vm1002, %v6280, 0
      %v6316 = vsel %vm1002, %v6281, 0
      %v6319 = vsel %vm1002, %v6282, 0
      %v6322 = vsel %vm1002, %v6283, 0
      %v6325 = vsel %vm1002, %v6284, 0
      %v6328 = vsel %vm1002, %v6285, 0
      %v6331 = vsel %vm1002, %v6286, 0
      %v6334 = vsel %vm1002, %v6287, 0
      %v6337 = vsel %vm3129, %v6207, 0
      %6339 = vmatpush.bf16.msra.mxu0 0
      %6340 = vmatpush.bf16.msra.mxu0 0
      %6341 = vmatpush.bf16.msra.mxu0 0
      %6342 = vmatpush.bf16.msra.mxu0 0
      %6343 = vmatpush.bf16.msra.mxu0 0
      %6344 = vmatpush.bf16.msra.mxu0 0
      %6345 = vmatpush.bf16.msra.mxu0 0
      %6346 = vmatpush.bf16.msra.mxu0 %v6337
      %6347 = vmatmul.bf16.gmra.mxu0 %v6289
      %v6348 = vpop.f32.mrf.mxu0
      %v6349 = vadd.f32 0.0, %v6348
      %v6350 = vpop.f32.mrf.mxu0
      %v6351 = vadd.f32 0.0, %v6350
      %6352 = vmatmul.bf16.gmra.mxu0 %v6292
      %v6353 = vpop.f32.mrf.mxu0
      %v6354 = vadd.f32 0.0, %v6353
      %v6355 = vpop.f32.mrf.mxu0
      %v6356 = vadd.f32 0.0, %v6355
      %6357 = vmatmul.bf16.gmra.mxu0 %v6295
      %v6358 = vpop.f32.mrf.mxu0
      %v6359 = vadd.f32 0.0, %v6358
      %v6360 = vpop.f32.mrf.mxu0
      %v6361 = vadd.f32 0.0, %v6360
      %6362 = vmatmul.bf16.gmra.mxu0 %v6298
      %v6363 = vpop.f32.mrf.mxu0
      %v6364 = vadd.f32 0.0, %v6363
      %v6365 = vpop.f32.mrf.mxu0
      %v6366 = vadd.f32 0.0, %v6365
      %6367 = vmatmul.bf16.gmra.mxu0 %v6301
      %v6368 = vpop.f32.mrf.mxu0
      %v6369 = vadd.f32 0.0, %v6368
      %v6370 = vpop.f32.mrf.mxu0
      %v6371 = vadd.f32 0.0, %v6370
      %6372 = vmatmul.bf16.gmra.mxu0 %v6304
      %v6373 = vpop.f32.mrf.mxu0
      %v6374 = vadd.f32 0.0, %v6373
      %v6375 = vpop.f32.mrf.mxu0
      %v6376 = vadd.f32 0.0, %v6375
      %6377 = vmatmul.bf16.gmra.mxu0 %v6307
      %v6378 = vpop.f32.mrf.mxu0
      %v6379 = vadd.f32 0.0, %v6378
      %v6380 = vpop.f32.mrf.mxu0
      %v6381 = vadd.f32 0.0, %v6380
      %6382 = vmatmul.bf16.gmra.mxu0 %v6310
      %v6383 = vpop.f32.mrf.mxu0
      %v6384 = vadd.f32 0.0, %v6383
      %v6385 = vpop.f32.mrf.mxu0
      %v6386 = vadd.f32 0.0, %v6385
      %6387 = vmatmul.bf16.gmra.mxu0 %v6313
      %v6388 = vpop.f32.mrf.mxu0
      %v6389 = vadd.f32 0.0, %v6388
      %v6390 = vpop.f32.mrf.mxu0
      %v6391 = vadd.f32 0.0, %v6390
      %6392 = vmatmul.bf16.gmra.mxu0 %v6316
      %v6393 = vpop.f32.mrf.mxu0
      %v6394 = vadd.f32 0.0, %v6393
      %v6395 = vpop.f32.mrf.mxu0
      %v6396 = vadd.f32 0.0, %v6395
      %6397 = vmatmul.bf16.gmra.mxu0 %v6319
      %v6398 = vpop.f32.mrf.mxu0
      %v6399 = vadd.f32 0.0, %v6398
      %v6400 = vpop.f32.mrf.mxu0
      %v6401 = vadd.f32 0.0, %v6400
      %6402 = vmatmul.bf16.gmra.mxu0 %v6322
      %v6403 = vpop.f32.mrf.mxu0
      %v6404 = vadd.f32 0.0, %v6403
      %v6405 = vpop.f32.mrf.mxu0
      %v6406 = vadd.f32 0.0, %v6405
      %6407 = vmatmul.bf16.gmra.mxu0 %v6325
      %v6408 = vpop.f32.mrf.mxu0
      %v6409 = vadd.f32 0.0, %v6408
      %v6410 = vpop.f32.mrf.mxu0
      %v6411 = vadd.f32 0.0, %v6410
      %6412 = vmatmul.bf16.gmra.mxu0 %v6328
      %v6413 = vpop.f32.mrf.mxu0
      %v6414 = vadd.f32 0.0, %v6413
      %v6415 = vpop.f32.mrf.mxu0
      %v6416 = vadd.f32 0.0, %v6415
      %6417 = vmatmul.bf16.gmra.mxu0 %v6331
      %v6418 = vpop.f32.mrf.mxu0
      %v6419 = vadd.f32 0.0, %v6418
      %v6420 = vpop.f32.mrf.mxu0
      %v6421 = vadd.f32 0.0, %v6420
      %6422 = vmatmul.bf16.gmra.mxu0 %v6334
      %v6423 = vpop.f32.mrf.mxu0
      %v6424 = vadd.f32 0.0, %v6423
      %v6425 = vpop.f32.mrf.mxu0
      %v6426 = vadd.f32 0.0, %v6425
      %6427 = vdwg.mxu0
      %v6428 = vadd.f32 %v6174, %v6349
      %v6429 = vadd.f32 %v6175, %v6351
      %v6430 = vadd.f32 %v6176, %v6354
      %v6431 = vadd.f32 %v6177, %v6356
      %v6432 = vadd.f32 %v6178, %v6359
      %v6433 = vadd.f32 %v6179, %v6361
      %v6434 = vadd.f32 %v6180, %v6364
      %v6435 = vadd.f32 %v6181, %v6366
      %v6436 = vadd.f32 %v6182, %v6369
      %v6437 = vadd.f32 %v6183, %v6371
      %v6438 = vadd.f32 %v6184, %v6374
      %v6439 = vadd.f32 %v6185, %v6376
      %v6440 = vadd.f32 %v6186, %v6379
      %v6441 = vadd.f32 %v6187, %v6381
      %v6442 = vadd.f32 %v6188, %v6384
      %v6443 = vadd.f32 %v6189, %v6386
      %v6444 = vadd.f32 %v6190, %v6389
      %v6445 = vadd.f32 %v6191, %v6391
      %v6446 = vadd.f32 %v6192, %v6394
      %v6447 = vadd.f32 %v6193, %v6396
      %v6448 = vadd.f32 %v6194, %v6399
      %v6449 = vadd.f32 %v6195, %v6401
      %v6450 = vadd.f32 %v6196, %v6404
      %v6451 = vadd.f32 %v6197, %v6406
      %v6452 = vadd.f32 %v6198, %v6409
      %v6453 = vadd.f32 %v6199, %v6411
      %v6454 = vadd.f32 %v6200, %v6414
      %v6455 = vadd.f32 %v6201, %v6416
      %v6456 = vadd.f32 %v6202, %v6419
      %v6457 = vadd.f32 %v6203, %v6421
      %v6458 = vadd.f32 %v6204, %v6424
      %v6459 = vadd.f32 %v6205, %v6426
      %v6460 = vld [vmem:[#allocation2 + $0x14] sm:$0xf]
      %v6461 = vld [vmem:[#allocation2 + $0x18] sm:$0xf]
      %v6462 = vld [vmem:[#allocation2 + $0x1c] sm:$0xf]
      %v6463 = vld [vmem:[#allocation2 + $0x20] sm:$0xf]
      %v6464 = vld [vmem:[#allocation2 + $0x24] sm:$0xf]
      %v6465 = vld [vmem:[#allocation2 + $0x28] sm:$0xf]
      %v6466 = vld [vmem:[#allocation2 + $0x2c] sm:$0xf]
      %v6467 = vld [vmem:[#allocation2 + $0x30] sm:$0xf]
      %v6468 = vld [vmem:[#allocation2 + $0x34] sm:$0xf]
      %v6469 = vld [vmem:[#allocation2 + $0x38] sm:$0xf]
      %v6470 = vld [vmem:[#allocation2 + $0x3c] sm:$0xf]
      %v6471 = vld [vmem:[#allocation2 + $0x40] sm:$0xf]
      %v6472 = vld [vmem:[#allocation2 + $0x44] sm:$0xf]
      %v6473 = vld [vmem:[#allocation2 + $0x48] sm:$0xf]
      %v6474 = vld [vmem:[#allocation2 + $0x4c] sm:$0xf]
      %v6475 = vld [vmem:[#allocation2 + $0x50] sm:$0xf]
      %v6476 = vld [vmem:[#allocation2 + $0x54] sm:$0xf]
      %v6477 = vld [vmem:[#allocation2 + $0x58] sm:$0xf]
      %v6478 = vld [vmem:[#allocation2 + $0x5c] sm:$0xf]
      %v6479 = vld [vmem:[#allocation2 + $0x60] sm:$0xf]
      %v6480 = vld [vmem:[#allocation2 + $0x64] sm:$0xf]
      %v6481 = vld [vmem:[#allocation2 + $0x68] sm:$0xf]
      %v6482 = vld [vmem:[#allocation2 + $0x6c] sm:$0xf]
      %v6483 = vld [vmem:[#allocation2 + $0x70] sm:$0xf]
      %v6484 = vld [vmem:[#allocation2 + $0x74] sm:$0xf]
      %v6485 = vld [vmem:[#allocation2 + $0x78] sm:$0xf]
      %v6486 = vld [vmem:[#allocation2 + $0x7c] sm:$0xf]
      %v6487 = vld [vmem:[#allocation2 + $0x80] sm:$0xf]
      %v6488 = vld [vmem:[#allocation2 + $0x84] sm:$0xf]
      %v6489 = vld [vmem:[#allocation2 + $0x88] sm:$0xf]
      %v6490 = vld [vmem:[#allocation2 + $0x8c] sm:$0xf]
      %v6491 = vld [vmem:[#allocation2 + $0x90] sm:$0xf]
      %v6492 = vld [vmem:[#allocation2 + $0x94] sm:$0x1]
      %v6493 = vsel %vm4153, %v6460, 0
      %v6494 = vsel %vm4160, %v6461, 0
      %v6495 = vsel %vm4167, %v6462, 0
      %v6496 = vsel %vm4174, %v6463, 0
      %v6497 = vsel %vm4181, %v6464, 0
      %v6498 = vsel %vm4188, %v6465, 0
      %v6499 = vsel %vm4195, %v6466, 0
      %v6500 = vsel %vm4202, %v6467, 0
      %v6501 = vsel %vm4209, %v6468, 0
      %v6502 = vsel %vm4216, %v6469, 0
      %v6503 = vsel %vm4223, %v6470, 0
      %v6504 = vsel %vm4230, %v6471, 0
      %v6505 = vsel %vm4237, %v6472, 0
      %v6506 = vsel %vm4244, %v6473, 0
      %v6507 = vsel %vm4251, %v6474, 0
      %v6508 = vsel %vm4258, %v6475, 0
      %v6509 = vsel %vm4265, %v6476, 0
      %v6510 = vsel %vm4272, %v6477, 0
      %v6511 = vsel %vm4279, %v6478, 0
      %v6512 = vsel %vm4286, %v6479, 0
      %v6513 = vsel %vm4293, %v6480, 0
      %v6514 = vsel %vm4300, %v6481, 0
      %v6515 = vsel %vm4307, %v6482, 0
      %v6516 = vsel %vm4314, %v6483, 0
      %v6517 = vsel %vm4321, %v6484, 0
      %v6518 = vsel %vm4328, %v6485, 0
      %v6519 = vsel %vm4335, %v6486, 0
      %v6520 = vsel %vm4342, %v6487, 0
      %v6521 = vsel %vm4349, %v6488, 0
      %v6522 = vsel %vm4356, %v6489, 0
      %v6523 = vsel %vm4363, %v6490, 0
      %v6524 = vsel %vm4370, %v6491, 0
      %v6525 = vsel %vm4377, %v6492, 0
      %s6526 = scalar_lea.vmem %s6, 16
      %v6527 = vld [vmem:[%s6526] sm:$0x3]
      %v6561 = vunpack.c.l.b16 %v6493
      %v6562 = vunpack.c.l.b16 %v6494
      %v6563 = vunpack.c.l.b16 %v6495
      %v6564 = vunpack.c.l.b16 %v6496
      %v6565 = vunpack.c.l.b16 %v6497
      %v6566 = vunpack.c.l.b16 %v6498
      %v6567 = vunpack.c.l.b16 %v6499
      %v6568 = vunpack.c.l.b16 %v6500
      %v6569 = vunpack.c.l.b16 %v6501
      %v6570 = vunpack.c.l.b16 %v6502
      %v6571 = vunpack.c.l.b16 %v6503
      %v6572 = vunpack.c.l.b16 %v6504
      %v6573 = vunpack.c.l.b16 %v6505
      %v6574 = vunpack.c.l.b16 %v6506
      %v6575 = vunpack.c.l.b16 %v6507
      %v6576 = vunpack.c.l.b16 %v6508
      %v6577 = vunpack.c.l.b16 %v6509
      %v6578 = vunpack.c.l.b16 %v6510
      %v6579 = vunpack.c.l.b16 %v6511
      %v6580 = vunpack.c.l.b16 %v6512
      %v6581 = vunpack.c.l.b16 %v6513
      %v6582 = vunpack.c.l.b16 %v6514
      %v6583 = vunpack.c.l.b16 %v6515
      %v6584 = vunpack.c.l.b16 %v6516
      %v6585 = vunpack.c.l.b16 %v6517
      %v6586 = vunpack.c.l.b16 %v6518
      %v6587 = vunpack.c.l.b16 %v6519
      %v6588 = vunpack.c.l.b16 %v6520
      %v6589 = vunpack.c.l.b16 %v6521
      %v6590 = vunpack.c.l.b16 %v6522
      %v6591 = vunpack.c.l.b16 %v6523
      %v6592 = vunpack.c.l.b16 %v6524
      %v6593 = vunpack.c.l.b16 %v6525
      %v6594 = vpack.c.b16 %v6562, %v6561
      %v6595 = vpack.c.b16 %v6564, %v6563
      %v6596 = vpack.c.b16 %v6566, %v6565
      %v6597 = vpack.c.b16 %v6568, %v6567
      %v6598 = vpack.c.b16 %v6570, %v6569
      %v6599 = vpack.c.b16 %v6572, %v6571
      %v6600 = vpack.c.b16 %v6574, %v6573
      %v6601 = vpack.c.b16 %v6576, %v6575
      %v6602 = vpack.c.b16 %v6578, %v6577
      %v6603 = vpack.c.b16 %v6580, %v6579
      %v6604 = vpack.c.b16 %v6582, %v6581
      %v6605 = vpack.c.b16 %v6584, %v6583
      %v6606 = vpack.c.b16 %v6586, %v6585
      %v6607 = vpack.c.b16 %v6588, %v6587
      %v6608 = vpack.c.b16 %v6590, %v6589
      %v6609 = vpack.c.b16 %v6592, %v6591
      %v6610 = vpack.c.b16 %v6593, %v6593
      %v6612 = vshrl.u32 %v6594, 16
      %v6614 = vshll.u32 %v6594, 16
      %v6616 = vrot.slane %v6614, 1
      %v6617 = vor.u32 %v6612, %v6616
      %v6619 = vshll.u32 %v6595, 16
      %v6621 = vrot.slane %v6619, 1
      %v6622 = vsel %vm4496, %v6617, %v6621
      %v6623 = vshrl.u32 %v6595, 16
      %v6625 = vor.u32 %v6623, %v6621
      %v6627 = vshll.u32 %v6596, 16
      %v6629 = vrot.slane %v6627, 1
      %v6630 = vsel %vm4496, %v6625, %v6629
      %v6631 = vshrl.u32 %v6596, 16
      %v6633 = vor.u32 %v6631, %v6629
      %v6635 = vshll.u32 %v6597, 16
      %v6637 = vrot.slane %v6635, 1
      %v6638 = vsel %vm4496, %v6633, %v6637
      %v6639 = vshrl.u32 %v6597, 16
      %v6641 = vor.u32 %v6639, %v6637
      %v6643 = vshll.u32 %v6598, 16
      %v6645 = vrot.slane %v6643, 1
      %v6646 = vsel %vm4496, %v6641, %v6645
      %v6647 = vshrl.u32 %v6598, 16
      %v6649 = vor.u32 %v6647, %v6645
      %v6651 = vshll.u32 %v6599, 16
      %v6653 = vrot.slane %v6651, 1
      %v6654 = vsel %vm4496, %v6649, %v6653
      %v6655 = vshrl.u32 %v6599, 16
      %v6657 = vor.u32 %v6655, %v6653
      %v6659 = vshll.u32 %v6600, 16
      %v6661 = vrot.slane %v6659, 1
      %v6662 = vsel %vm4496, %v6657, %v6661
      %v6663 = vshrl.u32 %v6600, 16
      %v6665 = vor.u32 %v6663, %v6661
      %v6667 = vshll.u32 %v6601, 16
      %v6669 = vrot.slane %v6667, 1
      %v6670 = vsel %vm4496, %v6665, %v6669
      %v6671 = vshrl.u32 %v6601, 16
      %v6673 = vor.u32 %v6671, %v6669
      %v6675 = vshll.u32 %v6602, 16
      %v6677 = vrot.slane %v6675, 1
      %v6678 = vsel %vm4496, %v6673, %v6677
      %v6679 = vshrl.u32 %v6602, 16
      %v6681 = vor.u32 %v6679, %v6677
      %v6683 = vshll.u32 %v6603, 16
      %v6685 = vrot.slane %v6683, 1
      %v6686 = vsel %vm4496, %v6681, %v6685
      %v6687 = vshrl.u32 %v6603, 16
      %v6689 = vor.u32 %v6687, %v6685
      %v6691 = vshll.u32 %v6604, 16
      %v6693 = vrot.slane %v6691, 1
      %v6694 = vsel %vm4496, %v6689, %v6693
      %v6695 = vshrl.u32 %v6604, 16
      %v6697 = vor.u32 %v6695, %v6693
      %v6699 = vshll.u32 %v6605, 16
      %v6701 = vrot.slane %v6699, 1
      %v6702 = vsel %vm4496, %v6697, %v6701
      %v6703 = vshrl.u32 %v6605, 16
      %v6705 = vor.u32 %v6703, %v6701
      %v6707 = vshll.u32 %v6606, 16
      %v6709 = vrot.slane %v6707, 1
      %v6710 = vsel %vm4496, %v6705, %v6709
      %v6711 = vshrl.u32 %v6606, 16
      %v6713 = vor.u32 %v6711, %v6709
      %v6715 = vshll.u32 %v6607, 16
      %v6717 = vrot.slane %v6715, 1
      %v6718 = vsel %vm4496, %v6713, %v6717
      %v6719 = vshrl.u32 %v6607, 16
      %v6721 = vor.u32 %v6719, %v6717
      %v6723 = vshll.u32 %v6608, 16
      %v6725 = vrot.slane %v6723, 1
      %v6726 = vsel %vm4496, %v6721, %v6725
      %v6727 = vshrl.u32 %v6608, 16
      %v6729 = vor.u32 %v6727, %v6725
      %v6731 = vshll.u32 %v6609, 16
      %v6733 = vrot.slane %v6731, 1
      %v6734 = vsel %vm4496, %v6729, %v6733
      %v6735 = vshrl.u32 %v6609, 16
      %v6737 = vor.u32 %v6735, %v6733
      %v6739 = vshll.u32 %v6610, 16
      %v6741 = vrot.slane %v6739, 1
      %v6742 = vsel %vm4496, %v6737, %v6741
      %v6744 = vsel %vm1002, %v6622, 0
      %v6747 = vsel %vm1002, %v6630, 0
      %v6750 = vsel %vm1002, %v6638, 0
      %v6753 = vsel %vm1002, %v6646, 0
      %v6756 = vsel %vm1002, %v6654, 0
      %v6759 = vsel %vm1002, %v6662, 0
      %v6762 = vsel %vm1002, %v6670, 0
      %v6765 = vsel %vm1002, %v6678, 0
      %v6768 = vsel %vm1002, %v6686, 0
      %v6771 = vsel %vm1002, %v6694, 0
      %v6774 = vsel %vm1002, %v6702, 0
      %v6777 = vsel %vm1002, %v6710, 0
      %v6780 = vsel %vm1002, %v6718, 0
      %v6783 = vsel %vm1002, %v6726, 0
      %v6786 = vsel %vm1002, %v6734, 0
      %v6789 = vsel %vm1002, %v6742, 0
      %v6792 = vsel %vm3129, %v6527, 0
      %6794 = vmatpush.bf16.msra.mxu0 0
      %6795 = vmatpush.bf16.msra.mxu0 0
      %6796 = vmatpush.bf16.msra.mxu0 0
      %6797 = vmatpush.bf16.msra.mxu0 0
      %6798 = vmatpush.bf16.msra.mxu0 0
      %6799 = vmatpush.bf16.msra.mxu0 0
      %6800 = vmatpush.bf16.msra.mxu0 0
      %6801 = vmatpush.bf16.msra.mxu0 %v6792
      %6802 = vmatmul.bf16.gmra.mxu0 %v6744
      %v6803 = vpop.f32.mrf.mxu0
      %v6804 = vadd.f32 0.0, %v6803
      %v6805 = vpop.f32.mrf.mxu0
      %v6806 = vadd.f32 0.0, %v6805
      %6807 = vmatmul.bf16.gmra.mxu0 %v6747
      %v6808 = vpop.f32.mrf.mxu0
      %v6809 = vadd.f32 0.0, %v6808
      %v6810 = vpop.f32.mrf.mxu0
      %v6811 = vadd.f32 0.0, %v6810
      %6812 = vmatmul.bf16.gmra.mxu0 %v6750
      %v6813 = vpop.f32.mrf.mxu0
      %v6814 = vadd.f32 0.0, %v6813
      %v6815 = vpop.f32.mrf.mxu0
      %v6816 = vadd.f32 0.0, %v6815
      %6817 = vmatmul.bf16.gmra.mxu0 %v6753
      %v6818 = vpop.f32.mrf.mxu0
      %v6819 = vadd.f32 0.0, %v6818
      %v6820 = vpop.f32.mrf.mxu0
      %v6821 = vadd.f32 0.0, %v6820
      %6822 = vmatmul.bf16.gmra.mxu0 %v6756
      %v6823 = vpop.f32.mrf.mxu0
      %v6824 = vadd.f32 0.0, %v6823
      %v6825 = vpop.f32.mrf.mxu0
      %v6826 = vadd.f32 0.0, %v6825
      %6827 = vmatmul.bf16.gmra.mxu0 %v6759
      %v6828 = vpop.f32.mrf.mxu0
      %v6829 = vadd.f32 0.0, %v6828
      %v6830 = vpop.f32.mrf.mxu0
      %v6831 = vadd.f32 0.0, %v6830
      %6832 = vmatmul.bf16.gmra.mxu0 %v6762
      %v6833 = vpop.f32.mrf.mxu0
      %v6834 = vadd.f32 0.0, %v6833
      %v6835 = vpop.f32.mrf.mxu0
      %v6836 = vadd.f32 0.0, %v6835
      %6837 = vmatmul.bf16.gmra.mxu0 %v6765
      %v6838 = vpop.f32.mrf.mxu0
      %v6839 = vadd.f32 0.0, %v6838
      %v6840 = vpop.f32.mrf.mxu0
      %v6841 = vadd.f32 0.0, %v6840
      %6842 = vmatmul.bf16.gmra.mxu0 %v6768
      %v6843 = vpop.f32.mrf.mxu0
      %v6844 = vadd.f32 0.0, %v6843
      %v6845 = vpop.f32.mrf.mxu0
      %v6846 = vadd.f32 0.0, %v6845
      %6847 = vmatmul.bf16.gmra.mxu0 %v6771
      %v6848 = vpop.f32.mrf.mxu0
      %v6849 = vadd.f32 0.0, %v6848
      %v6850 = vpop.f32.mrf.mxu0
      %v6851 = vadd.f32 0.0, %v6850
      %6852 = vmatmul.bf16.gmra.mxu0 %v6774
      %v6853 = vpop.f32.mrf.mxu0
      %v6854 = vadd.f32 0.0, %v6853
      %v6855 = vpop.f32.mrf.mxu0
      %v6856 = vadd.f32 0.0, %v6855
      %6857 = vmatmul.bf16.gmra.mxu0 %v6777
      %v6858 = vpop.f32.mrf.mxu0
      %v6859 = vadd.f32 0.0, %v6858
      %v6860 = vpop.f32.mrf.mxu0
      %v6861 = vadd.f32 0.0, %v6860
      %6862 = vmatmul.bf16.gmra.mxu0 %v6780
      %v6863 = vpop.f32.mrf.mxu0
      %v6864 = vadd.f32 0.0, %v6863
      %v6865 = vpop.f32.mrf.mxu0
      %v6866 = vadd.f32 0.0, %v6865
      %6867 = vmatmul.bf16.gmra.mxu0 %v6783
      %v6868 = vpop.f32.mrf.mxu0
      %v6869 = vadd.f32 0.0, %v6868
      %v6870 = vpop.f32.mrf.mxu0
      %v6871 = vadd.f32 0.0, %v6870
      %6872 = vmatmul.bf16.gmra.mxu0 %v6786
      %v6873 = vpop.f32.mrf.mxu0
      %v6874 = vadd.f32 0.0, %v6873
      %v6875 = vpop.f32.mrf.mxu0
      %v6876 = vadd.f32 0.0, %v6875
      %6877 = vmatmul.bf16.gmra.mxu0 %v6789
      %v6878 = vpop.f32.mrf.mxu0
      %v6879 = vadd.f32 0.0, %v6878
      %v6880 = vpop.f32.mrf.mxu0
      %v6881 = vadd.f32 0.0, %v6880
      %6882 = vdwg.mxu0
      %v6883 = vadd.f32 %v6428, %v6804
      %v6884 = vadd.f32 %v6429, %v6806
      %v6885 = vadd.f32 %v6430, %v6809
      %v6886 = vadd.f32 %v6431, %v6811
      %v6887 = vadd.f32 %v6432, %v6814
      %v6888 = vadd.f32 %v6433, %v6816
      %v6889 = vadd.f32 %v6434, %v6819
      %v6890 = vadd.f32 %v6435, %v6821
      %v6891 = vadd.f32 %v6436, %v6824
      %v6892 = vadd.f32 %v6437, %v6826
      %v6893 = vadd.f32 %v6438, %v6829
      %v6894 = vadd.f32 %v6439, %v6831
      %v6895 = vadd.f32 %v6440, %v6834
      %v6896 = vadd.f32 %v6441, %v6836
      %v6897 = vadd.f32 %v6442, %v6839
      %v6898 = vadd.f32 %v6443, %v6841
      %v6899 = vadd.f32 %v6444, %v6844
      %v6900 = vadd.f32 %v6445, %v6846
      %v6901 = vadd.f32 %v6446, %v6849
      %v6902 = vadd.f32 %v6447, %v6851
      %v6903 = vadd.f32 %v6448, %v6854
      %v6904 = vadd.f32 %v6449, %v6856
      %v6905 = vadd.f32 %v6450, %v6859
      %v6906 = vadd.f32 %v6451, %v6861
      %v6907 = vadd.f32 %v6452, %v6864
      %v6908 = vadd.f32 %v6453, %v6866
      %v6909 = vadd.f32 %v6454, %v6869
      %v6910 = vadd.f32 %v6455, %v6871
      %v6911 = vadd.f32 %v6456, %v6874
      %v6912 = vadd.f32 %v6457, %v6876
      %v6913 = vadd.f32 %v6458, %v6879
      %v6914 = vadd.f32 %v6459, %v6881
      %v6915 = vld [vmem:[%s476] sm:$0x1]
      %v6917 = vperm.slane %v6915, 0
      %v6919 = vadd.f32 %v6883, %v6917
      %v6920 = vadd.f32 %v6884, %v6917
      %v6921 = vadd.f32 %v6885, %v6917
      %v6922 = vadd.f32 %v6886, %v6917
      %v6923 = vadd.f32 %v6887, %v6917
      %v6924 = vadd.f32 %v6888, %v6917
      %v6925 = vadd.f32 %v6889, %v6917
      %v6926 = vadd.f32 %v6890, %v6917
      %v6927 = vadd.f32 %v6891, %v6917
      %v6928 = vadd.f32 %v6892, %v6917
      %v6929 = vadd.f32 %v6893, %v6917
      %v6930 = vadd.f32 %v6894, %v6917
      %v6931 = vadd.f32 %v6895, %v6917
      %v6932 = vadd.f32 %v6896, %v6917
      %v6933 = vadd.f32 %v6897, %v6917
      %v6934 = vadd.f32 %v6898, %v6917
      %v6935 = vadd.f32 %v6899, %v6917
      %v6936 = vadd.f32 %v6900, %v6917
      %v6937 = vadd.f32 %v6901, %v6917
      %v6938 = vadd.f32 %v6902, %v6917
      %v6939 = vadd.f32 %v6903, %v6917
      %v6940 = vadd.f32 %v6904, %v6917
      %v6941 = vadd.f32 %v6905, %v6917
      %v6942 = vadd.f32 %v6906, %v6917
      %v6943 = vadd.f32 %v6907, %v6917
      %v6944 = vadd.f32 %v6908, %v6917
      %v6945 = vadd.f32 %v6909, %v6917
      %v6946 = vadd.f32 %v6910, %v6917
      %v6947 = vadd.f32 %v6911, %v6917
      %v6948 = vadd.f32 %v6912, %v6917
      %v6949 = vadd.f32 %v6913, %v6917
      %v6950 = vadd.f32 %v6914, %v6917
      %v6951 = vld [vmem:[%s9] sm:$0xff]
      %v6952 = vld [vmem:[%s10] sm:$0xff]
      %v6953 = vld [vmem:[%s7] sm:$0x1]
      %v6954 = vld [vmem:[%s8] sm:$0x1]
      %vm6955 = vcmask 64512
      %v6956 = vsel %vm6955, %v6919, 0.0
      %v6957 = vsel %vm6955, %v6920, 0.0
      %v6958 = vadd.f32 %v6956, %v6957
      %v6959 = vsel %vm6955, %v6921, 0.0
      %v6960 = vadd.f32 %v6958, %v6959
      %v6961 = vsel %vm6955, %v6922, 0.0
      %v6962 = vadd.f32 %v6960, %v6961
      %v6963 = vsel %vm6955, %v6923, 0.0
      %v6964 = vadd.f32 %v6962, %v6963
      %v6965 = vsel %vm6955, %v6924, 0.0
      %v6966 = vadd.f32 %v6964, %v6965
      %v6967 = vsel %vm6955, %v6925, 0.0
      %v6968 = vadd.f32 %v6966, %v6967
      %v6969 = vsel %vm6955, %v6926, 0.0
      %v6970 = vadd.f32 %v6968, %v6969
      %v6971 = vsel %vm6955, %v6927, 0.0
      %v6972 = vadd.f32 %v6970, %v6971
      %v6973 = vsel %vm6955, %v6928, 0.0
      %v6974 = vadd.f32 %v6972, %v6973
      %v6975 = vsel %vm6955, %v6929, 0.0
      %v6976 = vadd.f32 %v6974, %v6975
      %v6977 = vsel %vm6955, %v6930, 0.0
      %v6978 = vadd.f32 %v6976, %v6977
      %v6979 = vsel %vm6955, %v6931, 0.0
      %v6980 = vadd.f32 %v6978, %v6979
      %v6981 = vsel %vm6955, %v6932, 0.0
      %v6982 = vadd.f32 %v6980, %v6981
      %v6983 = vsel %vm6955, %v6933, 0.0
      %v6984 = vadd.f32 %v6982, %v6983
      %v6985 = vsel %vm6955, %v6934, 0.0
      %v6986 = vadd.f32 %v6984, %v6985
      %v6987 = vsel %vm6955, %v6935, 0.0
      %v6988 = vadd.f32 %v6986, %v6987
      %v6989 = vsel %vm6955, %v6936, 0.0
      %v6990 = vadd.f32 %v6988, %v6989
      %v6991 = vsel %vm6955, %v6937, 0.0
      %v6992 = vadd.f32 %v6990, %v6991
      %v6993 = vsel %vm6955, %v6938, 0.0
      %v6994 = vadd.f32 %v6992, %v6993
      %v6995 = vsel %vm6955, %v6939, 0.0
      %v6996 = vadd.f32 %v6994, %v6995
      %v6997 = vsel %vm6955, %v6940, 0.0
      %v6998 = vadd.f32 %v6996, %v6997
      %v6999 = vsel %vm6955, %v6941, 0.0
      %v7000 = vadd.f32 %v6998, %v6999
      %v7001 = vsel %vm6955, %v6942, 0.0
      %v7002 = vadd.f32 %v7000, %v7001
      %v7003 = vsel %vm6955, %v6943, 0.0
      %v7004 = vadd.f32 %v7002, %v7003
      %v7005 = vsel %vm6955, %v6944, 0.0
      %v7006 = vadd.f32 %v7004, %v7005
      %v7007 = vsel %vm6955, %v6945, 0.0
      %v7008 = vadd.f32 %v7006, %v7007
      %v7009 = vsel %vm6955, %v6946, 0.0
      %v7010 = vadd.f32 %v7008, %v7009
      %v7011 = vsel %vm6955, %v6947, 0.0
      %v7012 = vadd.f32 %v7010, %v7011
      %v7013 = vsel %vm6955, %v6948, 0.0
      %v7014 = vadd.f32 %v7012, %v7013
      %v7015 = vsel %vm6955, %v6949, 0.0
      %v7016 = vadd.f32 %v7014, %v7015
      %v7017 = vsel %vm6955, %v6950, 0.0
      %v7018 = vadd.f32 %v7016, %v7017
      %v7019 = vrot.slane %v7018, 4
      %v7020 = vadd.f32 %v7018, %v7019
      %v7021 = vrot.slane %v7020, 2
      %v7022 = vadd.f32 %v7020, %v7021
      %v7023 = vrot.slane %v7022, 1
      %v7024 = vadd.f32 %v7022, %v7023
      %v7026 = vsel %vm6955, %v7024, 0
      %7028 = vmatpush.msra.mxu0 0.0
      %7029 = vmatpush.msra.mxu0 0.0
      %7030 = vmatpush.msra.mxu0 0.0
      %7031 = vmatpush.msra.mxu0 0.0
      %7032 = vmatpush.msra.mxu0 0.0
      %7033 = vmatpush.msra.mxu0 0.0
      %7034 = vmatpush.msra.mxu0 0.0
      %7035 = vmatpush.msra.mxu0 0.0
      %7036 = vmatpush.msra.mxu0 0.0
      %7037 = vmatpush.msra.mxu0 0.0
      %7038 = vmatpush.msra.mxu0 0.0
      %7039 = vmatpush.msra.mxu0 0.0
      %7040 = vmatpush.msra.mxu0 0.0
      %7041 = vmatpush.msra.mxu0 0.0
      %7042 = vmatpush.msra.mxu0 0.0
      %7043 = vmatpush.msra.mxu0 %v6951
      %7044 = vmatmul.f32.gmra.mxu0 %v7026
      %v7045 = vpop.f32.mrf.mxu0
      %v7046 = vadd.f32 0.0, %v7045
      %7047 = vdwg.mxu0
      %v7048 = vmul.f32 %v7046, 0.00390625
      %v7050 = vsel %vm6955, %v7048, 0
      %7052 = vmatpush.msra.mxu0 0.0
      %7053 = vmatpush.msra.mxu0 0.0
      %7054 = vmatpush.msra.mxu0 0.0
      %7055 = vmatpush.msra.mxu0 0.0
      %7056 = vmatpush.msra.mxu0 0.0
      %7057 = vmatpush.msra.mxu0 0.0
      %7058 = vmatpush.msra.mxu0 0.0
      %7059 = vmatpush.msra.mxu0 0.0
      %7060 = vmatpush.msra.mxu0 0.0
      %7061 = vmatpush.msra.mxu0 0.0
      %7062 = vmatpush.msra.mxu0 0.0
      %7063 = vmatpush.msra.mxu0 0.0
      %7064 = vmatpush.msra.mxu0 0.0
      %7065 = vmatpush.msra.mxu0 0.0
      %7066 = vmatpush.msra.mxu0 0.0
      %7067 = vmatpush.msra.mxu0 %v6952
      %7068 = vmatmul.f32.gmra.mxu0 %v7050
      %v7069 = vpop.f32.mrf.mxu0
      %v7070 = vadd.f32 0.0, %v7069
      %7071 = vdwg.mxu0
      %v7072 = vperm.slane %v7070, 0
      %v7073 = vsub.f32 %v6919, %v7072
      %v7074 = vsub.f32 %v6920, %v7072
      %v7075 = vsub.f32 %v6921, %v7072
      %v7076 = vsub.f32 %v6922, %v7072
      %v7077 = vsub.f32 %v6923, %v7072
      %v7078 = vsub.f32 %v6924, %v7072
      %v7079 = vsub.f32 %v6925, %v7072
      %v7080 = vsub.f32 %v6926, %v7072
      %v7081 = vsub.f32 %v6927, %v7072
      %v7082 = vsub.f32 %v6928, %v7072
      %v7083 = vsub.f32 %v6929, %v7072
      %v7084 = vsub.f32 %v6930, %v7072
      %v7085 = vsub.f32 %v6931, %v7072
      %v7086 = vsub.f32 %v6932, %v7072
      %v7087 = vsub.f32 %v6933, %v7072
      %v7088 = vsub.f32 %v6934, %v7072
      %v7089 = vsub.f32 %v6935, %v7072
      %v7090 = vsub.f32 %v6936, %v7072
      %v7091 = vsub.f32 %v6937, %v7072
      %v7092 = vsub.f32 %v6938, %v7072
      %v7093 = vsub.f32 %v6939, %v7072
      %v7094 = vsub.f32 %v6940, %v7072
      %v7095 = vsub.f32 %v6941, %v7072
      %v7096 = vsub.f32 %v6942, %v7072
      %v7097 = vsub.f32 %v6943, %v7072
      %v7098 = vsub.f32 %v6944, %v7072
      %v7099 = vsub.f32 %v6945, %v7072
      %v7100 = vsub.f32 %v6946, %v7072
      %v7101 = vsub.f32 %v6947, %v7072
      %v7102 = vsub.f32 %v6948, %v7072
      %v7103 = vsub.f32 %v6949, %v7072
      %v7104 = vsub.f32 %v6950, %v7072
      %v7105 = vmul.f32 %v7073, %v7073
      %v7106 = vmul.f32 %v7074, %v7074
      %v7107 = vmul.f32 %v7075, %v7075
      %v7108 = vmul.f32 %v7076, %v7076
      %v7109 = vmul.f32 %v7077, %v7077
      %v7110 = vmul.f32 %v7078, %v7078
      %v7111 = vmul.f32 %v7079, %v7079
      %v7112 = vmul.f32 %v7080, %v7080
      %v7113 = vmul.f32 %v7081, %v7081
      %v7114 = vmul.f32 %v7082, %v7082
      %v7115 = vmul.f32 %v7083, %v7083
      %v7116 = vmul.f32 %v7084, %v7084
      %v7117 = vmul.f32 %v7085, %v7085
      %v7118 = vmul.f32 %v7086, %v7086
      %v7119 = vmul.f32 %v7087, %v7087
      %v7120 = vmul.f32 %v7088, %v7088
      %v7121 = vmul.f32 %v7089, %v7089
      %v7122 = vmul.f32 %v7090, %v7090
      %v7123 = vmul.f32 %v7091, %v7091
      %v7124 = vmul.f32 %v7092, %v7092
      %v7125 = vmul.f32 %v7093, %v7093
      %v7126 = vmul.f32 %v7094, %v7094
      %v7127 = vmul.f32 %v7095, %v7095
      %v7128 = vmul.f32 %v7096, %v7096
      %v7129 = vmul.f32 %v7097, %v7097
      %v7130 = vmul.f32 %v7098, %v7098
      %v7131 = vmul.f32 %v7099, %v7099
      %v7132 = vmul.f32 %v7100, %v7100
      %v7133 = vmul.f32 %v7101, %v7101
      %v7134 = vmul.f32 %v7102, %v7102
      %v7135 = vmul.f32 %v7103, %v7103
      %v7136 = vmul.f32 %v7104, %v7104
      %v7137 = vsel %vm6955, %v7105, 0.0
      %v7138 = vsel %vm6955, %v7106, 0.0
      %v7139 = vadd.f32 %v7137, %v7138
      %v7140 = vsel %vm6955, %v7107, 0.0
      %v7141 = vadd.f32 %v7139, %v7140
      %v7142 = vsel %vm6955, %v7108, 0.0
      %v7143 = vadd.f32 %v7141, %v7142
      %v7144 = vsel %vm6955, %v7109, 0.0
      %v7145 = vadd.f32 %v7143, %v7144
      %v7146 = vsel %vm6955, %v7110, 0.0
      %v7147 = vadd.f32 %v7145, %v7146
      %v7148 = vsel %vm6955, %v7111, 0.0
      %v7149 = vadd.f32 %v7147, %v7148
      %v7150 = vsel %vm6955, %v7112, 0.0
      %v7151 = vadd.f32 %v7149, %v7150
      %v7152 = vsel %vm6955, %v7113, 0.0
      %v7153 = vadd.f32 %v7151, %v7152
      %v7154 = vsel %vm6955, %v7114, 0.0
      %v7155 = vadd.f32 %v7153, %v7154
      %v7156 = vsel %vm6955, %v7115, 0.0
      %v7157 = vadd.f32 %v7155, %v7156
      %v7158 = vsel %vm6955, %v7116, 0.0
      %v7159 = vadd.f32 %v7157, %v7158
      %v7160 = vsel %vm6955, %v7117, 0.0
      %v7161 = vadd.f32 %v7159, %v7160
      %v7162 = vsel %vm6955, %v7118, 0.0
      %v7163 = vadd.f32 %v7161, %v7162
      %v7164 = vsel %vm6955, %v7119, 0.0
      %v7165 = vadd.f32 %v7163, %v7164
      %v7166 = vsel %vm6955, %v7120, 0.0
      %v7167 = vadd.f32 %v7165, %v7166
      %v7168 = vsel %vm6955, %v7121, 0.0
      %v7169 = vadd.f32 %v7167, %v7168
      %v7170 = vsel %vm6955, %v7122, 0.0
      %v7171 = vadd.f32 %v7169, %v7170
      %v7172 = vsel %vm6955, %v7123, 0.0
      %v7173 = vadd.f32 %v7171, %v7172
      %v7174 = vsel %vm6955, %v7124, 0.0
      %v7175 = vadd.f32 %v7173, %v7174
      %v7176 = vsel %vm6955, %v7125, 0.0
      %v7177 = vadd.f32 %v7175, %v7176
      %v7178 = vsel %vm6955, %v7126, 0.0
      %v7179 = vadd.f32 %v7177, %v7178
      %v7180 = vsel %vm6955, %v7127, 0.0
      %v7181 = vadd.f32 %v7179, %v7180
      %v7182 = vsel %vm6955, %v7128, 0.0
      %v7183 = vadd.f32 %v7181, %v7182
      %v7184 = vsel %vm6955, %v7129, 0.0
      %v7185 = vadd.f32 %v7183, %v7184
      %v7186 = vsel %vm6955, %v7130, 0.0
      %v7187 = vadd.f32 %v7185, %v7186
      %v7188 = vsel %vm6955, %v7131, 0.0
      %v7189 = vadd.f32 %v7187, %v7188
      %v7190 = vsel %vm6955, %v7132, 0.0
      %v7191 = vadd.f32 %v7189, %v7190
      %v7192 = vsel %vm6955, %v7133, 0.0
      %v7193 = vadd.f32 %v7191, %v7192
      %v7194 = vsel %vm6955, %v7134, 0.0
      %v7195 = vadd.f32 %v7193, %v7194
      %v7196 = vsel %vm6955, %v7135, 0.0
      %v7197 = vadd.f32 %v7195, %v7196
      %v7198 = vsel %vm6955, %v7136, 0.0
      %v7199 = vadd.f32 %v7197, %v7198
      %v7200 = vrot.slane %v7199, 4
      %v7201 = vadd.f32 %v7199, %v7200
      %v7202 = vrot.slane %v7201, 2
      %v7203 = vadd.f32 %v7201, %v7202
      %v7204 = vrot.slane %v7203, 1
      %v7205 = vadd.f32 %v7203, %v7204
      %v7207 = vsel %vm6955, %v7205, 0
      %7209 = vmatpush.msra.mxu0 0.0
      %7210 = vmatpush.msra.mxu0 0.0
      %7211 = vmatpush.msra.mxu0 0.0
      %7212 = vmatpush.msra.mxu0 0.0
      %7213 = vmatpush.msra.mxu0 0.0
      %7214 = vmatpush.msra.mxu0 0.0
      %7215 = vmatpush.msra.mxu0 0.0
      %7216 = vmatpush.msra.mxu0 0.0
      %7217 = vmatpush.msra.mxu0 0.0
      %7218 = vmatpush.msra.mxu0 0.0
      %7219 = vmatpush.msra.mxu0 0.0
      %7220 = vmatpush.msra.mxu0 0.0
      %7221 = vmatpush.msra.mxu0 0.0
      %7222 = vmatpush.msra.mxu0 0.0
      %7223 = vmatpush.msra.mxu0 0.0
      %7224 = vmatpush.msra.mxu0 %v6951
      %7225 = vmatmul.f32.gmra.mxu0 %v7207
      %v7226 = vpop.f32.mrf.mxu0
      %v7227 = vadd.f32 0.0, %v7226
      %7228 = vdwg.mxu0
      %v7229 = vmul.f32 %v7227, 0.00390625
      %v7231 = vsel %vm6955, %v7229, 0
      %7233 = vmatpush.msra.mxu0 0.0
      %7234 = vmatpush.msra.mxu0 0.0
      %7235 = vmatpush.msra.mxu0 0.0
      %7236 = vmatpush.msra.mxu0 0.0
      %7237 = vmatpush.msra.mxu0 0.0
      %7238 = vmatpush.msra.mxu0 0.0
      %7239 = vmatpush.msra.mxu0 0.0
      %7240 = vmatpush.msra.mxu0 0.0
      %7241 = vmatpush.msra.mxu0 0.0
      %7242 = vmatpush.msra.mxu0 0.0
      %7243 = vmatpush.msra.mxu0 0.0
      %7244 = vmatpush.msra.mxu0 0.0
      %7245 = vmatpush.msra.mxu0 0.0
      %7246 = vmatpush.msra.mxu0 0.0
      %7247 = vmatpush.msra.mxu0 0.0
      %7248 = vmatpush.msra.mxu0 %v6952
      %7249 = vmatmul.f32.gmra.mxu0 %v7231
      %v7250 = vpop.f32.mrf.mxu0
      %v7251 = vadd.f32 1e-05, %v7250
      %7252 = vdwg.mxu0
      %v7253 = vrsqrt.pop %v7251
      %v7254 = vmul.f32 %v7253, %v7251
      %v7255 = vmul.f32 %v7254, %v7253
      %v7256 = vmul.f32 0.5, %v7255
      %v7257 = vsub.f32 1.5, %v7256
      %v7258 = vmul.f32 %v7253, %v7257
      %vm7259 = vweird.f32 %v7251
      %vm7260 = vweird.f32 %v7253
      %vm7261 = vmor %vm7259, %vm7260
      %v7262 = vsel %vm7261, %v7253, %v7258
      %v7263 = vmul.f32 %v7262, %v6953
      %v7264 = vperm.slane %v7263, 0
      %v7265 = vmul.f32 %v7073, %v7264
      %v7266 = vmul.f32 %v7074, %v7264
      %v7267 = vmul.f32 %v7075, %v7264
      %v7268 = vmul.f32 %v7076, %v7264
      %v7269 = vmul.f32 %v7077, %v7264
      %v7270 = vmul.f32 %v7078, %v7264
      %v7271 = vmul.f32 %v7079, %v7264
      %v7272 = vmul.f32 %v7080, %v7264
      %v7273 = vmul.f32 %v7081, %v7264
      %v7274 = vmul.f32 %v7082, %v7264
      %v7275 = vmul.f32 %v7083, %v7264
      %v7276 = vmul.f32 %v7084, %v7264
      %v7277 = vmul.f32 %v7085, %v7264
      %v7278 = vmul.f32 %v7086, %v7264
      %v7279 = vmul.f32 %v7087, %v7264
      %v7280 = vmul.f32 %v7088, %v7264
      %v7281 = vmul.f32 %v7089, %v7264
      %v7282 = vmul.f32 %v7090, %v7264
      %v7283 = vmul.f32 %v7091, %v7264
      %v7284 = vmul.f32 %v7092, %v7264
      %v7285 = vmul.f32 %v7093, %v7264
      %v7286 = vmul.f32 %v7094, %v7264
      %v7287 = vmul.f32 %v7095, %v7264
      %v7288 = vmul.f32 %v7096, %v7264
      %v7289 = vmul.f32 %v7097, %v7264
      %v7290 = vmul.f32 %v7098, %v7264
      %v7291 = vmul.f32 %v7099, %v7264
      %v7292 = vmul.f32 %v7100, %v7264
      %v7293 = vmul.f32 %v7101, %v7264
      %v7294 = vmul.f32 %v7102, %v7264
      %v7295 = vmul.f32 %v7103, %v7264
      %v7296 = vmul.f32 %v7104, %v7264
      %v7298 = vperm.slane %v6954, 0
      %v7300 = vadd.f32 %v7265, %v7298
      %v7301 = vadd.f32 %v7266, %v7298
      %v7302 = vadd.f32 %v7267, %v7298
      %v7303 = vadd.f32 %v7268, %v7298
      %v7304 = vadd.f32 %v7269, %v7298
      %v7305 = vadd.f32 %v7270, %v7298
      %v7306 = vadd.f32 %v7271, %v7298
      %v7307 = vadd.f32 %v7272, %v7298
      %v7308 = vadd.f32 %v7273, %v7298
      %v7309 = vadd.f32 %v7274, %v7298
      %v7310 = vadd.f32 %v7275, %v7298
      %v7311 = vadd.f32 %v7276, %v7298
      %v7312 = vadd.f32 %v7277, %v7298
      %v7313 = vadd.f32 %v7278, %v7298
      %v7314 = vadd.f32 %v7279, %v7298
      %v7315 = vadd.f32 %v7280, %v7298
      %v7316 = vadd.f32 %v7281, %v7298
      %v7317 = vadd.f32 %v7282, %v7298
      %v7318 = vadd.f32 %v7283, %v7298
      %v7319 = vadd.f32 %v7284, %v7298
      %v7320 = vadd.f32 %v7285, %v7298
      %v7321 = vadd.f32 %v7286, %v7298
      %v7322 = vadd.f32 %v7287, %v7298
      %v7323 = vadd.f32 %v7288, %v7298
      %v7324 = vadd.f32 %v7289, %v7298
      %v7325 = vadd.f32 %v7290, %v7298
      %v7326 = vadd.f32 %v7291, %v7298
      %v7327 = vadd.f32 %v7292, %v7298
      %v7328 = vadd.f32 %v7293, %v7298
      %v7329 = vadd.f32 %v7294, %v7298
      %v7330 = vadd.f32 %v7295, %v7298
      %v7331 = vadd.f32 %v7296, %v7298
      %v7332 = vxor.u32 %v7300, 2147483648
      %v7333 = vxor.u32 %v7301, 2147483648
      %v7334 = vxor.u32 %v7302, 2147483648
      %v7335 = vxor.u32 %v7303, 2147483648
      %v7336 = vxor.u32 %v7304, 2147483648
      %v7337 = vxor.u32 %v7305, 2147483648
      %v7338 = vxor.u32 %v7306, 2147483648
      %v7339 = vxor.u32 %v7307, 2147483648
      %v7340 = vxor.u32 %v7308, 2147483648
      %v7341 = vxor.u32 %v7309, 2147483648
      %v7342 = vxor.u32 %v7310, 2147483648
      %v7343 = vxor.u32 %v7311, 2147483648
      %v7344 = vxor.u32 %v7312, 2147483648
      %v7345 = vxor.u32 %v7313, 2147483648
      %v7346 = vxor.u32 %v7314, 2147483648
      %v7347 = vxor.u32 %v7315, 2147483648
      %v7348 = vxor.u32 %v7316, 2147483648
      %v7349 = vxor.u32 %v7317, 2147483648
      %v7350 = vxor.u32 %v7318, 2147483648
      %v7351 = vxor.u32 %v7319, 2147483648
      %v7352 = vxor.u32 %v7320, 2147483648
      %v7353 = vxor.u32 %v7321, 2147483648
      %v7354 = vxor.u32 %v7322, 2147483648
      %v7355 = vxor.u32 %v7323, 2147483648
      %v7356 = vxor.u32 %v7324, 2147483648
      %v7357 = vxor.u32 %v7325, 2147483648
      %v7358 = vxor.u32 %v7326, 2147483648
      %v7359 = vxor.u32 %v7327, 2147483648
      %v7360 = vxor.u32 %v7328, 2147483648
      %v7361 = vxor.u32 %v7329, 2147483648
      %v7362 = vxor.u32 %v7330, 2147483648
      %v7363 = vxor.u32 %v7331, 2147483648
      %v7364 = vmul.f32 %v7332, 1.442695
      %v7365 = vpow.pop %v7364
      %v7366 = vmul.f32 %v7333, 1.442695
      %v7367 = vpow.pop %v7366
      %v7368 = vmul.f32 %v7334, 1.442695
      %v7369 = vpow.pop %v7368
      %v7370 = vmul.f32 %v7335, 1.442695
      %v7371 = vpow.pop %v7370
      %v7372 = vmul.f32 %v7336, 1.442695
      %v7373 = vpow.pop %v7372
      %v7374 = vmul.f32 %v7337, 1.442695
      %v7375 = vpow.pop %v7374
      %v7376 = vmul.f32 %v7338, 1.442695
      %v7377 = vpow.pop %v7376
      %v7378 = vmul.f32 %v7339, 1.442695
      %v7379 = vpow.pop %v7378
      %v7380 = vmul.f32 %v7340, 1.442695
      %v7381 = vpow.pop %v7380
      %v7382 = vmul.f32 %v7341, 1.442695
      %v7383 = vpow.pop %v7382
      %v7384 = vmul.f32 %v7342, 1.442695
      %v7385 = vpow.pop %v7384
      %v7386 = vmul.f32 %v7343, 1.442695
      %v7387 = vpow.pop %v7386
      %v7388 = vmul.f32 %v7344, 1.442695
      %v7389 = vpow.pop %v7388
      %v7390 = vmul.f32 %v7345, 1.442695
      %v7391 = vpow.pop %v7390
      %v7392 = vmul.f32 %v7346, 1.442695
      %v7393 = vpow.pop %v7392
      %v7394 = vmul.f32 %v7347, 1.442695
      %v7395 = vpow.pop %v7394
      %v7396 = vmul.f32 %v7348, 1.442695
      %v7397 = vpow.pop %v7396
      %v7398 = vmul.f32 %v7349, 1.442695
      %v7399 = vpow.pop %v7398
      %v7400 = vmul.f32 %v7350, 1.442695
      %v7401 = vpow.pop %v7400
      %v7402 = vmul.f32 %v7351, 1.442695
      %v7403 = vpow.pop %v7402
      %v7404 = vmul.f32 %v7352, 1.442695
      %v7405 = vpow.pop %v7404
      %v7406 = vmul.f32 %v7353, 1.442695
      %v7407 = vpow.pop %v7406
      %v7408 = vmul.f32 %v7354, 1.442695
      %v7409 = vpow.pop %v7408
      %v7410 = vmul.f32 %v7355, 1.442695
      %v7411 = vpow.pop %v7410
      %v7412 = vmul.f32 %v7356, 1.442695
      %v7413 = vpow.pop %v7412
      %v7414 = vmul.f32 %v7357, 1.442695
      %v7415 = vpow.pop %v7414
      %v7416 = vmul.f32 %v7358, 1.442695
      %v7417 = vpow.pop %v7416
      %v7418 = vmul.f32 %v7359, 1.442695
      %v7419 = vpow.pop %v7418
      %v7420 = vmul.f32 %v7360, 1.442695
      %v7421 = vpow.pop %v7420
      %v7422 = vmul.f32 %v7361, 1.442695
      %v7423 = vpow.pop %v7422
      %v7424 = vmul.f32 %v7362, 1.442695
      %v7425 = vpow.pop %v7424
      %v7426 = vmul.f32 %v7363, 1.442695
      %v7427 = vpow.pop %v7426
      %v7428 = vadd.f32 %v7365, 1.0
      %v7429 = vadd.f32 %v7367, 1.0
      %v7430 = vadd.f32 %v7369, 1.0
      %v7431 = vadd.f32 %v7371, 1.0
      %v7432 = vadd.f32 %v7373, 1.0
      %v7433 = vadd.f32 %v7375, 1.0
      %v7434 = vadd.f32 %v7377, 1.0
      %v7435 = vadd.f32 %v7379, 1.0
      %v7436 = vadd.f32 %v7381, 1.0
      %v7437 = vadd.f32 %v7383, 1.0
      %v7438 = vadd.f32 %v7385, 1.0
      %v7439 = vadd.f32 %v7387, 1.0
      %v7440 = vadd.f32 %v7389, 1.0
      %v7441 = vadd.f32 %v7391, 1.0
      %v7442 = vadd.f32 %v7393, 1.0
      %v7443 = vadd.f32 %v7395, 1.0
      %v7444 = vadd.f32 %v7397, 1.0
      %v7445 = vadd.f32 %v7399, 1.0
      %v7446 = vadd.f32 %v7401, 1.0
      %v7447 = vadd.f32 %v7403, 1.0
      %v7448 = vadd.f32 %v7405, 1.0
      %v7449 = vadd.f32 %v7407, 1.0
      %v7450 = vadd.f32 %v7409, 1.0
      %v7451 = vadd.f32 %v7411, 1.0
      %v7452 = vadd.f32 %v7413, 1.0
      %v7453 = vadd.f32 %v7415, 1.0
      %v7454 = vadd.f32 %v7417, 1.0
      %v7455 = vadd.f32 %v7419, 1.0
      %v7456 = vadd.f32 %v7421, 1.0
      %v7457 = vadd.f32 %v7423, 1.0
      %v7458 = vadd.f32 %v7425, 1.0
      %v7459 = vadd.f32 %v7427, 1.0
      %v7460 = vrcp.pop %v7428
      %v7461 = vmul.f32 %v7428, %v7460
      %v7462 = vsub.f32 1.0, %v7461
      %v7463 = vmul.f32 %v7460, %v7462
      %v7464 = vadd.f32 %v7460, %v7463
      %vm7465 = vweird.f32 %v7428
      %vm7466 = vweird.f32 %v7460
      %vm7467 = vmor %vm7465, %vm7466
      %v7468 = vsel %vm7467, %v7460, %v7464
      %v7469 = vand.u32 2147483647, %v7428
      %vm7470 = vcmp.eq.f32.partialorder %v7469, 8.507059e+37
      %v7471 = vand.u32 %v7428, 2147483648
      %v7472 = vor.u32 1.1754944e-38, %v7471
      %v7473 = vsel %vm7470, %v7472, %v7468
      %v7474 = vmul.f32 1.0, %v7473
      %v7475 = vrcp.pop %v7429
      %v7476 = vmul.f32 %v7429, %v7475
      %v7477 = vsub.f32 1.0, %v7476
      %v7478 = vmul.f32 %v7475, %v7477
      %v7479 = vadd.f32 %v7475, %v7478
      %vm7480 = vweird.f32 %v7429
      %vm7481 = vweird.f32 %v7475
      %vm7482 = vmor %vm7480, %vm7481
      %v7483 = vsel %vm7482, %v7475, %v7479
      %v7484 = vand.u32 2147483647, %v7429
      %vm7485 = vcmp.eq.f32.partialorder %v7484, 8.507059e+37
      %v7486 = vand.u32 %v7429, 2147483648
      %v7487 = vor.u32 1.1754944e-38, %v7486
      %v7488 = vsel %vm7485, %v7487, %v7483
      %v7489 = vmul.f32 1.0, %v7488
      %v7490 = vrcp.pop %v7430
      %v7491 = vmul.f32 %v7430, %v7490
      %v7492 = vsub.f32 1.0, %v7491
      %v7493 = vmul.f32 %v7490, %v7492
      %v7494 = vadd.f32 %v7490, %v7493
      %vm7495 = vweird.f32 %v7430
      %vm7496 = vweird.f32 %v7490
      %vm7497 = vmor %vm7495, %vm7496
      %v7498 = vsel %vm7497, %v7490, %v7494
      %v7499 = vand.u32 2147483647, %v7430
      %vm7500 = vcmp.eq.f32.partialorder %v7499, 8.507059e+37
      %v7501 = vand.u32 %v7430, 2147483648
      %v7502 = vor.u32 1.1754944e-38, %v7501
      %v7503 = vsel %vm7500, %v7502, %v7498
      %v7504 = vmul.f32 1.0, %v7503
      %v7505 = vrcp.pop %v7431
      %v7506 = vmul.f32 %v7431, %v7505
      %v7507 = vsub.f32 1.0, %v7506
      %v7508 = vmul.f32 %v7505, %v7507
      %v7509 = vadd.f32 %v7505, %v7508
      %vm7510 = vweird.f32 %v7431
      %vm7511 = vweird.f32 %v7505
      %vm7512 = vmor %vm7510, %vm7511
      %v7513 = vsel %vm7512, %v7505, %v7509
      %v7514 = vand.u32 2147483647, %v7431
      %vm7515 = vcmp.eq.f32.partialorder %v7514, 8.507059e+37
      %v7516 = vand.u32 %v7431, 2147483648
      %v7517 = vor.u32 1.1754944e-38, %v7516
      %v7518 = vsel %vm7515, %v7517, %v7513
      %v7519 = vmul.f32 1.0, %v7518
      %v7520 = vrcp.pop %v7432
      %v7521 = vmul.f32 %v7432, %v7520
      %v7522 = vsub.f32 1.0, %v7521
      %v7523 = vmul.f32 %v7520, %v7522
      %v7524 = vadd.f32 %v7520, %v7523
      %vm7525 = vweird.f32 %v7432
      %vm7526 = vweird.f32 %v7520
      %vm7527 = vmor %vm7525, %vm7526
      %v7528 = vsel %vm7527, %v7520, %v7524
      %v7529 = vand.u32 2147483647, %v7432
      %vm7530 = vcmp.eq.f32.partialorder %v7529, 8.507059e+37
      %v7531 = vand.u32 %v7432, 2147483648
      %v7532 = vor.u32 1.1754944e-38, %v7531
      %v7533 = vsel %vm7530, %v7532, %v7528
      %v7534 = vmul.f32 1.0, %v7533
      %v7535 = vrcp.pop %v7433
      %v7536 = vmul.f32 %v7433, %v7535
      %v7537 = vsub.f32 1.0, %v7536
      %v7538 = vmul.f32 %v7535, %v7537
      %v7539 = vadd.f32 %v7535, %v7538
      %vm7540 = vweird.f32 %v7433
      %vm7541 = vweird.f32 %v7535
      %vm7542 = vmor %vm7540, %vm7541
      %v7543 = vsel %vm7542, %v7535, %v7539
      %v7544 = vand.u32 2147483647, %v7433
      %vm7545 = vcmp.eq.f32.partialorder %v7544, 8.507059e+37
      %v7546 = vand.u32 %v7433, 2147483648
      %v7547 = vor.u32 1.1754944e-38, %v7546
      %v7548 = vsel %vm7545, %v7547, %v7543
      %v7549 = vmul.f32 1.0, %v7548
      %v7550 = vrcp.pop %v7434
      %v7551 = vmul.f32 %v7434, %v7550
      %v7552 = vsub.f32 1.0, %v7551
      %v7553 = vmul.f32 %v7550, %v7552
      %v7554 = vadd.f32 %v7550, %v7553
      %vm7555 = vweird.f32 %v7434
      %vm7556 = vweird.f32 %v7550
      %vm7557 = vmor %vm7555, %vm7556
      %v7558 = vsel %vm7557, %v7550, %v7554
      %v7559 = vand.u32 2147483647, %v7434
      %vm7560 = vcmp.eq.f32.partialorder %v7559, 8.507059e+37
      %v7561 = vand.u32 %v7434, 2147483648
      %v7562 = vor.u32 1.1754944e-38, %v7561
      %v7563 = vsel %vm7560, %v7562, %v7558
      %v7564 = vmul.f32 1.0, %v7563
      %v7565 = vrcp.pop %v7435
      %v7566 = vmul.f32 %v7435, %v7565
      %v7567 = vsub.f32 1.0, %v7566
      %v7568 = vmul.f32 %v7565, %v7567
      %v7569 = vadd.f32 %v7565, %v7568
      %vm7570 = vweird.f32 %v7435
      %vm7571 = vweird.f32 %v7565
      %vm7572 = vmor %vm7570, %vm7571
      %v7573 = vsel %vm7572, %v7565, %v7569
      %v7574 = vand.u32 2147483647, %v7435
      %vm7575 = vcmp.eq.f32.partialorder %v7574, 8.507059e+37
      %v7576 = vand.u32 %v7435, 2147483648
      %v7577 = vor.u32 1.1754944e-38, %v7576
      %v7578 = vsel %vm7575, %v7577, %v7573
      %v7579 = vmul.f32 1.0, %v7578
      %v7580 = vrcp.pop %v7436
      %v7581 = vmul.f32 %v7436, %v7580
      %v7582 = vsub.f32 1.0, %v7581
      %v7583 = vmul.f32 %v7580, %v7582
      %v7584 = vadd.f32 %v7580, %v7583
      %vm7585 = vweird.f32 %v7436
      %vm7586 = vweird.f32 %v7580
      %vm7587 = vmor %vm7585, %vm7586
      %v7588 = vsel %vm7587, %v7580, %v7584
      %v7589 = vand.u32 2147483647, %v7436
      %vm7590 = vcmp.eq.f32.partialorder %v7589, 8.507059e+37
      %v7591 = vand.u32 %v7436, 2147483648
      %v7592 = vor.u32 1.1754944e-38, %v7591
      %v7593 = vsel %vm7590, %v7592, %v7588
      %v7594 = vmul.f32 1.0, %v7593
      %v7595 = vrcp.pop %v7437
      %v7596 = vmul.f32 %v7437, %v7595
      %v7597 = vsub.f32 1.0, %v7596
      %v7598 = vmul.f32 %v7595, %v7597
      %v7599 = vadd.f32 %v7595, %v7598
      %vm7600 = vweird.f32 %v7437
      %vm7601 = vweird.f32 %v7595
      %vm7602 = vmor %vm7600, %vm7601
      %v7603 = vsel %vm7602, %v7595, %v7599
      %v7604 = vand.u32 2147483647, %v7437
      %vm7605 = vcmp.eq.f32.partialorder %v7604, 8.507059e+37
      %v7606 = vand.u32 %v7437, 2147483648
      %v7607 = vor.u32 1.1754944e-38, %v7606
      %v7608 = vsel %vm7605, %v7607, %v7603
      %v7609 = vmul.f32 1.0, %v7608
      %v7610 = vrcp.pop %v7438
      %v7611 = vmul.f32 %v7438, %v7610
      %v7612 = vsub.f32 1.0, %v7611
      %v7613 = vmul.f32 %v7610, %v7612
      %v7614 = vadd.f32 %v7610, %v7613
      %vm7615 = vweird.f32 %v7438
      %vm7616 = vweird.f32 %v7610
      %vm7617 = vmor %vm7615, %vm7616
      %v7618 = vsel %vm7617, %v7610, %v7614
      %v7619 = vand.u32 2147483647, %v7438
      %vm7620 = vcmp.eq.f32.partialorder %v7619, 8.507059e+37
      %v7621 = vand.u32 %v7438, 2147483648
      %v7622 = vor.u32 1.1754944e-38, %v7621
      %v7623 = vsel %vm7620, %v7622, %v7618
      %v7624 = vmul.f32 1.0, %v7623
      %v7625 = vrcp.pop %v7439
      %v7626 = vmul.f32 %v7439, %v7625
      %v7627 = vsub.f32 1.0, %v7626
      %v7628 = vmul.f32 %v7625, %v7627
      %v7629 = vadd.f32 %v7625, %v7628
      %vm7630 = vweird.f32 %v7439
      %vm7631 = vweird.f32 %v7625
      %vm7632 = vmor %vm7630, %vm7631
      %v7633 = vsel %vm7632, %v7625, %v7629
      %v7634 = vand.u32 2147483647, %v7439
      %vm7635 = vcmp.eq.f32.partialorder %v7634, 8.507059e+37
      %v7636 = vand.u32 %v7439, 2147483648
      %v7637 = vor.u32 1.1754944e-38, %v7636
      %v7638 = vsel %vm7635, %v7637, %v7633
      %v7639 = vmul.f32 1.0, %v7638
      %v7640 = vrcp.pop %v7440
      %v7641 = vmul.f32 %v7440, %v7640
      %v7642 = vsub.f32 1.0, %v7641
      %v7643 = vmul.f32 %v7640, %v7642
      %v7644 = vadd.f32 %v7640, %v7643
      %vm7645 = vweird.f32 %v7440
      %vm7646 = vweird.f32 %v7640
      %vm7647 = vmor %vm7645, %vm7646
      %v7648 = vsel %vm7647, %v7640, %v7644
      %v7649 = vand.u32 2147483647, %v7440
      %vm7650 = vcmp.eq.f32.partialorder %v7649, 8.507059e+37
      %v7651 = vand.u32 %v7440, 2147483648
      %v7652 = vor.u32 1.1754944e-38, %v7651
      %v7653 = vsel %vm7650, %v7652, %v7648
      %v7654 = vmul.f32 1.0, %v7653
      %v7655 = vrcp.pop %v7441
      %v7656 = vmul.f32 %v7441, %v7655
      %v7657 = vsub.f32 1.0, %v7656
      %v7658 = vmul.f32 %v7655, %v7657
      %v7659 = vadd.f32 %v7655, %v7658
      %vm7660 = vweird.f32 %v7441
      %vm7661 = vweird.f32 %v7655
      %vm7662 = vmor %vm7660, %vm7661
      %v7663 = vsel %vm7662, %v7655, %v7659
      %v7664 = vand.u32 2147483647, %v7441
      %vm7665 = vcmp.eq.f32.partialorder %v7664, 8.507059e+37
      %v7666 = vand.u32 %v7441, 2147483648
      %v7667 = vor.u32 1.1754944e-38, %v7666
      %v7668 = vsel %vm7665, %v7667, %v7663
      %v7669 = vmul.f32 1.0, %v7668
      %v7670 = vrcp.pop %v7442
      %v7671 = vmul.f32 %v7442, %v7670
      %v7672 = vsub.f32 1.0, %v7671
      %v7673 = vmul.f32 %v7670, %v7672
      %v7674 = vadd.f32 %v7670, %v7673
      %vm7675 = vweird.f32 %v7442
      %vm7676 = vweird.f32 %v7670
      %vm7677 = vmor %vm7675, %vm7676
      %v7678 = vsel %vm7677, %v7670, %v7674
      %v7679 = vand.u32 2147483647, %v7442
      %vm7680 = vcmp.eq.f32.partialorder %v7679, 8.507059e+37
      %v7681 = vand.u32 %v7442, 2147483648
      %v7682 = vor.u32 1.1754944e-38, %v7681
      %v7683 = vsel %vm7680, %v7682, %v7678
      %v7684 = vmul.f32 1.0, %v7683
      %v7685 = vrcp.pop %v7443
      %v7686 = vmul.f32 %v7443, %v7685
      %v7687 = vsub.f32 1.0, %v7686
      %v7688 = vmul.f32 %v7685, %v7687
      %v7689 = vadd.f32 %v7685, %v7688
      %vm7690 = vweird.f32 %v7443
      %vm7691 = vweird.f32 %v7685
      %vm7692 = vmor %vm7690, %vm7691
      %v7693 = vsel %vm7692, %v7685, %v7689
      %v7694 = vand.u32 2147483647, %v7443
      %vm7695 = vcmp.eq.f32.partialorder %v7694, 8.507059e+37
      %v7696 = vand.u32 %v7443, 2147483648
      %v7697 = vor.u32 1.1754944e-38, %v7696
      %v7698 = vsel %vm7695, %v7697, %v7693
      %v7699 = vmul.f32 1.0, %v7698
      %v7700 = vrcp.pop %v7444
      %v7701 = vmul.f32 %v7444, %v7700
      %v7702 = vsub.f32 1.0, %v7701
      %v7703 = vmul.f32 %v7700, %v7702
      %v7704 = vadd.f32 %v7700, %v7703
      %vm7705 = vweird.f32 %v7444
      %vm7706 = vweird.f32 %v7700
      %vm7707 = vmor %vm7705, %vm7706
      %v7708 = vsel %vm7707, %v7700, %v7704
      %v7709 = vand.u32 2147483647, %v7444
      %vm7710 = vcmp.eq.f32.partialorder %v7709, 8.507059e+37
      %v7711 = vand.u32 %v7444, 2147483648
      %v7712 = vor.u32 1.1754944e-38, %v7711
      %v7713 = vsel %vm7710, %v7712, %v7708
      %v7714 = vmul.f32 1.0, %v7713
      %v7715 = vrcp.pop %v7445
      %v7716 = vmul.f32 %v7445, %v7715
      %v7717 = vsub.f32 1.0, %v7716
      %v7718 = vmul.f32 %v7715, %v7717
      %v7719 = vadd.f32 %v7715, %v7718
      %vm7720 = vweird.f32 %v7445
      %vm7721 = vweird.f32 %v7715
      %vm7722 = vmor %vm7720, %vm7721
      %v7723 = vsel %vm7722, %v7715, %v7719
      %v7724 = vand.u32 2147483647, %v7445
      %vm7725 = vcmp.eq.f32.partialorder %v7724, 8.507059e+37
      %v7726 = vand.u32 %v7445, 2147483648
      %v7727 = vor.u32 1.1754944e-38, %v7726
      %v7728 = vsel %vm7725, %v7727, %v7723
      %v7729 = vmul.f32 1.0, %v7728
      %v7730 = vrcp.pop %v7446
      %v7731 = vmul.f32 %v7446, %v7730
      %v7732 = vsub.f32 1.0, %v7731
      %v7733 = vmul.f32 %v7730, %v7732
      %v7734 = vadd.f32 %v7730, %v7733
      %vm7735 = vweird.f32 %v7446
      %vm7736 = vweird.f32 %v7730
      %vm7737 = vmor %vm7735, %vm7736
      %v7738 = vsel %vm7737, %v7730, %v7734
      %v7739 = vand.u32 2147483647, %v7446
      %vm7740 = vcmp.eq.f32.partialorder %v7739, 8.507059e+37
      %v7741 = vand.u32 %v7446, 2147483648
      %v7742 = vor.u32 1.1754944e-38, %v7741
      %v7743 = vsel %vm7740, %v7742, %v7738
      %v7744 = vmul.f32 1.0, %v7743
      %v7745 = vrcp.pop %v7447
      %v7746 = vmul.f32 %v7447, %v7745
      %v7747 = vsub.f32 1.0, %v7746
      %v7748 = vmul.f32 %v7745, %v7747
      %v7749 = vadd.f32 %v7745, %v7748
      %vm7750 = vweird.f32 %v7447
      %vm7751 = vweird.f32 %v7745
      %vm7752 = vmor %vm7750, %vm7751
      %v7753 = vsel %vm7752, %v7745, %v7749
      %v7754 = vand.u32 2147483647, %v7447
      %vm7755 = vcmp.eq.f32.partialorder %v7754, 8.507059e+37
      %v7756 = vand.u32 %v7447, 2147483648
      %v7757 = vor.u32 1.1754944e-38, %v7756
      %v7758 = vsel %vm7755, %v7757, %v7753
      %v7759 = vmul.f32 1.0, %v7758
      %v7760 = vrcp.pop %v7448
      %v7761 = vmul.f32 %v7448, %v7760
      %v7762 = vsub.f32 1.0, %v7761
      %v7763 = vmul.f32 %v7760, %v7762
      %v7764 = vadd.f32 %v7760, %v7763
      %vm7765 = vweird.f32 %v7448
      %vm7766 = vweird.f32 %v7760
      %vm7767 = vmor %vm7765, %vm7766
      %v7768 = vsel %vm7767, %v7760, %v7764
      %v7769 = vand.u32 2147483647, %v7448
      %vm7770 = vcmp.eq.f32.partialorder %v7769, 8.507059e+37
      %v7771 = vand.u32 %v7448, 2147483648
      %v7772 = vor.u32 1.1754944e-38, %v7771
      %v7773 = vsel %vm7770, %v7772, %v7768
      %v7774 = vmul.f32 1.0, %v7773
      %v7775 = vrcp.pop %v7449
      %v7776 = vmul.f32 %v7449, %v7775
      %v7777 = vsub.f32 1.0, %v7776
      %v7778 = vmul.f32 %v7775, %v7777
      %v7779 = vadd.f32 %v7775, %v7778
      %vm7780 = vweird.f32 %v7449
      %vm7781 = vweird.f32 %v7775
      %vm7782 = vmor %vm7780, %vm7781
      %v7783 = vsel %vm7782, %v7775, %v7779
      %v7784 = vand.u32 2147483647, %v7449
      %vm7785 = vcmp.eq.f32.partialorder %v7784, 8.507059e+37
      %v7786 = vand.u32 %v7449, 2147483648
      %v7787 = vor.u32 1.1754944e-38, %v7786
      %v7788 = vsel %vm7785, %v7787, %v7783
      %v7789 = vmul.f32 1.0, %v7788
      %v7790 = vrcp.pop %v7450
      %v7791 = vmul.f32 %v7450, %v7790
      %v7792 = vsub.f32 1.0, %v7791
      %v7793 = vmul.f32 %v7790, %v7792
      %v7794 = vadd.f32 %v7790, %v7793
      %vm7795 = vweird.f32 %v7450
      %vm7796 = vweird.f32 %v7790
      %vm7797 = vmor %vm7795, %vm7796
      %v7798 = vsel %vm7797, %v7790, %v7794
      %v7799 = vand.u32 2147483647, %v7450
      %vm7800 = vcmp.eq.f32.partialorder %v7799, 8.507059e+37
      %v7801 = vand.u32 %v7450, 2147483648
      %v7802 = vor.u32 1.1754944e-38, %v7801
      %v7803 = vsel %vm7800, %v7802, %v7798
      %v7804 = vmul.f32 1.0, %v7803
      %v7805 = vrcp.pop %v7451
      %v7806 = vmul.f32 %v7451, %v7805
      %v7807 = vsub.f32 1.0, %v7806
      %v7808 = vmul.f32 %v7805, %v7807
      %v7809 = vadd.f32 %v7805, %v7808
      %vm7810 = vweird.f32 %v7451
      %vm7811 = vweird.f32 %v7805
      %vm7812 = vmor %vm7810, %vm7811
      %v7813 = vsel %vm7812, %v7805, %v7809
      %v7814 = vand.u32 2147483647, %v7451
      %vm7815 = vcmp.eq.f32.partialorder %v7814, 8.507059e+37
      %v7816 = vand.u32 %v7451, 2147483648
      %v7817 = vor.u32 1.1754944e-38, %v7816
      %v7818 = vsel %vm7815, %v7817, %v7813
      %v7819 = vmul.f32 1.0, %v7818
      %v7820 = vrcp.pop %v7452
      %v7821 = vmul.f32 %v7452, %v7820
      %v7822 = vsub.f32 1.0, %v7821
      %v7823 = vmul.f32 %v7820, %v7822
      %v7824 = vadd.f32 %v7820, %v7823
      %vm7825 = vweird.f32 %v7452
      %vm7826 = vweird.f32 %v7820
      %vm7827 = vmor %vm7825, %vm7826
      %v7828 = vsel %vm7827, %v7820, %v7824
      %v7829 = vand.u32 2147483647, %v7452
      %vm7830 = vcmp.eq.f32.partialorder %v7829, 8.507059e+37
      %v7831 = vand.u32 %v7452, 2147483648
      %v7832 = vor.u32 1.1754944e-38, %v7831
      %v7833 = vsel %vm7830, %v7832, %v7828
      %v7834 = vmul.f32 1.0, %v7833
      %v7835 = vrcp.pop %v7453
      %v7836 = vmul.f32 %v7453, %v7835
      %v7837 = vsub.f32 1.0, %v7836
      %v7838 = vmul.f32 %v7835, %v7837
      %v7839 = vadd.f32 %v7835, %v7838
      %vm7840 = vweird.f32 %v7453
      %vm7841 = vweird.f32 %v7835
      %vm7842 = vmor %vm7840, %vm7841
      %v7843 = vsel %vm7842, %v7835, %v7839
      %v7844 = vand.u32 2147483647, %v7453
      %vm7845 = vcmp.eq.f32.partialorder %v7844, 8.507059e+37
      %v7846 = vand.u32 %v7453, 2147483648
      %v7847 = vor.u32 1.1754944e-38, %v7846
      %v7848 = vsel %vm7845, %v7847, %v7843
      %v7849 = vmul.f32 1.0, %v7848
      %v7850 = vrcp.pop %v7454
      %v7851 = vmul.f32 %v7454, %v7850
      %v7852 = vsub.f32 1.0, %v7851
      %v7853 = vmul.f32 %v7850, %v7852
      %v7854 = vadd.f32 %v7850, %v7853
      %vm7855 = vweird.f32 %v7454
      %vm7856 = vweird.f32 %v7850
      %vm7857 = vmor %vm7855, %vm7856
      %v7858 = vsel %vm7857, %v7850, %v7854
      %v7859 = vand.u32 2147483647, %v7454
      %vm7860 = vcmp.eq.f32.partialorder %v7859, 8.507059e+37
      %v7861 = vand.u32 %v7454, 2147483648
      %v7862 = vor.u32 1.1754944e-38, %v7861
      %v7863 = vsel %vm7860, %v7862, %v7858
      %v7864 = vmul.f32 1.0, %v7863
      %v7865 = vrcp.pop %v7455
      %v7866 = vmul.f32 %v7455, %v7865
      %v7867 = vsub.f32 1.0, %v7866
      %v7868 = vmul.f32 %v7865, %v7867
      %v7869 = vadd.f32 %v7865, %v7868
      %vm7870 = vweird.f32 %v7455
      %vm7871 = vweird.f32 %v7865
      %vm7872 = vmor %vm7870, %vm7871
      %v7873 = vsel %vm7872, %v7865, %v7869
      %v7874 = vand.u32 2147483647, %v7455
      %vm7875 = vcmp.eq.f32.partialorder %v7874, 8.507059e+37
      %v7876 = vand.u32 %v7455, 2147483648
      %v7877 = vor.u32 1.1754944e-38, %v7876
      %v7878 = vsel %vm7875, %v7877, %v7873
      %v7879 = vmul.f32 1.0, %v7878
      %v7880 = vrcp.pop %v7456
      %v7881 = vmul.f32 %v7456, %v7880
      %v7882 = vsub.f32 1.0, %v7881
      %v7883 = vmul.f32 %v7880, %v7882
      %v7884 = vadd.f32 %v7880, %v7883
      %vm7885 = vweird.f32 %v7456
      %vm7886 = vweird.f32 %v7880
      %vm7887 = vmor %vm7885, %vm7886
      %v7888 = vsel %vm7887, %v7880, %v7884
      %v7889 = vand.u32 2147483647, %v7456
      %vm7890 = vcmp.eq.f32.partialorder %v7889, 8.507059e+37
      %v7891 = vand.u32 %v7456, 2147483648
      %v7892 = vor.u32 1.1754944e-38, %v7891
      %v7893 = vsel %vm7890, %v7892, %v7888
      %v7894 = vmul.f32 1.0, %v7893
      %v7895 = vrcp.pop %v7457
      %v7896 = vmul.f32 %v7457, %v7895
      %v7897 = vsub.f32 1.0, %v7896
      %v7898 = vmul.f32 %v7895, %v7897
      %v7899 = vadd.f32 %v7895, %v7898
      %vm7900 = vweird.f32 %v7457
      %vm7901 = vweird.f32 %v7895
      %vm7902 = vmor %vm7900, %vm7901
      %v7903 = vsel %vm7902, %v7895, %v7899
      %v7904 = vand.u32 2147483647, %v7457
      %vm7905 = vcmp.eq.f32.partialorder %v7904, 8.507059e+37
      %v7906 = vand.u32 %v7457, 2147483648
      %v7907 = vor.u32 1.1754944e-38, %v7906
      %v7908 = vsel %vm7905, %v7907, %v7903
      %v7909 = vmul.f32 1.0, %v7908
      %v7910 = vrcp.pop %v7458
      %v7911 = vmul.f32 %v7458, %v7910
      %v7912 = vsub.f32 1.0, %v7911
      %v7913 = vmul.f32 %v7910, %v7912
      %v7914 = vadd.f32 %v7910, %v7913
      %vm7915 = vweird.f32 %v7458
      %vm7916 = vweird.f32 %v7910
      %vm7917 = vmor %vm7915, %vm7916
      %v7918 = vsel %vm7917, %v7910, %v7914
      %v7919 = vand.u32 2147483647, %v7458
      %vm7920 = vcmp.eq.f32.partialorder %v7919, 8.507059e+37
      %v7921 = vand.u32 %v7458, 2147483648
      %v7922 = vor.u32 1.1754944e-38, %v7921
      %v7923 = vsel %vm7920, %v7922, %v7918
      %v7924 = vmul.f32 1.0, %v7923
      %v7925 = vrcp.pop %v7459
      %v7926 = vmul.f32 %v7459, %v7925
      %v7927 = vsub.f32 1.0, %v7926
      %v7928 = vmul.f32 %v7925, %v7927
      %v7929 = vadd.f32 %v7925, %v7928
      %vm7930 = vweird.f32 %v7459
      %vm7931 = vweird.f32 %v7925
      %vm7932 = vmor %vm7930, %vm7931
      %v7933 = vsel %vm7932, %v7925, %v7929
      %v7934 = vand.u32 2147483647, %v7459
      %vm7935 = vcmp.eq.f32.partialorder %v7934, 8.507059e+37
      %v7936 = vand.u32 %v7459, 2147483648
      %v7937 = vor.u32 1.1754944e-38, %v7936
      %v7938 = vsel %vm7935, %v7937, %v7933
      %v7939 = vmul.f32 1.0, %v7938
      %v7940 = vmul.f32 %v7300, %v7474
      %v7941 = vmul.f32 %v7301, %v7489
      %v7942 = vmul.f32 %v7302, %v7504
      %v7943 = vmul.f32 %v7303, %v7519
      %v7944 = vmul.f32 %v7304, %v7534
      %v7945 = vmul.f32 %v7305, %v7549
      %v7946 = vmul.f32 %v7306, %v7564
      %v7947 = vmul.f32 %v7307, %v7579
      %v7948 = vmul.f32 %v7308, %v7594
      %v7949 = vmul.f32 %v7309, %v7609
      %v7950 = vmul.f32 %v7310, %v7624
      %v7951 = vmul.f32 %v7311, %v7639
      %v7952 = vmul.f32 %v7312, %v7654
      %v7953 = vmul.f32 %v7313, %v7669
      %v7954 = vmul.f32 %v7314, %v7684
      %v7955 = vmul.f32 %v7315, %v7699
      %v7956 = vmul.f32 %v7316, %v7714
      %v7957 = vmul.f32 %v7317, %v7729
      %v7958 = vmul.f32 %v7318, %v7744
      %v7959 = vmul.f32 %v7319, %v7759
      %v7960 = vmul.f32 %v7320, %v7774
      %v7961 = vmul.f32 %v7321, %v7789
      %v7962 = vmul.f32 %v7322, %v7804
      %v7963 = vmul.f32 %v7323, %v7819
      %v7964 = vmul.f32 %v7324, %v7834
      %v7965 = vmul.f32 %v7325, %v7849
      %v7966 = vmul.f32 %v7326, %v7864
      %v7967 = vmul.f32 %v7327, %v7879
      %v7968 = vmul.f32 %v7328, %v7894
      %v7969 = vmul.f32 %v7329, %v7909
      %v7970 = vmul.f32 %v7330, %v7924
      %v7971 = vmul.f32 %v7331, %v7939
      %v7972 = vpack.c.bf16 %v7940, %v7940
      %v7973 = vpack.c.bf16 %v7941, %v7941
      %v7974 = vpack.c.bf16 %v7942, %v7942
      %v7975 = vpack.c.bf16 %v7943, %v7943
      %v7976 = vpack.c.bf16 %v7944, %v7944
      %v7977 = vpack.c.bf16 %v7945, %v7945
      %v7978 = vpack.c.bf16 %v7946, %v7946
      %v7979 = vpack.c.bf16 %v7947, %v7947
      %v7980 = vpack.c.bf16 %v7948, %v7948
      %v7981 = vpack.c.bf16 %v7949, %v7949
      %v7982 = vpack.c.bf16 %v7950, %v7950
      %v7983 = vpack.c.bf16 %v7951, %v7951
      %v7984 = vpack.c.bf16 %v7952, %v7952
      %v7985 = vpack.c.bf16 %v7953, %v7953
      %v7986 = vpack.c.bf16 %v7954, %v7954
      %v7987 = vpack.c.bf16 %v7955, %v7955
      %v7988 = vpack.c.bf16 %v7956, %v7956
      %v7989 = vpack.c.bf16 %v7957, %v7957
      %v7990 = vpack.c.bf16 %v7958, %v7958
      %v7991 = vpack.c.bf16 %v7959, %v7959
      %v7992 = vpack.c.bf16 %v7960, %v7960
      %v7993 = vpack.c.bf16 %v7961, %v7961
      %v7994 = vpack.c.bf16 %v7962, %v7962
      %v7995 = vpack.c.bf16 %v7963, %v7963
      %v7996 = vpack.c.bf16 %v7964, %v7964
      %v7997 = vpack.c.bf16 %v7965, %v7965
      %v7998 = vpack.c.bf16 %v7966, %v7966
      %v7999 = vpack.c.bf16 %v7967, %v7967
      %v8000 = vpack.c.bf16 %v7968, %v7968
      %v8001 = vpack.c.bf16 %v7969, %v7969
      %v8002 = vpack.c.bf16 %v7970, %v7970
      %v8003 = vpack.c.bf16 %v7971, %v7971
      %vm8004 = vcmask 60416
      %8005 = vst.msk [vmem:[#allocation3 + $0x4] sm:$0xf] %vm8004, 0
      %8006 = vst.msk [vmem:[#allocation3 + $0x8] sm:$0xf] %vm8004, 0
      %8007 = vst.msk [vmem:[#allocation3 + $0xc] sm:$0xf] %vm8004, %v7972
      %8008 = vst.msk [vmem:[#allocation3 + $0x10] sm:$0xf] %vm8004, %v7973
      %8009 = vst.msk [vmem:[#allocation3 + $0x14] sm:$0xf] %vm8004, %v7974
      %8010 = vst.msk [vmem:[#allocation3 + $0x18] sm:$0xf] %vm8004, %v7975
      %8011 = vst.msk [vmem:[#allocation3 + $0x1c] sm:$0xf] %vm8004, %v7976
      %8012 = vst.msk [vmem:[#allocation3 + $0x20] sm:$0xf] %vm8004, %v7977
      %8013 = vst.msk [vmem:[#allocation3 + $0x24] sm:$0xf] %vm8004, %v7978
      %8014 = vst.msk [vmem:[#allocation3 + $0x28] sm:$0xf] %vm8004, %v7979
      %8015 = vst.msk [vmem:[#allocation3 + $0x2c] sm:$0xf] %vm8004, %v7980
      %8016 = vst.msk [vmem:[#allocation3 + $0x30] sm:$0xf] %vm8004, %v7981
      %8017 = vst.msk [vmem:[#allocation3 + $0x34] sm:$0xf] %vm8004, %v7982
      %8018 = vst.msk [vmem:[#allocation3 + $0x38] sm:$0xf] %vm8004, %v7983
      %8019 = vst.msk [vmem:[#allocation3 + $0x3c] sm:$0xf] %vm8004, %v7984
      %8020 = vst.msk [vmem:[#allocation3 + $0x40] sm:$0xf] %vm8004, %v7985
      %8021 = vst.msk [vmem:[#allocation3 + $0x44] sm:$0xf] %vm8004, %v7986
      %8022 = vst.msk [vmem:[#allocation3 + $0x48] sm:$0xf] %vm8004, %v7987
      %8023 = vst.msk [vmem:[#allocation3 + $0x4c] sm:$0xf] %vm8004, %v7988
      %8024 = vst.msk [vmem:[#allocation3 + $0x50] sm:$0xf] %vm8004, %v7989
      %8025 = vst.msk [vmem:[#allocation3 + $0x54] sm:$0xf] %vm8004, %v7990
      %8026 = vst.msk [vmem:[#allocation3 + $0x58] sm:$0xf] %vm8004, %v7991
      %8027 = vst.msk [vmem:[#allocation3 + $0x5c] sm:$0xf] %vm8004, %v7992
      %8028 = vst.msk [vmem:[#allocation3 + $0x60] sm:$0xf] %vm8004, %v7993
      %8029 = vst.msk [vmem:[#allocation3 + $0x64] sm:$0xf] %vm8004, %v7994
      %8030 = vst.msk [vmem:[#allocation3 + $0x68] sm:$0xf] %vm8004, %v7995
      %8031 = vst.msk [vmem:[#allocation3 + $0x6c] sm:$0xf] %vm8004, %v7996
      %8032 = vst.msk [vmem:[#allocation3 + $0x70] sm:$0xf] %vm8004, %v7997
      %8033 = vst.msk [vmem:[#allocation3 + $0x74] sm:$0xf] %vm8004, %v7998
      %8034 = vst.msk [vmem:[#allocation3 + $0x78] sm:$0xf] %vm8004, %v7999
      %8035 = vst.msk [vmem:[#allocation3 + $0x7c] sm:$0xf] %vm8004, %v8000
      %8036 = vst.msk [vmem:[#allocation3 + $0x80] sm:$0xf] %vm8004, %v8001
      %8037 = vst.msk [vmem:[#allocation3 + $0x84] sm:$0xf] %vm8004, %v8002
      %8038 = vst.msk [vmem:[#allocation3 + $0x88] sm:$0xf] %vm8004, %v8003
      %8039 = vst.msk [vmem:[#allocation3 + $0x8c] sm:$0xf] %vm8004, 0
      %8040 = vst.msk [vmem:[#allocation3 + $0x90] sm:$0xf] %vm8004, 0
      %s8041 = scalar_lea.vmem %s11, 16
      %v8042 = vld [vmem:[%s8041] sm:$0xf]
      %v8043 = vld [vmem:[#allocation3] sm:$0x8]
      %v8044 = vld [vmem:[#allocation3 + $0x4] sm:$0xf]
      %v8045 = vld [vmem:[#allocation3 + $0x8] sm:$0xf]
      %v8046 = vld [vmem:[#allocation3 + $0xc] sm:$0xf]
      %v8047 = vld [vmem:[#allocation3 + $0x10] sm:$0xf]
      %v8048 = vld [vmem:[#allocation3 + $0x14] sm:$0xf]
      %v8049 = vld [vmem:[#allocation3 + $0x18] sm:$0xf]
      %v8050 = vld [vmem:[#allocation3 + $0x1c] sm:$0xf]
      %v8051 = vld [vmem:[#allocation3 + $0x20] sm:$0xf]
      %v8052 = vld [vmem:[#allocation3 + $0x24] sm:$0xf]
      %v8053 = vld [vmem:[#allocation3 + $0x28] sm:$0xf]
      %v8054 = vld [vmem:[#allocation3 + $0x2c] sm:$0xf]
      %v8055 = vld [vmem:[#allocation3 + $0x30] sm:$0xf]
      %v8056 = vld [vmem:[#allocation3 + $0x34] sm:$0xf]
      %v8057 = vld [vmem:[#allocation3 + $0x38] sm:$0xf]
      %v8058 = vld [vmem:[#allocation3 + $0x3c] sm:$0xf]
      %v8059 = vld [vmem:[#allocation3 + $0x40] sm:$0xf]
      %v8060 = vld [vmem:[#allocation3 + $0x44] sm:$0xf]
      %v8061 = vld [vmem:[#allocation3 + $0x48] sm:$0xf]
      %v8062 = vld [vmem:[#allocation3 + $0x4c] sm:$0xf]
      %v8063 = vld [vmem:[#allocation3 + $0x50] sm:$0xf]
      %v8064 = vld [vmem:[#allocation3 + $0x54] sm:$0xf]
      %v8065 = vld [vmem:[#allocation3 + $0x58] sm:$0xf]
      %v8066 = vld [vmem:[#allocation3 + $0x5c] sm:$0xf]
      %v8067 = vld [vmem:[#allocation3 + $0x60] sm:$0xf]
      %v8068 = vld [vmem:[#allocation3 + $0x64] sm:$0xf]
      %v8069 = vld [vmem:[#allocation3 + $0x68] sm:$0xf]
      %v8070 = vld [vmem:[#allocation3 + $0x6c] sm:$0xf]
      %v8071 = vld [vmem:[#allocation3 + $0x70] sm:$0xf]
      %v8072 = vld [vmem:[#allocation3 + $0x74] sm:$0xf]
      %v8073 = vld [vmem:[#allocation3 + $0x78] sm:$0xf]
      %v8074 = vld [vmem:[#allocation3 + $0x7c] sm:$0xf]
      %v8075 = vld [vmem:[#allocation3 + $0x80] sm:$0xf]
      %v8076 = vsel %vm2586, %v8043, 0
      %v8077 = vsel %vm2593, %v8044, 0
      %v8078 = vsel %vm2600, %v8045, 0
      %v8079 = vsel %vm2607, %v8046, 0
      %v8080 = vsel %vm2614, %v8047, 0
      %v8081 = vsel %vm2621, %v8048, 0
      %v8082 = vsel %vm2628, %v8049, 0
      %v8083 = vsel %vm2635, %v8050, 0
      %v8084 = vsel %vm2642, %v8051, 0
      %v8085 = vsel %vm2649, %v8052, 0
      %v8086 = vsel %vm2656, %v8053, 0
      %v8087 = vsel %vm2663, %v8054, 0
      %v8088 = vsel %vm2670, %v8055, 0
      %v8089 = vsel %vm2677, %v8056, 0
      %v8090 = vsel %vm2684, %v8057, 0
      %v8091 = vsel %vm2691, %v8058, 0
      %v8092 = vsel %vm2698, %v8059, 0
      %v8093 = vsel %vm2705, %v8060, 0
      %v8094 = vsel %vm2712, %v8061, 0
      %v8095 = vsel %vm2719, %v8062, 0
      %v8096 = vsel %vm2726, %v8063, 0
      %v8097 = vsel %vm2733, %v8064, 0
      %v8098 = vsel %vm2740, %v8065, 0
      %v8099 = vsel %vm2747, %v8066, 0
      %v8100 = vsel %vm2754, %v8067, 0
      %v8101 = vsel %vm2761, %v8068, 0
      %v8102 = vsel %vm2768, %v8069, 0
      %v8103 = vsel %vm2775, %v8070, 0
      %v8104 = vsel %vm2782, %v8071, 0
      %v8105 = vsel %vm2789, %v8072, 0
      %v8106 = vsel %vm2796, %v8073, 0
      %v8107 = vsel %vm2803, %v8074, 0
      %v8108 = vsel %vm2810, %v8075, 0
      %v8109 = vld [vmem:[%s11] sm:$0xf]
      %v8143 = vunpack.c.l.b16 %v8076
      %v8144 = vunpack.c.l.b16 %v8077
      %v8145 = vunpack.c.l.b16 %v8078
      %v8146 = vunpack.c.l.b16 %v8079
      %v8147 = vunpack.c.l.b16 %v8080
      %v8148 = vunpack.c.l.b16 %v8081
      %v8149 = vunpack.c.l.b16 %v8082
      %v8150 = vunpack.c.l.b16 %v8083
      %v8151 = vunpack.c.l.b16 %v8084
      %v8152 = vunpack.c.l.b16 %v8085
      %v8153 = vunpack.c.l.b16 %v8086
      %v8154 = vunpack.c.l.b16 %v8087
      %v8155 = vunpack.c.l.b16 %v8088
      %v8156 = vunpack.c.l.b16 %v8089
      %v8157 = vunpack.c.l.b16 %v8090
      %v8158 = vunpack.c.l.b16 %v8091
      %v8159 = vunpack.c.l.b16 %v8092
      %v8160 = vunpack.c.l.b16 %v8093
      %v8161 = vunpack.c.l.b16 %v8094
      %v8162 = vunpack.c.l.b16 %v8095
      %v8163 = vunpack.c.l.b16 %v8096
      %v8164 = vunpack.c.l.b16 %v8097
      %v8165 = vunpack.c.l.b16 %v8098
      %v8166 = vunpack.c.l.b16 %v8099
      %v8167 = vunpack.c.l.b16 %v8100
      %v8168 = vunpack.c.l.b16 %v8101
      %v8169 = vunpack.c.l.b16 %v8102
      %v8170 = vunpack.c.l.b16 %v8103
      %v8171 = vunpack.c.l.b16 %v8104
      %v8172 = vunpack.c.l.b16 %v8105
      %v8173 = vunpack.c.l.b16 %v8106
      %v8174 = vunpack.c.l.b16 %v8107
      %v8175 = vunpack.c.l.b16 %v8108
      %v8176 = vpack.c.b16 %v8144, %v8143
      %v8177 = vpack.c.b16 %v8146, %v8145
      %v8178 = vpack.c.b16 %v8148, %v8147
      %v8179 = vpack.c.b16 %v8150, %v8149
      %v8180 = vpack.c.b16 %v8152, %v8151
      %v8181 = vpack.c.b16 %v8154, %v8153
      %v8182 = vpack.c.b16 %v8156, %v8155
      %v8183 = vpack.c.b16 %v8158, %v8157
      %v8184 = vpack.c.b16 %v8160, %v8159
      %v8185 = vpack.c.b16 %v8162, %v8161
      %v8186 = vpack.c.b16 %v8164, %v8163
      %v8187 = vpack.c.b16 %v8166, %v8165
      %v8188 = vpack.c.b16 %v8168, %v8167
      %v8189 = vpack.c.b16 %v8170, %v8169
      %v8190 = vpack.c.b16 %v8172, %v8171
      %v8191 = vpack.c.b16 %v8174, %v8173
      %v8192 = vpack.c.b16 %v8175, %v8175
      %v8194 = vshrl.u32 %v8176, 16
      %v8196 = vrot.slane %v8194, 3
      %v8197 = vshll.u32 %v8176, 16
      %v8199 = vrot.slane %v8197, 4
      %v8200 = vor.u32 %v8196, %v8199
      %v8202 = vshrl.u32 %v8177, 16
      %v8204 = vrot.slane %v8202, 3
      %v8205 = vshll.u32 %v8177, 16
      %v8207 = vrot.slane %v8205, 4
      %v8208 = vor.u32 %v8204, %v8207
      %v8209 = vsel %vm2928, %v8200, %v8208
      %v8211 = vshrl.u32 %v8178, 16
      %v8213 = vrot.slane %v8211, 3
      %v8214 = vshll.u32 %v8178, 16
      %v8216 = vrot.slane %v8214, 4
      %v8217 = vor.u32 %v8213, %v8216
      %v8218 = vsel %vm2928, %v8208, %v8217
      %v8220 = vshrl.u32 %v8179, 16
      %v8222 = vrot.slane %v8220, 3
      %v8223 = vshll.u32 %v8179, 16
      %v8225 = vrot.slane %v8223, 4
      %v8226 = vor.u32 %v8222, %v8225
      %v8227 = vsel %vm2928, %v8217, %v8226
      %v8229 = vshrl.u32 %v8180, 16
      %v8231 = vrot.slane %v8229, 3
      %v8232 = vshll.u32 %v8180, 16
      %v8234 = vrot.slane %v8232, 4
      %v8235 = vor.u32 %v8231, %v8234
      %v8236 = vsel %vm2928, %v8226, %v8235
      %v8238 = vshrl.u32 %v8181, 16
      %v8240 = vrot.slane %v8238, 3
      %v8241 = vshll.u32 %v8181, 16
      %v8243 = vrot.slane %v8241, 4
      %v8244 = vor.u32 %v8240, %v8243
      %v8245 = vsel %vm2928, %v8235, %v8244
      %v8247 = vshrl.u32 %v8182, 16
      %v8249 = vrot.slane %v8247, 3
      %v8250 = vshll.u32 %v8182, 16
      %v8252 = vrot.slane %v8250, 4
      %v8253 = vor.u32 %v8249, %v8252
      %v8254 = vsel %vm2928, %v8244, %v8253
      %v8256 = vshrl.u32 %v8183, 16
      %v8258 = vrot.slane %v8256, 3
      %v8259 = vshll.u32 %v8183, 16
      %v8261 = vrot.slane %v8259, 4
      %v8262 = vor.u32 %v8258, %v8261
      %v8263 = vsel %vm2928, %v8253, %v8262
      %v8265 = vshrl.u32 %v8184, 16
      %v8267 = vrot.slane %v8265, 3
      %v8268 = vshll.u32 %v8184, 16
      %v8270 = vrot.slane %v8268, 4
      %v8271 = vor.u32 %v8267, %v8270
      %v8272 = vsel %vm2928, %v8262, %v8271
      %v8274 = vshrl.u32 %v8185, 16
      %v8276 = vrot.slane %v8274, 3
      %v8277 = vshll.u32 %v8185, 16
      %v8279 = vrot.slane %v8277, 4
      %v8280 = vor.u32 %v8276, %v8279
      %v8281 = vsel %vm2928, %v8271, %v8280
      %v8283 = vshrl.u32 %v8186, 16
      %v8285 = vrot.slane %v8283, 3
      %v8286 = vshll.u32 %v8186, 16
      %v8288 = vrot.slane %v8286, 4
      %v8289 = vor.u32 %v8285, %v8288
      %v8290 = vsel %vm2928, %v8280, %v8289
      %v8292 = vshrl.u32 %v8187, 16
      %v8294 = vrot.slane %v8292, 3
      %v8295 = vshll.u32 %v8187, 16
      %v8297 = vrot.slane %v8295, 4
      %v8298 = vor.u32 %v8294, %v8297
      %v8299 = vsel %vm2928, %v8289, %v8298
      %v8301 = vshrl.u32 %v8188, 16
      %v8303 = vrot.slane %v8301, 3
      %v8304 = vshll.u32 %v8188, 16
      %v8306 = vrot.slane %v8304, 4
      %v8307 = vor.u32 %v8303, %v8306
      %v8308 = vsel %vm2928, %v8298, %v8307
      %v8310 = vshrl.u32 %v8189, 16
      %v8312 = vrot.slane %v8310, 3
      %v8313 = vshll.u32 %v8189, 16
      %v8315 = vrot.slane %v8313, 4
      %v8316 = vor.u32 %v8312, %v8315
      %v8317 = vsel %vm2928, %v8307, %v8316
      %v8319 = vshrl.u32 %v8190, 16
      %v8321 = vrot.slane %v8319, 3
      %v8322 = vshll.u32 %v8190, 16
      %v8324 = vrot.slane %v8322, 4
      %v8325 = vor.u32 %v8321, %v8324
      %v8326 = vsel %vm2928, %v8316, %v8325
      %v8328 = vshrl.u32 %v8191, 16
      %v8330 = vrot.slane %v8328, 3
      %v8331 = vshll.u32 %v8191, 16
      %v8333 = vrot.slane %v8331, 4
      %v8334 = vor.u32 %v8330, %v8333
      %v8335 = vsel %vm2928, %v8325, %v8334
      %v8337 = vshrl.u32 %v8192, 16
      %v8339 = vrot.slane %v8337, 3
      %v8340 = vshll.u32 %v8192, 16
      %v8342 = vrot.slane %v8340, 4
      %v8343 = vor.u32 %v8339, %v8342
      %v8344 = vsel %vm2928, %v8334, %v8343
      %v8346 = vsel %vm6955, %v8209, 0
      %v8349 = vsel %vm6955, %v8218, 0
      %v8352 = vsel %vm6955, %v8227, 0
      %v8355 = vsel %vm6955, %v8236, 0
      %v8358 = vsel %vm6955, %v8245, 0
      %v8361 = vsel %vm6955, %v8254, 0
      %v8364 = vsel %vm6955, %v8263, 0
      %v8367 = vsel %vm6955, %v8272, 0
      %v8370 = vsel %vm6955, %v8281, 0
      %v8373 = vsel %vm6955, %v8290, 0
      %v8376 = vsel %vm6955, %v8299, 0
      %v8379 = vsel %vm6955, %v8308, 0
      %v8382 = vsel %vm6955, %v8317, 0
      %v8385 = vsel %vm6955, %v8326, 0
      %v8388 = vsel %vm6955, %v8335, 0
      %v8391 = vsel %vm6955, %v8344, 0
      %v8394 = vsel %vm1075, %v8109, 0
      %8396 = vmatpush.bf16.msra.mxu0 0
      %8397 = vmatpush.bf16.msra.mxu0 0
      %8398 = vmatpush.bf16.msra.mxu0 0
      %8399 = vmatpush.bf16.msra.mxu0 0
      %8400 = vmatpush.bf16.msra.mxu0 0
      %8401 = vmatpush.bf16.msra.mxu0 0
      %8402 = vmatpush.bf16.msra.mxu0 0
      %8403 = vmatpush.bf16.msra.mxu0 %v8394
      %8404 = vmatmul.bf16.gmra.mxu0 %v8346
      %v8405 = vpop.f32.mrf.mxu0
      %v8406 = vadd.f32 0.0, %v8405
      %v8407 = vpop.f32.mrf.mxu0
      %v8408 = vadd.f32 0.0, %v8407
      %8409 = vmatmul.bf16.gmra.mxu0 %v8349
      %v8410 = vpop.f32.mrf.mxu0
      %v8411 = vadd.f32 0.0, %v8410
      %v8412 = vpop.f32.mrf.mxu0
      %v8413 = vadd.f32 0.0, %v8412
      %8414 = vmatmul.bf16.gmra.mxu0 %v8352
      %v8415 = vpop.f32.mrf.mxu0
      %v8416 = vadd.f32 0.0, %v8415
      %v8417 = vpop.f32.mrf.mxu0
      %v8418 = vadd.f32 0.0, %v8417
      %8419 = vmatmul.bf16.gmra.mxu0 %v8355
      %v8420 = vpop.f32.mrf.mxu0
      %v8421 = vadd.f32 0.0, %v8420
      %v8422 = vpop.f32.mrf.mxu0
      %v8423 = vadd.f32 0.0, %v8422
      %8424 = vmatmul.bf16.gmra.mxu0 %v8358
      %v8425 = vpop.f32.mrf.mxu0
      %v8426 = vadd.f32 0.0, %v8425
      %v8427 = vpop.f32.mrf.mxu0
      %v8428 = vadd.f32 0.0, %v8427
      %8429 = vmatmul.bf16.gmra.mxu0 %v8361
      %v8430 = vpop.f32.mrf.mxu0
      %v8431 = vadd.f32 0.0, %v8430
      %v8432 = vpop.f32.mrf.mxu0
      %v8433 = vadd.f32 0.0, %v8432
      %8434 = vmatmul.bf16.gmra.mxu0 %v8364
      %v8435 = vpop.f32.mrf.mxu0
      %v8436 = vadd.f32 0.0, %v8435
      %v8437 = vpop.f32.mrf.mxu0
      %v8438 = vadd.f32 0.0, %v8437
      %8439 = vmatmul.bf16.gmra.mxu0 %v8367
      %v8440 = vpop.f32.mrf.mxu0
      %v8441 = vadd.f32 0.0, %v8440
      %v8442 = vpop.f32.mrf.mxu0
      %v8443 = vadd.f32 0.0, %v8442
      %8444 = vmatmul.bf16.gmra.mxu0 %v8370
      %v8445 = vpop.f32.mrf.mxu0
      %v8446 = vadd.f32 0.0, %v8445
      %v8447 = vpop.f32.mrf.mxu0
      %v8448 = vadd.f32 0.0, %v8447
      %8449 = vmatmul.bf16.gmra.mxu0 %v8373
      %v8450 = vpop.f32.mrf.mxu0
      %v8451 = vadd.f32 0.0, %v8450
      %v8452 = vpop.f32.mrf.mxu0
      %v8453 = vadd.f32 0.0, %v8452
      %8454 = vmatmul.bf16.gmra.mxu0 %v8376
      %v8455 = vpop.f32.mrf.mxu0
      %v8456 = vadd.f32 0.0, %v8455
      %v8457 = vpop.f32.mrf.mxu0
      %v8458 = vadd.f32 0.0, %v8457
      %8459 = vmatmul.bf16.gmra.mxu0 %v8379
      %v8460 = vpop.f32.mrf.mxu0
      %v8461 = vadd.f32 0.0, %v8460
      %v8462 = vpop.f32.mrf.mxu0
      %v8463 = vadd.f32 0.0, %v8462
      %8464 = vmatmul.bf16.gmra.mxu0 %v8382
      %v8465 = vpop.f32.mrf.mxu0
      %v8466 = vadd.f32 0.0, %v8465
      %v8467 = vpop.f32.mrf.mxu0
      %v8468 = vadd.f32 0.0, %v8467
      %8469 = vmatmul.bf16.gmra.mxu0 %v8385
      %v8470 = vpop.f32.mrf.mxu0
      %v8471 = vadd.f32 0.0, %v8470
      %v8472 = vpop.f32.mrf.mxu0
      %v8473 = vadd.f32 0.0, %v8472
      %8474 = vmatmul.bf16.gmra.mxu0 %v8388
      %v8475 = vpop.f32.mrf.mxu0
      %v8476 = vadd.f32 0.0, %v8475
      %v8477 = vpop.f32.mrf.mxu0
      %v8478 = vadd.f32 0.0, %v8477
      %8479 = vmatmul.bf16.gmra.mxu0 %v8391
      %v8480 = vpop.f32.mrf.mxu0
      %v8481 = vadd.f32 0.0, %v8480
      %v8482 = vpop.f32.mrf.mxu0
      %v8483 = vadd.f32 0.0, %v8482
      %8484 = vdwg.mxu0
      %v8517 = vunpack.c.l.b16 %v7972
      %v8518 = vunpack.c.l.b16 %v7973
      %v8519 = vunpack.c.l.b16 %v7974
      %v8520 = vunpack.c.l.b16 %v7975
      %v8521 = vunpack.c.l.b16 %v7976
      %v8522 = vunpack.c.l.b16 %v7977
      %v8523 = vunpack.c.l.b16 %v7978
      %v8524 = vunpack.c.l.b16 %v7979
      %v8525 = vunpack.c.l.b16 %v7980
      %v8526 = vunpack.c.l.b16 %v7981
      %v8527 = vunpack.c.l.b16 %v7982
      %v8528 = vunpack.c.l.b16 %v7983
      %v8529 = vunpack.c.l.b16 %v7984
      %v8530 = vunpack.c.l.b16 %v7985
      %v8531 = vunpack.c.l.b16 %v7986
      %v8532 = vunpack.c.l.b16 %v7987
      %v8533 = vunpack.c.l.b16 %v7988
      %v8534 = vunpack.c.l.b16 %v7989
      %v8535 = vunpack.c.l.b16 %v7990
      %v8536 = vunpack.c.l.b16 %v7991
      %v8537 = vunpack.c.l.b16 %v7992
      %v8538 = vunpack.c.l.b16 %v7993
      %v8539 = vunpack.c.l.b16 %v7994
      %v8540 = vunpack.c.l.b16 %v7995
      %v8541 = vunpack.c.l.b16 %v7996
      %v8542 = vunpack.c.l.b16 %v7997
      %v8543 = vunpack.c.l.b16 %v7998
      %v8544 = vunpack.c.l.b16 %v7999
      %v8545 = vunpack.c.l.b16 %v8000
      %v8546 = vunpack.c.l.b16 %v8001
      %v8547 = vunpack.c.l.b16 %v8002
      %v8548 = vunpack.c.l.b16 %v8003
      %v8549 = vpack.c.b16 %v8518, %v8517
      %v8550 = vpack.c.b16 %v8520, %v8519
      %v8551 = vpack.c.b16 %v8522, %v8521
      %v8552 = vpack.c.b16 %v8524, %v8523
      %v8553 = vpack.c.b16 %v8526, %v8525
      %v8554 = vpack.c.b16 %v8528, %v8527
      %v8555 = vpack.c.b16 %v8530, %v8529
      %v8556 = vpack.c.b16 %v8532, %v8531
      %v8557 = vpack.c.b16 %v8534, %v8533
      %v8558 = vpack.c.b16 %v8536, %v8535
      %v8559 = vpack.c.b16 %v8538, %v8537
      %v8560 = vpack.c.b16 %v8540, %v8539
      %v8561 = vpack.c.b16 %v8542, %v8541
      %v8562 = vpack.c.b16 %v8544, %v8543
      %v8563 = vpack.c.b16 %v8546, %v8545
      %v8564 = vpack.c.b16 %v8548, %v8547
      %v8566 = vsel %vm6955, %v8549, 0
      %v8569 = vsel %vm6955, %v8550, 0
      %v8572 = vsel %vm6955, %v8551, 0
      %v8575 = vsel %vm6955, %v8552, 0
      %v8578 = vsel %vm6955, %v8553, 0
      %v8581 = vsel %vm6955, %v8554, 0
      %v8584 = vsel %vm6955, %v8555, 0
      %v8587 = vsel %vm6955, %v8556, 0
      %v8590 = vsel %vm6955, %v8557, 0
      %v8593 = vsel %vm6955, %v8558, 0
      %v8596 = vsel %vm6955, %v8559, 0
      %v8599 = vsel %vm6955, %v8560, 0
      %v8602 = vsel %vm6955, %v8561, 0
      %v8605 = vsel %vm6955, %v8562, 0
      %v8608 = vsel %vm6955, %v8563, 0
      %v8611 = vsel %vm6955, %v8564, 0
      %v8614 = vsel %vm1075, %v8042, 0
      %8616 = vmatpush.bf16.msra.mxu0 0
      %8617 = vmatpush.bf16.msra.mxu0 0
      %8618 = vmatpush.bf16.msra.mxu0 0
      %8619 = vmatpush.bf16.msra.mxu0 0
      %8620 = vmatpush.bf16.msra.mxu0 0
      %8621 = vmatpush.bf16.msra.mxu0 0
      %8622 = vmatpush.bf16.msra.mxu0 0
      %8623 = vmatpush.bf16.msra.mxu0 %v8614
      %8624 = vmatmul.bf16.gmra.mxu0 %v8566
      %v8625 = vpop.f32.mrf.mxu0
      %v8626 = vadd.f32 %v8406, %v8625
      %v8627 = vpop.f32.mrf.mxu0
      %v8628 = vadd.f32 %v8408, %v8627
      %8629 = vmatmul.bf16.gmra.mxu0 %v8569
      %v8630 = vpop.f32.mrf.mxu0
      %v8631 = vadd.f32 %v8411, %v8630
      %v8632 = vpop.f32.mrf.mxu0
      %v8633 = vadd.f32 %v8413, %v8632
      %8634 = vmatmul.bf16.gmra.mxu0 %v8572
      %v8635 = vpop.f32.mrf.mxu0
      %v8636 = vadd.f32 %v8416, %v8635
      %v8637 = vpop.f32.mrf.mxu0
      %v8638 = vadd.f32 %v8418, %v8637
      %8639 = vmatmul.bf16.gmra.mxu0 %v8575
      %v8640 = vpop.f32.mrf.mxu0
      %v8641 = vadd.f32 %v8421, %v8640
      %v8642 = vpop.f32.mrf.mxu0
      %v8643 = vadd.f32 %v8423, %v8642
      %8644 = vmatmul.bf16.gmra.mxu0 %v8578
      %v8645 = vpop.f32.mrf.mxu0
      %v8646 = vadd.f32 %v8426, %v8645
      %v8647 = vpop.f32.mrf.mxu0
      %v8648 = vadd.f32 %v8428, %v8647
      %8649 = vmatmul.bf16.gmra.mxu0 %v8581
      %v8650 = vpop.f32.mrf.mxu0
      %v8651 = vadd.f32 %v8431, %v8650
      %v8652 = vpop.f32.mrf.mxu0
      %v8653 = vadd.f32 %v8433, %v8652
      %8654 = vmatmul.bf16.gmra.mxu0 %v8584
      %v8655 = vpop.f32.mrf.mxu0
      %v8656 = vadd.f32 %v8436, %v8655
      %v8657 = vpop.f32.mrf.mxu0
      %v8658 = vadd.f32 %v8438, %v8657
      %8659 = vmatmul.bf16.gmra.mxu0 %v8587
      %v8660 = vpop.f32.mrf.mxu0
      %v8661 = vadd.f32 %v8441, %v8660
      %v8662 = vpop.f32.mrf.mxu0
      %v8663 = vadd.f32 %v8443, %v8662
      %8664 = vmatmul.bf16.gmra.mxu0 %v8590
      %v8665 = vpop.f32.mrf.mxu0
      %v8666 = vadd.f32 %v8446, %v8665
      %v8667 = vpop.f32.mrf.mxu0
      %v8668 = vadd.f32 %v8448, %v8667
      %8669 = vmatmul.bf16.gmra.mxu0 %v8593
      %v8670 = vpop.f32.mrf.mxu0
      %v8671 = vadd.f32 %v8451, %v8670
      %v8672 = vpop.f32.mrf.mxu0
      %v8673 = vadd.f32 %v8453, %v8672
      %8674 = vmatmul.bf16.gmra.mxu0 %v8596
      %v8675 = vpop.f32.mrf.mxu0
      %v8676 = vadd.f32 %v8456, %v8675
      %v8677 = vpop.f32.mrf.mxu0
      %v8678 = vadd.f32 %v8458, %v8677
      %8679 = vmatmul.bf16.gmra.mxu0 %v8599
      %v8680 = vpop.f32.mrf.mxu0
      %v8681 = vadd.f32 %v8461, %v8680
      %v8682 = vpop.f32.mrf.mxu0
      %v8683 = vadd.f32 %v8463, %v8682
      %8684 = vmatmul.bf16.gmra.mxu0 %v8602
      %v8685 = vpop.f32.mrf.mxu0
      %v8686 = vadd.f32 %v8466, %v8685
      %v8687 = vpop.f32.mrf.mxu0
      %v8688 = vadd.f32 %v8468, %v8687
      %8689 = vmatmul.bf16.gmra.mxu0 %v8605
      %v8690 = vpop.f32.mrf.mxu0
      %v8691 = vadd.f32 %v8471, %v8690
      %v8692 = vpop.f32.mrf.mxu0
      %v8693 = vadd.f32 %v8473, %v8692
      %8694 = vmatmul.bf16.gmra.mxu0 %v8608
      %v8695 = vpop.f32.mrf.mxu0
      %v8696 = vadd.f32 %v8476, %v8695
      %v8697 = vpop.f32.mrf.mxu0
      %v8698 = vadd.f32 %v8478, %v8697
      %8699 = vmatmul.bf16.gmra.mxu0 %v8611
      %v8700 = vpop.f32.mrf.mxu0
      %v8701 = vadd.f32 %v8481, %v8700
      %v8702 = vpop.f32.mrf.mxu0
      %v8703 = vadd.f32 %v8483, %v8702
      %8704 = vdwg.mxu0
      %s8705 = scalar_lea.vmem %s11, 4
      %v8706 = vld [vmem:[%s8705] sm:$0xf]
      %v8739 = vunpack.c.l.b16 %v8044
      %v8740 = vunpack.c.l.b16 %v8045
      %v8741 = vunpack.c.l.b16 %v8046
      %v8742 = vunpack.c.l.b16 %v8047
      %v8743 = vunpack.c.l.b16 %v8048
      %v8744 = vunpack.c.l.b16 %v8049
      %v8745 = vunpack.c.l.b16 %v8050
      %v8746 = vunpack.c.l.b16 %v8051
      %v8747 = vunpack.c.l.b16 %v8052
      %v8748 = vunpack.c.l.b16 %v8053
      %v8749 = vunpack.c.l.b16 %v8054
      %v8750 = vunpack.c.l.b16 %v8055
      %v8751 = vunpack.c.l.b16 %v8056
      %v8752 = vunpack.c.l.b16 %v8057
      %v8753 = vunpack.c.l.b16 %v8058
      %v8754 = vunpack.c.l.b16 %v8059
      %v8755 = vunpack.c.l.b16 %v8060
      %v8756 = vunpack.c.l.b16 %v8061
      %v8757 = vunpack.c.l.b16 %v8062
      %v8758 = vunpack.c.l.b16 %v8063
      %v8759 = vunpack.c.l.b16 %v8064
      %v8760 = vunpack.c.l.b16 %v8065
      %v8761 = vunpack.c.l.b16 %v8066
      %v8762 = vunpack.c.l.b16 %v8067
      %v8763 = vunpack.c.l.b16 %v8068
      %v8764 = vunpack.c.l.b16 %v8069
      %v8765 = vunpack.c.l.b16 %v8070
      %v8766 = vunpack.c.l.b16 %v8071
      %v8767 = vunpack.c.l.b16 %v8072
      %v8768 = vunpack.c.l.b16 %v8073
      %v8769 = vunpack.c.l.b16 %v8074
      %v8770 = vunpack.c.l.b16 %v8075
      %v8771 = vpack.c.b16 %v8740, %v8739
      %v8772 = vpack.c.b16 %v8742, %v8741
      %v8773 = vpack.c.b16 %v8744, %v8743
      %v8774 = vpack.c.b16 %v8746, %v8745
      %v8775 = vpack.c.b16 %v8748, %v8747
      %v8776 = vpack.c.b16 %v8750, %v8749
      %v8777 = vpack.c.b16 %v8752, %v8751
      %v8778 = vpack.c.b16 %v8754, %v8753
      %v8779 = vpack.c.b16 %v8756, %v8755
      %v8780 = vpack.c.b16 %v8758, %v8757
      %v8781 = vpack.c.b16 %v8760, %v8759
      %v8782 = vpack.c.b16 %v8762, %v8761
      %v8783 = vpack.c.b16 %v8764, %v8763
      %v8784 = vpack.c.b16 %v8766, %v8765
      %v8785 = vpack.c.b16 %v8768, %v8767
      %v8786 = vpack.c.b16 %v8770, %v8769
      %v8788 = vsel %vm6955, %v8771, 0
      %v8791 = vsel %vm6955, %v8772, 0
      %v8794 = vsel %vm6955, %v8773, 0
      %v8797 = vsel %vm6955, %v8774, 0
      %v8800 = vsel %vm6955, %v8775, 0
      %v8803 = vsel %vm6955, %v8776, 0
      %v8806 = vsel %vm6955, %v8777, 0
      %v8809 = vsel %vm6955, %v8778, 0
      %v8812 = vsel %vm6955, %v8779, 0
      %v8815 = vsel %vm6955, %v8780, 0
      %v8818 = vsel %vm6955, %v8781, 0
      %v8821 = vsel %vm6955, %v8782, 0
      %v8824 = vsel %vm6955, %v8783, 0
      %v8827 = vsel %vm6955, %v8784, 0
      %v8830 = vsel %vm6955, %v8785, 0
      %v8833 = vsel %vm6955, %v8786, 0
      %v8836 = vsel %vm1075, %v8706, 0
      %8838 = vmatpush.bf16.msra.mxu0 0
      %8839 = vmatpush.bf16.msra.mxu0 0
      %8840 = vmatpush.bf16.msra.mxu0 0
      %8841 = vmatpush.bf16.msra.mxu0 0
      %8842 = vmatpush.bf16.msra.mxu0 0
      %8843 = vmatpush.bf16.msra.mxu0 0
      %8844 = vmatpush.bf16.msra.mxu0 0
      %8845 = vmatpush.bf16.msra.mxu0 %v8836
      %8846 = vmatmul.bf16.gmra.mxu0 %v8788
      %v8847 = vpop.f32.mrf.mxu0
      %v8848 = vadd.f32 0.0, %v8847
      %v8849 = vpop.f32.mrf.mxu0
      %v8850 = vadd.f32 0.0, %v8849
      %8851 = vmatmul.bf16.gmra.mxu0 %v8791
      %v8852 = vpop.f32.mrf.mxu0
      %v8853 = vadd.f32 0.0, %v8852
      %v8854 = vpop.f32.mrf.mxu0
      %v8855 = vadd.f32 0.0, %v8854
      %8856 = vmatmul.bf16.gmra.mxu0 %v8794
      %v8857 = vpop.f32.mrf.mxu0
      %v8858 = vadd.f32 0.0, %v8857
      %v8859 = vpop.f32.mrf.mxu0
      %v8860 = vadd.f32 0.0, %v8859
      %8861 = vmatmul.bf16.gmra.mxu0 %v8797
      %v8862 = vpop.f32.mrf.mxu0
      %v8863 = vadd.f32 0.0, %v8862
      %v8864 = vpop.f32.mrf.mxu0
      %v8865 = vadd.f32 0.0, %v8864
      %8866 = vmatmul.bf16.gmra.mxu0 %v8800
      %v8867 = vpop.f32.mrf.mxu0
      %v8868 = vadd.f32 0.0, %v8867
      %v8869 = vpop.f32.mrf.mxu0
      %v8870 = vadd.f32 0.0, %v8869
      %8871 = vmatmul.bf16.gmra.mxu0 %v8803
      %v8872 = vpop.f32.mrf.mxu0
      %v8873 = vadd.f32 0.0, %v8872
      %v8874 = vpop.f32.mrf.mxu0
      %v8875 = vadd.f32 0.0, %v8874
      %8876 = vmatmul.bf16.gmra.mxu0 %v8806
      %v8877 = vpop.f32.mrf.mxu0
      %v8878 = vadd.f32 0.0, %v8877
      %v8879 = vpop.f32.mrf.mxu0
      %v8880 = vadd.f32 0.0, %v8879
      %8881 = vmatmul.bf16.gmra.mxu0 %v8809
      %v8882 = vpop.f32.mrf.mxu0
      %v8883 = vadd.f32 0.0, %v8882
      %v8884 = vpop.f32.mrf.mxu0
      %v8885 = vadd.f32 0.0, %v8884
      %8886 = vmatmul.bf16.gmra.mxu0 %v8812
      %v8887 = vpop.f32.mrf.mxu0
      %v8888 = vadd.f32 0.0, %v8887
      %v8889 = vpop.f32.mrf.mxu0
      %v8890 = vadd.f32 0.0, %v8889
      %8891 = vmatmul.bf16.gmra.mxu0 %v8815
      %v8892 = vpop.f32.mrf.mxu0
      %v8893 = vadd.f32 0.0, %v8892
      %v8894 = vpop.f32.mrf.mxu0
      %v8895 = vadd.f32 0.0, %v8894
      %8896 = vmatmul.bf16.gmra.mxu0 %v8818
      %v8897 = vpop.f32.mrf.mxu0
      %v8898 = vadd.f32 0.0, %v8897
      %v8899 = vpop.f32.mrf.mxu0
      %v8900 = vadd.f32 0.0, %v8899
      %8901 = vmatmul.bf16.gmra.mxu0 %v8821
      %v8902 = vpop.f32.mrf.mxu0
      %v8903 = vadd.f32 0.0, %v8902
      %v8904 = vpop.f32.mrf.mxu0
      %v8905 = vadd.f32 0.0, %v8904
      %8906 = vmatmul.bf16.gmra.mxu0 %v8824
      %v8907 = vpop.f32.mrf.mxu0
      %v8908 = vadd.f32 0.0, %v8907
      %v8909 = vpop.f32.mrf.mxu0
      %v8910 = vadd.f32 0.0, %v8909
      %8911 = vmatmul.bf16.gmra.mxu0 %v8827
      %v8912 = vpop.f32.mrf.mxu0
      %v8913 = vadd.f32 0.0, %v8912
      %v8914 = vpop.f32.mrf.mxu0
      %v8915 = vadd.f32 0.0, %v8914
      %8916 = vmatmul.bf16.gmra.mxu0 %v8830
      %v8917 = vpop.f32.mrf.mxu0
      %v8918 = vadd.f32 0.0, %v8917
      %v8919 = vpop.f32.mrf.mxu0
      %v8920 = vadd.f32 0.0, %v8919
      %8921 = vmatmul.bf16.gmra.mxu0 %v8833
      %v8922 = vpop.f32.mrf.mxu0
      %v8923 = vadd.f32 0.0, %v8922
      %v8924 = vpop.f32.mrf.mxu0
      %v8925 = vadd.f32 0.0, %v8924
      %8926 = vdwg.mxu0
      %v8927 = vadd.f32 %v8626, %v8848
      %v8928 = vadd.f32 %v8628, %v8850
      %v8929 = vadd.f32 %v8631, %v8853
      %v8930 = vadd.f32 %v8633, %v8855
      %v8931 = vadd.f32 %v8636, %v8858
      %v8932 = vadd.f32 %v8638, %v8860
      %v8933 = vadd.f32 %v8641, %v8863
      %v8934 = vadd.f32 %v8643, %v8865
      %v8935 = vadd.f32 %v8646, %v8868
      %v8936 = vadd.f32 %v8648, %v8870
      %v8937 = vadd.f32 %v8651, %v8873
      %v8938 = vadd.f32 %v8653, %v8875
      %v8939 = vadd.f32 %v8656, %v8878
      %v8940 = vadd.f32 %v8658, %v8880
      %v8941 = vadd.f32 %v8661, %v8883
      %v8942 = vadd.f32 %v8663, %v8885
      %v8943 = vadd.f32 %v8666, %v8888
      %v8944 = vadd.f32 %v8668, %v8890
      %v8945 = vadd.f32 %v8671, %v8893
      %v8946 = vadd.f32 %v8673, %v8895
      %v8947 = vadd.f32 %v8676, %v8898
      %v8948 = vadd.f32 %v8678, %v8900
      %v8949 = vadd.f32 %v8681, %v8903
      %v8950 = vadd.f32 %v8683, %v8905
      %v8951 = vadd.f32 %v8686, %v8908
      %v8952 = vadd.f32 %v8688, %v8910
      %v8953 = vadd.f32 %v8691, %v8913
      %v8954 = vadd.f32 %v8693, %v8915
      %v8955 = vadd.f32 %v8696, %v8918
      %v8956 = vadd.f32 %v8698, %v8920
      %v8957 = vadd.f32 %v8701, %v8923
      %v8958 = vadd.f32 %v8703, %v8925
      %v8959 = vld [vmem:[#allocation3 + $0x4] sm:$0xf]
      %v8960 = vld [vmem:[#allocation3 + $0x8] sm:$0xf]
      %v8961 = vld [vmem:[#allocation3 + $0xc] sm:$0xf]
      %v8962 = vld [vmem:[#allocation3 + $0x10] sm:$0xf]
      %v8963 = vld [vmem:[#allocation3 + $0x14] sm:$0xf]
      %v8964 = vld [vmem:[#allocation3 + $0x18] sm:$0xf]
      %v8965 = vld [vmem:[#allocation3 + $0x1c] sm:$0xf]
      %v8966 = vld [vmem:[#allocation3 + $0x20] sm:$0xf]
      %v8967 = vld [vmem:[#allocation3 + $0x24] sm:$0xf]
      %v8968 = vld [vmem:[#allocation3 + $0x28] sm:$0xf]
      %v8969 = vld [vmem:[#allocation3 + $0x2c] sm:$0xf]
      %v8970 = vld [vmem:[#allocation3 + $0x30] sm:$0xf]
      %v8971 = vld [vmem:[#allocation3 + $0x34] sm:$0xf]
      %v8972 = vld [vmem:[#allocation3 + $0x38] sm:$0xf]
      %v8973 = vld [vmem:[#allocation3 + $0x3c] sm:$0xf]
      %v8974 = vld [vmem:[#allocation3 + $0x40] sm:$0xf]
      %v8975 = vld [vmem:[#allocation3 + $0x44] sm:$0xf]
      %v8976 = vld [vmem:[#allocation3 + $0x48] sm:$0xf]
      %v8977 = vld [vmem:[#allocation3 + $0x4c] sm:$0xf]
      %v8978 = vld [vmem:[#allocation3 + $0x50] sm:$0xf]
      %v8979 = vld [vmem:[#allocation3 + $0x54] sm:$0xf]
      %v8980 = vld [vmem:[#allocation3 + $0x58] sm:$0xf]
      %v8981 = vld [vmem:[#allocation3 + $0x5c] sm:$0xf]
      %v8982 = vld [vmem:[#allocation3 + $0x60] sm:$0xf]
      %v8983 = vld [vmem:[#allocation3 + $0x64] sm:$0xf]
      %v8984 = vld [vmem:[#allocation3 + $0x68] sm:$0xf]
      %v8985 = vld [vmem:[#allocation3 + $0x6c] sm:$0xf]
      %v8986 = vld [vmem:[#allocation3 + $0x70] sm:$0xf]
      %v8987 = vld [vmem:[#allocation3 + $0x74] sm:$0xf]
      %v8988 = vld [vmem:[#allocation3 + $0x78] sm:$0xf]
      %v8989 = vld [vmem:[#allocation3 + $0x7c] sm:$0xf]
      %v8990 = vld [vmem:[#allocation3 + $0x80] sm:$0xf]
      %v8991 = vld [vmem:[#allocation3 + $0x84] sm:$0x1]
      %v8992 = vsel %vm4153, %v8959, 0
      %v8993 = vsel %vm4160, %v8960, 0
      %v8994 = vsel %vm4167, %v8961, 0
      %v8995 = vsel %vm4174, %v8962, 0
      %v8996 = vsel %vm4181, %v8963, 0
      %v8997 = vsel %vm4188, %v8964, 0
      %v8998 = vsel %vm4195, %v8965, 0
      %v8999 = vsel %vm4202, %v8966, 0
      %v9000 = vsel %vm4209, %v8967, 0
      %v9001 = vsel %vm4216, %v8968, 0
      %v9002 = vsel %vm4223, %v8969, 0
      %v9003 = vsel %vm4230, %v8970, 0
      %v9004 = vsel %vm4237, %v8971, 0
      %v9005 = vsel %vm4244, %v8972, 0
      %v9006 = vsel %vm4251, %v8973, 0
      %v9007 = vsel %vm4258, %v8974, 0
      %v9008 = vsel %vm4265, %v8975, 0
      %v9009 = vsel %vm4272, %v8976, 0
      %v9010 = vsel %vm4279, %v8977, 0
      %v9011 = vsel %vm4286, %v8978, 0
      %v9012 = vsel %vm4293, %v8979, 0
      %v9013 = vsel %vm4300, %v8980, 0
      %v9014 = vsel %vm4307, %v8981, 0
      %v9015 = vsel %vm4314, %v8982, 0
      %v9016 = vsel %vm4321, %v8983, 0
      %v9017 = vsel %vm4328, %v8984, 0
      %v9018 = vsel %vm4335, %v8985, 0
      %v9019 = vsel %vm4342, %v8986, 0
      %v9020 = vsel %vm4349, %v8987, 0
      %v9021 = vsel %vm4356, %v8988, 0
      %v9022 = vsel %vm4363, %v8989, 0
      %v9023 = vsel %vm4370, %v8990, 0
      %v9024 = vsel %vm4377, %v8991, 0
      %s9025 = scalar_lea.vmem %s11, 8
      %v9026 = vld [vmem:[%s9025] sm:$0xf]
      %v9060 = vunpack.c.l.b16 %v8992
      %v9061 = vunpack.c.l.b16 %v8993
      %v9062 = vunpack.c.l.b16 %v8994
      %v9063 = vunpack.c.l.b16 %v8995
      %v9064 = vunpack.c.l.b16 %v8996
      %v9065 = vunpack.c.l.b16 %v8997
      %v9066 = vunpack.c.l.b16 %v8998
      %v9067 = vunpack.c.l.b16 %v8999
      %v9068 = vunpack.c.l.b16 %v9000
      %v9069 = vunpack.c.l.b16 %v9001
      %v9070 = vunpack.c.l.b16 %v9002
      %v9071 = vunpack.c.l.b16 %v9003
      %v9072 = vunpack.c.l.b16 %v9004
      %v9073 = vunpack.c.l.b16 %v9005
      %v9074 = vunpack.c.l.b16 %v9006
      %v9075 = vunpack.c.l.b16 %v9007
      %v9076 = vunpack.c.l.b16 %v9008
      %v9077 = vunpack.c.l.b16 %v9009
      %v9078 = vunpack.c.l.b16 %v9010
      %v9079 = vunpack.c.l.b16 %v9011
      %v9080 = vunpack.c.l.b16 %v9012
      %v9081 = vunpack.c.l.b16 %v9013
      %v9082 = vunpack.c.l.b16 %v9014
      %v9083 = vunpack.c.l.b16 %v9015
      %v9084 = vunpack.c.l.b16 %v9016
      %v9085 = vunpack.c.l.b16 %v9017
      %v9086 = vunpack.c.l.b16 %v9018
      %v9087 = vunpack.c.l.b16 %v9019
      %v9088 = vunpack.c.l.b16 %v9020
      %v9089 = vunpack.c.l.b16 %v9021
      %v9090 = vunpack.c.l.b16 %v9022
      %v9091 = vunpack.c.l.b16 %v9023
      %v9092 = vunpack.c.l.b16 %v9024
      %v9093 = vpack.c.b16 %v9061, %v9060
      %v9094 = vpack.c.b16 %v9063, %v9062
      %v9095 = vpack.c.b16 %v9065, %v9064
      %v9096 = vpack.c.b16 %v9067, %v9066
      %v9097 = vpack.c.b16 %v9069, %v9068
      %v9098 = vpack.c.b16 %v9071, %v9070
      %v9099 = vpack.c.b16 %v9073, %v9072
      %v9100 = vpack.c.b16 %v9075, %v9074
      %v9101 = vpack.c.b16 %v9077, %v9076
      %v9102 = vpack.c.b16 %v9079, %v9078
      %v9103 = vpack.c.b16 %v9081, %v9080
      %v9104 = vpack.c.b16 %v9083, %v9082
      %v9105 = vpack.c.b16 %v9085, %v9084
      %v9106 = vpack.c.b16 %v9087, %v9086
      %v9107 = vpack.c.b16 %v9089, %v9088
      %v9108 = vpack.c.b16 %v9091, %v9090
      %v9109 = vpack.c.b16 %v9092, %v9092
      %v9111 = vshrl.u32 %v9093, 16
      %v9113 = vshll.u32 %v9093, 16
      %v9115 = vrot.slane %v9113, 1
      %v9116 = vor.u32 %v9111, %v9115
      %v9118 = vshll.u32 %v9094, 16
      %v9120 = vrot.slane %v9118, 1
      %v9121 = vsel %vm4496, %v9116, %v9120
      %v9122 = vshrl.u32 %v9094, 16
      %v9124 = vor.u32 %v9122, %v9120
      %v9126 = vshll.u32 %v9095, 16
      %v9128 = vrot.slane %v9126, 1
      %v9129 = vsel %vm4496, %v9124, %v9128
      %v9130 = vshrl.u32 %v9095, 16
      %v9132 = vor.u32 %v9130, %v9128
      %v9134 = vshll.u32 %v9096, 16
      %v9136 = vrot.slane %v9134, 1
      %v9137 = vsel %vm4496, %v9132, %v9136
      %v9138 = vshrl.u32 %v9096, 16
      %v9140 = vor.u32 %v9138, %v9136
      %v9142 = vshll.u32 %v9097, 16
      %v9144 = vrot.slane %v9142, 1
      %v9145 = vsel %vm4496, %v9140, %v9144
      %v9146 = vshrl.u32 %v9097, 16
      %v9148 = vor.u32 %v9146, %v9144
      %v9150 = vshll.u32 %v9098, 16
      %v9152 = vrot.slane %v9150, 1
      %v9153 = vsel %vm4496, %v9148, %v9152
      %v9154 = vshrl.u32 %v9098, 16
      %v9156 = vor.u32 %v9154, %v9152
      %v9158 = vshll.u32 %v9099, 16
      %v9160 = vrot.slane %v9158, 1
      %v9161 = vsel %vm4496, %v9156, %v9160
      %v9162 = vshrl.u32 %v9099, 16
      %v9164 = vor.u32 %v9162, %v9160
      %v9166 = vshll.u32 %v9100, 16
      %v9168 = vrot.slane %v9166, 1
      %v9169 = vsel %vm4496, %v9164, %v9168
      %v9170 = vshrl.u32 %v9100, 16
      %v9172 = vor.u32 %v9170, %v9168
      %v9174 = vshll.u32 %v9101, 16
      %v9176 = vrot.slane %v9174, 1
      %v9177 = vsel %vm4496, %v9172, %v9176
      %v9178 = vshrl.u32 %v9101, 16
      %v9180 = vor.u32 %v9178, %v9176
      %v9182 = vshll.u32 %v9102, 16
      %v9184 = vrot.slane %v9182, 1
      %v9185 = vsel %vm4496, %v9180, %v9184
      %v9186 = vshrl.u32 %v9102, 16
      %v9188 = vor.u32 %v9186, %v9184
      %v9190 = vshll.u32 %v9103, 16
      %v9192 = vrot.slane %v9190, 1
      %v9193 = vsel %vm4496, %v9188, %v9192
      %v9194 = vshrl.u32 %v9103, 16
      %v9196 = vor.u32 %v9194, %v9192
      %v9198 = vshll.u32 %v9104, 16
      %v9200 = vrot.slane %v9198, 1
      %v9201 = vsel %vm4496, %v9196, %v9200
      %v9202 = vshrl.u32 %v9104, 16
      %v9204 = vor.u32 %v9202, %v9200
      %v9206 = vshll.u32 %v9105, 16
      %v9208 = vrot.slane %v9206, 1
      %v9209 = vsel %vm4496, %v9204, %v9208
      %v9210 = vshrl.u32 %v9105, 16
      %v9212 = vor.u32 %v9210, %v9208
      %v9214 = vshll.u32 %v9106, 16
      %v9216 = vrot.slane %v9214, 1
      %v9217 = vsel %vm4496, %v9212, %v9216
      %v9218 = vshrl.u32 %v9106, 16
      %v9220 = vor.u32 %v9218, %v9216
      %v9222 = vshll.u32 %v9107, 16
      %v9224 = vrot.slane %v9222, 1
      %v9225 = vsel %vm4496, %v9220, %v9224
      %v9226 = vshrl.u32 %v9107, 16
      %v9228 = vor.u32 %v9226, %v9224
      %v9230 = vshll.u32 %v9108, 16
      %v9232 = vrot.slane %v9230, 1
      %v9233 = vsel %vm4496, %v9228, %v9232
      %v9234 = vshrl.u32 %v9108, 16
      %v9236 = vor.u32 %v9234, %v9232
      %v9238 = vshll.u32 %v9109, 16
      %v9240 = vrot.slane %v9238, 1
      %v9241 = vsel %vm4496, %v9236, %v9240
      %v9243 = vsel %vm6955, %v9121, 0
      %v9246 = vsel %vm6955, %v9129, 0
      %v9249 = vsel %vm6955, %v9137, 0
      %v9252 = vsel %vm6955, %v9145, 0
      %v9255 = vsel %vm6955, %v9153, 0
      %v9258 = vsel %vm6955, %v9161, 0
      %v9261 = vsel %vm6955, %v9169, 0
      %v9264 = vsel %vm6955, %v9177, 0
      %v9267 = vsel %vm6955, %v9185, 0
      %v9270 = vsel %vm6955, %v9193, 0
      %v9273 = vsel %vm6955, %v9201, 0
      %v9276 = vsel %vm6955, %v9209, 0
      %v9279 = vsel %vm6955, %v9217, 0
      %v9282 = vsel %vm6955, %v9225, 0
      %v9285 = vsel %vm6955, %v9233, 0
      %v9288 = vsel %vm6955, %v9241, 0
      %v9291 = vsel %vm1075, %v9026, 0
      %9293 = vmatpush.bf16.msra.mxu0 0
      %9294 = vmatpush.bf16.msra.mxu0 0
      %9295 = vmatpush.bf16.msra.mxu0 0
      %9296 = vmatpush.bf16.msra.mxu0 0
      %9297 = vmatpush.bf16.msra.mxu0 0
      %9298 = vmatpush.bf16.msra.mxu0 0
      %9299 = vmatpush.bf16.msra.mxu0 0
      %9300 = vmatpush.bf16.msra.mxu0 %v9291
      %9301 = vmatmul.bf16.gmra.mxu0 %v9243
      %v9302 = vpop.f32.mrf.mxu0
      %v9303 = vadd.f32 0.0, %v9302
      %v9304 = vpop.f32.mrf.mxu0
      %v9305 = vadd.f32 0.0, %v9304
      %9306 = vmatmul.bf16.gmra.mxu0 %v9246
      %v9307 = vpop.f32.mrf.mxu0
      %v9308 = vadd.f32 0.0, %v9307
      %v9309 = vpop.f32.mrf.mxu0
      %v9310 = vadd.f32 0.0, %v9309
      %9311 = vmatmul.bf16.gmra.mxu0 %v9249
      %v9312 = vpop.f32.mrf.mxu0
      %v9313 = vadd.f32 0.0, %v9312
      %v9314 = vpop.f32.mrf.mxu0
      %v9315 = vadd.f32 0.0, %v9314
      %9316 = vmatmul.bf16.gmra.mxu0 %v9252
      %v9317 = vpop.f32.mrf.mxu0
      %v9318 = vadd.f32 0.0, %v9317
      %v9319 = vpop.f32.mrf.mxu0
      %v9320 = vadd.f32 0.0, %v9319
      %9321 = vmatmul.bf16.gmra.mxu0 %v9255
      %v9322 = vpop.f32.mrf.mxu0
      %v9323 = vadd.f32 0.0, %v9322
      %v9324 = vpop.f32.mrf.mxu0
      %v9325 = vadd.f32 0.0, %v9324
      %9326 = vmatmul.bf16.gmra.mxu0 %v9258
      %v9327 = vpop.f32.mrf.mxu0
      %v9328 = vadd.f32 0.0, %v9327
      %v9329 = vpop.f32.mrf.mxu0
      %v9330 = vadd.f32 0.0, %v9329
      %9331 = vmatmul.bf16.gmra.mxu0 %v9261
      %v9332 = vpop.f32.mrf.mxu0
      %v9333 = vadd.f32 0.0, %v9332
      %v9334 = vpop.f32.mrf.mxu0
      %v9335 = vadd.f32 0.0, %v9334
      %9336 = vmatmul.bf16.gmra.mxu0 %v9264
      %v9337 = vpop.f32.mrf.mxu0
      %v9338 = vadd.f32 0.0, %v9337
      %v9339 = vpop.f32.mrf.mxu0
      %v9340 = vadd.f32 0.0, %v9339
      %9341 = vmatmul.bf16.gmra.mxu0 %v9267
      %v9342 = vpop.f32.mrf.mxu0
      %v9343 = vadd.f32 0.0, %v9342
      %v9344 = vpop.f32.mrf.mxu0
      %v9345 = vadd.f32 0.0, %v9344
      %9346 = vmatmul.bf16.gmra.mxu0 %v9270
      %v9347 = vpop.f32.mrf.mxu0
      %v9348 = vadd.f32 0.0, %v9347
      %v9349 = vpop.f32.mrf.mxu0
      %v9350 = vadd.f32 0.0, %v9349
      %9351 = vmatmul.bf16.gmra.mxu0 %v9273
      %v9352 = vpop.f32.mrf.mxu0
      %v9353 = vadd.f32 0.0, %v9352
      %v9354 = vpop.f32.mrf.mxu0
      %v9355 = vadd.f32 0.0, %v9354
      %9356 = vmatmul.bf16.gmra.mxu0 %v9276
      %v9357 = vpop.f32.mrf.mxu0
      %v9358 = vadd.f32 0.0, %v9357
      %v9359 = vpop.f32.mrf.mxu0
      %v9360 = vadd.f32 0.0, %v9359
      %9361 = vmatmul.bf16.gmra.mxu0 %v9279
      %v9362 = vpop.f32.mrf.mxu0
      %v9363 = vadd.f32 0.0, %v9362
      %v9364 = vpop.f32.mrf.mxu0
      %v9365 = vadd.f32 0.0, %v9364
      %9366 = vmatmul.bf16.gmra.mxu0 %v9282
      %v9367 = vpop.f32.mrf.mxu0
      %v9368 = vadd.f32 0.0, %v9367
      %v9369 = vpop.f32.mrf.mxu0
      %v9370 = vadd.f32 0.0, %v9369
      %9371 = vmatmul.bf16.gmra.mxu0 %v9285
      %v9372 = vpop.f32.mrf.mxu0
      %v9373 = vadd.f32 0.0, %v9372
      %v9374 = vpop.f32.mrf.mxu0
      %v9375 = vadd.f32 0.0, %v9374
      %9376 = vmatmul.bf16.gmra.mxu0 %v9288
      %v9377 = vpop.f32.mrf.mxu0
      %v9378 = vadd.f32 0.0, %v9377
      %v9379 = vpop.f32.mrf.mxu0
      %v9380 = vadd.f32 0.0, %v9379
      %9381 = vdwg.mxu0
      %v9382 = vadd.f32 %v8927, %v9303
      %v9383 = vadd.f32 %v8928, %v9305
      %v9384 = vadd.f32 %v8929, %v9308
      %v9385 = vadd.f32 %v8930, %v9310
      %v9386 = vadd.f32 %v8931, %v9313
      %v9387 = vadd.f32 %v8932, %v9315
      %v9388 = vadd.f32 %v8933, %v9318
      %v9389 = vadd.f32 %v8934, %v9320
      %v9390 = vadd.f32 %v8935, %v9323
      %v9391 = vadd.f32 %v8936, %v9325
      %v9392 = vadd.f32 %v8937, %v9328
      %v9393 = vadd.f32 %v8938, %v9330
      %v9394 = vadd.f32 %v8939, %v9333
      %v9395 = vadd.f32 %v8940, %v9335
      %v9396 = vadd.f32 %v8941, %v9338
      %v9397 = vadd.f32 %v8942, %v9340
      %v9398 = vadd.f32 %v8943, %v9343
      %v9399 = vadd.f32 %v8944, %v9345
      %v9400 = vadd.f32 %v8945, %v9348
      %v9401 = vadd.f32 %v8946, %v9350
      %v9402 = vadd.f32 %v8947, %v9353
      %v9403 = vadd.f32 %v8948, %v9355
      %v9404 = vadd.f32 %v8949, %v9358
      %v9405 = vadd.f32 %v8950, %v9360
      %v9406 = vadd.f32 %v8951, %v9363
      %v9407 = vadd.f32 %v8952, %v9365
      %v9408 = vadd.f32 %v8953, %v9368
      %v9409 = vadd.f32 %v8954, %v9370
      %v9410 = vadd.f32 %v8955, %v9373
      %v9411 = vadd.f32 %v8956, %v9375
      %v9412 = vadd.f32 %v8957, %v9378
      %v9413 = vadd.f32 %v8958, %v9380
      %v9414 = vld [vmem:[#allocation3 + $0x8] sm:$0x8]
      %v9415 = vld [vmem:[#allocation3 + $0xc] sm:$0xf]
      %v9416 = vld [vmem:[#allocation3 + $0x10] sm:$0xf]
      %v9417 = vld [vmem:[#allocation3 + $0x14] sm:$0xf]
      %v9418 = vld [vmem:[#allocation3 + $0x18] sm:$0xf]
      %v9419 = vld [vmem:[#allocation3 + $0x1c] sm:$0xf]
      %v9420 = vld [vmem:[#allocation3 + $0x20] sm:$0xf]
      %v9421 = vld [vmem:[#allocation3 + $0x24] sm:$0xf]
      %v9422 = vld [vmem:[#allocation3 + $0x28] sm:$0xf]
      %v9423 = vld [vmem:[#allocation3 + $0x2c] sm:$0xf]
      %v9424 = vld [vmem:[#allocation3 + $0x30] sm:$0xf]
      %v9425 = vld [vmem:[#allocation3 + $0x34] sm:$0xf]
      %v9426 = vld [vmem:[#allocation3 + $0x38] sm:$0xf]
      %v9427 = vld [vmem:[#allocation3 + $0x3c] sm:$0xf]
      %v9428 = vld [vmem:[#allocation3 + $0x40] sm:$0xf]
      %v9429 = vld [vmem:[#allocation3 + $0x44] sm:$0xf]
      %v9430 = vld [vmem:[#allocation3 + $0x48] sm:$0xf]
      %v9431 = vld [vmem:[#allocation3 + $0x4c] sm:$0xf]
      %v9432 = vld [vmem:[#allocation3 + $0x50] sm:$0xf]
      %v9433 = vld [vmem:[#allocation3 + $0x54] sm:$0xf]
      %v9434 = vld [vmem:[#allocation3 + $0x58] sm:$0xf]
      %v9435 = vld [vmem:[#allocation3 + $0x5c] sm:$0xf]
      %v9436 = vld [vmem:[#allocation3 + $0x60] sm:$0xf]
      %v9437 = vld [vmem:[#allocation3 + $0x64] sm:$0xf]
      %v9438 = vld [vmem:[#allocation3 + $0x68] sm:$0xf]
      %v9439 = vld [vmem:[#allocation3 + $0x6c] sm:$0xf]
      %v9440 = vld [vmem:[#allocation3 + $0x70] sm:$0xf]
      %v9441 = vld [vmem:[#allocation3 + $0x74] sm:$0xf]
      %v9442 = vld [vmem:[#allocation3 + $0x78] sm:$0xf]
      %v9443 = vld [vmem:[#allocation3 + $0x7c] sm:$0xf]
      %v9444 = vld [vmem:[#allocation3 + $0x80] sm:$0xf]
      %v9445 = vld [vmem:[#allocation3 + $0x84] sm:$0xf]
      %v9446 = vld [vmem:[#allocation3 + $0x88] sm:$0xf]
      %v9447 = vsel %vm2586, %v9414, 0
      %v9448 = vsel %vm2593, %v9415, 0
      %v9449 = vsel %vm2600, %v9416, 0
      %v9450 = vsel %vm2607, %v9417, 0
      %v9451 = vsel %vm2614, %v9418, 0
      %v9452 = vsel %vm2621, %v9419, 0
      %v9453 = vsel %vm2628, %v9420, 0
      %v9454 = vsel %vm2635, %v9421, 0
      %v9455 = vsel %vm2642, %v9422, 0
      %v9456 = vsel %vm2649, %v9423, 0
      %v9457 = vsel %vm2656, %v9424, 0
      %v9458 = vsel %vm2663, %v9425, 0
      %v9459 = vsel %vm2670, %v9426, 0
      %v9460 = vsel %vm2677, %v9427, 0
      %v9461 = vsel %vm2684, %v9428, 0
      %v9462 = vsel %vm2691, %v9429, 0
      %v9463 = vsel %vm2698, %v9430, 0
      %v9464 = vsel %vm2705, %v9431, 0
      %v9465 = vsel %vm2712, %v9432, 0
      %v9466 = vsel %vm2719, %v9433, 0
      %v9467 = vsel %vm2726, %v9434, 0
      %v9468 = vsel %vm2733, %v9435, 0
      %v9469 = vsel %vm2740, %v9436, 0
      %v9470 = vsel %vm2747, %v9437, 0
      %v9471 = vsel %vm2754, %v9438, 0
      %v9472 = vsel %vm2761, %v9439, 0
      %v9473 = vsel %vm2768, %v9440, 0
      %v9474 = vsel %vm2775, %v9441, 0
      %v9475 = vsel %vm2782, %v9442, 0
      %v9476 = vsel %vm2789, %v9443, 0
      %v9477 = vsel %vm2796, %v9444, 0
      %v9478 = vsel %vm2803, %v9445, 0
      %v9479 = vsel %vm2810, %v9446, 0
      %s9480 = scalar_lea.vmem %s11, 12
      %v9481 = vld [vmem:[%s9480] sm:$0xf]
      %v9515 = vunpack.c.l.b16 %v9447
      %v9516 = vunpack.c.l.b16 %v9448
      %v9517 = vunpack.c.l.b16 %v9449
      %v9518 = vunpack.c.l.b16 %v9450
      %v9519 = vunpack.c.l.b16 %v9451
      %v9520 = vunpack.c.l.b16 %v9452
      %v9521 = vunpack.c.l.b16 %v9453
      %v9522 = vunpack.c.l.b16 %v9454
      %v9523 = vunpack.c.l.b16 %v9455
      %v9524 = vunpack.c.l.b16 %v9456
      %v9525 = vunpack.c.l.b16 %v9457
      %v9526 = vunpack.c.l.b16 %v9458
      %v9527 = vunpack.c.l.b16 %v9459
      %v9528 = vunpack.c.l.b16 %v9460
      %v9529 = vunpack.c.l.b16 %v9461
      %v9530 = vunpack.c.l.b16 %v9462
      %v9531 = vunpack.c.l.b16 %v9463
      %v9532 = vunpack.c.l.b16 %v9464
      %v9533 = vunpack.c.l.b16 %v9465
      %v9534 = vunpack.c.l.b16 %v9466
      %v9535 = vunpack.c.l.b16 %v9467
      %v9536 = vunpack.c.l.b16 %v9468
      %v9537 = vunpack.c.l.b16 %v9469
      %v9538 = vunpack.c.l.b16 %v9470
      %v9539 = vunpack.c.l.b16 %v9471
      %v9540 = vunpack.c.l.b16 %v9472
      %v9541 = vunpack.c.l.b16 %v9473
      %v9542 = vunpack.c.l.b16 %v9474
      %v9543 = vunpack.c.l.b16 %v9475
      %v9544 = vunpack.c.l.b16 %v9476
      %v9545 = vunpack.c.l.b16 %v9477
      %v9546 = vunpack.c.l.b16 %v9478
      %v9547 = vunpack.c.l.b16 %v9479
      %v9548 = vpack.c.b16 %v9516, %v9515
      %v9549 = vpack.c.b16 %v9518, %v9517
      %v9550 = vpack.c.b16 %v9520, %v9519
      %v9551 = vpack.c.b16 %v9522, %v9521
      %v9552 = vpack.c.b16 %v9524, %v9523
      %v9553 = vpack.c.b16 %v9526, %v9525
      %v9554 = vpack.c.b16 %v9528, %v9527
      %v9555 = vpack.c.b16 %v9530, %v9529
      %v9556 = vpack.c.b16 %v9532, %v9531
      %v9557 = vpack.c.b16 %v9534, %v9533
      %v9558 = vpack.c.b16 %v9536, %v9535
      %v9559 = vpack.c.b16 %v9538, %v9537
      %v9560 = vpack.c.b16 %v9540, %v9539
      %v9561 = vpack.c.b16 %v9542, %v9541
      %v9562 = vpack.c.b16 %v9544, %v9543
      %v9563 = vpack.c.b16 %v9546, %v9545
      %v9564 = vpack.c.b16 %v9547, %v9547
      %v9566 = vshrl.u32 %v9548, 16
      %v9568 = vrot.slane %v9566, 3
      %v9569 = vshll.u32 %v9548, 16
      %v9571 = vrot.slane %v9569, 4
      %v9572 = vor.u32 %v9568, %v9571
      %v9574 = vshrl.u32 %v9549, 16
      %v9576 = vrot.slane %v9574, 3
      %v9577 = vshll.u32 %v9549, 16
      %v9579 = vrot.slane %v9577, 4
      %v9580 = vor.u32 %v9576, %v9579
      %v9581 = vsel %vm2928, %v9572, %v9580
      %v9583 = vshrl.u32 %v9550, 16
      %v9585 = vrot.slane %v9583, 3
      %v9586 = vshll.u32 %v9550, 16
      %v9588 = vrot.slane %v9586, 4
      %v9589 = vor.u32 %v9585, %v9588
      %v9590 = vsel %vm2928, %v9580, %v9589
      %v9592 = vshrl.u32 %v9551, 16
      %v9594 = vrot.slane %v9592, 3
      %v9595 = vshll.u32 %v9551, 16
      %v9597 = vrot.slane %v9595, 4
      %v9598 = vor.u32 %v9594, %v9597
      %v9599 = vsel %vm2928, %v9589, %v9598
      %v9601 = vshrl.u32 %v9552, 16
      %v9603 = vrot.slane %v9601, 3
      %v9604 = vshll.u32 %v9552, 16
      %v9606 = vrot.slane %v9604, 4
      %v9607 = vor.u32 %v9603, %v9606
      %v9608 = vsel %vm2928, %v9598, %v9607
      %v9610 = vshrl.u32 %v9553, 16
      %v9612 = vrot.slane %v9610, 3
      %v9613 = vshll.u32 %v9553, 16
      %v9615 = vrot.slane %v9613, 4
      %v9616 = vor.u32 %v9612, %v9615
      %v9617 = vsel %vm2928, %v9607, %v9616
      %v9619 = vshrl.u32 %v9554, 16
      %v9621 = vrot.slane %v9619, 3
      %v9622 = vshll.u32 %v9554, 16
      %v9624 = vrot.slane %v9622, 4
      %v9625 = vor.u32 %v9621, %v9624
      %v9626 = vsel %vm2928, %v9616, %v9625
      %v9628 = vshrl.u32 %v9555, 16
      %v9630 = vrot.slane %v9628, 3
      %v9631 = vshll.u32 %v9555, 16
      %v9633 = vrot.slane %v9631, 4
      %v9634 = vor.u32 %v9630, %v9633
      %v9635 = vsel %vm2928, %v9625, %v9634
      %v9637 = vshrl.u32 %v9556, 16
      %v9639 = vrot.slane %v9637, 3
      %v9640 = vshll.u32 %v9556, 16
      %v9642 = vrot.slane %v9640, 4
      %v9643 = vor.u32 %v9639, %v9642
      %v9644 = vsel %vm2928, %v9634, %v9643
      %v9646 = vshrl.u32 %v9557, 16
      %v9648 = vrot.slane %v9646, 3
      %v9649 = vshll.u32 %v9557, 16
      %v9651 = vrot.slane %v9649, 4
      %v9652 = vor.u32 %v9648, %v9651
      %v9653 = vsel %vm2928, %v9643, %v9652
      %v9655 = vshrl.u32 %v9558, 16
      %v9657 = vrot.slane %v9655, 3
      %v9658 = vshll.u32 %v9558, 16
      %v9660 = vrot.slane %v9658, 4
      %v9661 = vor.u32 %v9657, %v9660
      %v9662 = vsel %vm2928, %v9652, %v9661
      %v9664 = vshrl.u32 %v9559, 16
      %v9666 = vrot.slane %v9664, 3
      %v9667 = vshll.u32 %v9559, 16
      %v9669 = vrot.slane %v9667, 4
      %v9670 = vor.u32 %v9666, %v9669
      %v9671 = vsel %vm2928, %v9661, %v9670
      %v9673 = vshrl.u32 %v9560, 16
      %v9675 = vrot.slane %v9673, 3
      %v9676 = vshll.u32 %v9560, 16
      %v9678 = vrot.slane %v9676, 4
      %v9679 = vor.u32 %v9675, %v9678
      %v9680 = vsel %vm2928, %v9670, %v9679
      %v9682 = vshrl.u32 %v9561, 16
      %v9684 = vrot.slane %v9682, 3
      %v9685 = vshll.u32 %v9561, 16
      %v9687 = vrot.slane %v9685, 4
      %v9688 = vor.u32 %v9684, %v9687
      %v9689 = vsel %vm2928, %v9679, %v9688
      %v9691 = vshrl.u32 %v9562, 16
      %v9693 = vrot.slane %v9691, 3
      %v9694 = vshll.u32 %v9562, 16
      %v9696 = vrot.slane %v9694, 4
      %v9697 = vor.u32 %v9693, %v9696
      %v9698 = vsel %vm2928, %v9688, %v9697
      %v9700 = vshrl.u32 %v9563, 16
      %v9702 = vrot.slane %v9700, 3
      %v9703 = vshll.u32 %v9563, 16
      %v9705 = vrot.slane %v9703, 4
      %v9706 = vor.u32 %v9702, %v9705
      %v9707 = vsel %vm2928, %v9697, %v9706
      %v9709 = vshrl.u32 %v9564, 16
      %v9711 = vrot.slane %v9709, 3
      %v9712 = vshll.u32 %v9564, 16
      %v9714 = vrot.slane %v9712, 4
      %v9715 = vor.u32 %v9711, %v9714
      %v9716 = vsel %vm2928, %v9706, %v9715
      %v9718 = vsel %vm6955, %v9581, 0
      %v9721 = vsel %vm6955, %v9590, 0
      %v9724 = vsel %vm6955, %v9599, 0
      %v9727 = vsel %vm6955, %v9608, 0
      %v9730 = vsel %vm6955, %v9617, 0
      %v9733 = vsel %vm6955, %v9626, 0
      %v9736 = vsel %vm6955, %v9635, 0
      %v9739 = vsel %vm6955, %v9644, 0
      %v9742 = vsel %vm6955, %v9653, 0
      %v9745 = vsel %vm6955, %v9662, 0
      %v9748 = vsel %vm6955, %v9671, 0
      %v9751 = vsel %vm6955, %v9680, 0
      %v9754 = vsel %vm6955, %v9689, 0
      %v9757 = vsel %vm6955, %v9698, 0
      %v9760 = vsel %vm6955, %v9707, 0
      %v9763 = vsel %vm6955, %v9716, 0
      %v9766 = vsel %vm1075, %v9481, 0
      %9768 = vmatpush.bf16.msra.mxu0 0
      %9769 = vmatpush.bf16.msra.mxu0 0
      %9770 = vmatpush.bf16.msra.mxu0 0
      %9771 = vmatpush.bf16.msra.mxu0 0
      %9772 = vmatpush.bf16.msra.mxu0 0
      %9773 = vmatpush.bf16.msra.mxu0 0
      %9774 = vmatpush.bf16.msra.mxu0 0
      %9775 = vmatpush.bf16.msra.mxu0 %v9766
      %9776 = vmatmul.bf16.gmra.mxu0 %v9718
      %v9777 = vpop.f32.mrf.mxu0
      %v9778 = vadd.f32 0.0, %v9777
      %v9779 = vpop.f32.mrf.mxu0
      %v9780 = vadd.f32 0.0, %v9779
      %9781 = vmatmul.bf16.gmra.mxu0 %v9721
      %v9782 = vpop.f32.mrf.mxu0
      %v9783 = vadd.f32 0.0, %v9782
      %v9784 = vpop.f32.mrf.mxu0
      %v9785 = vadd.f32 0.0, %v9784
      %9786 = vmatmul.bf16.gmra.mxu0 %v9724
      %v9787 = vpop.f32.mrf.mxu0
      %v9788 = vadd.f32 0.0, %v9787
      %v9789 = vpop.f32.mrf.mxu0
      %v9790 = vadd.f32 0.0, %v9789
      %9791 = vmatmul.bf16.gmra.mxu0 %v9727
      %v9792 = vpop.f32.mrf.mxu0
      %v9793 = vadd.f32 0.0, %v9792
      %v9794 = vpop.f32.mrf.mxu0
      %v9795 = vadd.f32 0.0, %v9794
      %9796 = vmatmul.bf16.gmra.mxu0 %v9730
      %v9797 = vpop.f32.mrf.mxu0
      %v9798 = vadd.f32 0.0, %v9797
      %v9799 = vpop.f32.mrf.mxu0
      %v9800 = vadd.f32 0.0, %v9799
      %9801 = vmatmul.bf16.gmra.mxu0 %v9733
      %v9802 = vpop.f32.mrf.mxu0
      %v9803 = vadd.f32 0.0, %v9802
      %v9804 = vpop.f32.mrf.mxu0
      %v9805 = vadd.f32 0.0, %v9804
      %9806 = vmatmul.bf16.gmra.mxu0 %v9736
      %v9807 = vpop.f32.mrf.mxu0
      %v9808 = vadd.f32 0.0, %v9807
      %v9809 = vpop.f32.mrf.mxu0
      %v9810 = vadd.f32 0.0, %v9809
      %9811 = vmatmul.bf16.gmra.mxu0 %v9739
      %v9812 = vpop.f32.mrf.mxu0
      %v9813 = vadd.f32 0.0, %v9812
      %v9814 = vpop.f32.mrf.mxu0
      %v9815 = vadd.f32 0.0, %v9814
      %9816 = vmatmul.bf16.gmra.mxu0 %v9742
      %v9817 = vpop.f32.mrf.mxu0
      %v9818 = vadd.f32 0.0, %v9817
      %v9819 = vpop.f32.mrf.mxu0
      %v9820 = vadd.f32 0.0, %v9819
      %9821 = vmatmul.bf16.gmra.mxu0 %v9745
      %v9822 = vpop.f32.mrf.mxu0
      %v9823 = vadd.f32 0.0, %v9822
      %v9824 = vpop.f32.mrf.mxu0
      %v9825 = vadd.f32 0.0, %v9824
      %9826 = vmatmul.bf16.gmra.mxu0 %v9748
      %v9827 = vpop.f32.mrf.mxu0
      %v9828 = vadd.f32 0.0, %v9827
      %v9829 = vpop.f32.mrf.mxu0
      %v9830 = vadd.f32 0.0, %v9829
      %9831 = vmatmul.bf16.gmra.mxu0 %v9751
      %v9832 = vpop.f32.mrf.mxu0
      %v9833 = vadd.f32 0.0, %v9832
      %v9834 = vpop.f32.mrf.mxu0
      %v9835 = vadd.f32 0.0, %v9834
      %9836 = vmatmul.bf16.gmra.mxu0 %v9754
      %v9837 = vpop.f32.mrf.mxu0
      %v9838 = vadd.f32 0.0, %v9837
      %v9839 = vpop.f32.mrf.mxu0
      %v9840 = vadd.f32 0.0, %v9839
      %9841 = vmatmul.bf16.gmra.mxu0 %v9757
      %v9842 = vpop.f32.mrf.mxu0
      %v9843 = vadd.f32 0.0, %v9842
      %v9844 = vpop.f32.mrf.mxu0
      %v9845 = vadd.f32 0.0, %v9844
      %9846 = vmatmul.bf16.gmra.mxu0 %v9760
      %v9847 = vpop.f32.mrf.mxu0
      %v9848 = vadd.f32 0.0, %v9847
      %v9849 = vpop.f32.mrf.mxu0
      %v9850 = vadd.f32 0.0, %v9849
      %9851 = vmatmul.bf16.gmra.mxu0 %v9763
      %v9852 = vpop.f32.mrf.mxu0
      %v9853 = vadd.f32 0.0, %v9852
      %v9854 = vpop.f32.mrf.mxu0
      %v9855 = vadd.f32 0.0, %v9854
      %9856 = vdwg.mxu0
      %v9857 = vadd.f32 %v9382, %v9778
      %v9858 = vadd.f32 %v9383, %v9780
      %v9859 = vadd.f32 %v9384, %v9783
      %v9860 = vadd.f32 %v9385, %v9785
      %v9861 = vadd.f32 %v9386, %v9788
      %v9862 = vadd.f32 %v9387, %v9790
      %v9863 = vadd.f32 %v9388, %v9793
      %v9864 = vadd.f32 %v9389, %v9795
      %v9865 = vadd.f32 %v9390, %v9798
      %v9866 = vadd.f32 %v9391, %v9800
      %v9867 = vadd.f32 %v9392, %v9803
      %v9868 = vadd.f32 %v9393, %v9805
      %v9869 = vadd.f32 %v9394, %v9808
      %v9870 = vadd.f32 %v9395, %v9810
      %v9871 = vadd.f32 %v9396, %v9813
      %v9872 = vadd.f32 %v9397, %v9815
      %v9873 = vadd.f32 %v9398, %v9818
      %v9874 = vadd.f32 %v9399, %v9820
      %v9875 = vadd.f32 %v9400, %v9823
      %v9876 = vadd.f32 %v9401, %v9825
      %v9877 = vadd.f32 %v9402, %v9828
      %v9878 = vadd.f32 %v9403, %v9830
      %v9879 = vadd.f32 %v9404, %v9833
      %v9880 = vadd.f32 %v9405, %v9835
      %v9881 = vadd.f32 %v9406, %v9838
      %v9882 = vadd.f32 %v9407, %v9840
      %v9883 = vadd.f32 %v9408, %v9843
      %v9884 = vadd.f32 %v9409, %v9845
      %v9885 = vadd.f32 %v9410, %v9848
      %v9886 = vadd.f32 %v9411, %v9850
      %v9887 = vadd.f32 %v9412, %v9853
      %v9888 = vadd.f32 %v9413, %v9855
      %v9889 = vld [vmem:[#allocation3 + $0xc] sm:$0xf]
      %v9890 = vld [vmem:[#allocation3 + $0x10] sm:$0xf]
      %v9891 = vld [vmem:[#allocation3 + $0x14] sm:$0xf]
      %v9892 = vld [vmem:[#allocation3 + $0x18] sm:$0xf]
      %v9893 = vld [vmem:[#allocation3 + $0x1c] sm:$0xf]
      %v9894 = vld [vmem:[#allocation3 + $0x20] sm:$0xf]
      %v9895 = vld [vmem:[#allocation3 + $0x24] sm:$0xf]
      %v9896 = vld [vmem:[#allocation3 + $0x28] sm:$0xf]
      %v9897 = vld [vmem:[#allocation3 + $0x2c] sm:$0xf]
      %v9898 = vld [vmem:[#allocation3 + $0x30] sm:$0xf]
      %v9899 = vld [vmem:[#allocation3 + $0x34] sm:$0xf]
      %v9900 = vld [vmem:[#allocation3 + $0x38] sm:$0xf]
      %v9901 = vld [vmem:[#allocation3 + $0x3c] sm:$0xf]
      %v9902 = vld [vmem:[#allocation3 + $0x40] sm:$0xf]
      %v9903 = vld [vmem:[#allocation3 + $0x44] sm:$0xf]
      %v9904 = vld [vmem:[#allocation3 + $0x48] sm:$0xf]
      %v9905 = vld [vmem:[#allocation3 + $0x4c] sm:$0xf]
      %v9906 = vld [vmem:[#allocation3 + $0x50] sm:$0xf]
      %v9907 = vld [vmem:[#allocation3 + $0x54] sm:$0xf]
      %v9908 = vld [vmem:[#allocation3 + $0x58] sm:$0xf]
      %v9909 = vld [vmem:[#allocation3 + $0x5c] sm:$0xf]
      %v9910 = vld [vmem:[#allocation3 + $0x60] sm:$0xf]
      %v9911 = vld [vmem:[#allocation3 + $0x64] sm:$0xf]
      %v9912 = vld [vmem:[#allocation3 + $0x68] sm:$0xf]
      %v9913 = vld [vmem:[#allocation3 + $0x6c] sm:$0xf]
      %v9914 = vld [vmem:[#allocation3 + $0x70] sm:$0xf]
      %v9915 = vld [vmem:[#allocation3 + $0x74] sm:$0xf]
      %v9916 = vld [vmem:[#allocation3 + $0x78] sm:$0xf]
      %v9917 = vld [vmem:[#allocation3 + $0x7c] sm:$0xf]
      %v9918 = vld [vmem:[#allocation3 + $0x80] sm:$0xf]
      %v9919 = vld [vmem:[#allocation3 + $0x84] sm:$0xf]
      %v9920 = vld [vmem:[#allocation3 + $0x88] sm:$0xf]
      %v9921 = vld [vmem:[#allocation3 + $0x8c] sm:$0x1]
      %v9922 = vsel %vm4153, %v9889, 0
      %v9923 = vsel %vm4160, %v9890, 0
      %v9924 = vsel %vm4167, %v9891, 0
      %v9925 = vsel %vm4174, %v9892, 0
      %v9926 = vsel %vm4181, %v9893, 0
      %v9927 = vsel %vm4188, %v9894, 0
      %v9928 = vsel %vm4195, %v9895, 0
      %v9929 = vsel %vm4202, %v9896, 0
      %v9930 = vsel %vm4209, %v9897, 0
      %v9931 = vsel %vm4216, %v9898, 0
      %v9932 = vsel %vm4223, %v9899, 0
      %v9933 = vsel %vm4230, %v9900, 0
      %v9934 = vsel %vm4237, %v9901, 0
      %v9935 = vsel %vm4244, %v9902, 0
      %v9936 = vsel %vm4251, %v9903, 0
      %v9937 = vsel %vm4258, %v9904, 0
      %v9938 = vsel %vm4265, %v9905, 0
      %v9939 = vsel %vm4272, %v9906, 0
      %v9940 = vsel %vm4279, %v9907, 0
      %v9941 = vsel %vm4286, %v9908, 0
      %v9942 = vsel %vm4293, %v9909, 0
      %v9943 = vsel %vm4300, %v9910, 0
      %v9944 = vsel %vm4307, %v9911, 0
      %v9945 = vsel %vm4314, %v9912, 0
      %v9946 = vsel %vm4321, %v9913, 0
      %v9947 = vsel %vm4328, %v9914, 0
      %v9948 = vsel %vm4335, %v9915, 0
      %v9949 = vsel %vm4342, %v9916, 0
      %v9950 = vsel %vm4349, %v9917, 0
      %v9951 = vsel %vm4356, %v9918, 0
      %v9952 = vsel %vm4363, %v9919, 0
      %v9953 = vsel %vm4370, %v9920, 0
      %v9954 = vsel %vm4377, %v9921, 0
      %s9955 = scalar_lea.vmem %s11, 20
      %v9956 = vld [vmem:[%s9955] sm:$0xf]
      %v9990 = vunpack.c.l.b16 %v9922
      %v9991 = vunpack.c.l.b16 %v9923
      %v9992 = vunpack.c.l.b16 %v9924
      %v9993 = vunpack.c.l.b16 %v9925
      %v9994 = vunpack.c.l.b16 %v9926
      %v9995 = vunpack.c.l.b16 %v9927
      %v9996 = vunpack.c.l.b16 %v9928
      %v9997 = vunpack.c.l.b16 %v9929
      %v9998 = vunpack.c.l.b16 %v9930
      %v9999 = vunpack.c.l.b16 %v9931
      %v10000 = vunpack.c.l.b16 %v9932
      %v10001 = vunpack.c.l.b16 %v9933
      %v10002 = vunpack.c.l.b16 %v9934
      %v10003 = vunpack.c.l.b16 %v9935
      %v10004 = vunpack.c.l.b16 %v9936
      %v10005 = vunpack.c.l.b16 %v9937
      %v10006 = vunpack.c.l.b16 %v9938
      %v10007 = vunpack.c.l.b16 %v9939
      %v10008 = vunpack.c.l.b16 %v9940
      %v10009 = vunpack.c.l.b16 %v9941
      %v10010 = vunpack.c.l.b16 %v9942
      %v10011 = vunpack.c.l.b16 %v9943
      %v10012 = vunpack.c.l.b16 %v9944
      %v10013 = vunpack.c.l.b16 %v9945
      %v10014 = vunpack.c.l.b16 %v9946
      %v10015 = vunpack.c.l.b16 %v9947
      %v10016 = vunpack.c.l.b16 %v9948
      %v10017 = vunpack.c.l.b16 %v9949
      %v10018 = vunpack.c.l.b16 %v9950
      %v10019 = vunpack.c.l.b16 %v9951
      %v10020 = vunpack.c.l.b16 %v9952
      %v10021 = vunpack.c.l.b16 %v9953
      %v10022 = vunpack.c.l.b16 %v9954
      %v10023 = vpack.c.b16 %v9991, %v9990
      %v10024 = vpack.c.b16 %v9993, %v9992
      %v10025 = vpack.c.b16 %v9995, %v9994
      %v10026 = vpack.c.b16 %v9997, %v9996
      %v10027 = vpack.c.b16 %v9999, %v9998
      %v10028 = vpack.c.b16 %v10001, %v10000
      %v10029 = vpack.c.b16 %v10003, %v10002
      %v10030 = vpack.c.b16 %v10005, %v10004
      %v10031 = vpack.c.b16 %v10007, %v10006
      %v10032 = vpack.c.b16 %v10009, %v10008
      %v10033 = vpack.c.b16 %v10011, %v10010
      %v10034 = vpack.c.b16 %v10013, %v10012
      %v10035 = vpack.c.b16 %v10015, %v10014
      %v10036 = vpack.c.b16 %v10017, %v10016
      %v10037 = vpack.c.b16 %v10019, %v10018
      %v10038 = vpack.c.b16 %v10021, %v10020
      %v10039 = vpack.c.b16 %v10022, %v10022
      %v10041 = vshrl.u32 %v10023, 16
      %v10043 = vshll.u32 %v10023, 16
      %v10045 = vrot.slane %v10043, 1
      %v10046 = vor.u32 %v10041, %v10045
      %v10048 = vshll.u32 %v10024, 16
      %v10050 = vrot.slane %v10048, 1
      %v10051 = vsel %vm4496, %v10046, %v10050
      %v10052 = vshrl.u32 %v10024, 16
      %v10054 = vor.u32 %v10052, %v10050
      %v10056 = vshll.u32 %v10025, 16
      %v10058 = vrot.slane %v10056, 1
      %v10059 = vsel %vm4496, %v10054, %v10058
      %v10060 = vshrl.u32 %v10025, 16
      %v10062 = vor.u32 %v10060, %v10058
      %v10064 = vshll.u32 %v10026, 16
      %v10066 = vrot.slane %v10064, 1
      %v10067 = vsel %vm4496, %v10062, %v10066
      %v10068 = vshrl.u32 %v10026, 16
      %v10070 = vor.u32 %v10068, %v10066
      %v10072 = vshll.u32 %v10027, 16
      %v10074 = vrot.slane %v10072, 1
      %v10075 = vsel %vm4496, %v10070, %v10074
      %v10076 = vshrl.u32 %v10027, 16
      %v10078 = vor.u32 %v10076, %v10074
      %v10080 = vshll.u32 %v10028, 16
      %v10082 = vrot.slane %v10080, 1
      %v10083 = vsel %vm4496, %v10078, %v10082
      %v10084 = vshrl.u32 %v10028, 16
      %v10086 = vor.u32 %v10084, %v10082
      %v10088 = vshll.u32 %v10029, 16
      %v10090 = vrot.slane %v10088, 1
      %v10091 = vsel %vm4496, %v10086, %v10090
      %v10092 = vshrl.u32 %v10029, 16
      %v10094 = vor.u32 %v10092, %v10090
      %v10096 = vshll.u32 %v10030, 16
      %v10098 = vrot.slane %v10096, 1
      %v10099 = vsel %vm4496, %v10094, %v10098
      %v10100 = vshrl.u32 %v10030, 16
      %v10102 = vor.u32 %v10100, %v10098
      %v10104 = vshll.u32 %v10031, 16
      %v10106 = vrot.slane %v10104, 1
      %v10107 = vsel %vm4496, %v10102, %v10106
      %v10108 = vshrl.u32 %v10031, 16
      %v10110 = vor.u32 %v10108, %v10106
      %v10112 = vshll.u32 %v10032, 16
      %v10114 = vrot.slane %v10112, 1
      %v10115 = vsel %vm4496, %v10110, %v10114
      %v10116 = vshrl.u32 %v10032, 16
      %v10118 = vor.u32 %v10116, %v10114
      %v10120 = vshll.u32 %v10033, 16
      %v10122 = vrot.slane %v10120, 1
      %v10123 = vsel %vm4496, %v10118, %v10122
      %v10124 = vshrl.u32 %v10033, 16
      %v10126 = vor.u32 %v10124, %v10122
      %v10128 = vshll.u32 %v10034, 16
      %v10130 = vrot.slane %v10128, 1
      %v10131 = vsel %vm4496, %v10126, %v10130
      %v10132 = vshrl.u32 %v10034, 16
      %v10134 = vor.u32 %v10132, %v10130
      %v10136 = vshll.u32 %v10035, 16
      %v10138 = vrot.slane %v10136, 1
      %v10139 = vsel %vm4496, %v10134, %v10138
      %v10140 = vshrl.u32 %v10035, 16
      %v10142 = vor.u32 %v10140, %v10138
      %v10144 = vshll.u32 %v10036, 16
      %v10146 = vrot.slane %v10144, 1
      %v10147 = vsel %vm4496, %v10142, %v10146
      %v10148 = vshrl.u32 %v10036, 16
      %v10150 = vor.u32 %v10148, %v10146
      %v10152 = vshll.u32 %v10037, 16
      %v10154 = vrot.slane %v10152, 1
      %v10155 = vsel %vm4496, %v10150, %v10154
      %v10156 = vshrl.u32 %v10037, 16
      %v10158 = vor.u32 %v10156, %v10154
      %v10160 = vshll.u32 %v10038, 16
      %v10162 = vrot.slane %v10160, 1
      %v10163 = vsel %vm4496, %v10158, %v10162
      %v10164 = vshrl.u32 %v10038, 16
      %v10166 = vor.u32 %v10164, %v10162
      %v10168 = vshll.u32 %v10039, 16
      %v10170 = vrot.slane %v10168, 1
      %v10171 = vsel %vm4496, %v10166, %v10170
      %v10173 = vsel %vm6955, %v10051, 0
      %v10176 = vsel %vm6955, %v10059, 0
      %v10179 = vsel %vm6955, %v10067, 0
      %v10182 = vsel %vm6955, %v10075, 0
      %v10185 = vsel %vm6955, %v10083, 0
      %v10188 = vsel %vm6955, %v10091, 0
      %v10191 = vsel %vm6955, %v10099, 0
      %v10194 = vsel %vm6955, %v10107, 0
      %v10197 = vsel %vm6955, %v10115, 0
      %v10200 = vsel %vm6955, %v10123, 0
      %v10203 = vsel %vm6955, %v10131, 0
      %v10206 = vsel %vm6955, %v10139, 0
      %v10209 = vsel %vm6955, %v10147, 0
      %v10212 = vsel %vm6955, %v10155, 0
      %v10215 = vsel %vm6955, %v10163, 0
      %v10218 = vsel %vm6955, %v10171, 0
      %v10221 = vsel %vm1075, %v9956, 0
      %10223 = vmatpush.bf16.msra.mxu0 0
      %10224 = vmatpush.bf16.msra.mxu0 0
      %10225 = vmatpush.bf16.msra.mxu0 0
      %10226 = vmatpush.bf16.msra.mxu0 0
      %10227 = vmatpush.bf16.msra.mxu0 0
      %10228 = vmatpush.bf16.msra.mxu0 0
      %10229 = vmatpush.bf16.msra.mxu0 0
      %10230 = vmatpush.bf16.msra.mxu0 %v10221
      %10231 = vmatmul.bf16.gmra.mxu0 %v10173
      %v10232 = vpop.f32.mrf.mxu0
      %v10233 = vadd.f32 0.0, %v10232
      %v10234 = vpop.f32.mrf.mxu0
      %v10235 = vadd.f32 0.0, %v10234
      %10236 = vmatmul.bf16.gmra.mxu0 %v10176
      %v10237 = vpop.f32.mrf.mxu0
      %v10238 = vadd.f32 0.0, %v10237
      %v10239 = vpop.f32.mrf.mxu0
      %v10240 = vadd.f32 0.0, %v10239
      %10241 = vmatmul.bf16.gmra.mxu0 %v10179
      %v10242 = vpop.f32.mrf.mxu0
      %v10243 = vadd.f32 0.0, %v10242
      %v10244 = vpop.f32.mrf.mxu0
      %v10245 = vadd.f32 0.0, %v10244
      %10246 = vmatmul.bf16.gmra.mxu0 %v10182
      %v10247 = vpop.f32.mrf.mxu0
      %v10248 = vadd.f32 0.0, %v10247
      %v10249 = vpop.f32.mrf.mxu0
      %v10250 = vadd.f32 0.0, %v10249
      %10251 = vmatmul.bf16.gmra.mxu0 %v10185
      %v10252 = vpop.f32.mrf.mxu0
      %v10253 = vadd.f32 0.0, %v10252
      %v10254 = vpop.f32.mrf.mxu0
      %v10255 = vadd.f32 0.0, %v10254
      %10256 = vmatmul.bf16.gmra.mxu0 %v10188
      %v10257 = vpop.f32.mrf.mxu0
      %v10258 = vadd.f32 0.0, %v10257
      %v10259 = vpop.f32.mrf.mxu0
      %v10260 = vadd.f32 0.0, %v10259
      %10261 = vmatmul.bf16.gmra.mxu0 %v10191
      %v10262 = vpop.f32.mrf.mxu0
      %v10263 = vadd.f32 0.0, %v10262
      %v10264 = vpop.f32.mrf.mxu0
      %v10265 = vadd.f32 0.0, %v10264
      %10266 = vmatmul.bf16.gmra.mxu0 %v10194
      %v10267 = vpop.f32.mrf.mxu0
      %v10268 = vadd.f32 0.0, %v10267
      %v10269 = vpop.f32.mrf.mxu0
      %v10270 = vadd.f32 0.0, %v10269
      %10271 = vmatmul.bf16.gmra.mxu0 %v10197
      %v10272 = vpop.f32.mrf.mxu0
      %v10273 = vadd.f32 0.0, %v10272
      %v10274 = vpop.f32.mrf.mxu0
      %v10275 = vadd.f32 0.0, %v10274
      %10276 = vmatmul.bf16.gmra.mxu0 %v10200
      %v10277 = vpop.f32.mrf.mxu0
      %v10278 = vadd.f32 0.0, %v10277
      %v10279 = vpop.f32.mrf.mxu0
      %v10280 = vadd.f32 0.0, %v10279
      %10281 = vmatmul.bf16.gmra.mxu0 %v10203
      %v10282 = vpop.f32.mrf.mxu0
      %v10283 = vadd.f32 0.0, %v10282
      %v10284 = vpop.f32.mrf.mxu0
      %v10285 = vadd.f32 0.0, %v10284
      %10286 = vmatmul.bf16.gmra.mxu0 %v10206
      %v10287 = vpop.f32.mrf.mxu0
      %v10288 = vadd.f32 0.0, %v10287
      %v10289 = vpop.f32.mrf.mxu0
      %v10290 = vadd.f32 0.0, %v10289
      %10291 = vmatmul.bf16.gmra.mxu0 %v10209
      %v10292 = vpop.f32.mrf.mxu0
      %v10293 = vadd.f32 0.0, %v10292
      %v10294 = vpop.f32.mrf.mxu0
      %v10295 = vadd.f32 0.0, %v10294
      %10296 = vmatmul.bf16.gmra.mxu0 %v10212
      %v10297 = vpop.f32.mrf.mxu0
      %v10298 = vadd.f32 0.0, %v10297
      %v10299 = vpop.f32.mrf.mxu0
      %v10300 = vadd.f32 0.0, %v10299
      %10301 = vmatmul.bf16.gmra.mxu0 %v10215
      %v10302 = vpop.f32.mrf.mxu0
      %v10303 = vadd.f32 0.0, %v10302
      %v10304 = vpop.f32.mrf.mxu0
      %v10305 = vadd.f32 0.0, %v10304
      %10306 = vmatmul.bf16.gmra.mxu0 %v10218
      %v10307 = vpop.f32.mrf.mxu0
      %v10308 = vadd.f32 0.0, %v10307
      %v10309 = vpop.f32.mrf.mxu0
      %v10310 = vadd.f32 0.0, %v10309
      %10311 = vdwg.mxu0
      %v10312 = vadd.f32 %v9857, %v10233
      %v10313 = vadd.f32 %v9858, %v10235
      %v10314 = vadd.f32 %v9859, %v10238
      %v10315 = vadd.f32 %v9860, %v10240
      %v10316 = vadd.f32 %v9861, %v10243
      %v10317 = vadd.f32 %v9862, %v10245
      %v10318 = vadd.f32 %v9863, %v10248
      %v10319 = vadd.f32 %v9864, %v10250
      %v10320 = vadd.f32 %v9865, %v10253
      %v10321 = vadd.f32 %v9866, %v10255
      %v10322 = vadd.f32 %v9867, %v10258
      %v10323 = vadd.f32 %v9868, %v10260
      %v10324 = vadd.f32 %v9869, %v10263
      %v10325 = vadd.f32 %v9870, %v10265
      %v10326 = vadd.f32 %v9871, %v10268
      %v10327 = vadd.f32 %v9872, %v10270
      %v10328 = vadd.f32 %v9873, %v10273
      %v10329 = vadd.f32 %v9874, %v10275
      %v10330 = vadd.f32 %v9875, %v10278
      %v10331 = vadd.f32 %v9876, %v10280
      %v10332 = vadd.f32 %v9877, %v10283
      %v10333 = vadd.f32 %v9878, %v10285
      %v10334 = vadd.f32 %v9879, %v10288
      %v10335 = vadd.f32 %v9880, %v10290
      %v10336 = vadd.f32 %v9881, %v10293
      %v10337 = vadd.f32 %v9882, %v10295
      %v10338 = vadd.f32 %v9883, %v10298
      %v10339 = vadd.f32 %v9884, %v10300
      %v10340 = vadd.f32 %v9885, %v10303
      %v10341 = vadd.f32 %v9886, %v10305
      %v10342 = vadd.f32 %v9887, %v10308
      %v10343 = vadd.f32 %v9888, %v10310
      %v10344 = vld [vmem:[#allocation3 + $0x10] sm:$0x8]
      %v10345 = vld [vmem:[#allocation3 + $0x14] sm:$0xf]
      %v10346 = vld [vmem:[#allocation3 + $0x18] sm:$0xf]
      %v10347 = vld [vmem:[#allocation3 + $0x1c] sm:$0xf]
      %v10348 = vld [vmem:[#allocation3 + $0x20] sm:$0xf]
      %v10349 = vld [vmem:[#allocation3 + $0x24] sm:$0xf]
      %v10350 = vld [vmem:[#allocation3 + $0x28] sm:$0xf]
      %v10351 = vld [vmem:[#allocation3 + $0x2c] sm:$0xf]
      %v10352 = vld [vmem:[#allocation3 + $0x30] sm:$0xf]
      %v10353 = vld [vmem:[#allocation3 + $0x34] sm:$0xf]
      %v10354 = vld [vmem:[#allocation3 + $0x38] sm:$0xf]
      %v10355 = vld [vmem:[#allocation3 + $0x3c] sm:$0xf]
      %v10356 = vld [vmem:[#allocation3 + $0x40] sm:$0xf]
      %v10357 = vld [vmem:[#allocation3 + $0x44] sm:$0xf]
      %v10358 = vld [vmem:[#allocation3 + $0x48] sm:$0xf]
      %v10359 = vld [vmem:[#allocation3 + $0x4c] sm:$0xf]
      %v10360 = vld [vmem:[#allocation3 + $0x50] sm:$0xf]
      %v10361 = vld [vmem:[#allocation3 + $0x54] sm:$0xf]
      %v10362 = vld [vmem:[#allocation3 + $0x58] sm:$0xf]
      %v10363 = vld [vmem:[#allocation3 + $0x5c] sm:$0xf]
      %v10364 = vld [vmem:[#allocation3 + $0x60] sm:$0xf]
      %v10365 = vld [vmem:[#allocation3 + $0x64] sm:$0xf]
      %v10366 = vld [vmem:[#allocation3 + $0x68] sm:$0xf]
      %v10367 = vld [vmem:[#allocation3 + $0x6c] sm:$0xf]
      %v10368 = vld [vmem:[#allocation3 + $0x70] sm:$0xf]
      %v10369 = vld [vmem:[#allocation3 + $0x74] sm:$0xf]
      %v10370 = vld [vmem:[#allocation3 + $0x78] sm:$0xf]
      %v10371 = vld [vmem:[#allocation3 + $0x7c] sm:$0xf]
      %v10372 = vld [vmem:[#allocation3 + $0x80] sm:$0xf]
      %v10373 = vld [vmem:[#allocation3 + $0x84] sm:$0xf]
      %v10374 = vld [vmem:[#allocation3 + $0x88] sm:$0xf]
      %v10375 = vld [vmem:[#allocation3 + $0x8c] sm:$0xf]
      %v10376 = vld [vmem:[#allocation3 + $0x90] sm:$0xf]
      %v10377 = vsel %vm2586, %v10344, 0
      %v10378 = vsel %vm2593, %v10345, 0
      %v10379 = vsel %vm2600, %v10346, 0
      %v10380 = vsel %vm2607, %v10347, 0
      %v10381 = vsel %vm2614, %v10348, 0
      %v10382 = vsel %vm2621, %v10349, 0
      %v10383 = vsel %vm2628, %v10350, 0
      %v10384 = vsel %vm2635, %v10351, 0
      %v10385 = vsel %vm2642, %v10352, 0
      %v10386 = vsel %vm2649, %v10353, 0
      %v10387 = vsel %vm2656, %v10354, 0
      %v10388 = vsel %vm2663, %v10355, 0
      %v10389 = vsel %vm2670, %v10356, 0
      %v10390 = vsel %vm2677, %v10357, 0
      %v10391 = vsel %vm2684, %v10358, 0
      %v10392 = vsel %vm2691, %v10359, 0
      %v10393 = vsel %vm2698, %v10360, 0
      %v10394 = vsel %vm2705, %v10361, 0
      %v10395 = vsel %vm2712, %v10362, 0
      %v10396 = vsel %vm2719, %v10363, 0
      %v10397 = vsel %vm2726, %v10364, 0
      %v10398 = vsel %vm2733, %v10365, 0
      %v10399 = vsel %vm2740, %v10366, 0
      %v10400 = vsel %vm2747, %v10367, 0
      %v10401 = vsel %vm2754, %v10368, 0
      %v10402 = vsel %vm2761, %v10369, 0
      %v10403 = vsel %vm2768, %v10370, 0
      %v10404 = vsel %vm2775, %v10371, 0
      %v10405 = vsel %vm2782, %v10372, 0
      %v10406 = vsel %vm2789, %v10373, 0
      %v10407 = vsel %vm2796, %v10374, 0
      %v10408 = vsel %vm2803, %v10375, 0
      %v10409 = vsel %vm2810, %v10376, 0
      %s10410 = scalar_lea.vmem %s11, 24
      %v10411 = vld [vmem:[%s10410] sm:$0xf]
      %v10445 = vunpack.c.l.b16 %v10377
      %v10446 = vunpack.c.l.b16 %v10378
      %v10447 = vunpack.c.l.b16 %v10379
      %v10448 = vunpack.c.l.b16 %v10380
      %v10449 = vunpack.c.l.b16 %v10381
      %v10450 = vunpack.c.l.b16 %v10382
      %v10451 = vunpack.c.l.b16 %v10383
      %v10452 = vunpack.c.l.b16 %v10384
      %v10453 = vunpack.c.l.b16 %v10385
      %v10454 = vunpack.c.l.b16 %v10386
      %v10455 = vunpack.c.l.b16 %v10387
      %v10456 = vunpack.c.l.b16 %v10388
      %v10457 = vunpack.c.l.b16 %v10389
      %v10458 = vunpack.c.l.b16 %v10390
      %v10459 = vunpack.c.l.b16 %v10391
      %v10460 = vunpack.c.l.b16 %v10392
      %v10461 = vunpack.c.l.b16 %v10393
      %v10462 = vunpack.c.l.b16 %v10394
      %v10463 = vunpack.c.l.b16 %v10395
      %v10464 = vunpack.c.l.b16 %v10396
      %v10465 = vunpack.c.l.b16 %v10397
      %v10466 = vunpack.c.l.b16 %v10398
      %v10467 = vunpack.c.l.b16 %v10399
      %v10468 = vunpack.c.l.b16 %v10400
      %v10469 = vunpack.c.l.b16 %v10401
      %v10470 = vunpack.c.l.b16 %v10402
      %v10471 = vunpack.c.l.b16 %v10403
      %v10472 = vunpack.c.l.b16 %v10404
      %v10473 = vunpack.c.l.b16 %v10405
      %v10474 = vunpack.c.l.b16 %v10406
      %v10475 = vunpack.c.l.b16 %v10407
      %v10476 = vunpack.c.l.b16 %v10408
      %v10477 = vunpack.c.l.b16 %v10409
      %v10478 = vpack.c.b16 %v10446, %v10445
      %v10479 = vpack.c.b16 %v10448, %v10447
      %v10480 = vpack.c.b16 %v10450, %v10449
      %v10481 = vpack.c.b16 %v10452, %v10451
      %v10482 = vpack.c.b16 %v10454, %v10453
      %v10483 = vpack.c.b16 %v10456, %v10455
      %v10484 = vpack.c.b16 %v10458, %v10457
      %v10485 = vpack.c.b16 %v10460, %v10459
      %v10486 = vpack.c.b16 %v10462, %v10461
      %v10487 = vpack.c.b16 %v10464, %v10463
      %v10488 = vpack.c.b16 %v10466, %v10465
      %v10489 = vpack.c.b16 %v10468, %v10467
      %v10490 = vpack.c.b16 %v10470, %v10469
      %v10491 = vpack.c.b16 %v10472, %v10471
      %v10492 = vpack.c.b16 %v10474, %v10473
      %v10493 = vpack.c.b16 %v10476, %v10475
      %v10494 = vpack.c.b16 %v10477, %v10477
      %v10496 = vshrl.u32 %v10478, 16
      %v10498 = vrot.slane %v10496, 3
      %v10499 = vshll.u32 %v10478, 16
      %v10501 = vrot.slane %v10499, 4
      %v10502 = vor.u32 %v10498, %v10501
      %v10504 = vshrl.u32 %v10479, 16
      %v10506 = vrot.slane %v10504, 3
      %v10507 = vshll.u32 %v10479, 16
      %v10509 = vrot.slane %v10507, 4
      %v10510 = vor.u32 %v10506, %v10509
      %v10511 = vsel %vm2928, %v10502, %v10510
      %v10513 = vshrl.u32 %v10480, 16
      %v10515 = vrot.slane %v10513, 3
      %v10516 = vshll.u32 %v10480, 16
      %v10518 = vrot.slane %v10516, 4
      %v10519 = vor.u32 %v10515, %v10518
      %v10520 = vsel %vm2928, %v10510, %v10519
      %v10522 = vshrl.u32 %v10481, 16
      %v10524 = vrot.slane %v10522, 3
      %v10525 = vshll.u32 %v10481, 16
      %v10527 = vrot.slane %v10525, 4
      %v10528 = vor.u32 %v10524, %v10527
      %v10529 = vsel %vm2928, %v10519, %v10528
      %v10531 = vshrl.u32 %v10482, 16
      %v10533 = vrot.slane %v10531, 3
      %v10534 = vshll.u32 %v10482, 16
      %v10536 = vrot.slane %v10534, 4
      %v10537 = vor.u32 %v10533, %v10536
      %v10538 = vsel %vm2928, %v10528, %v10537
      %v10540 = vshrl.u32 %v10483, 16
      %v10542 = vrot.slane %v10540, 3
      %v10543 = vshll.u32 %v10483, 16
      %v10545 = vrot.slane %v10543, 4
      %v10546 = vor.u32 %v10542, %v10545
      %v10547 = vsel %vm2928, %v10537, %v10546
      %v10549 = vshrl.u32 %v10484, 16
      %v10551 = vrot.slane %v10549, 3
      %v10552 = vshll.u32 %v10484, 16
      %v10554 = vrot.slane %v10552, 4
      %v10555 = vor.u32 %v10551, %v10554
      %v10556 = vsel %vm2928, %v10546, %v10555
      %v10558 = vshrl.u32 %v10485, 16
      %v10560 = vrot.slane %v10558, 3
      %v10561 = vshll.u32 %v10485, 16
      %v10563 = vrot.slane %v10561, 4
      %v10564 = vor.u32 %v10560, %v10563
      %v10565 = vsel %vm2928, %v10555, %v10564
      %v10567 = vshrl.u32 %v10486, 16
      %v10569 = vrot.slane %v10567, 3
      %v10570 = vshll.u32 %v10486, 16
      %v10572 = vrot.slane %v10570, 4
      %v10573 = vor.u32 %v10569, %v10572
      %v10574 = vsel %vm2928, %v10564, %v10573
      %v10576 = vshrl.u32 %v10487, 16
      %v10578 = vrot.slane %v10576, 3
      %v10579 = vshll.u32 %v10487, 16
      %v10581 = vrot.slane %v10579, 4
      %v10582 = vor.u32 %v10578, %v10581
      %v10583 = vsel %vm2928, %v10573, %v10582
      %v10585 = vshrl.u32 %v10488, 16
      %v10587 = vrot.slane %v10585, 3
      %v10588 = vshll.u32 %v10488, 16
      %v10590 = vrot.slane %v10588, 4
      %v10591 = vor.u32 %v10587, %v10590
      %v10592 = vsel %vm2928, %v10582, %v10591
      %v10594 = vshrl.u32 %v10489, 16
      %v10596 = vrot.slane %v10594, 3
      %v10597 = vshll.u32 %v10489, 16
      %v10599 = vrot.slane %v10597, 4
      %v10600 = vor.u32 %v10596, %v10599
      %v10601 = vsel %vm2928, %v10591, %v10600
      %v10603 = vshrl.u32 %v10490, 16
      %v10605 = vrot.slane %v10603, 3
      %v10606 = vshll.u32 %v10490, 16
      %v10608 = vrot.slane %v10606, 4
      %v10609 = vor.u32 %v10605, %v10608
      %v10610 = vsel %vm2928, %v10600, %v10609
      %v10612 = vshrl.u32 %v10491, 16
      %v10614 = vrot.slane %v10612, 3
      %v10615 = vshll.u32 %v10491, 16
      %v10617 = vrot.slane %v10615, 4
      %v10618 = vor.u32 %v10614, %v10617
      %v10619 = vsel %vm2928, %v10609, %v10618
      %v10621 = vshrl.u32 %v10492, 16
      %v10623 = vrot.slane %v10621, 3
      %v10624 = vshll.u32 %v10492, 16
      %v10626 = vrot.slane %v10624, 4
      %v10627 = vor.u32 %v10623, %v10626
      %v10628 = vsel %vm2928, %v10618, %v10627
      %v10630 = vshrl.u32 %v10493, 16
      %v10632 = vrot.slane %v10630, 3
      %v10633 = vshll.u32 %v10493, 16
      %v10635 = vrot.slane %v10633, 4
      %v10636 = vor.u32 %v10632, %v10635
      %v10637 = vsel %vm2928, %v10627, %v10636
      %v10639 = vshrl.u32 %v10494, 16
      %v10641 = vrot.slane %v10639, 3
      %v10642 = vshll.u32 %v10494, 16
      %v10644 = vrot.slane %v10642, 4
      %v10645 = vor.u32 %v10641, %v10644
      %v10646 = vsel %vm2928, %v10636, %v10645
      %v10648 = vsel %vm6955, %v10511, 0
      %v10651 = vsel %vm6955, %v10520, 0
      %v10654 = vsel %vm6955, %v10529, 0
      %v10657 = vsel %vm6955, %v10538, 0
      %v10660 = vsel %vm6955, %v10547, 0
      %v10663 = vsel %vm6955, %v10556, 0
      %v10666 = vsel %vm6955, %v10565, 0
      %v10669 = vsel %vm6955, %v10574, 0
      %v10672 = vsel %vm6955, %v10583, 0
      %v10675 = vsel %vm6955, %v10592, 0
      %v10678 = vsel %vm6955, %v10601, 0
      %v10681 = vsel %vm6955, %v10610, 0
      %v10684 = vsel %vm6955, %v10619, 0
      %v10687 = vsel %vm6955, %v10628, 0
      %v10690 = vsel %vm6955, %v10637, 0
      %v10693 = vsel %vm6955, %v10646, 0
      %v10696 = vsel %vm1075, %v10411, 0
      %10698 = vmatpush.bf16.msra.mxu0 0
      %10699 = vmatpush.bf16.msra.mxu0 0
      %10700 = vmatpush.bf16.msra.mxu0 0
      %10701 = vmatpush.bf16.msra.mxu0 0
      %10702 = vmatpush.bf16.msra.mxu0 0
      %10703 = vmatpush.bf16.msra.mxu0 0
      %10704 = vmatpush.bf16.msra.mxu0 0
      %10705 = vmatpush.bf16.msra.mxu0 %v10696
      %10706 = vmatmul.bf16.gmra.mxu0 %v10648
      %v10707 = vpop.f32.mrf.mxu0
      %v10708 = vadd.f32 0.0, %v10707
      %v10709 = vpop.f32.mrf.mxu0
      %v10710 = vadd.f32 0.0, %v10709
      %10711 = vmatmul.bf16.gmra.mxu0 %v10651
      %v10712 = vpop.f32.mrf.mxu0
      %v10713 = vadd.f32 0.0, %v10712
      %v10714 = vpop.f32.mrf.mxu0
      %v10715 = vadd.f32 0.0, %v10714
      %10716 = vmatmul.bf16.gmra.mxu0 %v10654
      %v10717 = vpop.f32.mrf.mxu0
      %v10718 = vadd.f32 0.0, %v10717
      %v10719 = vpop.f32.mrf.mxu0
      %v10720 = vadd.f32 0.0, %v10719
      %10721 = vmatmul.bf16.gmra.mxu0 %v10657
      %v10722 = vpop.f32.mrf.mxu0
      %v10723 = vadd.f32 0.0, %v10722
      %v10724 = vpop.f32.mrf.mxu0
      %v10725 = vadd.f32 0.0, %v10724
      %10726 = vmatmul.bf16.gmra.mxu0 %v10660
      %v10727 = vpop.f32.mrf.mxu0
      %v10728 = vadd.f32 0.0, %v10727
      %v10729 = vpop.f32.mrf.mxu0
      %v10730 = vadd.f32 0.0, %v10729
      %10731 = vmatmul.bf16.gmra.mxu0 %v10663
      %v10732 = vpop.f32.mrf.mxu0
      %v10733 = vadd.f32 0.0, %v10732
      %v10734 = vpop.f32.mrf.mxu0
      %v10735 = vadd.f32 0.0, %v10734
      %10736 = vmatmul.bf16.gmra.mxu0 %v10666
      %v10737 = vpop.f32.mrf.mxu0
      %v10738 = vadd.f32 0.0, %v10737
      %v10739 = vpop.f32.mrf.mxu0
      %v10740 = vadd.f32 0.0, %v10739
      %10741 = vmatmul.bf16.gmra.mxu0 %v10669
      %v10742 = vpop.f32.mrf.mxu0
      %v10743 = vadd.f32 0.0, %v10742
      %v10744 = vpop.f32.mrf.mxu0
      %v10745 = vadd.f32 0.0, %v10744
      %10746 = vmatmul.bf16.gmra.mxu0 %v10672
      %v10747 = vpop.f32.mrf.mxu0
      %v10748 = vadd.f32 0.0, %v10747
      %v10749 = vpop.f32.mrf.mxu0
      %v10750 = vadd.f32 0.0, %v10749
      %10751 = vmatmul.bf16.gmra.mxu0 %v10675
      %v10752 = vpop.f32.mrf.mxu0
      %v10753 = vadd.f32 0.0, %v10752
      %v10754 = vpop.f32.mrf.mxu0
      %v10755 = vadd.f32 0.0, %v10754
      %10756 = vmatmul.bf16.gmra.mxu0 %v10678
      %v10757 = vpop.f32.mrf.mxu0
      %v10758 = vadd.f32 0.0, %v10757
      %v10759 = vpop.f32.mrf.mxu0
      %v10760 = vadd.f32 0.0, %v10759
      %10761 = vmatmul.bf16.gmra.mxu0 %v10681
      %v10762 = vpop.f32.mrf.mxu0
      %v10763 = vadd.f32 0.0, %v10762
      %v10764 = vpop.f32.mrf.mxu0
      %v10765 = vadd.f32 0.0, %v10764
      %10766 = vmatmul.bf16.gmra.mxu0 %v10684
      %v10767 = vpop.f32.mrf.mxu0
      %v10768 = vadd.f32 0.0, %v10767
      %v10769 = vpop.f32.mrf.mxu0
      %v10770 = vadd.f32 0.0, %v10769
      %10771 = vmatmul.bf16.gmra.mxu0 %v10687
      %v10772 = vpop.f32.mrf.mxu0
      %v10773 = vadd.f32 0.0, %v10772
      %v10774 = vpop.f32.mrf.mxu0
      %v10775 = vadd.f32 0.0, %v10774
      %10776 = vmatmul.bf16.gmra.mxu0 %v10690
      %v10777 = vpop.f32.mrf.mxu0
      %v10778 = vadd.f32 0.0, %v10777
      %v10779 = vpop.f32.mrf.mxu0
      %v10780 = vadd.f32 0.0, %v10779
      %10781 = vmatmul.bf16.gmra.mxu0 %v10693
      %v10782 = vpop.f32.mrf.mxu0
      %v10783 = vadd.f32 0.0, %v10782
      %v10784 = vpop.f32.mrf.mxu0
      %v10785 = vadd.f32 0.0, %v10784
      %10786 = vdwg.mxu0
      %v10787 = vadd.f32 %v10312, %v10708
      %v10788 = vadd.f32 %v10313, %v10710
      %v10789 = vadd.f32 %v10314, %v10713
      %v10790 = vadd.f32 %v10315, %v10715
      %v10791 = vadd.f32 %v10316, %v10718
      %v10792 = vadd.f32 %v10317, %v10720
      %v10793 = vadd.f32 %v10318, %v10723
      %v10794 = vadd.f32 %v10319, %v10725
      %v10795 = vadd.f32 %v10320, %v10728
      %v10796 = vadd.f32 %v10321, %v10730
      %v10797 = vadd.f32 %v10322, %v10733
      %v10798 = vadd.f32 %v10323, %v10735
      %v10799 = vadd.f32 %v10324, %v10738
      %v10800 = vadd.f32 %v10325, %v10740
      %v10801 = vadd.f32 %v10326, %v10743
      %v10802 = vadd.f32 %v10327, %v10745
      %v10803 = vadd.f32 %v10328, %v10748
      %v10804 = vadd.f32 %v10329, %v10750
      %v10805 = vadd.f32 %v10330, %v10753
      %v10806 = vadd.f32 %v10331, %v10755
      %v10807 = vadd.f32 %v10332, %v10758
      %v10808 = vadd.f32 %v10333, %v10760
      %v10809 = vadd.f32 %v10334, %v10763
      %v10810 = vadd.f32 %v10335, %v10765
      %v10811 = vadd.f32 %v10336, %v10768
      %v10812 = vadd.f32 %v10337, %v10770
      %v10813 = vadd.f32 %v10338, %v10773
      %v10814 = vadd.f32 %v10339, %v10775
      %v10815 = vadd.f32 %v10340, %v10778
      %v10816 = vadd.f32 %v10341, %v10780
      %v10817 = vadd.f32 %v10342, %v10783
      %v10818 = vadd.f32 %v10343, %v10785
      %s10819 = scalar_lea.vmem %s11, 28
      %v10820 = vld [vmem:[%s10819] sm:$0xf]
      %v10853 = vunpack.c.l.b16 %v10345
      %v10854 = vunpack.c.l.b16 %v10346
      %v10855 = vunpack.c.l.b16 %v10347
      %v10856 = vunpack.c.l.b16 %v10348
      %v10857 = vunpack.c.l.b16 %v10349
      %v10858 = vunpack.c.l.b16 %v10350
      %v10859 = vunpack.c.l.b16 %v10351
      %v10860 = vunpack.c.l.b16 %v10352
      %v10861 = vunpack.c.l.b16 %v10353
      %v10862 = vunpack.c.l.b16 %v10354
      %v10863 = vunpack.c.l.b16 %v10355
      %v10864 = vunpack.c.l.b16 %v10356
      %v10865 = vunpack.c.l.b16 %v10357
      %v10866 = vunpack.c.l.b16 %v10358
      %v10867 = vunpack.c.l.b16 %v10359
      %v10868 = vunpack.c.l.b16 %v10360
      %v10869 = vunpack.c.l.b16 %v10361
      %v10870 = vunpack.c.l.b16 %v10362
      %v10871 = vunpack.c.l.b16 %v10363
      %v10872 = vunpack.c.l.b16 %v10364
      %v10873 = vunpack.c.l.b16 %v10365
      %v10874 = vunpack.c.l.b16 %v10366
      %v10875 = vunpack.c.l.b16 %v10367
      %v10876 = vunpack.c.l.b16 %v10368
      %v10877 = vunpack.c.l.b16 %v10369
      %v10878 = vunpack.c.l.b16 %v10370
      %v10879 = vunpack.c.l.b16 %v10371
      %v10880 = vunpack.c.l.b16 %v10372
      %v10881 = vunpack.c.l.b16 %v10373
      %v10882 = vunpack.c.l.b16 %v10374
      %v10883 = vunpack.c.l.b16 %v10375
      %v10884 = vunpack.c.l.b16 %v10376
      %v10885 = vpack.c.b16 %v10854, %v10853
      %v10886 = vpack.c.b16 %v10856, %v10855
      %v10887 = vpack.c.b16 %v10858, %v10857
      %v10888 = vpack.c.b16 %v10860, %v10859
      %v10889 = vpack.c.b16 %v10862, %v10861
      %v10890 = vpack.c.b16 %v10864, %v10863
      %v10891 = vpack.c.b16 %v10866, %v10865
      %v10892 = vpack.c.b16 %v10868, %v10867
      %v10893 = vpack.c.b16 %v10870, %v10869
      %v10894 = vpack.c.b16 %v10872, %v10871
      %v10895 = vpack.c.b16 %v10874, %v10873
      %v10896 = vpack.c.b16 %v10876, %v10875
      %v10897 = vpack.c.b16 %v10878, %v10877
      %v10898 = vpack.c.b16 %v10880, %v10879
      %v10899 = vpack.c.b16 %v10882, %v10881
      %v10900 = vpack.c.b16 %v10884, %v10883
      %v10902 = vsel %vm6955, %v10885, 0
      %v10905 = vsel %vm6955, %v10886, 0
      %v10908 = vsel %vm6955, %v10887, 0
      %v10911 = vsel %vm6955, %v10888, 0
      %v10914 = vsel %vm6955, %v10889, 0
      %v10917 = vsel %vm6955, %v10890, 0
      %v10920 = vsel %vm6955, %v10891, 0
      %v10923 = vsel %vm6955, %v10892, 0
      %v10926 = vsel %vm6955, %v10893, 0
      %v10929 = vsel %vm6955, %v10894, 0
      %v10932 = vsel %vm6955, %v10895, 0
      %v10935 = vsel %vm6955, %v10896, 0
      %v10938 = vsel %vm6955, %v10897, 0
      %v10941 = vsel %vm6955, %v10898, 0
      %v10944 = vsel %vm6955, %v10899, 0
      %v10947 = vsel %vm6955, %v10900, 0
      %v10950 = vsel %vm1075, %v10820, 0
      %10952 = vmatpush.bf16.msra.mxu0 0
      %10953 = vmatpush.bf16.msra.mxu0 0
      %10954 = vmatpush.bf16.msra.mxu0 0
      %10955 = vmatpush.bf16.msra.mxu0 0
      %10956 = vmatpush.bf16.msra.mxu0 0
      %10957 = vmatpush.bf16.msra.mxu0 0
      %10958 = vmatpush.bf16.msra.mxu0 0
      %10959 = vmatpush.bf16.msra.mxu0 %v10950
      %10960 = vmatmul.bf16.gmra.mxu0 %v10902
      %v10961 = vpop.f32.mrf.mxu0
      %v10962 = vadd.f32 0.0, %v10961
      %v10963 = vpop.f32.mrf.mxu0
      %v10964 = vadd.f32 0.0, %v10963
      %10965 = vmatmul.bf16.gmra.mxu0 %v10905
      %v10966 = vpop.f32.mrf.mxu0
      %v10967 = vadd.f32 0.0, %v10966
      %v10968 = vpop.f32.mrf.mxu0
      %v10969 = vadd.f32 0.0, %v10968
      %10970 = vmatmul.bf16.gmra.mxu0 %v10908
      %v10971 = vpop.f32.mrf.mxu0
      %v10972 = vadd.f32 0.0, %v10971
      %v10973 = vpop.f32.mrf.mxu0
      %v10974 = vadd.f32 0.0, %v10973
      %10975 = vmatmul.bf16.gmra.mxu0 %v10911
      %v10976 = vpop.f32.mrf.mxu0
      %v10977 = vadd.f32 0.0, %v10976
      %v10978 = vpop.f32.mrf.mxu0
      %v10979 = vadd.f32 0.0, %v10978
      %10980 = vmatmul.bf16.gmra.mxu0 %v10914
      %v10981 = vpop.f32.mrf.mxu0
      %v10982 = vadd.f32 0.0, %v10981
      %v10983 = vpop.f32.mrf.mxu0
      %v10984 = vadd.f32 0.0, %v10983
      %10985 = vmatmul.bf16.gmra.mxu0 %v10917
      %v10986 = vpop.f32.mrf.mxu0
      %v10987 = vadd.f32 0.0, %v10986
      %v10988 = vpop.f32.mrf.mxu0
      %v10989 = vadd.f32 0.0, %v10988
      %10990 = vmatmul.bf16.gmra.mxu0 %v10920
      %v10991 = vpop.f32.mrf.mxu0
      %v10992 = vadd.f32 0.0, %v10991
      %v10993 = vpop.f32.mrf.mxu0
      %v10994 = vadd.f32 0.0, %v10993
      %10995 = vmatmul.bf16.gmra.mxu0 %v10923
      %v10996 = vpop.f32.mrf.mxu0
      %v10997 = vadd.f32 0.0, %v10996
      %v10998 = vpop.f32.mrf.mxu0
      %v10999 = vadd.f32 0.0, %v10998
      %11000 = vmatmul.bf16.gmra.mxu0 %v10926
      %v11001 = vpop.f32.mrf.mxu0
      %v11002 = vadd.f32 0.0, %v11001
      %v11003 = vpop.f32.mrf.mxu0
      %v11004 = vadd.f32 0.0, %v11003
      %11005 = vmatmul.bf16.gmra.mxu0 %v10929
      %v11006 = vpop.f32.mrf.mxu0
      %v11007 = vadd.f32 0.0, %v11006
      %v11008 = vpop.f32.mrf.mxu0
      %v11009 = vadd.f32 0.0, %v11008
      %11010 = vmatmul.bf16.gmra.mxu0 %v10932
      %v11011 = vpop.f32.mrf.mxu0
      %v11012 = vadd.f32 0.0, %v11011
      %v11013 = vpop.f32.mrf.mxu0
      %v11014 = vadd.f32 0.0, %v11013
      %11015 = vmatmul.bf16.gmra.mxu0 %v10935
      %v11016 = vpop.f32.mrf.mxu0
      %v11017 = vadd.f32 0.0, %v11016
      %v11018 = vpop.f32.mrf.mxu0
      %v11019 = vadd.f32 0.0, %v11018
      %11020 = vmatmul.bf16.gmra.mxu0 %v10938
      %v11021 = vpop.f32.mrf.mxu0
      %v11022 = vadd.f32 0.0, %v11021
      %v11023 = vpop.f32.mrf.mxu0
      %v11024 = vadd.f32 0.0, %v11023
      %11025 = vmatmul.bf16.gmra.mxu0 %v10941
      %v11026 = vpop.f32.mrf.mxu0
      %v11027 = vadd.f32 0.0, %v11026
      %v11028 = vpop.f32.mrf.mxu0
      %v11029 = vadd.f32 0.0, %v11028
      %11030 = vmatmul.bf16.gmra.mxu0 %v10944
      %v11031 = vpop.f32.mrf.mxu0
      %v11032 = vadd.f32 0.0, %v11031
      %v11033 = vpop.f32.mrf.mxu0
      %v11034 = vadd.f32 0.0, %v11033
      %11035 = vmatmul.bf16.gmra.mxu0 %v10947
      %v11036 = vpop.f32.mrf.mxu0
      %v11037 = vadd.f32 0.0, %v11036
      %v11038 = vpop.f32.mrf.mxu0
      %v11039 = vadd.f32 0.0, %v11038
      %11040 = vdwg.mxu0
      %v11041 = vadd.f32 %v10787, %v10962
      %v11042 = vadd.f32 %v10788, %v10964
      %v11043 = vadd.f32 %v10789, %v10967
      %v11044 = vadd.f32 %v10790, %v10969
      %v11045 = vadd.f32 %v10791, %v10972
      %v11046 = vadd.f32 %v10792, %v10974
      %v11047 = vadd.f32 %v10793, %v10977
      %v11048 = vadd.f32 %v10794, %v10979
      %v11049 = vadd.f32 %v10795, %v10982
      %v11050 = vadd.f32 %v10796, %v10984
      %v11051 = vadd.f32 %v10797, %v10987
      %v11052 = vadd.f32 %v10798, %v10989
      %v11053 = vadd.f32 %v10799, %v10992
      %v11054 = vadd.f32 %v10800, %v10994
      %v11055 = vadd.f32 %v10801, %v10997
      %v11056 = vadd.f32 %v10802, %v10999
      %v11057 = vadd.f32 %v10803, %v11002
      %v11058 = vadd.f32 %v10804, %v11004
      %v11059 = vadd.f32 %v10805, %v11007
      %v11060 = vadd.f32 %v10806, %v11009
      %v11061 = vadd.f32 %v10807, %v11012
      %v11062 = vadd.f32 %v10808, %v11014
      %v11063 = vadd.f32 %v10809, %v11017
      %v11064 = vadd.f32 %v10810, %v11019
      %v11065 = vadd.f32 %v10811, %v11022
      %v11066 = vadd.f32 %v10812, %v11024
      %v11067 = vadd.f32 %v10813, %v11027
      %v11068 = vadd.f32 %v10814, %v11029
      %v11069 = vadd.f32 %v10815, %v11032
      %v11070 = vadd.f32 %v10816, %v11034
      %v11071 = vadd.f32 %v10817, %v11037
      %v11072 = vadd.f32 %v10818, %v11039
      %v11073 = vld [vmem:[#allocation3 + $0x14] sm:$0xf]
      %v11074 = vld [vmem:[#allocation3 + $0x18] sm:$0xf]
      %v11075 = vld [vmem:[#allocation3 + $0x1c] sm:$0xf]
      %v11076 = vld [vmem:[#allocation3 + $0x20] sm:$0xf]
      %v11077 = vld [vmem:[#allocation3 + $0x24] sm:$0xf]
      %v11078 = vld [vmem:[#allocation3 + $0x28] sm:$0xf]
      %v11079 = vld [vmem:[#allocation3 + $0x2c] sm:$0xf]
      %v11080 = vld [vmem:[#allocation3 + $0x30] sm:$0xf]
      %v11081 = vld [vmem:[#allocation3 + $0x34] sm:$0xf]
      %v11082 = vld [vmem:[#allocation3 + $0x38] sm:$0xf]
      %v11083 = vld [vmem:[#allocation3 + $0x3c] sm:$0xf]
      %v11084 = vld [vmem:[#allocation3 + $0x40] sm:$0xf]
      %v11085 = vld [vmem:[#allocation3 + $0x44] sm:$0xf]
      %v11086 = vld [vmem:[#allocation3 + $0x48] sm:$0xf]
      %v11087 = vld [vmem:[#allocation3 + $0x4c] sm:$0xf]
      %v11088 = vld [vmem:[#allocation3 + $0x50] sm:$0xf]
      %v11089 = vld [vmem:[#allocation3 + $0x54] sm:$0xf]
      %v11090 = vld [vmem:[#allocation3 + $0x58] sm:$0xf]
      %v11091 = vld [vmem:[#allocation3 + $0x5c] sm:$0xf]
      %v11092 = vld [vmem:[#allocation3 + $0x60] sm:$0xf]
      %v11093 = vld [vmem:[#allocation3 + $0x64] sm:$0xf]
      %v11094 = vld [vmem:[#allocation3 + $0x68] sm:$0xf]
      %v11095 = vld [vmem:[#allocation3 + $0x6c] sm:$0xf]
      %v11096 = vld [vmem:[#allocation3 + $0x70] sm:$0xf]
      %v11097 = vld [vmem:[#allocation3 + $0x74] sm:$0xf]
      %v11098 = vld [vmem:[#allocation3 + $0x78] sm:$0xf]
      %v11099 = vld [vmem:[#allocation3 + $0x7c] sm:$0xf]
      %v11100 = vld [vmem:[#allocation3 + $0x80] sm:$0xf]
      %v11101 = vld [vmem:[#allocation3 + $0x84] sm:$0xf]
      %v11102 = vld [vmem:[#allocation3 + $0x88] sm:$0xf]
      %v11103 = vld [vmem:[#allocation3 + $0x8c] sm:$0xf]
      %v11104 = vld [vmem:[#allocation3 + $0x90] sm:$0xf]
      %v11105 = vld [vmem:[#allocation3 + $0x94] sm:$0x1]
      %v11106 = vsel %vm4153, %v11073, 0
      %v11107 = vsel %vm4160, %v11074, 0
      %v11108 = vsel %vm4167, %v11075, 0
      %v11109 = vsel %vm4174, %v11076, 0
      %v11110 = vsel %vm4181, %v11077, 0
      %v11111 = vsel %vm4188, %v11078, 0
      %v11112 = vsel %vm4195, %v11079, 0
      %v11113 = vsel %vm4202, %v11080, 0
      %v11114 = vsel %vm4209, %v11081, 0
      %v11115 = vsel %vm4216, %v11082, 0
      %v11116 = vsel %vm4223, %v11083, 0
      %v11117 = vsel %vm4230, %v11084, 0
      %v11118 = vsel %vm4237, %v11085, 0
      %v11119 = vsel %vm4244, %v11086, 0
      %v11120 = vsel %vm4251, %v11087, 0
      %v11121 = vsel %vm4258, %v11088, 0
      %v11122 = vsel %vm4265, %v11089, 0
      %v11123 = vsel %vm4272, %v11090, 0
      %v11124 = vsel %vm4279, %v11091, 0
      %v11125 = vsel %vm4286, %v11092, 0
      %v11126 = vsel %vm4293, %v11093, 0
      %v11127 = vsel %vm4300, %v11094, 0
      %v11128 = vsel %vm4307, %v11095, 0
      %v11129 = vsel %vm4314, %v11096, 0
      %v11130 = vsel %vm4321, %v11097, 0
      %v11131 = vsel %vm4328, %v11098, 0
      %v11132 = vsel %vm4335, %v11099, 0
      %v11133 = vsel %vm4342, %v11100, 0
      %v11134 = vsel %vm4349, %v11101, 0
      %v11135 = vsel %vm4356, %v11102, 0
      %v11136 = vsel %vm4363, %v11103, 0
      %v11137 = vsel %vm4370, %v11104, 0
      %v11138 = vsel %vm4377, %v11105, 0
      %s11139 = scalar_lea.vmem %s11, 32
      %v11140 = vld [vmem:[%s11139] sm:$0xf]
      %v11174 = vunpack.c.l.b16 %v11106
      %v11175 = vunpack.c.l.b16 %v11107
      %v11176 = vunpack.c.l.b16 %v11108
      %v11177 = vunpack.c.l.b16 %v11109
      %v11178 = vunpack.c.l.b16 %v11110
      %v11179 = vunpack.c.l.b16 %v11111
      %v11180 = vunpack.c.l.b16 %v11112
      %v11181 = vunpack.c.l.b16 %v11113
      %v11182 = vunpack.c.l.b16 %v11114
      %v11183 = vunpack.c.l.b16 %v11115
      %v11184 = vunpack.c.l.b16 %v11116
      %v11185 = vunpack.c.l.b16 %v11117
      %v11186 = vunpack.c.l.b16 %v11118
      %v11187 = vunpack.c.l.b16 %v11119
      %v11188 = vunpack.c.l.b16 %v11120
      %v11189 = vunpack.c.l.b16 %v11121
      %v11190 = vunpack.c.l.b16 %v11122
      %v11191 = vunpack.c.l.b16 %v11123
      %v11192 = vunpack.c.l.b16 %v11124
      %v11193 = vunpack.c.l.b16 %v11125
      %v11194 = vunpack.c.l.b16 %v11126
      %v11195 = vunpack.c.l.b16 %v11127
      %v11196 = vunpack.c.l.b16 %v11128
      %v11197 = vunpack.c.l.b16 %v11129
      %v11198 = vunpack.c.l.b16 %v11130
      %v11199 = vunpack.c.l.b16 %v11131
      %v11200 = vunpack.c.l.b16 %v11132
      %v11201 = vunpack.c.l.b16 %v11133
      %v11202 = vunpack.c.l.b16 %v11134
      %v11203 = vunpack.c.l.b16 %v11135
      %v11204 = vunpack.c.l.b16 %v11136
      %v11205 = vunpack.c.l.b16 %v11137
      %v11206 = vunpack.c.l.b16 %v11138
      %v11207 = vpack.c.b16 %v11175, %v11174
      %v11208 = vpack.c.b16 %v11177, %v11176
      %v11209 = vpack.c.b16 %v11179, %v11178
      %v11210 = vpack.c.b16 %v11181, %v11180
      %v11211 = vpack.c.b16 %v11183, %v11182
      %v11212 = vpack.c.b16 %v11185, %v11184
      %v11213 = vpack.c.b16 %v11187, %v11186
      %v11214 = vpack.c.b16 %v11189, %v11188
      %v11215 = vpack.c.b16 %v11191, %v11190
      %v11216 = vpack.c.b16 %v11193, %v11192
      %v11217 = vpack.c.b16 %v11195, %v11194
      %v11218 = vpack.c.b16 %v11197, %v11196
      %v11219 = vpack.c.b16 %v11199, %v11198
      %v11220 = vpack.c.b16 %v11201, %v11200
      %v11221 = vpack.c.b16 %v11203, %v11202
      %v11222 = vpack.c.b16 %v11205, %v11204
      %v11223 = vpack.c.b16 %v11206, %v11206
      %v11225 = vshrl.u32 %v11207, 16
      %v11227 = vshll.u32 %v11207, 16
      %v11229 = vrot.slane %v11227, 1
      %v11230 = vor.u32 %v11225, %v11229
      %v11232 = vshll.u32 %v11208, 16
      %v11234 = vrot.slane %v11232, 1
      %v11235 = vsel %vm4496, %v11230, %v11234
      %v11236 = vshrl.u32 %v11208, 16
      %v11238 = vor.u32 %v11236, %v11234
      %v11240 = vshll.u32 %v11209, 16
      %v11242 = vrot.slane %v11240, 1
      %v11243 = vsel %vm4496, %v11238, %v11242
      %v11244 = vshrl.u32 %v11209, 16
      %v11246 = vor.u32 %v11244, %v11242
      %v11248 = vshll.u32 %v11210, 16
      %v11250 = vrot.slane %v11248, 1
      %v11251 = vsel %vm4496, %v11246, %v11250
      %v11252 = vshrl.u32 %v11210, 16
      %v11254 = vor.u32 %v11252, %v11250
      %v11256 = vshll.u32 %v11211, 16
      %v11258 = vrot.slane %v11256, 1
      %v11259 = vsel %vm4496, %v11254, %v11258
      %v11260 = vshrl.u32 %v11211, 16
      %v11262 = vor.u32 %v11260, %v11258
      %v11264 = vshll.u32 %v11212, 16
      %v11266 = vrot.slane %v11264, 1
      %v11267 = vsel %vm4496, %v11262, %v11266
      %v11268 = vshrl.u32 %v11212, 16
      %v11270 = vor.u32 %v11268, %v11266
      %v11272 = vshll.u32 %v11213, 16
      %v11274 = vrot.slane %v11272, 1
      %v11275 = vsel %vm4496, %v11270, %v11274
      %v11276 = vshrl.u32 %v11213, 16
      %v11278 = vor.u32 %v11276, %v11274
      %v11280 = vshll.u32 %v11214, 16
      %v11282 = vrot.slane %v11280, 1
      %v11283 = vsel %vm4496, %v11278, %v11282
      %v11284 = vshrl.u32 %v11214, 16
      %v11286 = vor.u32 %v11284, %v11282
      %v11288 = vshll.u32 %v11215, 16
      %v11290 = vrot.slane %v11288, 1
      %v11291 = vsel %vm4496, %v11286, %v11290
      %v11292 = vshrl.u32 %v11215, 16
      %v11294 = vor.u32 %v11292, %v11290
      %v11296 = vshll.u32 %v11216, 16
      %v11298 = vrot.slane %v11296, 1
      %v11299 = vsel %vm4496, %v11294, %v11298
      %v11300 = vshrl.u32 %v11216, 16
      %v11302 = vor.u32 %v11300, %v11298
      %v11304 = vshll.u32 %v11217, 16
      %v11306 = vrot.slane %v11304, 1
      %v11307 = vsel %vm4496, %v11302, %v11306
      %v11308 = vshrl.u32 %v11217, 16
      %v11310 = vor.u32 %v11308, %v11306
      %v11312 = vshll.u32 %v11218, 16
      %v11314 = vrot.slane %v11312, 1
      %v11315 = vsel %vm4496, %v11310, %v11314
      %v11316 = vshrl.u32 %v11218, 16
      %v11318 = vor.u32 %v11316, %v11314
      %v11320 = vshll.u32 %v11219, 16
      %v11322 = vrot.slane %v11320, 1
      %v11323 = vsel %vm4496, %v11318, %v11322
      %v11324 = vshrl.u32 %v11219, 16
      %v11326 = vor.u32 %v11324, %v11322
      %v11328 = vshll.u32 %v11220, 16
      %v11330 = vrot.slane %v11328, 1
      %v11331 = vsel %vm4496, %v11326, %v11330
      %v11332 = vshrl.u32 %v11220, 16
      %v11334 = vor.u32 %v11332, %v11330
      %v11336 = vshll.u32 %v11221, 16
      %v11338 = vrot.slane %v11336, 1
      %v11339 = vsel %vm4496, %v11334, %v11338
      %v11340 = vshrl.u32 %v11221, 16
      %v11342 = vor.u32 %v11340, %v11338
      %v11344 = vshll.u32 %v11222, 16
      %v11346 = vrot.slane %v11344, 1
      %v11347 = vsel %vm4496, %v11342, %v11346
      %v11348 = vshrl.u32 %v11222, 16
      %v11350 = vor.u32 %v11348, %v11346
      %v11352 = vshll.u32 %v11223, 16
      %v11354 = vrot.slane %v11352, 1
      %v11355 = vsel %vm4496, %v11350, %v11354
      %v11357 = vsel %vm6955, %v11235, 0
      %v11360 = vsel %vm6955, %v11243, 0
      %v11363 = vsel %vm6955, %v11251, 0
      %v11366 = vsel %vm6955, %v11259, 0
      %v11369 = vsel %vm6955, %v11267, 0
      %v11372 = vsel %vm6955, %v11275, 0
      %v11375 = vsel %vm6955, %v11283, 0
      %v11378 = vsel %vm6955, %v11291, 0
      %v11381 = vsel %vm6955, %v11299, 0
      %v11384 = vsel %vm6955, %v11307, 0
      %v11387 = vsel %vm6955, %v11315, 0
      %v11390 = vsel %vm6955, %v11323, 0
      %v11393 = vsel %vm6955, %v11331, 0
      %v11396 = vsel %vm6955, %v11339, 0
      %v11399 = vsel %vm6955, %v11347, 0
      %v11402 = vsel %vm6955, %v11355, 0
      %v11405 = vsel %vm1075, %v11140, 0
      %11407 = vmatpush.bf16.msra.mxu0 0
      %11408 = vmatpush.bf16.msra.mxu0 0
      %11409 = vmatpush.bf16.msra.mxu0 0
      %11410 = vmatpush.bf16.msra.mxu0 0
      %11411 = vmatpush.bf16.msra.mxu0 0
      %11412 = vmatpush.bf16.msra.mxu0 0
      %11413 = vmatpush.bf16.msra.mxu0 0
      %11414 = vmatpush.bf16.msra.mxu0 %v11405
      %11415 = vmatmul.bf16.gmra.mxu0 %v11357
      %v11416 = vpop.f32.mrf.mxu0
      %v11417 = vadd.f32 0.0, %v11416
      %v11418 = vpop.f32.mrf.mxu0
      %v11419 = vadd.f32 0.0, %v11418
      %11420 = vmatmul.bf16.gmra.mxu0 %v11360
      %v11421 = vpop.f32.mrf.mxu0
      %v11422 = vadd.f32 0.0, %v11421
      %v11423 = vpop.f32.mrf.mxu0
      %v11424 = vadd.f32 0.0, %v11423
      %11425 = vmatmul.bf16.gmra.mxu0 %v11363
      %v11426 = vpop.f32.mrf.mxu0
      %v11427 = vadd.f32 0.0, %v11426
      %v11428 = vpop.f32.mrf.mxu0
      %v11429 = vadd.f32 0.0, %v11428
      %11430 = vmatmul.bf16.gmra.mxu0 %v11366
      %v11431 = vpop.f32.mrf.mxu0
      %v11432 = vadd.f32 0.0, %v11431
      %v11433 = vpop.f32.mrf.mxu0
      %v11434 = vadd.f32 0.0, %v11433
      %11435 = vmatmul.bf16.gmra.mxu0 %v11369
      %v11436 = vpop.f32.mrf.mxu0
      %v11437 = vadd.f32 0.0, %v11436
      %v11438 = vpop.f32.mrf.mxu0
      %v11439 = vadd.f32 0.0, %v11438
      %11440 = vmatmul.bf16.gmra.mxu0 %v11372
      %v11441 = vpop.f32.mrf.mxu0
      %v11442 = vadd.f32 0.0, %v11441
      %v11443 = vpop.f32.mrf.mxu0
      %v11444 = vadd.f32 0.0, %v11443
      %11445 = vmatmul.bf16.gmra.mxu0 %v11375
      %v11446 = vpop.f32.mrf.mxu0
      %v11447 = vadd.f32 0.0, %v11446
      %v11448 = vpop.f32.mrf.mxu0
      %v11449 = vadd.f32 0.0, %v11448
      %11450 = vmatmul.bf16.gmra.mxu0 %v11378
      %v11451 = vpop.f32.mrf.mxu0
      %v11452 = vadd.f32 0.0, %v11451
      %v11453 = vpop.f32.mrf.mxu0
      %v11454 = vadd.f32 0.0, %v11453
      %11455 = vmatmul.bf16.gmra.mxu0 %v11381
      %v11456 = vpop.f32.mrf.mxu0
      %v11457 = vadd.f32 0.0, %v11456
      %v11458 = vpop.f32.mrf.mxu0
      %v11459 = vadd.f32 0.0, %v11458
      %11460 = vmatmul.bf16.gmra.mxu0 %v11384
      %v11461 = vpop.f32.mrf.mxu0
      %v11462 = vadd.f32 0.0, %v11461
      %v11463 = vpop.f32.mrf.mxu0
      %v11464 = vadd.f32 0.0, %v11463
      %11465 = vmatmul.bf16.gmra.mxu0 %v11387
      %v11466 = vpop.f32.mrf.mxu0
      %v11467 = vadd.f32 0.0, %v11466
      %v11468 = vpop.f32.mrf.mxu0
      %v11469 = vadd.f32 0.0, %v11468
      %11470 = vmatmul.bf16.gmra.mxu0 %v11390
      %v11471 = vpop.f32.mrf.mxu0
      %v11472 = vadd.f32 0.0, %v11471
      %v11473 = vpop.f32.mrf.mxu0
      %v11474 = vadd.f32 0.0, %v11473
      %11475 = vmatmul.bf16.gmra.mxu0 %v11393
      %v11476 = vpop.f32.mrf.mxu0
      %v11477 = vadd.f32 0.0, %v11476
      %v11478 = vpop.f32.mrf.mxu0
      %v11479 = vadd.f32 0.0, %v11478
      %11480 = vmatmul.bf16.gmra.mxu0 %v11396
      %v11481 = vpop.f32.mrf.mxu0
      %v11482 = vadd.f32 0.0, %v11481
      %v11483 = vpop.f32.mrf.mxu0
      %v11484 = vadd.f32 0.0, %v11483
      %11485 = vmatmul.bf16.gmra.mxu0 %v11399
      %v11486 = vpop.f32.mrf.mxu0
      %v11487 = vadd.f32 0.0, %v11486
      %v11488 = vpop.f32.mrf.mxu0
      %v11489 = vadd.f32 0.0, %v11488
      %11490 = vmatmul.bf16.gmra.mxu0 %v11402
      %v11491 = vpop.f32.mrf.mxu0
      %v11492 = vadd.f32 0.0, %v11491
      %v11493 = vpop.f32.mrf.mxu0
      %v11494 = vadd.f32 0.0, %v11493
      %11495 = vdwg.mxu0
      %v11496 = vadd.f32 %v11041, %v11417
      %v11497 = vadd.f32 %v11042, %v11419
      %v11498 = vadd.f32 %v11043, %v11422
      %v11499 = vadd.f32 %v11044, %v11424
      %v11500 = vadd.f32 %v11045, %v11427
      %v11501 = vadd.f32 %v11046, %v11429
      %v11502 = vadd.f32 %v11047, %v11432
      %v11503 = vadd.f32 %v11048, %v11434
      %v11504 = vadd.f32 %v11049, %v11437
      %v11505 = vadd.f32 %v11050, %v11439
      %v11506 = vadd.f32 %v11051, %v11442
      %v11507 = vadd.f32 %v11052, %v11444
      %v11508 = vadd.f32 %v11053, %v11447
      %v11509 = vadd.f32 %v11054, %v11449
      %v11510 = vadd.f32 %v11055, %v11452
      %v11511 = vadd.f32 %v11056, %v11454
      %v11512 = vadd.f32 %v11057, %v11457
      %v11513 = vadd.f32 %v11058, %v11459
      %v11514 = vadd.f32 %v11059, %v11462
      %v11515 = vadd.f32 %v11060, %v11464
      %v11516 = vadd.f32 %v11061, %v11467
      %v11517 = vadd.f32 %v11062, %v11469
      %v11518 = vadd.f32 %v11063, %v11472
      %v11519 = vadd.f32 %v11064, %v11474
      %v11520 = vadd.f32 %v11065, %v11477
      %v11521 = vadd.f32 %v11066, %v11479
      %v11522 = vadd.f32 %v11067, %v11482
      %v11523 = vadd.f32 %v11068, %v11484
      %v11524 = vadd.f32 %v11069, %v11487
      %v11525 = vadd.f32 %v11070, %v11489
      %v11526 = vadd.f32 %v11071, %v11492
      %v11527 = vadd.f32 %v11072, %v11494
      %v11528 = vpack.c.bf16 %v486, %v485
      %v11529 = vpack.c.bf16 %v488, %v487
      %v11530 = vpack.c.bf16 %v490, %v489
      %v11531 = vpack.c.bf16 %v492, %v491
      %v11532 = vpack.c.bf16 %v494, %v493
      %v11533 = vpack.c.bf16 %v496, %v495
      %v11534 = vpack.c.bf16 %v498, %v497
      %v11535 = vpack.c.bf16 %v500, %v499
      %v11536 = vpack.c.bf16 %v502, %v501
      %v11537 = vpack.c.bf16 %v504, %v503
      %v11538 = vpack.c.bf16 %v506, %v505
      %v11539 = vpack.c.bf16 %v508, %v507
      %v11540 = vpack.c.bf16 %v510, %v509
      %v11541 = vpack.c.bf16 %v512, %v511
      %v11542 = vpack.c.bf16 %v514, %v513
      %v11543 = vpack.c.bf16 %v516, %v515
      %v11544 = vld [vmem:[%s13] sm:$0x3]
      %v11546 = vsel %vm1002, %v11528, 0
      %v11549 = vsel %vm1002, %v11529, 0
      %v11552 = vsel %vm1002, %v11530, 0
      %v11555 = vsel %vm1002, %v11531, 0
      %v11558 = vsel %vm1002, %v11532, 0
      %v11561 = vsel %vm1002, %v11533, 0
      %v11564 = vsel %vm1002, %v11534, 0
      %v11567 = vsel %vm1002, %v11535, 0
      %v11570 = vsel %vm1002, %v11536, 0
      %v11573 = vsel %vm1002, %v11537, 0
      %v11576 = vsel %vm1002, %v11538, 0
      %v11579 = vsel %vm1002, %v11539, 0
      %v11582 = vsel %vm1002, %v11540, 0
      %v11585 = vsel %vm1002, %v11541, 0
      %v11588 = vsel %vm1002, %v11542, 0
      %v11591 = vsel %vm1002, %v11543, 0
      %v11594 = vsel %vm3129, %v11544, 0
      %11596 = vmatpush.bf16.msra.mxu0 0
      %11597 = vmatpush.bf16.msra.mxu0 0
      %11598 = vmatpush.bf16.msra.mxu0 0
      %11599 = vmatpush.bf16.msra.mxu0 0
      %11600 = vmatpush.bf16.msra.mxu0 0
      %11601 = vmatpush.bf16.msra.mxu0 0
      %11602 = vmatpush.bf16.msra.mxu0 0
      %11603 = vmatpush.bf16.msra.mxu0 %v11594
      %11604 = vmatmul.bf16.gmra.mxu0 %v11546
      %v11605 = vpop.f32.mrf.mxu0
      %v11606 = vadd.f32 0.0, %v11605
      %v11607 = vpop.f32.mrf.mxu0
      %v11608 = vadd.f32 0.0, %v11607
      %11609 = vmatmul.bf16.gmra.mxu0 %v11549
      %v11610 = vpop.f32.mrf.mxu0
      %v11611 = vadd.f32 0.0, %v11610
      %v11612 = vpop.f32.mrf.mxu0
      %v11613 = vadd.f32 0.0, %v11612
      %11614 = vmatmul.bf16.gmra.mxu0 %v11552
      %v11615 = vpop.f32.mrf.mxu0
      %v11616 = vadd.f32 0.0, %v11615
      %v11617 = vpop.f32.mrf.mxu0
      %v11618 = vadd.f32 0.0, %v11617
      %11619 = vmatmul.bf16.gmra.mxu0 %v11555
      %v11620 = vpop.f32.mrf.mxu0
      %v11621 = vadd.f32 0.0, %v11620
      %v11622 = vpop.f32.mrf.mxu0
      %v11623 = vadd.f32 0.0, %v11622
      %11624 = vmatmul.bf16.gmra.mxu0 %v11558
      %v11625 = vpop.f32.mrf.mxu0
      %v11626 = vadd.f32 0.0, %v11625
      %v11627 = vpop.f32.mrf.mxu0
      %v11628 = vadd.f32 0.0, %v11627
      %11629 = vmatmul.bf16.gmra.mxu0 %v11561
      %v11630 = vpop.f32.mrf.mxu0
      %v11631 = vadd.f32 0.0, %v11630
      %v11632 = vpop.f32.mrf.mxu0
      %v11633 = vadd.f32 0.0, %v11632
      %11634 = vmatmul.bf16.gmra.mxu0 %v11564
      %v11635 = vpop.f32.mrf.mxu0
      %v11636 = vadd.f32 0.0, %v11635
      %v11637 = vpop.f32.mrf.mxu0
      %v11638 = vadd.f32 0.0, %v11637
      %11639 = vmatmul.bf16.gmra.mxu0 %v11567
      %v11640 = vpop.f32.mrf.mxu0
      %v11641 = vadd.f32 0.0, %v11640
      %v11642 = vpop.f32.mrf.mxu0
      %v11643 = vadd.f32 0.0, %v11642
      %11644 = vmatmul.bf16.gmra.mxu0 %v11570
      %v11645 = vpop.f32.mrf.mxu0
      %v11646 = vadd.f32 0.0, %v11645
      %v11647 = vpop.f32.mrf.mxu0
      %v11648 = vadd.f32 0.0, %v11647
      %11649 = vmatmul.bf16.gmra.mxu0 %v11573
      %v11650 = vpop.f32.mrf.mxu0
      %v11651 = vadd.f32 0.0, %v11650
      %v11652 = vpop.f32.mrf.mxu0
      %v11653 = vadd.f32 0.0, %v11652
      %11654 = vmatmul.bf16.gmra.mxu0 %v11576
      %v11655 = vpop.f32.mrf.mxu0
      %v11656 = vadd.f32 0.0, %v11655
      %v11657 = vpop.f32.mrf.mxu0
      %v11658 = vadd.f32 0.0, %v11657
      %11659 = vmatmul.bf16.gmra.mxu0 %v11579
      %v11660 = vpop.f32.mrf.mxu0
      %v11661 = vadd.f32 0.0, %v11660
      %v11662 = vpop.f32.mrf.mxu0
      %v11663 = vadd.f32 0.0, %v11662
      %11664 = vmatmul.bf16.gmra.mxu0 %v11582
      %v11665 = vpop.f32.mrf.mxu0
      %v11666 = vadd.f32 0.0, %v11665
      %v11667 = vpop.f32.mrf.mxu0
      %v11668 = vadd.f32 0.0, %v11667
      %11669 = vmatmul.bf16.gmra.mxu0 %v11585
      %v11670 = vpop.f32.mrf.mxu0
      %v11671 = vadd.f32 0.0, %v11670
      %v11672 = vpop.f32.mrf.mxu0
      %v11673 = vadd.f32 0.0, %v11672
      %11674 = vmatmul.bf16.gmra.mxu0 %v11588
      %v11675 = vpop.f32.mrf.mxu0
      %v11676 = vadd.f32 0.0, %v11675
      %v11677 = vpop.f32.mrf.mxu0
      %v11678 = vadd.f32 0.0, %v11677
      %11679 = vmatmul.bf16.gmra.mxu0 %v11591
      %v11680 = vpop.f32.mrf.mxu0
      %v11681 = vadd.f32 0.0, %v11680
      %v11682 = vpop.f32.mrf.mxu0
      %v11683 = vadd.f32 0.0, %v11682
      %11684 = vdwg.mxu0
      %v11685 = vadd.f32 %v11496, %v11606
      %v11686 = vadd.f32 %v11497, %v11608
      %v11687 = vadd.f32 %v11498, %v11611
      %v11688 = vadd.f32 %v11499, %v11613
      %v11689 = vadd.f32 %v11500, %v11616
      %v11690 = vadd.f32 %v11501, %v11618
      %v11691 = vadd.f32 %v11502, %v11621
      %v11692 = vadd.f32 %v11503, %v11623
      %v11693 = vadd.f32 %v11504, %v11626
      %v11694 = vadd.f32 %v11505, %v11628
      %v11695 = vadd.f32 %v11506, %v11631
      %v11696 = vadd.f32 %v11507, %v11633
      %v11697 = vadd.f32 %v11508, %v11636
      %v11698 = vadd.f32 %v11509, %v11638
      %v11699 = vadd.f32 %v11510, %v11641
      %v11700 = vadd.f32 %v11511, %v11643
      %v11701 = vadd.f32 %v11512, %v11646
      %v11702 = vadd.f32 %v11513, %v11648
      %v11703 = vadd.f32 %v11514, %v11651
      %v11704 = vadd.f32 %v11515, %v11653
      %v11705 = vadd.f32 %v11516, %v11656
      %v11706 = vadd.f32 %v11517, %v11658
      %v11707 = vadd.f32 %v11518, %v11661
      %v11708 = vadd.f32 %v11519, %v11663
      %v11709 = vadd.f32 %v11520, %v11666
      %v11710 = vadd.f32 %v11521, %v11668
      %v11711 = vadd.f32 %v11522, %v11671
      %v11712 = vadd.f32 %v11523, %v11673
      %v11713 = vadd.f32 %v11524, %v11676
      %v11714 = vadd.f32 %v11525, %v11678
      %v11715 = vadd.f32 %v11526, %v11681
      %v11716 = vadd.f32 %v11527, %v11683
      %v11717 = vld [vmem:[%s12] sm:$0x1]
      %v11719 = vperm.slane %v11717, 0
      %v11721 = vadd.f32 %v11685, %v11719
      %v11722 = vadd.f32 %v11686, %v11719
      %v11723 = vadd.f32 %v11687, %v11719
      %v11724 = vadd.f32 %v11688, %v11719
      %v11725 = vadd.f32 %v11689, %v11719
      %v11726 = vadd.f32 %v11690, %v11719
      %v11727 = vadd.f32 %v11691, %v11719
      %v11728 = vadd.f32 %v11692, %v11719
      %v11729 = vadd.f32 %v11693, %v11719
      %v11730 = vadd.f32 %v11694, %v11719
      %v11731 = vadd.f32 %v11695, %v11719
      %v11732 = vadd.f32 %v11696, %v11719
      %v11733 = vadd.f32 %v11697, %v11719
      %v11734 = vadd.f32 %v11698, %v11719
      %v11735 = vadd.f32 %v11699, %v11719
      %v11736 = vadd.f32 %v11700, %v11719
      %v11737 = vadd.f32 %v11701, %v11719
      %v11738 = vadd.f32 %v11702, %v11719
      %v11739 = vadd.f32 %v11703, %v11719
      %v11740 = vadd.f32 %v11704, %v11719
      %v11741 = vadd.f32 %v11705, %v11719
      %v11742 = vadd.f32 %v11706, %v11719
      %v11743 = vadd.f32 %v11707, %v11719
      %v11744 = vadd.f32 %v11708, %v11719
      %v11745 = vadd.f32 %v11709, %v11719
      %v11746 = vadd.f32 %v11710, %v11719
      %v11747 = vadd.f32 %v11711, %v11719
      %v11748 = vadd.f32 %v11712, %v11719
      %v11749 = vadd.f32 %v11713, %v11719
      %v11750 = vadd.f32 %v11714, %v11719
      %v11751 = vadd.f32 %v11715, %v11719
      %v11752 = vadd.f32 %v11716, %v11719
      %11753 = vst.msk [vmem:[%s481] sm:$0xff] %vm6955, %v11721
      %11754 = vst.msk [vmem:[%s481 + $0x8] sm:$0xff] %vm6955, %v11722
      %11755 = vst.msk [vmem:[%s481 + $0x10] sm:$0xff] %vm6955, %v11723
      %11756 = vst.msk [vmem:[%s481 + $0x18] sm:$0xff] %vm6955, %v11724
      %11757 = vst.msk [vmem:[%s481 + $0x20] sm:$0xff] %vm6955, %v11725
      %11758 = vst.msk [vmem:[%s481 + $0x28] sm:$0xff] %vm6955, %v11726
      %11759 = vst.msk [vmem:[%s481 + $0x30] sm:$0xff] %vm6955, %v11727
      %11760 = vst.msk [vmem:[%s481 + $0x38] sm:$0xff] %vm6955, %v11728
      %11761 = vst.msk [vmem:[%s481 + $0x40] sm:$0xff] %vm6955, %v11729
      %11762 = vst.msk [vmem:[%s481 + $0x48] sm:$0xff] %vm6955, %v11730
      %11763 = vst.msk [vmem:[%s481 + $0x50] sm:$0xff] %vm6955, %v11731
      %11764 = vst.msk [vmem:[%s481 + $0x58] sm:$0xff] %vm6955, %v11732
      %11765 = vst.msk [vmem:[%s481 + $0x60] sm:$0xff] %vm6955, %v11733
      %11766 = vst.msk [vmem:[%s481 + $0x68] sm:$0xff] %vm6955, %v11734
      %11767 = vst.msk [vmem:[%s481 + $0x70] sm:$0xff] %vm6955, %v11735
      %11768 = vst.msk [vmem:[%s481 + $0x78] sm:$0xff] %vm6955, %v11736
      %11769 = vst.msk [vmem:[%s481 + $0x80] sm:$0xff] %vm6955, %v11737
      %11770 = vst.msk [vmem:[%s481 + $0x88] sm:$0xff] %vm6955, %v11738
      %11771 = vst.msk [vmem:[%s481 + $0x90] sm:$0xff] %vm6955, %v11739
      %11772 = vst.msk [vmem:[%s481 + $0x98] sm:$0xff] %vm6955, %v11740
      %11773 = vst.msk [vmem:[%s481 + $0xa0] sm:$0xff] %vm6955, %v11741
      %11774 = vst.msk [vmem:[%s481 + $0xa8] sm:$0xff] %vm6955, %v11742
      %11775 = vst.msk [vmem:[%s481 + $0xb0] sm:$0xff] %vm6955, %v11743
      %11776 = vst.msk [vmem:[%s481 + $0xb8] sm:$0xff] %vm6955, %v11744
      %11777 = vst.msk [vmem:[%s481 + $0xc0] sm:$0xff] %vm6955, %v11745
      %11778 = vst.msk [vmem:[%s481 + $0xc8] sm:$0xff] %vm6955, %v11746
      %11779 = vst.msk [vmem:[%s481 + $0xd0] sm:$0xff] %vm6955, %v11747
      %11780 = vst.msk [vmem:[%s481 + $0xd8] sm:$0xff] %vm6955, %v11748
      %11781 = vst.msk [vmem:[%s481 + $0xe0] sm:$0xff] %vm6955, %v11749
      %11782 = vst.msk [vmem:[%s481 + $0xe8] sm:$0xff] %vm6955, %v11750
      %11783 = vst.msk [vmem:[%s481 + $0xf0] sm:$0xff] %vm6955, %v11751
      %11784 = vst.msk [vmem:[%s481 + $0xf8] sm:$0xff] %vm6955, %v11752
      %p11785 = scmp.lt.s32.totalorder %s25, 1
      %s11786 = scalar_select %p11785, %s25, 1
      %s11787 = smul.addr %s11786, 32
      %s11788 = smul.addr %s11787, 8
      %s11789 = scalar_lea.vmem %s14, %s11788
      // Predicated region
      $region77: #{tpu_custom_call.1} parent=75 // pred_check
        %p11790 = pneg %p347
      $region78: #{tpu_custom_call.1} parent=75 // pred_check_branch
        %11792 = sbr.rel (%p11790) target = $region80
      $region79: #{tpu_custom_call.1} parent=75 // pred_region
        _
      $region80: #{tpu_custom_call.1} parent=75 // pred_fallthru
        _
    $region76: #{tpu_custom_call.1} parent=5 // pred_fallthru
      _
    %p11793 = scmp.le.s32.totalorder 2, %s20
    // Predicated region
    $region81: #{tpu_custom_call.1} parent=5 // pred_check
      %p11794 = pneg %p11793
    $region82: #{tpu_custom_call.1} parent=5 // pred_check_branch
      %11796 = sbr.rel (%p11794) target = $region84
    $region83: #{tpu_custom_call.1} parent=5 // pred_region
      %s11797 = ssub.s32 %s20, 2
      // Predicated region
      $region85: #{tpu_custom_call.1} parent=83 // pred_check
        %p11798 = pneg %p353
      $region86: #{tpu_custom_call.1} parent=83 // pred_check_branch
        %11800 = sbr.rel (%p11798) target = $region88
      $region87: #{tpu_custom_call.1} parent=83 // pred_region
        %p11801 = scmp.lt.s32.totalorder %s26, 1
        %s11802 = scalar_select %p11801, %s26, 1
        %s11803 = smul.addr %s11802, 32
        %s11804 = smul.addr %s11803, 8
        %s11805 = scalar_lea.vmem %s14, %s11804
      $region88: #{tpu_custom_call.1} parent=83 // pred_fallthru
        _
    $region84: #{tpu_custom_call.1} parent=5 // pred_fallthru
      _
  $region6: #{tpu_custom_call.1} parent=0 // loop_footer
    %s24 = sadd.s32 1, %s20
  $region7: #{tpu_custom_call.1} parent=0 // loop_footer_branch
    %19 = sbr.rel target = $region3
  $region8: #{tpu_custom_call.1} parent=0 // loop_exit
    _

</llo_original>
